<compile_context>
chip_gen: v7x
topology: tpu7x:2x2x1
jax: 0.10.0
libtpu: 0.0.40
codegen_flags: <defaults>
</compile_context>

<pallas_src>
import functools
import math

import jax
import jax.numpy as jnp
from jax.experimental import pallas as pl
from jax.experimental.pallas import tpu as pltpu


# ----------------------------------------------------------------------------
# Generation-aware VMEM / tile budgets
# ----------------------------------------------------------------------------

@functools.lru_cache(maxsize=None)
def _budgets():
    """(scoped vmem_limit_bytes, per-block byte budget) derived from the chip."""
    try:
        vmem = pltpu.get_tpu_info().vmem_capacity_bytes
    except Exception:
        vmem = 64 * 1024 * 1024                     # conservative (v7x-safe) fallback
    if vmem >= 100 * 1024 * 1024:                   # v5e / v6e : 128 MiB physical
        return 96 * 1024 * 1024, 12 * 1024 * 1024
    return 48 * 1024 * 1024, 5 * 1024 * 1024        # v7x : 64 MiB physical


def _pick_tile_h(h, bytes_per_row, budget):
    """Largest row tile that divides h, keeps blocks (8,128)-friendly and fits budget.

    Valid tiles: th == h, or th a divisor of h with th % 8 == 0 (so the second-minor
    dim of flattened output blocks stays 8-aligned and halo offsets stay even).
    TODO(synk): cdiv-based tiling with a masked last tile would avoid degenerate
    tiles for awkward H; not needed for the shapes exercised here.
    """
    cands = [t for t in range(h, 0, -1) if h % t == 0 and (t == h or t % 8 == 0)]
    for t in cands:
        if t * bytes_per_row <= budget:
            return t
    return cands[-1]


# ----------------------------------------------------------------------------
# Pallas kernels
# ----------------------------------------------------------------------------

def _conv_kernel(*refs, kh, kw, th, ow, fuse_add):
    """'same' KxK conv on one row tile via a single im2col GEMM, with the octave
    add (optional) and per-channel BN sum/sumsq fused into the epilogue.

    refs (fuse_add=True ): xm, xhalo, w, add, out, stats
    refs (fuse_add=False): xm, xhalo, w,      out, stats
      xm    : (1, th,     W+kw-1, Cin)     bf16   main rows of the padded input
      xhalo : (1, kh-1,   W+kw-1, Cin)     bf16   bottom halo rows
      w     : (kh*kw*Cin, Cout)            bf16   VMEM resident (constant index_map)
      add   : (1, th, W, Cout)             bf16   pre-upsampled low->high contribution
      out   : (1, th, W, Cout)             bf16
      stats : (1, 1, 2, Cout)              f32    [sum, sumsq] of this tile
    """
    if fuse_add:
        xm_ref, xh_ref, w_ref, add_ref, o_ref, st_ref = refs
    else:
        xm_ref, xh_ref, w_ref, o_ref, st_ref = refs
        add_ref = None

    cin = xm_ref.shape[-1]
    cout = o_ref.shape[-1]

    # Stitch the (K-1)-row halo onto the main tile in VMEM (only 2 rows re-read).
    xf = jnp.concatenate([xm_ref[0], xh_ref[0]], axis=0)      # (th+kh-1, ow+kw-1, cin)

    # im2col: (th*ow, kh*kw*cin) patch matrix, single MXU GEMM with f32 accumulation.
    cols = []
    for i in range(kh):
        for j in range(kw):
            cols.append(xf[i:i + th, j:j + ow, :].reshape(th * ow, cin))
    patches = jnp.concatenate(cols, axis=-1)
    acc = jnp.dot(patches, w_ref[...], preferred_element_type=jnp.float32)

    if fuse_add:                                               # fused octave merge
        acc = acc + add_ref[0].reshape(th * ow, cout).astype(jnp.float32)

    # Fused BN statistics (ride on XLU while the conv is MXU/DMA bound).
    s = jnp.sum(acc, axis=0, keepdims=True)                    # (1, cout)
    ss = jnp.sum(acc * acc, axis=0, keepdims=True)
    st_ref[...] = jnp.concatenate([s, ss], axis=0).reshape(1, 1, 2, cout)

    # TODO(synk): Cout < 128 makes this a masked store; an in-kernel relayout to a
    # (th, W*Cout) lane-dense slab was judged not worth the transpose cost here.
    o_ref[0] = acc.reshape(th, ow, cout).astype(o_ref.dtype)


def _bn_apply_kernel(x_ref, sc_ref, sh_ref, o_ref):
    """y = relu(x * scale + shift) on a lane-dense (1, th, W*C) tile.

    scale/shift are per-channel vectors tiled along W in the wrapper, so loads and
    stores here are fully lane-dense (W*C on the lane axis).
    """
    y = x_ref[0].astype(jnp.float32) * sc_ref[...] + sh_ref[...]
    o_ref[0] = jnp.maximum(y, 0.0).astype(o_ref.dtype)


# ----------------------------------------------------------------------------
# Pallas wrappers
# ----------------------------------------------------------------------------

def conv2d_oct(x, w, add=None):
    """NHWC conv, stride 1, 'same' padding, no bias (BN follows).

    Returns (out bf16 (N,H,W,Cout), stats f32 (N, nt, 2, Cout)) where stats holds
    per-tile [sum, sumsq] of the f32 conv output (including the fused `add`).
    """
    n, h, wd, cin = x.shape
    kh, kw, cin2, cout = w.shape
    assert cin == cin2 and h % 2 == 0
    ph, pw = kh // 2, kw // 2
    wpd = wd + 2 * pw

    xp = jnp.pad(x.astype(jnp.bfloat16), ((0, 0), (ph, ph), (pw, pw), (0, 0)))
    wmat = w.astype(jnp.bfloat16).reshape(kh * kw * cin, cout)

    vmem_limit, budget = _budgets()
    add_bytes = 0 if add is None else wd * cout * 2 * 2
    row_bytes = ((wpd * cin * 2) * 2                 # bf16 input, double-buffered
                 + (wd * cout * 2) * 2               # bf16 output, double-buffered
                 + add_bytes                         # fused-add input
                 + wd * kh * kw * cin * 2            # im2col patches (temp)
                 + wd * cout * 4)                    # f32 accumulator (temp)
    th = _pick_tile_h(h, row_bytes, budget)
    nt = h // th
    assert th % (kh - 1) == 0 or th == h

    in_specs = [
        pl.BlockSpec((1, th, wpd, cin), lambda b, t: (b, t, 0, 0)),
        pl.BlockSpec((1, kh - 1, wpd, cin),
                     lambda b, t: (b, (t + 1) * (th // (kh - 1)), 0, 0)),
        pl.BlockSpec((kh * kw * cin, cout), lambda b, t: (0, 0)),   # resident weights
    ]
    operands = [xp, xp, wmat]
    if add is not None:
        in_specs.append(pl.BlockSpec((1, th, wd, cout), lambda b, t: (b, t, 0, 0)))
        operands.append(add.astype(jnp.bfloat16))

    out, stats = pl.pallas_call(
        functools.partial(_conv_kernel, kh=kh, kw=kw, th=th, ow=wd,
                          fuse_add=add is not None),
        out_shape=(jax.ShapeDtypeStruct((n, h, wd, cout), jnp.bfloat16),
                   jax.ShapeDtypeStruct((n, nt, 2, cout), jnp.float32)),
        grid=(n, nt),
        in_specs=in_specs,
        out_specs=(pl.BlockSpec((1, th, wd, cout), lambda b, t: (b, t, 0, 0)),
                   pl.BlockSpec((1, 1, 2, cout), lambda b, t: (b, t, 0, 0))),
        compiler_params=pltpu.CompilerParams(
            dimension_semantics=("parallel", "parallel"),
            vmem_limit_bytes=vmem_limit),
    )(*operands)
    return out, stats


def batchnorm_relu(x, stats, gamma, beta, out_dtype, eps=1e-5):
    """Training-mode BatchNorm2d (batch stats over N,H,W) + ReLU, lane-dense apply.

    Stats come pre-reduced per tile from the conv epilogue; scale/shift are computed
    once here (tiny XLA work on (C,) vectors).
    TODO(synk): uses batch statistics only (PyTorch train mode); eval-mode running
    stats are not modeled.  var = E[x^2]-mean^2 is clamped at 0 to guard cancellation.
    """
    n, h, w, c = x.shape
    tot = stats.sum(axis=(0, 1))                      # (2, C)
    count = float(n * h * w)
    mean = tot[0] / count
    var = jnp.maximum(tot[1] / count - mean * mean, 0.0)
    inv = jax.lax.rsqrt(var + eps)
    scale = gamma * inv
    shift = beta - mean * scale

    wc = w * c
    xf = x.reshape(n, h, wc)                          # contiguous -> free reshape
    scale_row = jnp.tile(scale, w).reshape(1, wc).astype(jnp.float32)
    shift_row = jnp.tile(shift, w).reshape(1, wc).astype(jnp.float32)

    vmem_limit, budget = _budgets()
    out_bytes = jnp.dtype(out_dtype).itemsize
    row_bytes = (wc * 2) * 2 + (wc * out_bytes) * 2 + wc * 4
    th = _pick_tile_h(h, row_bytes, budget)
    nt = h // th

    y = pl.pallas_call(
        _bn_apply_kernel,
        out_shape=jax.ShapeDtypeStruct((n, h, wc), out_dtype),
        grid=(n, nt),
        in_specs=[pl.BlockSpec((1, th, wc), lambda b, t: (b, t, 0)),
                  pl.BlockSpec((1, wc), lambda b, t: (0, 0)),
                  pl.BlockSpec((1, wc), lambda b, t: (0, 0))],
        out_specs=pl.BlockSpec((1, th, wc), lambda b, t: (b, t, 0)),
        compiler_params=pltpu.CompilerParams(
            dimension_semantics=("parallel", "parallel"),
            vmem_limit_bytes=vmem_limit),
    )(xf, scale_row, shift_row)
    return y.reshape(n, h, w, c)


# ----------------------------------------------------------------------------
# Plain-JAX glue (pure data movement)
# ----------------------------------------------------------------------------

def avgpool2(x):
    n, h, w, c = x.shape
    return jnp.mean(x.reshape(n, h // 2, 2, w // 2, 2, c), axis=(2, 4))


def nearest_up2(x):
    # TODO(synk): could be fused into the h2h conv kernel (in-VMEM repeat) to save
    # one full-res HBM write; kept in XLA for robust lowering.
    return jnp.repeat(jnp.repeat(x, 2, axis=1), 2, axis=2)


# ----------------------------------------------------------------------------
# Module application (mirrors the PyTorch forward, alpha_in = alpha_out = 0.5)
# ----------------------------------------------------------------------------

def apply_cba(p, x_h, x_l, out_dtype):
    """Conv_BN_ACT: OctaveConv -> BatchNorm2d (per branch) -> ReLU."""
    c = p['conv']

    # Low branch: h2l(avgpool2(x_h)) + l2l(x_l) as ONE conv on the channel-concat
    # input (weights stacked along Cin) -> output IS out_l; BN stats fused.
    x_lo = jnp.concatenate([avgpool2(x_h), x_l], axis=-1)
    w_lo = jnp.concatenate([c['h2l'], c['l2l']], axis=2)
    out_l, st_l = conv2d_oct(x_lo, w_lo)

    # High branch: h2h(x_h) + up2(l2h(x_l)); the upsample-add and BN stats are
    # fused into the h2h conv epilogue.
    y_l2h, _ = conv2d_oct(x_l, c['l2h'])
    out_h, st_h = conv2d_oct(x_h, c['h2h'], add=nearest_up2(y_l2h))

    y_h = batchnorm_relu(out_h, st_h, p['bn_h'][0], p['bn_h'][1], out_dtype)
    y_l = batchnorm_relu(out_l, st_l, p['bn_l'][0], p['bn_l'][1], out_dtype)
    return y_h, y_l


def double_conv_forward(params, x_h_nchw, x_l_nchw):
    """(OctConv => BN => ReLU) * 2 on an octave pair; NCHW in / NCHW out."""
    x_h = jnp.transpose(x_h_nchw, (0, 2, 3, 1)).astype(jnp.float32)
    x_l = jnp.transpose(x_l_nchw, (0, 2, 3, 1)).astype(jnp.float32)
    y_h, y_l = apply_cba(params['c1'], x_h, x_l, out_dtype=jnp.bfloat16)
    y_h, y_l = apply_cba(params['c2'], y_h, y_l, out_dtype=jnp.float32)
    return (jnp.transpose(y_h, (0, 3, 1, 2)),
            jnp.transpose(y_l, (0, 3, 1, 2)))


# ----------------------------------------------------------------------------
# Parameters (deterministic synthetic init)
# ----------------------------------------------------------------------------

def _split(c, alpha):
    c_l = int(alpha * c)
    return c - c_l, c_l


def init_octconv(key, cin, cout, k=3, alpha_in=0.5, alpha_out=0.5):
    cin_h, cin_l = _split(cin, alpha_in)
    cout_h, cout_l = _split(cout, alpha_out)
    ks = jax.random.split(key, 4)

    def cw(kk, ci, co):
        return (1.0 / math.sqrt(k * k * ci)) * jax.random.normal(
            kk, (k, k, ci, co), jnp.float32)

    # TODO(synk): reference OctaveConv uses bias=False (BN follows), so no conv bias.
    return {'h2h': cw(ks[0], cin_h, cout_h),
            'h2l': cw(ks[1], cin_h, cout_l),
            'l2h': cw(ks[2], cin_l, cout_h),
            'l2l': cw(ks[3], cin_l, cout_l)}


def init_cba(key, cin, cout, alpha=0.5):
    cout_h, cout_l = _split(cout, alpha)
    return {'conv': init_octconv(key, cin, cout, 3, alpha, alpha),
            'bn_h': (jnp.ones((cout_h,), jnp.float32), jnp.zeros((cout_h,), jnp.float32)),
            'bn_l': (jnp.ones((cout_l,), jnp.float32), jnp.zeros((cout_l,), jnp.float32))}


def init_double_conv(key, in_ch, out_ch):
    k1, k2 = jax.random.split(key)
    return {'c1': init_cba(k1, in_ch, out_ch),
            'c2': init_cba(k2, out_ch, out_ch)}


# ----------------------------------------------------------------------------
# Main
# ----------------------------------------------------------------------------

if __name__ == "__main__":
    N, in_ch, out_ch, H, W = 2, 8, 16, 16, 16
    cin_h, cin_l = _split(in_ch, 0.5)
    cout_h, cout_l = _split(out_ch, 0.5)

    key = jax.random.PRNGKey(0)
    kx_h, kx_l, kp = jax.random.split(key, 3)
    # double_conv with alpha_in=0.5 consumes an octave pair (x_h full-res, x_l half-res).
    x_h = jax.random.normal(kx_h, (N, cin_h, H, W), jnp.float32)
    x_l = jax.random.normal(kx_l, (N, cin_l, H // 2, W // 2), jnp.float32)
    params = init_double_conv(kp, in_ch, out_ch)

    fwd = jax.jit(double_conv_forward)
    y_h, y_l = fwd(params, x_h, x_l)
    y_h, y_l = jax.block_until_ready((y_h, y_l))

    assert y_h.shape == (N, cout_h, H, W), y_h.shape
    assert y_l.shape == (N, cout_l, H // 2, W // 2), y_l.shape
    assert bool(jnp.isfinite(y_h).all()) and bool(jnp.isfinite(y_l).all())
    print("KERNEL_OK")
</pallas_src>

<mosaic_0001>
module attributes {stable_mosaic.version = 11 : i64} {
  func.func @_conv_kernel(%arg0: i32, %arg1: i32, %arg2: memref<1x8x10x8xbf16, #tpu.memory_space<vmem>>, %arg3: memref<1x2x10x8xbf16, #tpu.memory_space<vmem>>, %arg4: memref<72x8xbf16, #tpu.memory_space<vmem>>, %arg5: memref<1x8x8x8xbf16, #tpu.memory_space<vmem>>, %arg6: memref<1x1x2x8xf32, #tpu.memory_space<vmem>>) attributes {dimension_semantics = [#tpu.dimension_semantics<parallel>, #tpu.dimension_semantics<parallel>], iteration_bounds = array<i64: 2, 1>, scalar_prefetch = 0 : i64, scratch_operands = 0 : i64, tpu.core_type = #tpu.core_type<tc>, window_params = [{transform_indices = @transform_0, window_bounds = array<i64: 1, 8, 10, 8>}, {transform_indices = @transform_1, window_bounds = array<i64: 1, 2, 10, 8>}, {pipeline_mode = #tpu.pipeline_mode<synchronous>, transform_indices = @transform_2, window_bounds = array<i64: 72, 8>}, {transform_indices = @transform_3, window_bounds = array<i64: 1, 8, 8, 8>}, {transform_indices = @transform_4, window_bounds = array<i64: 1, 1, 2, 8>}]} {
    %c0 = arith.constant 0 : index
    %c0_0 = arith.constant 0 : index
    %c0_1 = arith.constant 0 : index
    %c0_2 = arith.constant 0 : index
    %0 = vector.load %arg2[%c0, %c0_0, %c0_1, %c0_2] : memref<1x8x10x8xbf16, #tpu.memory_space<vmem>>, vector<1x8x10x8xbf16>
    %1 = vector.shape_cast %0 : vector<1x8x10x8xbf16> to vector<8x10x8xbf16>
    %c0_3 = arith.constant 0 : index
    %c0_4 = arith.constant 0 : index
    %c0_5 = arith.constant 0 : index
    %c0_6 = arith.constant 0 : index
    %2 = vector.load %arg3[%c0_3, %c0_4, %c0_5, %c0_6] : memref<1x2x10x8xbf16, #tpu.memory_space<vmem>>, vector<1x2x10x8xbf16>
    %3 = vector.shape_cast %2 : vector<1x2x10x8xbf16> to vector<2x10x8xbf16>
    %4 = tpu.concatenate %1, %3 in 0 : vector<8x10x8xbf16>, vector<2x10x8xbf16> -> vector<10x10x8xbf16>
    %5 = vector.extract_strided_slice %4 {offsets = [0, 0, 0], sizes = [8, 8, 8], strides = [1, 1, 1]} : vector<10x10x8xbf16> to vector<8x8x8xbf16>
    %6 = vector.shape_cast %5 : vector<8x8x8xbf16> to vector<64x8xbf16>
    %7 = vector.extract_strided_slice %4 {offsets = [0, 1, 0], sizes = [8, 8, 8], strides = [1, 1, 1]} : vector<10x10x8xbf16> to vector<8x8x8xbf16>
    %8 = vector.shape_cast %7 : vector<8x8x8xbf16> to vector<64x8xbf16>
    %9 = vector.extract_strided_slice %4 {offsets = [0, 2, 0], sizes = [8, 8, 8], strides = [1, 1, 1]} : vector<10x10x8xbf16> to vector<8x8x8xbf16>
    %10 = vector.shape_cast %9 : vector<8x8x8xbf16> to vector<64x8xbf16>
    %11 = vector.extract_strided_slice %4 {offsets = [1, 0, 0], sizes = [8, 8, 8], strides = [1, 1, 1]} : vector<10x10x8xbf16> to vector<8x8x8xbf16>
    %12 = vector.shape_cast %11 : vector<8x8x8xbf16> to vector<64x8xbf16>
    %13 = vector.extract_strided_slice %4 {offsets = [1, 1, 0], sizes = [8, 8, 8], strides = [1, 1, 1]} : vector<10x10x8xbf16> to vector<8x8x8xbf16>
    %14 = vector.shape_cast %13 : vector<8x8x8xbf16> to vector<64x8xbf16>
    %15 = vector.extract_strided_slice %4 {offsets = [1, 2, 0], sizes = [8, 8, 8], strides = [1, 1, 1]} : vector<10x10x8xbf16> to vector<8x8x8xbf16>
    %16 = vector.shape_cast %15 : vector<8x8x8xbf16> to vector<64x8xbf16>
    %17 = vector.extract_strided_slice %4 {offsets = [2, 0, 0], sizes = [8, 8, 8], strides = [1, 1, 1]} : vector<10x10x8xbf16> to vector<8x8x8xbf16>
    %18 = vector.shape_cast %17 : vector<8x8x8xbf16> to vector<64x8xbf16>
    %19 = vector.extract_strided_slice %4 {offsets = [2, 1, 0], sizes = [8, 8, 8], strides = [1, 1, 1]} : vector<10x10x8xbf16> to vector<8x8x8xbf16>
    %20 = vector.shape_cast %19 : vector<8x8x8xbf16> to vector<64x8xbf16>
    %21 = vector.extract_strided_slice %4 {offsets = [2, 2, 0], sizes = [8, 8, 8], strides = [1, 1, 1]} : vector<10x10x8xbf16> to vector<8x8x8xbf16>
    %22 = vector.shape_cast %21 : vector<8x8x8xbf16> to vector<64x8xbf16>
    %23 = tpu.concatenate %6, %8, %10, %12, %14, %16, %18, %20, %22 in 1 : vector<64x8xbf16>, vector<64x8xbf16>, vector<64x8xbf16>, vector<64x8xbf16>, vector<64x8xbf16>, vector<64x8xbf16>, vector<64x8xbf16>, vector<64x8xbf16>, vector<64x8xbf16> -> vector<64x72xbf16>
    %c0_7 = arith.constant 0 : index
    %c0_8 = arith.constant 0 : index
    %24 = vector.load %arg4[%c0_7, %c0_8] : memref<72x8xbf16, #tpu.memory_space<vmem>>, vector<72x8xbf16>
    %cst = arith.constant dense<0.000000e+00> : vector<64x8xf32>
    %25 = tpu.matmul %23, %24, %cst {dimension_numbers = #tpu.dot_dimension_numbers<[1], [0], [0], [1], [0, 0, 1, 1], [], []>} : vector<64x72xbf16>, vector<72x8xbf16>, vector<64x8xf32> -> vector<64x8xf32>
    %cst_9 = arith.constant dense<0.000000e+00> : vector<8xf32>
    %26 = vector.multi_reduction <add>, %25, %cst_9 [0] : vector<64x8xf32> to vector<8xf32>
    %27 = vector.shape_cast %26 : vector<8xf32> to vector<1x8xf32>
    %28 = arith.mulf %25, %25 : vector<64x8xf32>
    %cst_10 = arith.constant dense<0.000000e+00> : vector<8xf32>
    %29 = vector.multi_reduction <add>, %28, %cst_10 [0] : vector<64x8xf32> to vector<8xf32>
    %30 = vector.shape_cast %29 : vector<8xf32> to vector<1x8xf32>
    %31 = tpu.concatenate %27, %30 in 0 : vector<1x8xf32>, vector<1x8xf32> -> vector<2x8xf32>
    %32 = vector.shape_cast %31 : vector<2x8xf32> to vector<1x1x2x8xf32>
    %c0_11 = arith.constant 0 : index
    %c0_12 = arith.constant 0 : index
    %c0_13 = arith.constant 0 : index
    %c0_14 = arith.constant 0 : index
    %33 = vector.load %arg6[%c0_11, %c0_12, %c0_13, %c0_14] : memref<1x1x2x8xf32, #tpu.memory_space<vmem>>, vector<1x1x2x8xf32>
    tpu.vector_store %arg6[%c0_11, %c0_12, %c0_13, %c0_14], %32 {strides = array<i32>} : memref<1x1x2x8xf32, #tpu.memory_space<vmem>>, vector<1x1x2x8xf32>,
    %34 = vector.shape_cast %25 : vector<64x8xf32> to vector<8x8x8xf32>
    %35 = arith.truncf %34 : vector<8x8x8xf32> to vector<8x8x8xbf16>
    %c0_15 = arith.constant 0 : index
    %c0_16 = arith.constant 0 : index
    %c0_17 = arith.constant 0 : index
    %c0_18 = arith.constant 0 : index
    %36 = vector.load %arg5[%c0_15, %c0_16, %c0_17, %c0_18] : memref<1x8x8x8xbf16, #tpu.memory_space<vmem>>, vector<1x8x8x8xbf16>
    %37 = vector.shape_cast %36 : vector<1x8x8x8xbf16> to vector<8x8x8xbf16>
    %38 = vector.shape_cast %35 : vector<8x8x8xbf16> to vector<1x8x8x8xbf16>
    tpu.vector_store %arg5[%c0_15, %c0_16, %c0_17, %c0_18], %38 {strides = array<i32>} : memref<1x8x8x8xbf16, #tpu.memory_space<vmem>>, vector<1x8x8x8xbf16>,
    return
  }
  func.func @transform_0(%arg0: i32, %arg1: i32) -> (i32, i32, i32, i32) {
    %c0_i32 = arith.constant 0 : i32
    %c0_i32_0 = arith.constant 0 : i32
    %c0_i32_1 = arith.constant 0 : i32
    return %arg0, %arg1, %c0_i32, %c0_i32_0 : i32, i32, i32, i32
  }
  func.func @transform_1(%arg0: i32, %arg1: i32) -> (i32, i32, i32, i32) {
    %c1_i32 = arith.constant 1 : i32
    %0 = arith.addi %arg1, %c1_i32 : i32
    %c4_i32 = arith.constant 4 : i32
    %1 = arith.muli %0, %c4_i32 : i32
    %c0_i32 = arith.constant 0 : i32
    %c0_i32_0 = arith.constant 0 : i32
    %c0_i32_1 = arith.constant 0 : i32
    return %arg0, %1, %c0_i32, %c0_i32_0 : i32, i32, i32, i32
  }
  func.func @transform_2(%arg0: i32, %arg1: i32) -> (i32, i32) {
    %c0_i32 = arith.constant 0 : i32
    %c0_i32_0 = arith.constant 0 : i32
    %c0_i32_1 = arith.constant 0 : i32
    return %c0_i32, %c0_i32_0 : i32, i32
  }
  func.func @transform_3(%arg0: i32, %arg1: i32) -> (i32, i32, i32, i32) {
    %c0_i32 = arith.constant 0 : i32
    %c0_i32_0 = arith.constant 0 : i32
    %c0_i32_1 = arith.constant 0 : i32
    return %arg0, %arg1, %c0_i32, %c0_i32_0 : i32, i32, i32, i32
  }
  func.func @transform_4(%arg0: i32, %arg1: i32) -> (i32, i32, i32, i32) {
    %c0_i32 = arith.constant 0 : i32
    %c0_i32_0 = arith.constant 0 : i32
    %c0_i32_1 = arith.constant 0 : i32
    return %arg0, %arg1, %c0_i32, %c0_i32_0 : i32, i32, i32, i32
  }
}

module attributes {stable_mosaic.version = 11 : i64} {
  func.func @_bn_apply_kernel(%arg0: i32, %arg1: i32, %arg2: memref<1x8x64xbf16, #tpu.memory_space<vmem>>, %arg3: memref<1x64xf32, #tpu.memory_space<vmem>>, %arg4: memref<1x64xf32, #tpu.memory_space<vmem>>, %arg5: memref<1x8x64xbf16, #tpu.memory_space<vmem>>) attributes {dimension_semantics = [#tpu.dimension_semantics<parallel>, #tpu.dimension_semantics<parallel>], iteration_bounds = array<i64: 2, 1>, scalar_prefetch = 0 : i64, scratch_operands = 0 : i64, tpu.core_type = #tpu.core_type<tc>, window_params = [{transform_indices = @transform_0, window_bounds = array<i64: 1, 8, 64>}, {pipeline_mode = #tpu.pipeline_mode<synchronous>, transform_indices = @transform_1, window_bounds = array<i64: 1, 64>}, {pipeline_mode = #tpu.pipeline_mode<synchronous>, transform_indices = @transform_2, window_bounds = array<i64: 1, 64>}, {transform_indices = @transform_3, window_bounds = array<i64: 1, 8, 64>}]} {
    %c0 = arith.constant 0 : index
    %c0_0 = arith.constant 0 : index
    %c0_1 = arith.constant 0 : index
    %0 = vector.load %arg2[%c0, %c0_0, %c0_1] : memref<1x8x64xbf16, #tpu.memory_space<vmem>>, vector<1x8x64xbf16>
    %1 = vector.shape_cast %0 : vector<1x8x64xbf16> to vector<8x64xbf16>
    %2 = arith.extf %1 : vector<8x64xbf16> to vector<8x64xf32>
    %c0_2 = arith.constant 0 : index
    %c0_3 = arith.constant 0 : index
    %3 = vector.load %arg3[%c0_2, %c0_3] : memref<1x64xf32, #tpu.memory_space<vmem>>, vector<1x64xf32>
    %4 = vector.broadcast %3 : vector<1x64xf32> to vector<8x64xf32>
    %5 = arith.mulf %2, %4 : vector<8x64xf32>
    %c0_4 = arith.constant 0 : index
    %c0_5 = arith.constant 0 : index
    %6 = vector.load %arg4[%c0_4, %c0_5] : memref<1x64xf32, #tpu.memory_space<vmem>>, vector<1x64xf32>
    %7 = vector.broadcast %6 : vector<1x64xf32> to vector<8x64xf32>
    %8 = arith.addf %5, %7 : vector<8x64xf32>
    %cst = arith.constant 0.000000e+00 : f32
    %9 = vector.broadcast %cst : f32 to vector<8x64xf32>
    %10 = arith.maximumf %8, %9 : vector<8x64xf32>
    %11 = arith.truncf %10 : vector<8x64xf32> to vector<8x64xbf16>
    %c0_6 = arith.constant 0 : index
    %c0_7 = arith.constant 0 : index
    %c0_8 = arith.constant 0 : index
    %12 = vector.load %arg5[%c0_6, %c0_7, %c0_8] : memref<1x8x64xbf16, #tpu.memory_space<vmem>>, vector<1x8x64xbf16>
    %13 = vector.shape_cast %12 : vector<1x8x64xbf16> to vector<8x64xbf16>
    %14 = vector.shape_cast %11 : vector<8x64xbf16> to vector<1x8x64xbf16>
    tpu.vector_store %arg5[%c0_6, %c0_7, %c0_8], %14 {strides = array<i32>} : memref<1x8x64xbf16, #tpu.memory_space<vmem>>, vector<1x8x64xbf16>,
    return
  }
  func.func @transform_0(%arg0: i32, %arg1: i32) -> (i32, i32, i32) {
    %c0_i32 = arith.constant 0 : i32
    %c0_i32_0 = arith.constant 0 : i32
    return %arg0, %arg1, %c0_i32 : i32, i32, i32
  }
  func.func @transform_1(%arg0: i32, %arg1: i32) -> (i32, i32) {
    %c0_i32 = arith.constant 0 : i32
    %c0_i32_0 = arith.constant 0 : i32
    %c0_i32_1 = arith.constant 0 : i32
    return %c0_i32, %c0_i32_0 : i32, i32
  }
  func.func @transform_2(%arg0: i32, %arg1: i32) -> (i32, i32) {
    %c0_i32 = arith.constant 0 : i32
    %c0_i32_0 = arith.constant 0 : i32
    %c0_i32_1 = arith.constant 0 : i32
    return %c0_i32, %c0_i32_0 : i32, i32
  }
  func.func @transform_3(%arg0: i32, %arg1: i32) -> (i32, i32, i32) {
    %c0_i32 = arith.constant 0 : i32
    %c0_i32_0 = arith.constant 0 : i32
    return %arg0, %arg1, %c0_i32 : i32, i32, i32
  }
}

module attributes {stable_mosaic.version = 11 : i64} {
  func.func @_conv_kernel(%arg0: i32, %arg1: i32, %arg2: memref<1x16x18x4xbf16, #tpu.memory_space<vmem>>, %arg3: memref<1x2x18x4xbf16, #tpu.memory_space<vmem>>, %arg4: memref<36x8xbf16, #tpu.memory_space<vmem>>, %arg5: memref<1x16x16x8xbf16, #tpu.memory_space<vmem>>, %arg6: memref<1x16x16x8xbf16, #tpu.memory_space<vmem>>, %arg7: memref<1x1x2x8xf32, #tpu.memory_space<vmem>>) attributes {dimension_semantics = [#tpu.dimension_semantics<parallel>, #tpu.dimension_semantics<parallel>], iteration_bounds = array<i64: 2, 1>, scalar_prefetch = 0 : i64, scratch_operands = 0 : i64, tpu.core_type = #tpu.core_type<tc>, window_params = [{transform_indices = @transform_0, window_bounds = array<i64: 1, 16, 18, 4>}, {transform_indices = @transform_1, window_bounds = array<i64: 1, 2, 18, 4>}, {pipeline_mode = #tpu.pipeline_mode<synchronous>, transform_indices = @transform_2, window_bounds = array<i64: 36, 8>}, {transform_indices = @transform_3, window_bounds = array<i64: 1, 16, 16, 8>}, {transform_indices = @transform_4, window_bounds = array<i64: 1, 16, 16, 8>}, {transform_indices = @transform_5, window_bounds = array<i64: 1, 1, 2, 8>}]} {
    %c0 = arith.constant 0 : index
    %c0_0 = arith.constant 0 : index
    %c0_1 = arith.constant 0 : index
    %c0_2 = arith.constant 0 : index
    %0 = vector.load %arg2[%c0, %c0_0, %c0_1, %c0_2] : memref<1x16x18x4xbf16, #tpu.memory_space<vmem>>, vector<1x16x18x4xbf16>
    %1 = vector.shape_cast %0 : vector<1x16x18x4xbf16> to vector<16x18x4xbf16>
    %c0_3 = arith.constant 0 : index
    %c0_4 = arith.constant 0 : index
    %c0_5 = arith.constant 0 : index
    %c0_6 = arith.constant 0 : index
    %2 = vector.load %arg3[%c0_3, %c0_4, %c0_5, %c0_6] : memref<1x2x18x4xbf16, #tpu.memory_space<vmem>>, vector<1x2x18x4xbf16>
    %3 = vector.shape_cast %2 : vector<1x2x18x4xbf16> to vector<2x18x4xbf16>
    %4 = tpu.concatenate %1, %3 in 0 : vector<16x18x4xbf16>, vector<2x18x4xbf16> -> vector<18x18x4xbf16>
    %5 = vector.extract_strided_slice %4 {offsets = [0, 0, 0], sizes = [16, 16, 4], strides = [1, 1, 1]} : vector<18x18x4xbf16> to vector<16x16x4xbf16>
    %6 = vector.shape_cast %5 : vector<16x16x4xbf16> to vector<256x4xbf16>
    %7 = vector.extract_strided_slice %4 {offsets = [0, 1, 0], sizes = [16, 16, 4], strides = [1, 1, 1]} : vector<18x18x4xbf16> to vector<16x16x4xbf16>
    %8 = vector.shape_cast %7 : vector<16x16x4xbf16> to vector<256x4xbf16>
    %9 = vector.extract_strided_slice %4 {offsets = [0, 2, 0], sizes = [16, 16, 4], strides = [1, 1, 1]} : vector<18x18x4xbf16> to vector<16x16x4xbf16>
    %10 = vector.shape_cast %9 : vector<16x16x4xbf16> to vector<256x4xbf16>
    %11 = vector.extract_strided_slice %4 {offsets = [1, 0, 0], sizes = [16, 16, 4], strides = [1, 1, 1]} : vector<18x18x4xbf16> to vector<16x16x4xbf16>
    %12 = vector.shape_cast %11 : vector<16x16x4xbf16> to vector<256x4xbf16>
    %13 = vector.extract_strided_slice %4 {offsets = [1, 1, 0], sizes = [16, 16, 4], strides = [1, 1, 1]} : vector<18x18x4xbf16> to vector<16x16x4xbf16>
    %14 = vector.shape_cast %13 : vector<16x16x4xbf16> to vector<256x4xbf16>
    %15 = vector.extract_strided_slice %4 {offsets = [1, 2, 0], sizes = [16, 16, 4], strides = [1, 1, 1]} : vector<18x18x4xbf16> to vector<16x16x4xbf16>
    %16 = vector.shape_cast %15 : vector<16x16x4xbf16> to vector<256x4xbf16>
    %17 = vector.extract_strided_slice %4 {offsets = [2, 0, 0], sizes = [16, 16, 4], strides = [1, 1, 1]} : vector<18x18x4xbf16> to vector<16x16x4xbf16>
    %18 = vector.shape_cast %17 : vector<16x16x4xbf16> to vector<256x4xbf16>
    %19 = vector.extract_strided_slice %4 {offsets = [2, 1, 0], sizes = [16, 16, 4], strides = [1, 1, 1]} : vector<18x18x4xbf16> to vector<16x16x4xbf16>
    %20 = vector.shape_cast %19 : vector<16x16x4xbf16> to vector<256x4xbf16>
    %21 = vector.extract_strided_slice %4 {offsets = [2, 2, 0], sizes = [16, 16, 4], strides = [1, 1, 1]} : vector<18x18x4xbf16> to vector<16x16x4xbf16>
    %22 = vector.shape_cast %21 : vector<16x16x4xbf16> to vector<256x4xbf16>
    %23 = tpu.concatenate %6, %8, %10, %12, %14, %16, %18, %20, %22 in 1 : vector<256x4xbf16>, vector<256x4xbf16>, vector<256x4xbf16>, vector<256x4xbf16>, vector<256x4xbf16>, vector<256x4xbf16>, vector<256x4xbf16>, vector<256x4xbf16>, vector<256x4xbf16> -> vector<256x36xbf16>
    %c0_7 = arith.constant 0 : index
    %c0_8 = arith.constant 0 : index
    %24 = vector.load %arg4[%c0_7, %c0_8] : memref<36x8xbf16, #tpu.memory_space<vmem>>, vector<36x8xbf16>
    %cst = arith.constant dense<0.000000e+00> : vector<256x8xf32>
    %25 = tpu.matmul %23, %24, %cst {dimension_numbers = #tpu.dot_dimension_numbers<[1], [0], [0], [1], [0, 0, 1, 1], [], []>} : vector<256x36xbf16>, vector<36x8xbf16>, vector<256x8xf32> -> vector<256x8xf32>
    %c0_9 = arith.constant 0 : index
    %c0_10 = arith.constant 0 : index
    %c0_11 = arith.constant 0 : index
    %c0_12 = arith.constant 0 : index
    %26 = vector.load %arg5[%c0_9, %c0_10, %c0_11, %c0_12] : memref<1x16x16x8xbf16, #tpu.memory_space<vmem>>, vector<1x16x16x8xbf16>
    %27 = vector.shape_cast %26 : vector<1x16x16x8xbf16> to vector<16x16x8xbf16>
    %28 = vector.shape_cast %27 : vector<16x16x8xbf16> to vector<256x8xbf16>
    %29 = arith.extf %28 : vector<256x8xbf16> to vector<256x8xf32>
    %30 = arith.addf %25, %29 : vector<256x8xf32>
    %cst_13 = arith.constant dense<0.000000e+00> : vector<8xf32>
    %31 = vector.multi_reduction <add>, %30, %cst_13 [0] : vector<256x8xf32> to vector<8xf32>
    %32 = vector.shape_cast %31 : vector<8xf32> to vector<1x8xf32>
    %33 = arith.mulf %30, %30 : vector<256x8xf32>
    %cst_14 = arith.constant dense<0.000000e+00> : vector<8xf32>
    %34 = vector.multi_reduction <add>, %33, %cst_14 [0] : vector<256x8xf32> to vector<8xf32>
    %35 = vector.shape_cast %34 : vector<8xf32> to vector<1x8xf32>
    %36 = tpu.concatenate %32, %35 in 0 : vector<1x8xf32>, vector<1x8xf32> -> vector<2x8xf32>
    %37 = vector.shape_cast %36 : vector<2x8xf32> to vector<1x1x2x8xf32>
    %c0_15 = arith.constant 0 : index
    %c0_16 = arith.constant 0 : index
    %c0_17 = arith.constant 0 : index
    %c0_18 = arith.constant 0 : index
    %38 = vector.load %arg7[%c0_15, %c0_16, %c0_17, %c0_18] : memref<1x1x2x8xf32, #tpu.memory_space<vmem>>, vector<1x1x2x8xf32>
    tpu.vector_store %arg7[%c0_15, %c0_16, %c0_17, %c0_18], %37 {strides = array<i32>} : memref<1x1x2x8xf32, #tpu.memory_space<vmem>>, vector<1x1x2x8xf32>,
    %39 = vector.shape_cast %30 : vector<256x8xf32> to vector<16x16x8xf32>
    %40 = arith.truncf %39 : vector<16x16x8xf32> to vector<16x16x8xbf16>
    %c0_19 = arith.constant 0 : index
    %c0_20 = arith.constant 0 : index
    %c0_21 = arith.constant 0 : index
    %c0_22 = arith.constant 0 : index
    %41 = vector.load %arg6[%c0_19, %c0_20, %c0_21, %c0_22] : memref<1x16x16x8xbf16, #tpu.memory_space<vmem>>, vector<1x16x16x8xbf16>
    %42 = vector.shape_cast %41 : vector<1x16x16x8xbf16> to vector<16x16x8xbf16>
    %43 = vector.shape_cast %40 : vector<16x16x8xbf16> to vector<1x16x16x8xbf16>
    tpu.vector_store %arg6[%c0_19, %c0_20, %c0_21, %c0_22], %43 {strides = array<i32>} : memref<1x16x16x8xbf16, #tpu.memory_space<vmem>>, vector<1x16x16x8xbf16>,
    return
  }
  func.func @transform_0(%arg0: i32, %arg1: i32) -> (i32, i32, i32, i32) {
    %c0_i32 = arith.constant 0 : i32
    %c0_i32_0 = arith.constant 0 : i32
    %c0_i32_1 = arith.constant 0 : i32
    return %arg0, %arg1, %c0_i32, %c0_i32_0 : i32, i32, i32, i32
  }
  func.func @transform_1(%arg0: i32, %arg1: i32) -> (i32, i32, i32, i32) {
    %c1_i32 = arith.constant 1 : i32
    %0 = arith.addi %arg1, %c1_i32 : i32
    %c8_i32 = arith.constant 8 : i32
    %1 = arith.muli %0, %c8_i32 : i32
    %c0_i32 = arith.constant 0 : i32
    %c0_i32_0 = arith.constant 0 : i32
    %c0_i32_1 = arith.constant 0 : i32
    return %arg0, %1, %c0_i32, %c0_i32_0 : i32, i32, i32, i32
  }
  func.func @transform_2(%arg0: i32, %arg1: i32) -> (i32, i32) {
    %c0_i32 = arith.constant 0 : i32
    %c0_i32_0 = arith.constant 0 : i32
    %c0_i32_1 = arith.constant 0 : i32
    return %c0_i32, %c0_i32_0 : i32, i32
  }
  func.func @transform_3(%arg0: i32, %arg1: i32) -> (i32, i32, i32, i32) {
    %c0_i32 = arith.constant 0 : i32
    %c0_i32_0 = arith.constant 0 : i32
    %c0_i32_1 = arith.constant 0 : i32
    return %arg0, %arg1, %c0_i32, %c0_i32_0 : i32, i32, i32, i32
  }
  func.func @transform_4(%arg0: i32, %arg1: i32) -> (i32, i32, i32, i32) {
    %c0_i32 = arith.constant 0 : i32
    %c0_i32_0 = arith.constant 0 : i32
    %c0_i32_1 = arith.constant 0 : i32
    return %arg0, %arg1, %c0_i32, %c0_i32_0 : i32, i32, i32, i32
  }
  func.func @transform_5(%arg0: i32, %arg1: i32) -> (i32, i32, i32, i32) {
    %c0_i32 = arith.constant 0 : i32
    %c0_i32_0 = arith.constant 0 : i32
    %c0_i32_1 = arith.constant 0 : i32
    return %arg0, %arg1, %c0_i32, %c0_i32_0 : i32, i32, i32, i32
  }
}

module attributes {stable_mosaic.version = 11 : i64} {
  func.func @_conv_kernel(%arg0: i32, %arg1: i32, %arg2: memref<1x8x10x4xbf16, #tpu.memory_space<vmem>>, %arg3: memref<1x2x10x4xbf16, #tpu.memory_space<vmem>>, %arg4: memref<36x8xbf16, #tpu.memory_space<vmem>>, %arg5: memref<1x8x8x8xbf16, #tpu.memory_space<vmem>>, %arg6: memref<1x1x2x8xf32, #tpu.memory_space<vmem>>) attributes {dimension_semantics = [#tpu.dimension_semantics<parallel>, #tpu.dimension_semantics<parallel>], iteration_bounds = array<i64: 2, 1>, scalar_prefetch = 0 : i64, scratch_operands = 0 : i64, tpu.core_type = #tpu.core_type<tc>, window_params = [{transform_indices = @transform_0, window_bounds = array<i64: 1, 8, 10, 4>}, {transform_indices = @transform_1, window_bounds = array<i64: 1, 2, 10, 4>}, {pipeline_mode = #tpu.pipeline_mode<synchronous>, transform_indices = @transform_2, window_bounds = array<i64: 36, 8>}, {transform_indices = @transform_3, window_bounds = array<i64: 1, 8, 8, 8>}, {transform_indices = @transform_4, window_bounds = array<i64: 1, 1, 2, 8>}]} {
    %c0 = arith.constant 0 : index
    %c0_0 = arith.constant 0 : index
    %c0_1 = arith.constant 0 : index
    %c0_2 = arith.constant 0 : index
    %0 = vector.load %arg2[%c0, %c0_0, %c0_1, %c0_2] : memref<1x8x10x4xbf16, #tpu.memory_space<vmem>>, vector<1x8x10x4xbf16>
    %1 = vector.shape_cast %0 : vector<1x8x10x4xbf16> to vector<8x10x4xbf16>
    %c0_3 = arith.constant 0 : index
    %c0_4 = arith.constant 0 : index
    %c0_5 = arith.constant 0 : index
    %c0_6 = arith.constant 0 : index
    %2 = vector.load %arg3[%c0_3, %c0_4, %c0_5, %c0_6] : memref<1x2x10x4xbf16, #tpu.memory_space<vmem>>, vector<1x2x10x4xbf16>
    %3 = vector.shape_cast %2 : vector<1x2x10x4xbf16> to vector<2x10x4xbf16>
    %4 = tpu.concatenate %1, %3 in 0 : vector<8x10x4xbf16>, vector<2x10x4xbf16> -> vector<10x10x4xbf16>
    %5 = vector.extract_strided_slice %4 {offsets = [0, 0, 0], sizes = [8, 8, 4], strides = [1, 1, 1]} : vector<10x10x4xbf16> to vector<8x8x4xbf16>
    %6 = vector.shape_cast %5 : vector<8x8x4xbf16> to vector<64x4xbf16>
    %7 = vector.extract_strided_slice %4 {offsets = [0, 1, 0], sizes = [8, 8, 4], strides = [1, 1, 1]} : vector<10x10x4xbf16> to vector<8x8x4xbf16>
    %8 = vector.shape_cast %7 : vector<8x8x4xbf16> to vector<64x4xbf16>
    %9 = vector.extract_strided_slice %4 {offsets = [0, 2, 0], sizes = [8, 8, 4], strides = [1, 1, 1]} : vector<10x10x4xbf16> to vector<8x8x4xbf16>
    %10 = vector.shape_cast %9 : vector<8x8x4xbf16> to vector<64x4xbf16>
    %11 = vector.extract_strided_slice %4 {offsets = [1, 0, 0], sizes = [8, 8, 4], strides = [1, 1, 1]} : vector<10x10x4xbf16> to vector<8x8x4xbf16>
    %12 = vector.shape_cast %11 : vector<8x8x4xbf16> to vector<64x4xbf16>
    %13 = vector.extract_strided_slice %4 {offsets = [1, 1, 0], sizes = [8, 8, 4], strides = [1, 1, 1]} : vector<10x10x4xbf16> to vector<8x8x4xbf16>
    %14 = vector.shape_cast %13 : vector<8x8x4xbf16> to vector<64x4xbf16>
    %15 = vector.extract_strided_slice %4 {offsets = [1, 2, 0], sizes = [8, 8, 4], strides = [1, 1, 1]} : vector<10x10x4xbf16> to vector<8x8x4xbf16>
    %16 = vector.shape_cast %15 : vector<8x8x4xbf16> to vector<64x4xbf16>
    %17 = vector.extract_strided_slice %4 {offsets = [2, 0, 0], sizes = [8, 8, 4], strides = [1, 1, 1]} : vector<10x10x4xbf16> to vector<8x8x4xbf16>
    %18 = vector.shape_cast %17 : vector<8x8x4xbf16> to vector<64x4xbf16>
    %19 = vector.extract_strided_slice %4 {offsets = [2, 1, 0], sizes = [8, 8, 4], strides = [1, 1, 1]} : vector<10x10x4xbf16> to vector<8x8x4xbf16>
    %20 = vector.shape_cast %19 : vector<8x8x4xbf16> to vector<64x4xbf16>
    %21 = vector.extract_strided_slice %4 {offsets = [2, 2, 0], sizes = [8, 8, 4], strides = [1, 1, 1]} : vector<10x10x4xbf16> to vector<8x8x4xbf16>
    %22 = vector.shape_cast %21 : vector<8x8x4xbf16> to vector<64x4xbf16>
    %23 = tpu.concatenate %6, %8, %10, %12, %14, %16, %18, %20, %22 in 1 : vector<64x4xbf16>, vector<64x4xbf16>, vector<64x4xbf16>, vector<64x4xbf16>, vector<64x4xbf16>, vector<64x4xbf16>, vector<64x4xbf16>, vector<64x4xbf16>, vector<64x4xbf16> -> vector<64x36xbf16>
    %c0_7 = arith.constant 0 : index
    %c0_8 = arith.constant 0 : index
    %24 = vector.load %arg4[%c0_7, %c0_8] : memref<36x8xbf16, #tpu.memory_space<vmem>>, vector<36x8xbf16>
    %cst = arith.constant dense<0.000000e+00> : vector<64x8xf32>
    %25 = tpu.matmul %23, %24, %cst {dimension_numbers = #tpu.dot_dimension_numbers<[1], [0], [0], [1], [0, 0, 1, 1], [], []>} : vector<64x36xbf16>, vector<36x8xbf16>, vector<64x8xf32> -> vector<64x8xf32>
    %cst_9 = arith.constant dense<0.000000e+00> : vector<8xf32>
    %26 = vector.multi_reduction <add>, %25, %cst_9 [0] : vector<64x8xf32> to vector<8xf32>
    %27 = vector.shape_cast %26 : vector<8xf32> to vector<1x8xf32>
    %28 = arith.mulf %25, %25 : vector<64x8xf32>
    %cst_10 = arith.constant dense<0.000000e+00> : vector<8xf32>
    %29 = vector.multi_reduction <add>, %28, %cst_10 [0] : vector<64x8xf32> to vector<8xf32>
    %30 = vector.shape_cast %29 : vector<8xf32> to vector<1x8xf32>
    %31 = tpu.concatenate %27, %30 in 0 : vector<1x8xf32>, vector<1x8xf32> -> vector<2x8xf32>
    %32 = vector.shape_cast %31 : vector<2x8xf32> to vector<1x1x2x8xf32>
    %c0_11 = arith.constant 0 : index
    %c0_12 = arith.constant 0 : index
    %c0_13 = arith.constant 0 : index
    %c0_14 = arith.constant 0 : index
    %33 = vector.load %arg6[%c0_11, %c0_12, %c0_13, %c0_14] : memref<1x1x2x8xf32, #tpu.memory_space<vmem>>, vector<1x1x2x8xf32>
    tpu.vector_store %arg6[%c0_11, %c0_12, %c0_13, %c0_14], %32 {strides = array<i32>} : memref<1x1x2x8xf32, #tpu.memory_space<vmem>>, vector<1x1x2x8xf32>,
    %34 = vector.shape_cast %25 : vector<64x8xf32> to vector<8x8x8xf32>
    %35 = arith.truncf %34 : vector<8x8x8xf32> to vector<8x8x8xbf16>
    %c0_15 = arith.constant 0 : index
    %c0_16 = arith.constant 0 : index
    %c0_17 = arith.constant 0 : index
    %c0_18 = arith.constant 0 : index
    %36 = vector.load %arg5[%c0_15, %c0_16, %c0_17, %c0_18] : memref<1x8x8x8xbf16, #tpu.memory_space<vmem>>, vector<1x8x8x8xbf16>
    %37 = vector.shape_cast %36 : vector<1x8x8x8xbf16> to vector<8x8x8xbf16>
    %38 = vector.shape_cast %35 : vector<8x8x8xbf16> to vector<1x8x8x8xbf16>
    tpu.vector_store %arg5[%c0_15, %c0_16, %c0_17, %c0_18], %38 {strides = array<i32>} : memref<1x8x8x8xbf16, #tpu.memory_space<vmem>>, vector<1x8x8x8xbf16>,
    return
  }
  func.func @transform_0(%arg0: i32, %arg1: i32) -> (i32, i32, i32, i32) {
    %c0_i32 = arith.constant 0 : i32
    %c0_i32_0 = arith.constant 0 : i32
    %c0_i32_1 = arith.constant 0 : i32
    return %arg0, %arg1, %c0_i32, %c0_i32_0 : i32, i32, i32, i32
  }
  func.func @transform_1(%arg0: i32, %arg1: i32) -> (i32, i32, i32, i32) {
    %c1_i32 = arith.constant 1 : i32
    %0 = arith.addi %arg1, %c1_i32 : i32
    %c4_i32 = arith.constant 4 : i32
    %1 = arith.muli %0, %c4_i32 : i32
    %c0_i32 = arith.constant 0 : i32
    %c0_i32_0 = arith.constant 0 : i32
    %c0_i32_1 = arith.constant 0 : i32
    return %arg0, %1, %c0_i32, %c0_i32_0 : i32, i32, i32, i32
  }
  func.func @transform_2(%arg0: i32, %arg1: i32) -> (i32, i32) {
    %c0_i32 = arith.constant 0 : i32
    %c0_i32_0 = arith.constant 0 : i32
    %c0_i32_1 = arith.constant 0 : i32
    return %c0_i32, %c0_i32_0 : i32, i32
  }
  func.func @transform_3(%arg0: i32, %arg1: i32) -> (i32, i32, i32, i32) {
    %c0_i32 = arith.constant 0 : i32
    %c0_i32_0 = arith.constant 0 : i32
    %c0_i32_1 = arith.constant 0 : i32
    return %arg0, %arg1, %c0_i32, %c0_i32_0 : i32, i32, i32, i32
  }
  func.func @transform_4(%arg0: i32, %arg1: i32) -> (i32, i32, i32, i32) {
    %c0_i32 = arith.constant 0 : i32
    %c0_i32_0 = arith.constant 0 : i32
    %c0_i32_1 = arith.constant 0 : i32
    return %arg0, %arg1, %c0_i32, %c0_i32_0 : i32, i32, i32, i32
  }
}

module attributes {stable_mosaic.version = 11 : i64} {
  func.func @_bn_apply_kernel(%arg0: i32, %arg1: i32, %arg2: memref<1x16x128xbf16, #tpu.memory_space<vmem>>, %arg3: memref<1x128xf32, #tpu.memory_space<vmem>>, %arg4: memref<1x128xf32, #tpu.memory_space<vmem>>, %arg5: memref<1x16x128xbf16, #tpu.memory_space<vmem>>) attributes {dimension_semantics = [#tpu.dimension_semantics<parallel>, #tpu.dimension_semantics<parallel>], iteration_bounds = array<i64: 2, 1>, scalar_prefetch = 0 : i64, scratch_operands = 0 : i64, tpu.core_type = #tpu.core_type<tc>, window_params = [{transform_indices = @transform_0, window_bounds = array<i64: 1, 16, 128>}, {pipeline_mode = #tpu.pipeline_mode<synchronous>, transform_indices = @transform_1, window_bounds = array<i64: 1, 128>}, {pipeline_mode = #tpu.pipeline_mode<synchronous>, transform_indices = @transform_2, window_bounds = array<i64: 1, 128>}, {transform_indices = @transform_3, window_bounds = array<i64: 1, 16, 128>}]} {
    %c0 = arith.constant 0 : index
    %c0_0 = arith.constant 0 : index
    %c0_1 = arith.constant 0 : index
    %0 = vector.load %arg2[%c0, %c0_0, %c0_1] : memref<1x16x128xbf16, #tpu.memory_space<vmem>>, vector<1x16x128xbf16>
    %1 = vector.shape_cast %0 : vector<1x16x128xbf16> to vector<16x128xbf16>
    %2 = arith.extf %1 : vector<16x128xbf16> to vector<16x128xf32>
    %c0_2 = arith.constant 0 : index
    %c0_3 = arith.constant 0 : index
    %3 = vector.load %arg3[%c0_2, %c0_3] : memref<1x128xf32, #tpu.memory_space<vmem>>, vector<1x128xf32>
    %4 = vector.broadcast %3 : vector<1x128xf32> to vector<16x128xf32>
    %5 = arith.mulf %2, %4 : vector<16x128xf32>
    %c0_4 = arith.constant 0 : index
    %c0_5 = arith.constant 0 : index
    %6 = vector.load %arg4[%c0_4, %c0_5] : memref<1x128xf32, #tpu.memory_space<vmem>>, vector<1x128xf32>
    %7 = vector.broadcast %6 : vector<1x128xf32> to vector<16x128xf32>
    %8 = arith.addf %5, %7 : vector<16x128xf32>
    %cst = arith.constant 0.000000e+00 : f32
    %9 = vector.broadcast %cst : f32 to vector<16x128xf32>
    %10 = arith.maximumf %8, %9 : vector<16x128xf32>
    %11 = arith.truncf %10 : vector<16x128xf32> to vector<16x128xbf16>
    %c0_6 = arith.constant 0 : index
    %c0_7 = arith.constant 0 : index
    %c0_8 = arith.constant 0 : index
    %12 = vector.load %arg5[%c0_6, %c0_7, %c0_8] : memref<1x16x128xbf16, #tpu.memory_space<vmem>>, vector<1x16x128xbf16>
    %13 = vector.shape_cast %12 : vector<1x16x128xbf16> to vector<16x128xbf16>
    %14 = vector.shape_cast %11 : vector<16x128xbf16> to vector<1x16x128xbf16>
    tpu.vector_store %arg5[%c0_6, %c0_7, %c0_8], %14 {strides = array<i32>} : memref<1x16x128xbf16, #tpu.memory_space<vmem>>, vector<1x16x128xbf16>,
    return
  }
  func.func @transform_0(%arg0: i32, %arg1: i32) -> (i32, i32, i32) {
    %c0_i32 = arith.constant 0 : i32
    %c0_i32_0 = arith.constant 0 : i32
    return %arg0, %arg1, %c0_i32 : i32, i32, i32
  }
  func.func @transform_1(%arg0: i32, %arg1: i32) -> (i32, i32) {
    %c0_i32 = arith.constant 0 : i32
    %c0_i32_0 = arith.constant 0 : i32
    %c0_i32_1 = arith.constant 0 : i32
    return %c0_i32, %c0_i32_0 : i32, i32
  }
  func.func @transform_2(%arg0: i32, %arg1: i32) -> (i32, i32) {
    %c0_i32 = arith.constant 0 : i32
    %c0_i32_0 = arith.constant 0 : i32
    %c0_i32_1 = arith.constant 0 : i32
    return %c0_i32, %c0_i32_0 : i32, i32
  }
  func.func @transform_3(%arg0: i32, %arg1: i32) -> (i32, i32, i32) {
    %c0_i32 = arith.constant 0 : i32
    %c0_i32_0 = arith.constant 0 : i32
    return %arg0, %arg1, %c0_i32 : i32, i32, i32
  }
}

module attributes {stable_mosaic.version = 11 : i64} {
  func.func @_conv_kernel(%arg0: i32, %arg1: i32, %arg2: memref<1x8x10x16xbf16, #tpu.memory_space<vmem>>, %arg3: memref<1x2x10x16xbf16, #tpu.memory_space<vmem>>, %arg4: memref<144x8xbf16, #tpu.memory_space<vmem>>, %arg5: memref<1x8x8x8xbf16, #tpu.memory_space<vmem>>, %arg6: memref<1x1x2x8xf32, #tpu.memory_space<vmem>>) attributes {dimension_semantics = [#tpu.dimension_semantics<parallel>, #tpu.dimension_semantics<parallel>], iteration_bounds = array<i64: 2, 1>, scalar_prefetch = 0 : i64, scratch_operands = 0 : i64, tpu.core_type = #tpu.core_type<tc>, window_params = [{transform_indices = @transform_0, window_bounds = array<i64: 1, 8, 10, 16>}, {transform_indices = @transform_1, window_bounds = array<i64: 1, 2, 10, 16>}, {pipeline_mode = #tpu.pipeline_mode<synchronous>, transform_indices = @transform_2, window_bounds = array<i64: 144, 8>}, {transform_indices = @transform_3, window_bounds = array<i64: 1, 8, 8, 8>}, {transform_indices = @transform_4, window_bounds = array<i64: 1, 1, 2, 8>}]} {
    %c0 = arith.constant 0 : index
    %c0_0 = arith.constant 0 : index
    %c0_1 = arith.constant 0 : index
    %c0_2 = arith.constant 0 : index
    %0 = vector.load %arg2[%c0, %c0_0, %c0_1, %c0_2] : memref<1x8x10x16xbf16, #tpu.memory_space<vmem>>, vector<1x8x10x16xbf16>
    %1 = vector.shape_cast %0 : vector<1x8x10x16xbf16> to vector<8x10x16xbf16>
    %c0_3 = arith.constant 0 : index
    %c0_4 = arith.constant 0 : index
    %c0_5 = arith.constant 0 : index
    %c0_6 = arith.constant 0 : index
    %2 = vector.load %arg3[%c0_3, %c0_4, %c0_5, %c0_6] : memref<1x2x10x16xbf16, #tpu.memory_space<vmem>>, vector<1x2x10x16xbf16>
    %3 = vector.shape_cast %2 : vector<1x2x10x16xbf16> to vector<2x10x16xbf16>
    %4 = tpu.concatenate %1, %3 in 0 : vector<8x10x16xbf16>, vector<2x10x16xbf16> -> vector<10x10x16xbf16>
    %5 = vector.extract_strided_slice %4 {offsets = [0, 0, 0], sizes = [8, 8, 16], strides = [1, 1, 1]} : vector<10x10x16xbf16> to vector<8x8x16xbf16>
    %6 = vector.shape_cast %5 : vector<8x8x16xbf16> to vector<64x16xbf16>
    %7 = vector.extract_strided_slice %4 {offsets = [0, 1, 0], sizes = [8, 8, 16], strides = [1, 1, 1]} : vector<10x10x16xbf16> to vector<8x8x16xbf16>
    %8 = vector.shape_cast %7 : vector<8x8x16xbf16> to vector<64x16xbf16>
    %9 = vector.extract_strided_slice %4 {offsets = [0, 2, 0], sizes = [8, 8, 16], strides = [1, 1, 1]} : vector<10x10x16xbf16> to vector<8x8x16xbf16>
    %10 = vector.shape_cast %9 : vector<8x8x16xbf16> to vector<64x16xbf16>
    %11 = vector.extract_strided_slice %4 {offsets = [1, 0, 0], sizes = [8, 8, 16], strides = [1, 1, 1]} : vector<10x10x16xbf16> to vector<8x8x16xbf16>
    %12 = vector.shape_cast %11 : vector<8x8x16xbf16> to vector<64x16xbf16>
    %13 = vector.extract_strided_slice %4 {offsets = [1, 1, 0], sizes = [8, 8, 16], strides = [1, 1, 1]} : vector<10x10x16xbf16> to vector<8x8x16xbf16>
    %14 = vector.shape_cast %13 : vector<8x8x16xbf16> to vector<64x16xbf16>
    %15 = vector.extract_strided_slice %4 {offsets = [1, 2, 0], sizes = [8, 8, 16], strides = [1, 1, 1]} : vector<10x10x16xbf16> to vector<8x8x16xbf16>
    %16 = vector.shape_cast %15 : vector<8x8x16xbf16> to vector<64x16xbf16>
    %17 = vector.extract_strided_slice %4 {offsets = [2, 0, 0], sizes = [8, 8, 16], strides = [1, 1, 1]} : vector<10x10x16xbf16> to vector<8x8x16xbf16>
    %18 = vector.shape_cast %17 : vector<8x8x16xbf16> to vector<64x16xbf16>
    %19 = vector.extract_strided_slice %4 {offsets = [2, 1, 0], sizes = [8, 8, 16], strides = [1, 1, 1]} : vector<10x10x16xbf16> to vector<8x8x16xbf16>
    %20 = vector.shape_cast %19 : vector<8x8x16xbf16> to vector<64x16xbf16>
    %21 = vector.extract_strided_slice %4 {offsets = [2, 2, 0], sizes = [8, 8, 16], strides = [1, 1, 1]} : vector<10x10x16xbf16> to vector<8x8x16xbf16>
    %22 = vector.shape_cast %21 : vector<8x8x16xbf16> to vector<64x16xbf16>
    %23 = tpu.concatenate %6, %8, %10, %12, %14, %16, %18, %20, %22 in 1 : vector<64x16xbf16>, vector<64x16xbf16>, vector<64x16xbf16>, vector<64x16xbf16>, vector<64x16xbf16>, vector<64x16xbf16>, vector<64x16xbf16>, vector<64x16xbf16>, vector<64x16xbf16> -> vector<64x144xbf16>
    %c0_7 = arith.constant 0 : index
    %c0_8 = arith.constant 0 : index
    %24 = vector.load %arg4[%c0_7, %c0_8] : memref<144x8xbf16, #tpu.memory_space<vmem>>, vector<144x8xbf16>
    %cst = arith.constant dense<0.000000e+00> : vector<64x8xf32>
    %25 = tpu.matmul %23, %24, %cst {dimension_numbers = #tpu.dot_dimension_numbers<[1], [0], [0], [1], [0, 0, 1, 1], [], []>} : vector<64x144xbf16>, vector<144x8xbf16>, vector<64x8xf32> -> vector<64x8xf32>
    %cst_9 = arith.constant dense<0.000000e+00> : vector<8xf32>
    %26 = vector.multi_reduction <add>, %25, %cst_9 [0] : vector<64x8xf32> to vector<8xf32>
    %27 = vector.shape_cast %26 : vector<8xf32> to vector<1x8xf32>
    %28 = arith.mulf %25, %25 : vector<64x8xf32>
    %cst_10 = arith.constant dense<0.000000e+00> : vector<8xf32>
    %29 = vector.multi_reduction <add>, %28, %cst_10 [0] : vector<64x8xf32> to vector<8xf32>
    %30 = vector.shape_cast %29 : vector<8xf32> to vector<1x8xf32>
    %31 = tpu.concatenate %27, %30 in 0 : vector<1x8xf32>, vector<1x8xf32> -> vector<2x8xf32>
    %32 = vector.shape_cast %31 : vector<2x8xf32> to vector<1x1x2x8xf32>
    %c0_11 = arith.constant 0 : index
    %c0_12 = arith.constant 0 : index
    %c0_13 = arith.constant 0 : index
    %c0_14 = arith.constant 0 : index
    %33 = vector.load %arg6[%c0_11, %c0_12, %c0_13, %c0_14] : memref<1x1x2x8xf32, #tpu.memory_space<vmem>>, vector<1x1x2x8xf32>
    tpu.vector_store %arg6[%c0_11, %c0_12, %c0_13, %c0_14], %32 {strides = array<i32>} : memref<1x1x2x8xf32, #tpu.memory_space<vmem>>, vector<1x1x2x8xf32>,
    %34 = vector.shape_cast %25 : vector<64x8xf32> to vector<8x8x8xf32>
    %35 = arith.truncf %34 : vector<8x8x8xf32> to vector<8x8x8xbf16>
    %c0_15 = arith.constant 0 : index
    %c0_16 = arith.constant 0 : index
    %c0_17 = arith.constant 0 : index
    %c0_18 = arith.constant 0 : index
    %36 = vector.load %arg5[%c0_15, %c0_16, %c0_17, %c0_18] : memref<1x8x8x8xbf16, #tpu.memory_space<vmem>>, vector<1x8x8x8xbf16>
    %37 = vector.shape_cast %36 : vector<1x8x8x8xbf16> to vector<8x8x8xbf16>
    %38 = vector.shape_cast %35 : vector<8x8x8xbf16> to vector<1x8x8x8xbf16>
    tpu.vector_store %arg5[%c0_15, %c0_16, %c0_17, %c0_18], %38 {strides = array<i32>} : memref<1x8x8x8xbf16, #tpu.memory_space<vmem>>, vector<1x8x8x8xbf16>,
    return
  }
  func.func @transform_0(%arg0: i32, %arg1: i32) -> (i32, i32, i32, i32) {
    %c0_i32 = arith.constant 0 : i32
    %c0_i32_0 = arith.constant 0 : i32
    %c0_i32_1 = arith.constant 0 : i32
    return %arg0, %arg1, %c0_i32, %c0_i32_0 : i32, i32, i32, i32
  }
  func.func @transform_1(%arg0: i32, %arg1: i32) -> (i32, i32, i32, i32) {
    %c1_i32 = arith.constant 1 : i32
    %0 = arith.addi %arg1, %c1_i32 : i32
    %c4_i32 = arith.constant 4 : i32
    %1 = arith.muli %0, %c4_i32 : i32
    %c0_i32 = arith.constant 0 : i32
    %c0_i32_0 = arith.constant 0 : i32
    %c0_i32_1 = arith.constant 0 : i32
    return %arg0, %1, %c0_i32, %c0_i32_0 : i32, i32, i32, i32
  }
  func.func @transform_2(%arg0: i32, %arg1: i32) -> (i32, i32) {
    %c0_i32 = arith.constant 0 : i32
    %c0_i32_0 = arith.constant 0 : i32
    %c0_i32_1 = arith.constant 0 : i32
    return %c0_i32, %c0_i32_0 : i32, i32
  }
  func.func @transform_3(%arg0: i32, %arg1: i32) -> (i32, i32, i32, i32) {
    %c0_i32 = arith.constant 0 : i32
    %c0_i32_0 = arith.constant 0 : i32
    %c0_i32_1 = arith.constant 0 : i32
    return %arg0, %arg1, %c0_i32, %c0_i32_0 : i32, i32, i32, i32
  }
  func.func @transform_4(%arg0: i32, %arg1: i32) -> (i32, i32, i32, i32) {
    %c0_i32 = arith.constant 0 : i32
    %c0_i32_0 = arith.constant 0 : i32
    %c0_i32_1 = arith.constant 0 : i32
    return %arg0, %arg1, %c0_i32, %c0_i32_0 : i32, i32, i32, i32
  }
}

module attributes {stable_mosaic.version = 11 : i64} {
  func.func @_bn_apply_kernel(%arg0: i32, %arg1: i32, %arg2: memref<1x8x64xbf16, #tpu.memory_space<vmem>>, %arg3: memref<1x64xf32, #tpu.memory_space<vmem>>, %arg4: memref<1x64xf32, #tpu.memory_space<vmem>>, %arg5: memref<1x8x64xf32, #tpu.memory_space<vmem>>) attributes {dimension_semantics = [#tpu.dimension_semantics<parallel>, #tpu.dimension_semantics<parallel>], iteration_bounds = array<i64: 2, 1>, scalar_prefetch = 0 : i64, scratch_operands = 0 : i64, tpu.core_type = #tpu.core_type<tc>, window_params = [{transform_indices = @transform_0, window_bounds = array<i64: 1, 8, 64>}, {pipeline_mode = #tpu.pipeline_mode<synchronous>, transform_indices = @transform_1, window_bounds = array<i64: 1, 64>}, {pipeline_mode = #tpu.pipeline_mode<synchronous>, transform_indices = @transform_2, window_bounds = array<i64: 1, 64>}, {transform_indices = @transform_3, window_bounds = array<i64: 1, 8, 64>}]} {
    %c0 = arith.constant 0 : index
    %c0_0 = arith.constant 0 : index
    %c0_1 = arith.constant 0 : index
    %0 = vector.load %arg2[%c0, %c0_0, %c0_1] : memref<1x8x64xbf16, #tpu.memory_space<vmem>>, vector<1x8x64xbf16>
    %1 = vector.shape_cast %0 : vector<1x8x64xbf16> to vector<8x64xbf16>
    %2 = arith.extf %1 : vector<8x64xbf16> to vector<8x64xf32>
    %c0_2 = arith.constant 0 : index
    %c0_3 = arith.constant 0 : index
    %3 = vector.load %arg3[%c0_2, %c0_3] : memref<1x64xf32, #tpu.memory_space<vmem>>, vector<1x64xf32>
    %4 = vector.broadcast %3 : vector<1x64xf32> to vector<8x64xf32>
    %5 = arith.mulf %2, %4 : vector<8x64xf32>
    %c0_4 = arith.constant 0 : index
    %c0_5 = arith.constant 0 : index
    %6 = vector.load %arg4[%c0_4, %c0_5] : memref<1x64xf32, #tpu.memory_space<vmem>>, vector<1x64xf32>
    %7 = vector.broadcast %6 : vector<1x64xf32> to vector<8x64xf32>
    %8 = arith.addf %5, %7 : vector<8x64xf32>
    %cst = arith.constant 0.000000e+00 : f32
    %9 = vector.broadcast %cst : f32 to vector<8x64xf32>
    %10 = arith.maximumf %8, %9 : vector<8x64xf32>
    %c0_6 = arith.constant 0 : index
    %c0_7 = arith.constant 0 : index
    %c0_8 = arith.constant 0 : index
    %11 = vector.load %arg5[%c0_6, %c0_7, %c0_8] : memref<1x8x64xf32, #tpu.memory_space<vmem>>, vector<1x8x64xf32>
    %12 = vector.shape_cast %11 : vector<1x8x64xf32> to vector<8x64xf32>
    %13 = vector.shape_cast %10 : vector<8x64xf32> to vector<1x8x64xf32>
    tpu.vector_store %arg5[%c0_6, %c0_7, %c0_8], %13 {strides = array<i32>} : memref<1x8x64xf32, #tpu.memory_space<vmem>>, vector<1x8x64xf32>,
    return
  }
  func.func @transform_0(%arg0: i32, %arg1: i32) -> (i32, i32, i32) {
    %c0_i32 = arith.constant 0 : i32
    %c0_i32_0 = arith.constant 0 : i32
    return %arg0, %arg1, %c0_i32 : i32, i32, i32
  }
  func.func @transform_1(%arg0: i32, %arg1: i32) -> (i32, i32) {
    %c0_i32 = arith.constant 0 : i32
    %c0_i32_0 = arith.constant 0 : i32
    %c0_i32_1 = arith.constant 0 : i32
    return %c0_i32, %c0_i32_0 : i32, i32
  }
  func.func @transform_2(%arg0: i32, %arg1: i32) -> (i32, i32) {
    %c0_i32 = arith.constant 0 : i32
    %c0_i32_0 = arith.constant 0 : i32
    %c0_i32_1 = arith.constant 0 : i32
    return %c0_i32, %c0_i32_0 : i32, i32
  }
  func.func @transform_3(%arg0: i32, %arg1: i32) -> (i32, i32, i32) {
    %c0_i32 = arith.constant 0 : i32
    %c0_i32_0 = arith.constant 0 : i32
    return %arg0, %arg1, %c0_i32 : i32, i32, i32
  }
}

module attributes {stable_mosaic.version = 11 : i64} {
  func.func @_conv_kernel(%arg0: i32, %arg1: i32, %arg2: memref<1x8x10x8xbf16, #tpu.memory_space<vmem>>, %arg3: memref<1x2x10x8xbf16, #tpu.memory_space<vmem>>, %arg4: memref<72x8xbf16, #tpu.memory_space<vmem>>, %arg5: memref<1x8x8x8xbf16, #tpu.memory_space<vmem>>, %arg6: memref<1x1x2x8xf32, #tpu.memory_space<vmem>>) attributes {dimension_semantics = [#tpu.dimension_semantics<parallel>, #tpu.dimension_semantics<parallel>], iteration_bounds = array<i64: 2, 1>, scalar_prefetch = 0 : i64, scratch_operands = 0 : i64, tpu.core_type = #tpu.core_type<tc>, window_params = [{transform_indices = @transform_0, window_bounds = array<i64: 1, 8, 10, 8>}, {transform_indices = @transform_1, window_bounds = array<i64: 1, 2, 10, 8>}, {pipeline_mode = #tpu.pipeline_mode<synchronous>, transform_indices = @transform_2, window_bounds = array<i64: 72, 8>}, {transform_indices = @transform_3, window_bounds = array<i64: 1, 8, 8, 8>}, {transform_indices = @transform_4, window_bounds = array<i64: 1, 1, 2, 8>}]} {
    %c0 = arith.constant 0 : index
    %c0_0 = arith.constant 0 : index
    %c0_1 = arith.constant 0 : index
    %c0_2 = arith.constant 0 : index
    %0 = vector.load %arg2[%c0, %c0_0, %c0_1, %c0_2] : memref<1x8x10x8xbf16, #tpu.memory_space<vmem>>, vector<1x8x10x8xbf16>
    %1 = vector.shape_cast %0 : vector<1x8x10x8xbf16> to vector<8x10x8xbf16>
    %c0_3 = arith.constant 0 : index
    %c0_4 = arith.constant 0 : index
    %c0_5 = arith.constant 0 : index
    %c0_6 = arith.constant 0 : index
    %2 = vector.load %arg3[%c0_3, %c0_4, %c0_5, %c0_6] : memref<1x2x10x8xbf16, #tpu.memory_space<vmem>>, vector<1x2x10x8xbf16>
    %3 = vector.shape_cast %2 : vector<1x2x10x8xbf16> to vector<2x10x8xbf16>
    %4 = tpu.concatenate %1, %3 in 0 : vector<8x10x8xbf16>, vector<2x10x8xbf16> -> vector<10x10x8xbf16>
    %5 = vector.extract_strided_slice %4 {offsets = [0, 0, 0], sizes = [8, 8, 8], strides = [1, 1, 1]} : vector<10x10x8xbf16> to vector<8x8x8xbf16>
    %6 = vector.shape_cast %5 : vector<8x8x8xbf16> to vector<64x8xbf16>
    %7 = vector.extract_strided_slice %4 {offsets = [0, 1, 0], sizes = [8, 8, 8], strides = [1, 1, 1]} : vector<10x10x8xbf16> to vector<8x8x8xbf16>
    %8 = vector.shape_cast %7 : vector<8x8x8xbf16> to vector<64x8xbf16>
    %9 = vector.extract_strided_slice %4 {offsets = [0, 2, 0], sizes = [8, 8, 8], strides = [1, 1, 1]} : vector<10x10x8xbf16> to vector<8x8x8xbf16>
    %10 = vector.shape_cast %9 : vector<8x8x8xbf16> to vector<64x8xbf16>
    %11 = vector.extract_strided_slice %4 {offsets = [1, 0, 0], sizes = [8, 8, 8], strides = [1, 1, 1]} : vector<10x10x8xbf16> to vector<8x8x8xbf16>
    %12 = vector.shape_cast %11 : vector<8x8x8xbf16> to vector<64x8xbf16>
    %13 = vector.extract_strided_slice %4 {offsets = [1, 1, 0], sizes = [8, 8, 8], strides = [1, 1, 1]} : vector<10x10x8xbf16> to vector<8x8x8xbf16>
    %14 = vector.shape_cast %13 : vector<8x8x8xbf16> to vector<64x8xbf16>
    %15 = vector.extract_strided_slice %4 {offsets = [1, 2, 0], sizes = [8, 8, 8], strides = [1, 1, 1]} : vector<10x10x8xbf16> to vector<8x8x8xbf16>
    %16 = vector.shape_cast %15 : vector<8x8x8xbf16> to vector<64x8xbf16>
    %17 = vector.extract_strided_slice %4 {offsets = [2, 0, 0], sizes = [8, 8, 8], strides = [1, 1, 1]} : vector<10x10x8xbf16> to vector<8x8x8xbf16>
    %18 = vector.shape_cast %17 : vector<8x8x8xbf16> to vector<64x8xbf16>
    %19 = vector.extract_strided_slice %4 {offsets = [2, 1, 0], sizes = [8, 8, 8], strides = [1, 1, 1]} : vector<10x10x8xbf16> to vector<8x8x8xbf16>
    %20 = vector.shape_cast %19 : vector<8x8x8xbf16> to vector<64x8xbf16>
    %21 = vector.extract_strided_slice %4 {offsets = [2, 2, 0], sizes = [8, 8, 8], strides = [1, 1, 1]} : vector<10x10x8xbf16> to vector<8x8x8xbf16>
    %22 = vector.shape_cast %21 : vector<8x8x8xbf16> to vector<64x8xbf16>
    %23 = tpu.concatenate %6, %8, %10, %12, %14, %16, %18, %20, %22 in 1 : vector<64x8xbf16>, vector<64x8xbf16>, vector<64x8xbf16>, vector<64x8xbf16>, vector<64x8xbf16>, vector<64x8xbf16>, vector<64x8xbf16>, vector<64x8xbf16>, vector<64x8xbf16> -> vector<64x72xbf16>
    %c0_7 = arith.constant 0 : index
    %c0_8 = arith.constant 0 : index
    %24 = vector.load %arg4[%c0_7, %c0_8] : memref<72x8xbf16, #tpu.memory_space<vmem>>, vector<72x8xbf16>
    %cst = arith.constant dense<0.000000e+00> : vector<64x8xf32>
    %25 = tpu.matmul %23, %24, %cst {dimension_numbers = #tpu.dot_dimension_numbers<[1], [0], [0], [1], [0, 0, 1, 1], [], []>} : vector<64x72xbf16>, vector<72x8xbf16>, vector<64x8xf32> -> vector<64x8xf32>
    %cst_9 = arith.constant dense<0.000000e+00> : vector<8xf32>
    %26 = vector.multi_reduction <add>, %25, %cst_9 [0] : vector<64x8xf32> to vector<8xf32>
    %27 = vector.shape_cast %26 : vector<8xf32> to vector<1x8xf32>
    %28 = arith.mulf %25, %25 : vector<64x8xf32>
    %cst_10 = arith.constant dense<0.000000e+00> : vector<8xf32>
    %29 = vector.multi_reduction <add>, %28, %cst_10 [0] : vector<64x8xf32> to vector<8xf32>
    %30 = vector.shape_cast %29 : vector<8xf32> to vector<1x8xf32>
    %31 = tpu.concatenate %27, %30 in 0 : vector<1x8xf32>, vector<1x8xf32> -> vector<2x8xf32>
    %32 = vector.shape_cast %31 : vector<2x8xf32> to vector<1x1x2x8xf32>
    %c0_11 = arith.constant 0 : index
    %c0_12 = arith.constant 0 : index
    %c0_13 = arith.constant 0 : index
    %c0_14 = arith.constant 0 : index
    %33 = vector.load %arg6[%c0_11, %c0_12, %c0_13, %c0_14] : memref<1x1x2x8xf32, #tpu.memory_space<vmem>>, vector<1x1x2x8xf32>
    tpu.vector_store %arg6[%c0_11, %c0_12, %c0_13, %c0_14], %32 {strides = array<i32>} : memref<1x1x2x8xf32, #tpu.memory_space<vmem>>, vector<1x1x2x8xf32>,
    %34 = vector.shape_cast %25 : vector<64x8xf32> to vector<8x8x8xf32>
    %35 = arith.truncf %34 : vector<8x8x8xf32> to vector<8x8x8xbf16>
    %c0_15 = arith.constant 0 : index
    %c0_16 = arith.constant 0 : index
    %c0_17 = arith.constant 0 : index
    %c0_18 = arith.constant 0 : index
    %36 = vector.load %arg5[%c0_15, %c0_16, %c0_17, %c0_18] : memref<1x8x8x8xbf16, #tpu.memory_space<vmem>>, vector<1x8x8x8xbf16>
    %37 = vector.shape_cast %36 : vector<1x8x8x8xbf16> to vector<8x8x8xbf16>
    %38 = vector.shape_cast %35 : vector<8x8x8xbf16> to vector<1x8x8x8xbf16>
    tpu.vector_store %arg5[%c0_15, %c0_16, %c0_17, %c0_18], %38 {strides = array<i32>} : memref<1x8x8x8xbf16, #tpu.memory_space<vmem>>, vector<1x8x8x8xbf16>,
    return
  }
  func.func @transform_0(%arg0: i32, %arg1: i32) -> (i32, i32, i32, i32) {
    %c0_i32 = arith.constant 0 : i32
    %c0_i32_0 = arith.constant 0 : i32
    %c0_i32_1 = arith.constant 0 : i32
    return %arg0, %arg1, %c0_i32, %c0_i32_0 : i32, i32, i32, i32
  }
  func.func @transform_1(%arg0: i32, %arg1: i32) -> (i32, i32, i32, i32) {
    %c1_i32 = arith.constant 1 : i32
    %0 = arith.addi %arg1, %c1_i32 : i32
    %c4_i32 = arith.constant 4 : i32
    %1 = arith.muli %0, %c4_i32 : i32
    %c0_i32 = arith.constant 0 : i32
    %c0_i32_0 = arith.constant 0 : i32
    %c0_i32_1 = arith.constant 0 : i32
    return %arg0, %1, %c0_i32, %c0_i32_0 : i32, i32, i32, i32
  }
  func.func @transform_2(%arg0: i32, %arg1: i32) -> (i32, i32) {
    %c0_i32 = arith.constant 0 : i32
    %c0_i32_0 = arith.constant 0 : i32
    %c0_i32_1 = arith.constant 0 : i32
    return %c0_i32, %c0_i32_0 : i32, i32
  }
  func.func @transform_3(%arg0: i32, %arg1: i32) -> (i32, i32, i32, i32) {
    %c0_i32 = arith.constant 0 : i32
    %c0_i32_0 = arith.constant 0 : i32
    %c0_i32_1 = arith.constant 0 : i32
    return %arg0, %arg1, %c0_i32, %c0_i32_0 : i32, i32, i32, i32
  }
  func.func @transform_4(%arg0: i32, %arg1: i32) -> (i32, i32, i32, i32) {
    %c0_i32 = arith.constant 0 : i32
    %c0_i32_0 = arith.constant 0 : i32
    %c0_i32_1 = arith.constant 0 : i32
    return %arg0, %arg1, %c0_i32, %c0_i32_0 : i32, i32, i32, i32
  }
}

module attributes {stable_mosaic.version = 11 : i64} {
  func.func @_conv_kernel(%arg0: i32, %arg1: i32, %arg2: memref<1x16x18x8xbf16, #tpu.memory_space<vmem>>, %arg3: memref<1x2x18x8xbf16, #tpu.memory_space<vmem>>, %arg4: memref<72x8xbf16, #tpu.memory_space<vmem>>, %arg5: memref<1x16x16x8xbf16, #tpu.memory_space<vmem>>, %arg6: memref<1x16x16x8xbf16, #tpu.memory_space<vmem>>, %arg7: memref<1x1x2x8xf32, #tpu.memory_space<vmem>>) attributes {dimension_semantics = [#tpu.dimension_semantics<parallel>, #tpu.dimension_semantics<parallel>], iteration_bounds = array<i64: 2, 1>, scalar_prefetch = 0 : i64, scratch_operands = 0 : i64, tpu.core_type = #tpu.core_type<tc>, window_params = [{transform_indices = @transform_0, window_bounds = array<i64: 1, 16, 18, 8>}, {transform_indices = @transform_1, window_bounds = array<i64: 1, 2, 18, 8>}, {pipeline_mode = #tpu.pipeline_mode<synchronous>, transform_indices = @transform_2, window_bounds = array<i64: 72, 8>}, {transform_indices = @transform_3, window_bounds = array<i64: 1, 16, 16, 8>}, {transform_indices = @transform_4, window_bounds = array<i64: 1, 16, 16, 8>}, {transform_indices = @transform_5, window_bounds = array<i64: 1, 1, 2, 8>}]} {
    %c0 = arith.constant 0 : index
    %c0_0 = arith.constant 0 : index
    %c0_1 = arith.constant 0 : index
    %c0_2 = arith.constant 0 : index
    %0 = vector.load %arg2[%c0, %c0_0, %c0_1, %c0_2] : memref<1x16x18x8xbf16, #tpu.memory_space<vmem>>, vector<1x16x18x8xbf16>
    %1 = vector.shape_cast %0 : vector<1x16x18x8xbf16> to vector<16x18x8xbf16>
    %c0_3 = arith.constant 0 : index
    %c0_4 = arith.constant 0 : index
    %c0_5 = arith.constant 0 : index
    %c0_6 = arith.constant 0 : index
    %2 = vector.load %arg3[%c0_3, %c0_4, %c0_5, %c0_6] : memref<1x2x18x8xbf16, #tpu.memory_space<vmem>>, vector<1x2x18x8xbf16>
    %3 = vector.shape_cast %2 : vector<1x2x18x8xbf16> to vector<2x18x8xbf16>
    %4 = tpu.concatenate %1, %3 in 0 : vector<16x18x8xbf16>, vector<2x18x8xbf16> -> vector<18x18x8xbf16>
    %5 = vector.extract_strided_slice %4 {offsets = [0, 0, 0], sizes = [16, 16, 8], strides = [1, 1, 1]} : vector<18x18x8xbf16> to vector<16x16x8xbf16>
    %6 = vector.shape_cast %5 : vector<16x16x8xbf16> to vector<256x8xbf16>
    %7 = vector.extract_strided_slice %4 {offsets = [0, 1, 0], sizes = [16, 16, 8], strides = [1, 1, 1]} : vector<18x18x8xbf16> to vector<16x16x8xbf16>
    %8 = vector.shape_cast %7 : vector<16x16x8xbf16> to vector<256x8xbf16>
    %9 = vector.extract_strided_slice %4 {offsets = [0, 2, 0], sizes = [16, 16, 8], strides = [1, 1, 1]} : vector<18x18x8xbf16> to vector<16x16x8xbf16>
    %10 = vector.shape_cast %9 : vector<16x16x8xbf16> to vector<256x8xbf16>
    %11 = vector.extract_strided_slice %4 {offsets = [1, 0, 0], sizes = [16, 16, 8], strides = [1, 1, 1]} : vector<18x18x8xbf16> to vector<16x16x8xbf16>
    %12 = vector.shape_cast %11 : vector<16x16x8xbf16> to vector<256x8xbf16>
    %13 = vector.extract_strided_slice %4 {offsets = [1, 1, 0], sizes = [16, 16, 8], strides = [1, 1, 1]} : vector<18x18x8xbf16> to vector<16x16x8xbf16>
    %14 = vector.shape_cast %13 : vector<16x16x8xbf16> to vector<256x8xbf16>
    %15 = vector.extract_strided_slice %4 {offsets = [1, 2, 0], sizes = [16, 16, 8], strides = [1, 1, 1]} : vector<18x18x8xbf16> to vector<16x16x8xbf16>
    %16 = vector.shape_cast %15 : vector<16x16x8xbf16> to vector<256x8xbf16>
    %17 = vector.extract_strided_slice %4 {offsets = [2, 0, 0], sizes = [16, 16, 8], strides = [1, 1, 1]} : vector<18x18x8xbf16> to vector<16x16x8xbf16>
    %18 = vector.shape_cast %17 : vector<16x16x8xbf16> to vector<256x8xbf16>
    %19 = vector.extract_strided_slice %4 {offsets = [2, 1, 0], sizes = [16, 16, 8], strides = [1, 1, 1]} : vector<18x18x8xbf16> to vector<16x16x8xbf16>
    %20 = vector.shape_cast %19 : vector<16x16x8xbf16> to vector<256x8xbf16>
    %21 = vector.extract_strided_slice %4 {offsets = [2, 2, 0], sizes = [16, 16, 8], strides = [1, 1, 1]} : vector<18x18x8xbf16> to vector<16x16x8xbf16>
    %22 = vector.shape_cast %21 : vector<16x16x8xbf16> to vector<256x8xbf16>
    %23 = tpu.concatenate %6, %8, %10, %12, %14, %16, %18, %20, %22 in 1 : vector<256x8xbf16>, vector<256x8xbf16>, vector<256x8xbf16>, vector<256x8xbf16>, vector<256x8xbf16>, vector<256x8xbf16>, vector<256x8xbf16>, vector<256x8xbf16>, vector<256x8xbf16> -> vector<256x72xbf16>
    %c0_7 = arith.constant 0 : index
    %c0_8 = arith.constant 0 : index
    %24 = vector.load %arg4[%c0_7, %c0_8] : memref<72x8xbf16, #tpu.memory_space<vmem>>, vector<72x8xbf16>
    %cst = arith.constant dense<0.000000e+00> : vector<256x8xf32>
    %25 = tpu.matmul %23, %24, %cst {dimension_numbers = #tpu.dot_dimension_numbers<[1], [0], [0], [1], [0, 0, 1, 1], [], []>} : vector<256x72xbf16>, vector<72x8xbf16>, vector<256x8xf32> -> vector<256x8xf32>
    %c0_9 = arith.constant 0 : index
    %c0_10 = arith.constant 0 : index
    %c0_11 = arith.constant 0 : index
    %c0_12 = arith.constant 0 : index
    %26 = vector.load %arg5[%c0_9, %c0_10, %c0_11, %c0_12] : memref<1x16x16x8xbf16, #tpu.memory_space<vmem>>, vector<1x16x16x8xbf16>
    %27 = vector.shape_cast %26 : vector<1x16x16x8xbf16> to vector<16x16x8xbf16>
    %28 = vector.shape_cast %27 : vector<16x16x8xbf16> to vector<256x8xbf16>
    %29 = arith.extf %28 : vector<256x8xbf16> to vector<256x8xf32>
    %30 = arith.addf %25, %29 : vector<256x8xf32>
    %cst_13 = arith.constant dense<0.000000e+00> : vector<8xf32>
    %31 = vector.multi_reduction <add>, %30, %cst_13 [0] : vector<256x8xf32> to vector<8xf32>
    %32 = vector.shape_cast %31 : vector<8xf32> to vector<1x8xf32>
    %33 = arith.mulf %30, %30 : vector<256x8xf32>
    %cst_14 = arith.constant dense<0.000000e+00> : vector<8xf32>
    %34 = vector.multi_reduction <add>, %33, %cst_14 [0] : vector<256x8xf32> to vector<8xf32>
    %35 = vector.shape_cast %34 : vector<8xf32> to vector<1x8xf32>
    %36 = tpu.concatenate %32, %35 in 0 : vector<1x8xf32>, vector<1x8xf32> -> vector<2x8xf32>
    %37 = vector.shape_cast %36 : vector<2x8xf32> to vector<1x1x2x8xf32>
    %c0_15 = arith.constant 0 : index
    %c0_16 = arith.constant 0 : index
    %c0_17 = arith.constant 0 : index
    %c0_18 = arith.constant 0 : index
    %38 = vector.load %arg7[%c0_15, %c0_16, %c0_17, %c0_18] : memref<1x1x2x8xf32, #tpu.memory_space<vmem>>, vector<1x1x2x8xf32>
    tpu.vector_store %arg7[%c0_15, %c0_16, %c0_17, %c0_18], %37 {strides = array<i32>} : memref<1x1x2x8xf32, #tpu.memory_space<vmem>>, vector<1x1x2x8xf32>,
    %39 = vector.shape_cast %30 : vector<256x8xf32> to vector<16x16x8xf32>
    %40 = arith.truncf %39 : vector<16x16x8xf32> to vector<16x16x8xbf16>
    %c0_19 = arith.constant 0 : index
    %c0_20 = arith.constant 0 : index
    %c0_21 = arith.constant 0 : index
    %c0_22 = arith.constant 0 : index
    %41 = vector.load %arg6[%c0_19, %c0_20, %c0_21, %c0_22] : memref<1x16x16x8xbf16, #tpu.memory_space<vmem>>, vector<1x16x16x8xbf16>
    %42 = vector.shape_cast %41 : vector<1x16x16x8xbf16> to vector<16x16x8xbf16>
    %43 = vector.shape_cast %40 : vector<16x16x8xbf16> to vector<1x16x16x8xbf16>
    tpu.vector_store %arg6[%c0_19, %c0_20, %c0_21, %c0_22], %43 {strides = array<i32>} : memref<1x16x16x8xbf16, #tpu.memory_space<vmem>>, vector<1x16x16x8xbf16>,
    return
  }
  func.func @transform_0(%arg0: i32, %arg1: i32) -> (i32, i32, i32, i32) {
    %c0_i32 = arith.constant 0 : i32
    %c0_i32_0 = arith.constant 0 : i32
    %c0_i32_1 = arith.constant 0 : i32
    return %arg0, %arg1, %c0_i32, %c0_i32_0 : i32, i32, i32, i32
  }
  func.func @transform_1(%arg0: i32, %arg1: i32) -> (i32, i32, i32, i32) {
    %c1_i32 = arith.constant 1 : i32
    %0 = arith.addi %arg1, %c1_i32 : i32
    %c8_i32 = arith.constant 8 : i32
    %1 = arith.muli %0, %c8_i32 : i32
    %c0_i32 = arith.constant 0 : i32
    %c0_i32_0 = arith.constant 0 : i32
    %c0_i32_1 = arith.constant 0 : i32
    return %arg0, %1, %c0_i32, %c0_i32_0 : i32, i32, i32, i32
  }
  func.func @transform_2(%arg0: i32, %arg1: i32) -> (i32, i32) {
    %c0_i32 = arith.constant 0 : i32
    %c0_i32_0 = arith.constant 0 : i32
    %c0_i32_1 = arith.constant 0 : i32
    return %c0_i32, %c0_i32_0 : i32, i32
  }
  func.func @transform_3(%arg0: i32, %arg1: i32) -> (i32, i32, i32, i32) {
    %c0_i32 = arith.constant 0 : i32
    %c0_i32_0 = arith.constant 0 : i32
    %c0_i32_1 = arith.constant 0 : i32
    return %arg0, %arg1, %c0_i32, %c0_i32_0 : i32, i32, i32, i32
  }
  func.func @transform_4(%arg0: i32, %arg1: i32) -> (i32, i32, i32, i32) {
    %c0_i32 = arith.constant 0 : i32
    %c0_i32_0 = arith.constant 0 : i32
    %c0_i32_1 = arith.constant 0 : i32
    return %arg0, %arg1, %c0_i32, %c0_i32_0 : i32, i32, i32, i32
  }
  func.func @transform_5(%arg0: i32, %arg1: i32) -> (i32, i32, i32, i32) {
    %c0_i32 = arith.constant 0 : i32
    %c0_i32_0 = arith.constant 0 : i32
    %c0_i32_1 = arith.constant 0 : i32
    return %arg0, %arg1, %c0_i32, %c0_i32_0 : i32, i32, i32, i32
  }
}

module attributes {stable_mosaic.version = 11 : i64} {
  func.func @_bn_apply_kernel(%arg0: i32, %arg1: i32, %arg2: memref<1x16x128xbf16, #tpu.memory_space<vmem>>, %arg3: memref<1x128xf32, #tpu.memory_space<vmem>>, %arg4: memref<1x128xf32, #tpu.memory_space<vmem>>, %arg5: memref<1x16x128xf32, #tpu.memory_space<vmem>>) attributes {dimension_semantics = [#tpu.dimension_semantics<parallel>, #tpu.dimension_semantics<parallel>], iteration_bounds = array<i64: 2, 1>, scalar_prefetch = 0 : i64, scratch_operands = 0 : i64, tpu.core_type = #tpu.core_type<tc>, window_params = [{transform_indices = @transform_0, window_bounds = array<i64: 1, 16, 128>}, {pipeline_mode = #tpu.pipeline_mode<synchronous>, transform_indices = @transform_1, window_bounds = array<i64: 1, 128>}, {pipeline_mode = #tpu.pipeline_mode<synchronous>, transform_indices = @transform_2, window_bounds = array<i64: 1, 128>}, {transform_indices = @transform_3, window_bounds = array<i64: 1, 16, 128>}]} {
    %c0 = arith.constant 0 : index
    %c0_0 = arith.constant 0 : index
    %c0_1 = arith.constant 0 : index
    %0 = vector.load %arg2[%c0, %c0_0, %c0_1] : memref<1x16x128xbf16, #tpu.memory_space<vmem>>, vector<1x16x128xbf16>
    %1 = vector.shape_cast %0 : vector<1x16x128xbf16> to vector<16x128xbf16>
    %2 = arith.extf %1 : vector<16x128xbf16> to vector<16x128xf32>
    %c0_2 = arith.constant 0 : index
    %c0_3 = arith.constant 0 : index
    %3 = vector.load %arg3[%c0_2, %c0_3] : memref<1x128xf32, #tpu.memory_space<vmem>>, vector<1x128xf32>
    %4 = vector.broadcast %3 : vector<1x128xf32> to vector<16x128xf32>
    %5 = arith.mulf %2, %4 : vector<16x128xf32>
    %c0_4 = arith.constant 0 : index
    %c0_5 = arith.constant 0 : index
    %6 = vector.load %arg4[%c0_4, %c0_5] : memref<1x128xf32, #tpu.memory_space<vmem>>, vector<1x128xf32>
    %7 = vector.broadcast %6 : vector<1x128xf32> to vector<16x128xf32>
    %8 = arith.addf %5, %7 : vector<16x128xf32>
    %cst = arith.constant 0.000000e+00 : f32
    %9 = vector.broadcast %cst : f32 to vector<16x128xf32>
    %10 = arith.maximumf %8, %9 : vector<16x128xf32>
    %c0_6 = arith.constant 0 : index
    %c0_7 = arith.constant 0 : index
    %c0_8 = arith.constant 0 : index
    %11 = vector.load %arg5[%c0_6, %c0_7, %c0_8] : memref<1x16x128xf32, #tpu.memory_space<vmem>>, vector<1x16x128xf32>
    %12 = vector.shape_cast %11 : vector<1x16x128xf32> to vector<16x128xf32>
    %13 = vector.shape_cast %10 : vector<16x128xf32> to vector<1x16x128xf32>
    tpu.vector_store %arg5[%c0_6, %c0_7, %c0_8], %13 {strides = array<i32>} : memref<1x16x128xf32, #tpu.memory_space<vmem>>, vector<1x16x128xf32>,
    return
  }
  func.func @transform_0(%arg0: i32, %arg1: i32) -> (i32, i32, i32) {
    %c0_i32 = arith.constant 0 : i32
    %c0_i32_0 = arith.constant 0 : i32
    return %arg0, %arg1, %c0_i32 : i32, i32, i32
  }
  func.func @transform_1(%arg0: i32, %arg1: i32) -> (i32, i32) {
    %c0_i32 = arith.constant 0 : i32
    %c0_i32_0 = arith.constant 0 : i32
    %c0_i32_1 = arith.constant 0 : i32
    return %c0_i32, %c0_i32_0 : i32, i32
  }
  func.func @transform_2(%arg0: i32, %arg1: i32) -> (i32, i32) {
    %c0_i32 = arith.constant 0 : i32
    %c0_i32_0 = arith.constant 0 : i32
    %c0_i32_1 = arith.constant 0 : i32
    return %c0_i32, %c0_i32_0 : i32, i32
  }
  func.func @transform_3(%arg0: i32, %arg1: i32) -> (i32, i32, i32) {
    %c0_i32 = arith.constant 0 : i32
    %c0_i32_0 = arith.constant 0 : i32
    return %arg0, %arg1, %c0_i32 : i32, i32, i32
  }
}

</mosaic_0001>

<llo_original>
// kernel: tile.53
$region0: #{tile.53}
  #allocation0 [shape = 's32[1]{0}', space=sflag, size = 0x4, scoped, tag = 'scoped memory for tile.53']
  %s0 = inlined_call_operand.vmem [shape: f32[8], index: 0, kind: input, shape index: {}]
  %s1 = inlined_call_operand.vmem [shape: f32[8,8], index: 1, kind: output, shape index: {}]
  // Predicated region
  $region2: #{tile.53} parent=0 // pred_check
    _
  $region3: #{tile.53} parent=0 // pred_check_branch
    %3 = sbr.rel (0) target = $region5
  $region4: #{tile.53} parent=0 // pred_region
    _
  $region5: #{tile.53} parent=0 // pred_fallthru
    _
  %v4 = vld [vmem:[%s0] ss:$0 sm:$0xff]
  %5 = vst [vmem:[%s1] sm:$0xff] %v4

// kernel: tile.54
$region0: #{tile.54}
  %s0 = inlined_call_operand.vmem [shape: f32[8,8], index: 0, kind: input, shape index: {}]
  %s1 = inlined_call_operand.vmem [shape: f32[1,64], index: 1, kind: output, shape index: {}]
  $region1: #{tile.54} parent=0
    #allocation0 [shape = 'u8[4096]{0}', space=vmem, size = 0x1000, scoped, tag = 'scoped mem for output reshape']
    %v2 = vld [vmem:[%s0] sm:$0x1]
    %vm3 = vcmask 64512
    %4 = vst.msk [vmem:[#allocation0] sm:$0x1] %vm3, %v2
    %s5 = scalar_lea.vmem %s0, 7
    %v6 = vld [vmem:[%s5] sm:$0x1]
    %7 = vrot.lane.b32.xlu0 %v6, 56
    %v8 = vpop.permute.xlu0 %7
    %vm9 = vcmask 523712
    %10 = vst.msk [vmem:[#allocation0] sm:$0x1] %vm9, %v8
    %s11 = scalar_lea.vmem %s0, 6
    %v12 = vld [vmem:[%s11] sm:$0x1]
    %13 = vrot.lane.b32.xlu0 %v12, 48
    %v14 = vpop.permute.xlu0 %13
    %vm15 = vcmask 458112
    %16 = vst.msk [vmem:[#allocation0] sm:$0x1] %vm15, %v14
    %s17 = scalar_lea.vmem %s0, 5
    %v18 = vld [vmem:[%s17] sm:$0x1]
    %19 = vrot.lane.b32.xlu0 %v18, 40
    %v20 = vpop.permute.xlu0 %19
    %vm21 = vcmask 392512
    %22 = vst.msk [vmem:[#allocation0] sm:$0x1] %vm21, %v20
    %s23 = scalar_lea.vmem %s0, 4
    %v24 = vld [vmem:[%s23] sm:$0x1]
    %25 = vrot.lane.b32.xlu0 %v24, 32
    %v26 = vpop.permute.xlu0 %25
    %vm27 = vcmask 326912
    %28 = vst.msk [vmem:[#allocation0] sm:$0x1] %vm27, %v26
    %s29 = scalar_lea.vmem %s0, 3
    %v30 = vld [vmem:[%s29] sm:$0x1]
    %31 = vrot.lane.b32.xlu0 %v30, 24
    %v32 = vpop.permute.xlu0 %31
    %vm33 = vcmask 261312
    %34 = vst.msk [vmem:[#allocation0] sm:$0x1] %vm33, %v32
    %s35 = scalar_lea.vmem %s0, 2
    %v36 = vld [vmem:[%s35] sm:$0x1]
    %37 = vrot.lane.b32.xlu0 %v36, 16
    %v38 = vpop.permute.xlu0 %37
    %vm39 = vcmask 195712
    %40 = vst.msk [vmem:[#allocation0] sm:$0x1] %vm39, %v38
    %s41 = scalar_lea.vmem %s0, 1
    %v42 = vld [vmem:[%s41] sm:$0x1]
    %43 = vrot.lane.b32.xlu0 %v42, 8
    %v44 = vpop.permute.xlu0 %43
    %vm45 = vcmask 130112
    %46 = vst.msk [vmem:[#allocation0] sm:$0x1] %vm45, %v44
    %s48 = sshllo.u32 0, 1
    %v50 = vld [vmem:[#allocation0] sm:%s48]
    %s51 = sshllo.u32 0, 1
    %52 = vst [vmem:[%s1] sm:%s51] %v50

// kernel: double_conv_forward.14
$region0: #{double_conv_forward.14}
  #allocation0 [shape = 'u32[]', space=smem, size = 0x4, offset = 0x4, fixed_abs, tag = 'smem constant byte address 0x4 - core index']
  #allocation1 [shape = 'u32[144,128]{1,0:T(1,128)}', space=vmem, size = 0x12000, scoped, tag = 'internal scratch']
  %s0 = inlined_call_operand.vmem [shape: bf16[2,8,64], index: 0, kind: input, shape index: {}]
  %s1 = inlined_call_operand.vmem [shape: f32[1,64], index: 1, kind: input, shape index: {}]
  %s2 = inlined_call_operand.vmem [shape: f32[1,64], index: 2, kind: input, shape index: {}]
  %s3 = inlined_call_operand.vmem [shape: bf16[2,8,64], index: 3, kind: output, shape index: {}]
  %s4 = sld [smem:[#allocation0]]
  $region45: #{double_conv_forward.14} parent=0
    _
  %s6 = ssub.s32 1, %s4
  %s7 = scalar_select 0, %s6, %s4
  loop: start=0, step=1, limit=4
  $region2: #{double_conv_forward.14} parent=0 // loop_pre_header
    _
  $region3: #{double_conv_forward.14} parent=0 // loop_header
    %s9 = sphi 0, %s13
    %p10 = scmp.ge.s32.totalorder %s9, 4
    %s16 = sphi 0, %s28
    %s17 = sphi 0, %s24
    %s18 = sphi 0, %s16
    %s19 = sphi 0, %s17
    %s20 = sphi 0, %s18
    %s21 = sphi 0, %s19
    %s33 = sphi 0, %s35
    %s36 = sphi 0, %s33
    %s37 = sphi 0, %s36
    %s53 = sphi 0, %s37
    %s57 = sphi 0, %s57
    %s59 = sphi 0, %s57
    %s60 = sphi 0, %s59
    %s74 = sphi 0, %s60
    %s78 = sphi 0, %s78
    %s80 = sphi 0, %s78
    %s81 = sphi 0, %s80
    %s95 = sphi 0, %s81
    %s103 = sphi 0, %s105
    %s106 = sphi 0, %s103
    %s107 = sphi 0, %s106
    %s123 = sphi 0, %s107
  $region4: #{double_conv_forward.14} parent=0 // loop_header_branch
    %12 = sbr.rel (%p10) target = $region8
  $region5: #{double_conv_forward.14} parent=0 // loop_body
    %s14 = ssub.s32 %s9, 1
    %s15 = ssub.s32 %s9, 2
    %s22 = sadd.s32 1, %s17
    %p23 = scmp.ge.s32.totalorder %s22, 1
    %s24 = scalar_select %p23, 0, %s22
    %s25 = sadd.s32 1, %s16
    %s26 = scalar_select %p23, %s25, %s16
    %p27 = scmp.ge.s32.totalorder %s26, 2
    %s28 = scalar_select %p27, 0, %s26
    %s29 = ssub.s32 %s16, %s28
    %s30 = ssub.s32 %s17, %s24
    %s31 = sor.u32 %s29, %s30
    %p32 = scmp.eq.s32.totalorder %s31, 0
    %s34 = sadd.s32 %s33, 1
    %s35 = scalar_select %p32, %s33, %s34
    %p38 = pneg %p32
    %p39 = scmp.eq.s32.totalorder %s9, 1
    %p40 = por %p38, %p39
    %p41 = scmp.ne.s32.totalorder %s33, %s36
    %p42 = scmp.eq.s32.totalorder %s9, 0
    %p43 = por %p41, %p42
    %p44 = scmp.ne.s32.totalorder %s33, %s36
    %p45 = scmp.eq.s32.totalorder %s14, 1
    %p46 = por %p44, %p45
    %p47 = scmp.ne.s32.totalorder %s36, %s37
    %p48 = scmp.eq.s32.totalorder %s14, 0
    %p49 = por %p47, %p48
    %p50 = scmp.ne.s32.totalorder %s36, %s37
    %p51 = scmp.eq.s32.totalorder %s15, 1
    %p52 = por %p50, %p51
    %p54 = scmp.ne.s32.totalorder %s37, %s53
    %p55 = scmp.eq.s32.totalorder %s15, 0
    %p56 = por %p54, %p55
    %s58 = sadd.s32 %s57, 1
    %p61 = scmp.eq.s32.totalorder %s9, 1
    %p62 = scmp.ne.s32.totalorder %s57, %s59
    %p63 = scmp.eq.s32.totalorder %s9, 0
    %p64 = por %p62, %p63
    %p65 = scmp.ne.s32.totalorder %s57, %s59
    %p66 = scmp.eq.s32.totalorder %s14, 1
    %p67 = por %p65, %p66
    %p68 = scmp.ne.s32.totalorder %s59, %s60
    %p69 = scmp.eq.s32.totalorder %s14, 0
    %p70 = por %p68, %p69
    %p71 = scmp.ne.s32.totalorder %s59, %s60
    %p72 = scmp.eq.s32.totalorder %s15, 1
    %p73 = por %p71, %p72
    %p75 = scmp.ne.s32.totalorder %s60, %s74
    %p76 = scmp.eq.s32.totalorder %s15, 0
    %p77 = por %p75, %p76
    %s79 = sadd.s32 %s78, 1
    %p82 = scmp.eq.s32.totalorder %s9, 1
    %p83 = scmp.ne.s32.totalorder %s78, %s80
    %p84 = scmp.eq.s32.totalorder %s9, 0
    %p85 = por %p83, %p84
    %p86 = scmp.ne.s32.totalorder %s78, %s80
    %p87 = scmp.eq.s32.totalorder %s14, 1
    %p88 = por %p86, %p87
    %p89 = scmp.ne.s32.totalorder %s80, %s81
    %p90 = scmp.eq.s32.totalorder %s14, 0
    %p91 = por %p89, %p90
    %p92 = scmp.ne.s32.totalorder %s80, %s81
    %p93 = scmp.eq.s32.totalorder %s15, 1
    %p94 = por %p92, %p93
    %p96 = scmp.ne.s32.totalorder %s81, %s95
    %p97 = scmp.eq.s32.totalorder %s15, 0
    %p98 = por %p96, %p97
    %s99 = ssub.s32 %s16, %s28
    %s100 = ssub.s32 %s17, %s24
    %s101 = sor.u32 %s99, %s100
    %p102 = scmp.eq.s32.totalorder %s101, 0
    %s104 = sadd.s32 %s103, 1
    %s105 = scalar_select %p102, %s103, %s104
    %p108 = pneg %p102
    %p109 = scmp.eq.s32.totalorder %s9, 1
    %p110 = por %p108, %p109
    %p111 = scmp.ne.s32.totalorder %s103, %s106
    %p112 = scmp.eq.s32.totalorder %s9, 0
    %p113 = por %p111, %p112
    %p114 = scmp.ne.s32.totalorder %s103, %s106
    %p115 = scmp.eq.s32.totalorder %s14, 1
    %p116 = por %p114, %p115
    %p117 = scmp.ne.s32.totalorder %s106, %s107
    %p118 = scmp.eq.s32.totalorder %s14, 0
    %p119 = por %p117, %p118
    %p120 = scmp.ne.s32.totalorder %s106, %s107
    %p121 = scmp.eq.s32.totalorder %s15, 1
    %p122 = por %p120, %p121
    %p124 = scmp.ne.s32.totalorder %s107, %s123
    %p125 = scmp.eq.s32.totalorder %s15, 0
    %p126 = por %p124, %p125
    %p127 = scmp.le.s32.totalorder 1, %s9
    %p128 = scmp.lt.s32.totalorder %s9, 3
    %p129 = pnand %p127, %p128
    %p130 = pneg %p129
    // Predicated region
    $region9: #{double_conv_forward.14} parent=5 // pred_check
      _
    $region10: #{double_conv_forward.14} parent=5 // pred_check_branch
      %132 = sbr.rel (%p129) target = $region12
    $region11: #{double_conv_forward.14} parent=5 // pred_region
      %s133 = ssub.s32 %s9, 1
      // Predicated region
      $region13: #{double_conv_forward.14} parent=11 // pred_check
        %p134 = pneg %p70
      $region14: #{double_conv_forward.14} parent=11 // pred_check_branch
        %136 = sbr.rel (%p134) target = $region16
      $region15: #{double_conv_forward.14} parent=11 // pred_region
        _
      $region16: #{double_conv_forward.14} parent=11 // pred_fallthru
        _
      // Predicated region
      $region17: #{double_conv_forward.14} parent=11 // pred_check
        %p137 = pneg %p91
      $region18: #{double_conv_forward.14} parent=11 // pred_check_branch
        %139 = sbr.rel (%p137) target = $region20
      $region19: #{double_conv_forward.14} parent=11 // pred_region
        _
      $region20: #{double_conv_forward.14} parent=11 // pred_fallthru
        _
    $region12: #{double_conv_forward.14} parent=5 // pred_fallthru
      _
    %p140 = scmp.lt.s32.totalorder %s9, 2
    // Predicated region
    $region21: #{double_conv_forward.14} parent=5 // pred_check
      %p141 = pneg %p140
    $region22: #{double_conv_forward.14} parent=5 // pred_check_branch
      %143 = sbr.rel (%p141) target = $region24
    $region23: #{double_conv_forward.14} parent=5 // pred_region
      // Predicated region
      $region25: #{double_conv_forward.14} parent=23 // pred_check
        %p144 = pneg %p43
      $region26: #{double_conv_forward.14} parent=23 // pred_check_branch
        %146 = sbr.rel (%p144) target = $region28
      $region27: #{double_conv_forward.14} parent=23 // pred_region
        %p147 = scmp.lt.s32.totalorder %s16, 1
        %s148 = scalar_select %p147, %s16, 1
        %p149 = scmp.lt.s32.totalorder %s17, 0
        %s150 = scalar_select %p149, %s17, 0
        %s151 = sadd.s32 %s150, %s148
        %s152 = smul.addr %s151, 4
        %s153 = scalar_lea.vmem %s0, %s152
      $region28: #{double_conv_forward.14} parent=23 // pred_fallthru
        _
    $region24: #{double_conv_forward.14} parent=5 // pred_fallthru
      _
    %p154 = scmp.le.s32.totalorder 1, %s9
    %p155 = scmp.lt.s32.totalorder %s9, 3
    %p156 = pnand %p154, %p155
    %p157 = pneg %p156
    // Predicated region
    $region29: #{double_conv_forward.14} parent=5 // pred_check
      _
    $region30: #{double_conv_forward.14} parent=5 // pred_check_branch
      %159 = sbr.rel (%p156) target = $region32
    $region31: #{double_conv_forward.14} parent=5 // pred_region
      %s160 = ssub.s32 %s9, 1
      %p161 = scmp.lt.s32.totalorder %s18, 1
      %s162 = scalar_select %p161, %s18, 1
      %p163 = scmp.lt.s32.totalorder %s19, 0
      %s164 = scalar_select %p163, %s19, 0
      %s165 = sadd.s32 %s164, %s162
      %s166 = smul.addr %s165, 4
      %s167 = scalar_lea.vmem %s0, %s166
      %p168 = pneg %p49
      %p169 = pneg %p46
      %p170 = pneg %p70
      %p171 = pneg %p67
      %p172 = pneg %p91
      %p173 = pneg %p88
      %p174 = pneg %p119
      %p175 = pneg %p116
      %p176 = scmp.lt.s32.totalorder %s18, 1
      %s177 = scalar_select %p176, %s18, 1
      %p178 = scmp.lt.s32.totalorder %s19, 0
      %s179 = scalar_select %p178, %s19, 0
      %s180 = sadd.s32 %s179, %s177
      %s181 = smul.addr %s180, 4
      %s182 = scalar_lea.vmem %s3, %s181
      %p183 = scmp.lt.s32.totalorder %s18, 1
      %s184 = scalar_select %p183, %s18, 1
      %p185 = scmp.lt.s32.totalorder %s19, 0
      %s186 = scalar_select %p185, %s19, 0
      %s187 = sadd.s32 %s186, %s184
      %s188 = smul.addr %s187, 4
      %s189 = scalar_lea.vmem %s0, %s188
      %p190 = scmp.lt.s32.totalorder %s18, 1
      %s191 = scalar_select %p190, %s18, 1
      %p192 = scmp.lt.s32.totalorder %s19, 0
      %s193 = scalar_select %p192, %s19, 0
      %s194 = sadd.s32 %s193, %s191
      %s195 = smul.addr %s194, 4
      %s196 = scalar_lea.vmem %s3, %s195
      %v197 = vld [vmem:[%s189] sm:$0xf]
      %v198 = vunpack.c.l.bf16 %v197
      %v199 = vld [vmem:[%s1] sm:$0x1]
      %v201 = vlaneseq
      %v202 = vshrl.u32 %v201, 7
      %v203 = vsub.s32 0, %v202
      %v204 = vrot.slane %v199, %v203
      %v206 = vmul.f32 %v198, %v204
      %v207 = vld [vmem:[%s2] sm:$0x1]
      %v209 = vlaneseq
      %v210 = vshrl.u32 %v209, 7
      %v211 = vsub.s32 0, %v210
      %v212 = vrot.slane %v207, %v211
      %v214 = vadd.f32 %v206, %v212
      %v215 = vmax.f32 %v214, 0.0
      %v216 = vpack.c.bf16 %v215, %v215
      %vm217 = vcmask 519168
      %218 = vst.msk [vmem:[%s196] sm:$0xf] %vm217, %v216
      %p219 = scmp.lt.s32.totalorder %s18, 1
      %s220 = scalar_select %p219, %s18, 1
      %p221 = scmp.lt.s32.totalorder %s19, 0
      %s222 = scalar_select %p221, %s19, 0
      %s223 = sadd.s32 %s222, %s220
      %s224 = smul.addr %s223, 4
      %s225 = scalar_lea.vmem %s3, %s224
      // Predicated region
      $region33: #{double_conv_forward.14} parent=31 // pred_check
        %p226 = pneg %p116
      $region34: #{double_conv_forward.14} parent=31 // pred_check_branch
        %228 = sbr.rel (%p226) target = $region36
      $region35: #{double_conv_forward.14} parent=31 // pred_region
        _
      $region36: #{double_conv_forward.14} parent=31 // pred_fallthru
        _
    $region32: #{double_conv_forward.14} parent=5 // pred_fallthru
      _
    %p229 = scmp.le.s32.totalorder 2, %s9
    // Predicated region
    $region37: #{double_conv_forward.14} parent=5 // pred_check
      %p230 = pneg %p229
    $region38: #{double_conv_forward.14} parent=5 // pred_check_branch
      %232 = sbr.rel (%p230) target = $region40
    $region39: #{double_conv_forward.14} parent=5 // pred_region
      %s233 = ssub.s32 %s9, 2
      // Predicated region
      $region41: #{double_conv_forward.14} parent=39 // pred_check
        %p234 = pneg %p122
      $region42: #{double_conv_forward.14} parent=39 // pred_check_branch
        %236 = sbr.rel (%p234) target = $region44
      $region43: #{double_conv_forward.14} parent=39 // pred_region
        %p237 = scmp.lt.s32.totalorder %s20, 1
        %s238 = scalar_select %p237, %s20, 1
        %p239 = scmp.lt.s32.totalorder %s21, 0
        %s240 = scalar_select %p239, %s21, 0
        %s241 = sadd.s32 %s240, %s238
        %s242 = smul.addr %s241, 4
        %s243 = scalar_lea.vmem %s3, %s242
      $region44: #{double_conv_forward.14} parent=39 // pred_fallthru
        _
    $region40: #{double_conv_forward.14} parent=5 // pred_fallthru
      _
  $region6: #{double_conv_forward.14} parent=0 // loop_footer
    %s13 = sadd.s32 1, %s9
  $region7: #{double_conv_forward.14} parent=0 // loop_footer_branch
    %8 = sbr.rel target = $region3
  $region8: #{double_conv_forward.14} parent=0 // loop_exit
    _

// kernel: double_conv_forward.10
$region0: #{double_conv_forward.10}
  #allocation0 [shape = 'u32[]', space=smem, size = 0x4, offset = 0x4, fixed_abs, tag = 'smem constant byte address 0x4 - core index']
  #allocation1 [shape = 'u32[144,128]{1,0:T(1,128)}', space=vmem, size = 0x12000, scoped, tag = 'internal scratch']
  %s0 = inlined_call_operand.vmem [shape: bf16[2,10,10,8], index: 0, kind: input, shape index: {}, may-alias: {0,1}]
  %s1 = inlined_call_operand.vmem [shape: bf16[2,10,10,8], index: 1, kind: input, shape index: {}, may-alias: {0,1}]
  %s2 = inlined_call_operand.vmem [shape: bf16[72,8], index: 2, kind: input, shape index: {}]
  %s3 = inlined_call_operand.vmem [shape: bf16[2,8,8,8], index: 3, kind: output, shape index: {0}]
  %s4 = inlined_call_operand.vmem [shape: f32[2,1,2,8], index: 4, kind: output, shape index: {1}]
  %5 = xla_tuple %s3, %s4
  %s6 = sld [smem:[#allocation0]]
  $region53: #{double_conv_forward.10} parent=0
    _
  %s8 = ssub.s32 1, %s6
  %s9 = scalar_select 0, %s8, %s6
  loop: start=0, step=1, limit=4
  $region2: #{double_conv_forward.10} parent=0 // loop_pre_header
    _
  $region3: #{double_conv_forward.10} parent=0 // loop_header
    %s11 = sphi 0, %s15
    %p12 = scmp.ge.s32.totalorder %s11, 4
    %s18 = sphi 0, %s30
    %s19 = sphi 0, %s26
    %s20 = sphi 0, %s18
    %s21 = sphi 0, %s19
    %s22 = sphi 0, %s20
    %s23 = sphi 0, %s21
    %s35 = sphi 0, %s37
    %s38 = sphi 0, %s35
    %s39 = sphi 0, %s38
    %s55 = sphi 0, %s39
    %s67 = sphi 0, %s69
    %s70 = sphi 0, %s67
    %s71 = sphi 0, %s70
    %s87 = sphi 0, %s71
    %s91 = sphi 0, %s91
    %s93 = sphi 0, %s91
    %s94 = sphi 0, %s93
    %s108 = sphi 0, %s94
    %s116 = sphi 0, %s118
    %s119 = sphi 0, %s116
    %s120 = sphi 0, %s119
    %s136 = sphi 0, %s120
    %s144 = sphi 0, %s146
    %s147 = sphi 0, %s144
    %s148 = sphi 0, %s147
    %s164 = sphi 0, %s148
  $region4: #{double_conv_forward.10} parent=0 // loop_header_branch
    %14 = sbr.rel (%p12) target = $region8
  $region5: #{double_conv_forward.10} parent=0 // loop_body
    %s16 = ssub.s32 %s11, 1
    %s17 = ssub.s32 %s11, 2
    %s24 = sadd.s32 1, %s19
    %p25 = scmp.ge.s32.totalorder %s24, 1
    %s26 = scalar_select %p25, 0, %s24
    %s27 = sadd.s32 1, %s18
    %s28 = scalar_select %p25, %s27, %s18
    %p29 = scmp.ge.s32.totalorder %s28, 2
    %s30 = scalar_select %p29, 0, %s28
    %s31 = ssub.s32 %s18, %s30
    %s32 = ssub.s32 %s19, %s26
    %s33 = sor.u32 %s31, %s32
    %p34 = scmp.eq.s32.totalorder %s33, 0
    %s36 = sadd.s32 %s35, 1
    %s37 = scalar_select %p34, %s35, %s36
    %p40 = pneg %p34
    %p41 = scmp.eq.s32.totalorder %s11, 1
    %p42 = por %p40, %p41
    %p43 = scmp.ne.s32.totalorder %s35, %s38
    %p44 = scmp.eq.s32.totalorder %s11, 0
    %p45 = por %p43, %p44
    %p46 = scmp.ne.s32.totalorder %s35, %s38
    %p47 = scmp.eq.s32.totalorder %s16, 1
    %p48 = por %p46, %p47
    %p49 = scmp.ne.s32.totalorder %s38, %s39
    %p50 = scmp.eq.s32.totalorder %s16, 0
    %p51 = por %p49, %p50
    %p52 = scmp.ne.s32.totalorder %s38, %s39
    %p53 = scmp.eq.s32.totalorder %s17, 1
    %p54 = por %p52, %p53
    %p56 = scmp.ne.s32.totalorder %s39, %s55
    %p57 = scmp.eq.s32.totalorder %s17, 0
    %p58 = por %p56, %p57
    %s59 = sadd.s32 %s19, 1
    %s60 = smul.u32 %s59, 4
    %s61 = sadd.s32 %s26, 1
    %s62 = smul.u32 %s61, 4
    %s63 = ssub.s32 %s18, %s30
    %s64 = ssub.s32 %s60, %s62
    %s65 = sor.u32 %s63, %s64
    %p66 = scmp.eq.s32.totalorder %s65, 0
    %s68 = sadd.s32 %s67, 1
    %s69 = scalar_select %p66, %s67, %s68
    %p72 = pneg %p66
    %p73 = scmp.eq.s32.totalorder %s11, 1
    %p74 = por %p72, %p73
    %p75 = scmp.ne.s32.totalorder %s67, %s70
    %p76 = scmp.eq.s32.totalorder %s11, 0
    %p77 = por %p75, %p76
    %p78 = scmp.ne.s32.totalorder %s67, %s70
    %p79 = scmp.eq.s32.totalorder %s16, 1
    %p80 = por %p78, %p79
    %p81 = scmp.ne.s32.totalorder %s70, %s71
    %p82 = scmp.eq.s32.totalorder %s16, 0
    %p83 = por %p81, %p82
    %p84 = scmp.ne.s32.totalorder %s70, %s71
    %p85 = scmp.eq.s32.totalorder %s17, 1
    %p86 = por %p84, %p85
    %p88 = scmp.ne.s32.totalorder %s71, %s87
    %p89 = scmp.eq.s32.totalorder %s17, 0
    %p90 = por %p88, %p89
    %s92 = sadd.s32 %s91, 1
    %p95 = scmp.eq.s32.totalorder %s11, 1
    %p96 = scmp.ne.s32.totalorder %s91, %s93
    %p97 = scmp.eq.s32.totalorder %s11, 0
    %p98 = por %p96, %p97
    %p99 = scmp.ne.s32.totalorder %s91, %s93
    %p100 = scmp.eq.s32.totalorder %s16, 1
    %p101 = por %p99, %p100
    %p102 = scmp.ne.s32.totalorder %s93, %s94
    %p103 = scmp.eq.s32.totalorder %s16, 0
    %p104 = por %p102, %p103
    %p105 = scmp.ne.s32.totalorder %s93, %s94
    %p106 = scmp.eq.s32.totalorder %s17, 1
    %p107 = por %p105, %p106
    %p109 = scmp.ne.s32.totalorder %s94, %s108
    %p110 = scmp.eq.s32.totalorder %s17, 0
    %p111 = por %p109, %p110
    %s112 = ssub.s32 %s18, %s30
    %s113 = ssub.s32 %s19, %s26
    %s114 = sor.u32 %s112, %s113
    %p115 = scmp.eq.s32.totalorder %s114, 0
    %s117 = sadd.s32 %s116, 1
    %s118 = scalar_select %p115, %s116, %s117
    %p121 = pneg %p115
    %p122 = scmp.eq.s32.totalorder %s11, 1
    %p123 = por %p121, %p122
    %p124 = scmp.ne.s32.totalorder %s116, %s119
    %p125 = scmp.eq.s32.totalorder %s11, 0
    %p126 = por %p124, %p125
    %p127 = scmp.ne.s32.totalorder %s116, %s119
    %p128 = scmp.eq.s32.totalorder %s16, 1
    %p129 = por %p127, %p128
    %p130 = scmp.ne.s32.totalorder %s119, %s120
    %p131 = scmp.eq.s32.totalorder %s16, 0
    %p132 = por %p130, %p131
    %p133 = scmp.ne.s32.totalorder %s119, %s120
    %p134 = scmp.eq.s32.totalorder %s17, 1
    %p135 = por %p133, %p134
    %p137 = scmp.ne.s32.totalorder %s120, %s136
    %p138 = scmp.eq.s32.totalorder %s17, 0
    %p139 = por %p137, %p138
    %s140 = ssub.s32 %s18, %s30
    %s141 = ssub.s32 %s19, %s26
    %s142 = sor.u32 %s140, %s141
    %p143 = scmp.eq.s32.totalorder %s142, 0
    %s145 = sadd.s32 %s144, 1
    %s146 = scalar_select %p143, %s144, %s145
    %p149 = pneg %p143
    %p150 = scmp.eq.s32.totalorder %s11, 1
    %p151 = por %p149, %p150
    %p152 = scmp.ne.s32.totalorder %s144, %s147
    %p153 = scmp.eq.s32.totalorder %s11, 0
    %p154 = por %p152, %p153
    %p155 = scmp.ne.s32.totalorder %s144, %s147
    %p156 = scmp.eq.s32.totalorder %s16, 1
    %p157 = por %p155, %p156
    %p158 = scmp.ne.s32.totalorder %s147, %s148
    %p159 = scmp.eq.s32.totalorder %s16, 0
    %p160 = por %p158, %p159
    %p161 = scmp.ne.s32.totalorder %s147, %s148
    %p162 = scmp.eq.s32.totalorder %s17, 1
    %p163 = por %p161, %p162
    %p165 = scmp.ne.s32.totalorder %s148, %s164
    %p166 = scmp.eq.s32.totalorder %s17, 0
    %p167 = por %p165, %p166
    %p168 = scmp.le.s32.totalorder 1, %s11
    %p169 = scmp.lt.s32.totalorder %s11, 3
    %p170 = pnand %p168, %p169
    %p171 = pneg %p170
    // Predicated region
    $region9: #{double_conv_forward.10} parent=5 // pred_check
      _
    $region10: #{double_conv_forward.10} parent=5 // pred_check_branch
      %173 = sbr.rel (%p170) target = $region12
    $region11: #{double_conv_forward.10} parent=5 // pred_region
      %s174 = ssub.s32 %s11, 1
      // Predicated region
      $region13: #{double_conv_forward.10} parent=11 // pred_check
        %p175 = pneg %p104
      $region14: #{double_conv_forward.10} parent=11 // pred_check_branch
        %177 = sbr.rel (%p175) target = $region16
      $region15: #{double_conv_forward.10} parent=11 // pred_region
        _
      $region16: #{double_conv_forward.10} parent=11 // pred_fallthru
        _
    $region12: #{double_conv_forward.10} parent=5 // pred_fallthru
      _
    %p178 = scmp.lt.s32.totalorder %s11, 2
    // Predicated region
    $region17: #{double_conv_forward.10} parent=5 // pred_check
      %p179 = pneg %p178
    $region18: #{double_conv_forward.10} parent=5 // pred_check_branch
      %181 = sbr.rel (%p179) target = $region20
    $region19: #{double_conv_forward.10} parent=5 // pred_region
      // Predicated region
      $region21: #{double_conv_forward.10} parent=19 // pred_check
        %p182 = pneg %p45
      $region22: #{double_conv_forward.10} parent=19 // pred_check_branch
        %184 = sbr.rel (%p182) target = $region24
      $region23: #{double_conv_forward.10} parent=19 // pred_region
        %s185 = smul.u32 8, %s19
        %s186 = ssub.s32 10, %s185
        %p187 = scmp.lt.s32.totalorder %s186, 8
        %s188 = scalar_select %p187, %s186, 8
        %s189 = smul.u32 64, %s188
        %s190 = smul.u32 %s189, 2
        %p191 = scmp.lt.s32.totalorder %s18, 1
        %s192 = scalar_select %p191, %s18, 1
        %p193 = scmp.lt.s32.totalorder %s185, 9
        %s194 = scalar_select %p193, %s185, 9
        %s195 = smul.addr %s194, 2
        %s196 = smul.addr %s192, 20
        %s197 = sadd.s32 %s195, %s196
        %s198 = smul.addr %s197, 4
        %s199 = scalar_lea.vmem %s0, %s198
        %s200 = smul.u32 8, %s19
        %s201 = ssub.s32 10, %s200
        %p202 = scmp.lt.s32.totalorder %s201, 8
        %s203 = scalar_select %p202, %s201, 8
        %s204 = smul.u32 64, %s203
        %s205 = smul.u32 %s204, 2
      $region24: #{double_conv_forward.10} parent=19 // pred_fallthru
        _
      // Predicated region
      $region25: #{double_conv_forward.10} parent=19 // pred_check
        %p206 = pneg %p77
      $region26: #{double_conv_forward.10} parent=19 // pred_check_branch
        %208 = sbr.rel (%p206) target = $region28
      $region27: #{double_conv_forward.10} parent=19 // pred_region
        %s209 = sadd.s32 %s19, 1
        %s210 = smul.u32 %s209, 4
        %s211 = smul.u32 2, %s210
        %p212 = scmp.lt.s32.totalorder %s18, 1
        %s213 = scalar_select %p212, %s18, 1
        %p214 = scmp.lt.s32.totalorder %s211, 9
        %s215 = scalar_select %p214, %s211, 9
        %s216 = smul.addr %s215, 2
        %s217 = smul.addr %s213, 20
        %s218 = sadd.s32 %s216, %s217
        %s219 = smul.addr %s218, 4
        %s220 = scalar_lea.vmem %s1, %s219
        %s221 = sadd.s32 %s19, 1
        %s222 = smul.u32 %s221, 4
        %s223 = smul.u32 2, %s222
      $region28: #{double_conv_forward.10} parent=19 // pred_fallthru
        _
    $region20: #{double_conv_forward.10} parent=5 // pred_fallthru
      _
    %p224 = scmp.le.s32.totalorder 1, %s11
    %p225 = scmp.lt.s32.totalorder %s11, 3
    %p226 = pnand %p224, %p225
    %p227 = pneg %p226
    // Predicated region
    $region29: #{double_conv_forward.10} parent=5 // pred_check
      _
    $region30: #{double_conv_forward.10} parent=5 // pred_check_branch
      %229 = sbr.rel (%p226) target = $region32
    $region31: #{double_conv_forward.10} parent=5 // pred_region
      %s230 = ssub.s32 %s11, 1
      %s231 = smul.u32 8, %s21
      %s232 = ssub.s32 10, %s231
      %p233 = scmp.lt.s32.totalorder %s232, 8
      %s234 = scalar_select %p233, %s232, 8
      %s235 = smul.u32 64, %s234
      %s236 = smul.u32 %s235, 2
      %p237 = scmp.lt.s32.totalorder %s20, 1
      %s238 = scalar_select %p237, %s20, 1
      %p239 = scmp.lt.s32.totalorder %s231, 9
      %s240 = scalar_select %p239, %s231, 9
      %s241 = smul.addr %s240, 2
      %s242 = smul.addr %s238, 20
      %s243 = sadd.s32 %s241, %s242
      %s244 = smul.addr %s243, 4
      %s245 = scalar_lea.vmem %s0, %s244
      %p246 = pneg %p51
      %p247 = pneg %p48
      %s248 = sadd.s32 %s21, 1
      %s249 = smul.u32 %s248, 4
      %s250 = smul.u32 2, %s249
      %p251 = scmp.lt.s32.totalorder %s20, 1
      %s252 = scalar_select %p251, %s20, 1
      %p253 = scmp.lt.s32.totalorder %s250, 9
      %s254 = scalar_select %p253, %s250, 9
      %s255 = smul.addr %s254, 2
      %s256 = smul.addr %s252, 20
      %s257 = sadd.s32 %s255, %s256
      %s258 = smul.addr %s257, 4
      %s259 = scalar_lea.vmem %s1, %s258
      %p260 = pneg %p83
      %p261 = pneg %p80
      %p262 = pneg %p104
      %p263 = pneg %p101
      %p264 = pneg %p132
      %p265 = pneg %p129
      %s266 = smul.u32 8, %s21
      %p267 = scmp.lt.s32.totalorder %s20, 1
      %s268 = scalar_select %p267, %s20, 1
      %p269 = scmp.lt.s32.totalorder %s266, 7
      %s270 = scalar_select %p269, %s266, 7
      %s271 = smul.addr %s268, 8
      %s272 = sadd.s32 %s270, %s271
      %s273 = smul.addr %s272, 4
      %s274 = scalar_lea.vmem %s3, %s273
      %p275 = pneg %p160
      %p276 = pneg %p157
      %p277 = scmp.lt.s32.totalorder %s20, 1
      %s278 = scalar_select %p277, %s20, 1
      %p279 = scmp.lt.s32.totalorder %s21, 0
      %s280 = scalar_select %p279, %s21, 0
      %s281 = sadd.s32 %s280, %s278
      %s282 = smul.addr %s281, 2
      %s283 = scalar_lea.vmem %s4, %s282
      %s284 = smul.u32 8, %s21
      %s285 = ssub.s32 10, %s284
      %p286 = scmp.lt.s32.totalorder %s285, 8
      %s287 = scalar_select %p286, %s285, 8
      %s288 = smul.u32 64, %s287
      %s289 = smul.u32 %s288, 2
      %p290 = scmp.lt.s32.totalorder %s20, 1
      %s291 = scalar_select %p290, %s20, 1
      %p292 = scmp.lt.s32.totalorder %s284, 9
      %s293 = scalar_select %p292, %s284, 9
      %s294 = smul.addr %s293, 2
      %s295 = smul.addr %s291, 20
      %s296 = sadd.s32 %s294, %s295
      %s297 = smul.addr %s296, 4
      %s298 = scalar_lea.vmem %s0, %s297
      %s299 = smul.u32 8, %s21
      %s300 = ssub.s32 10, %s299
      %p301 = scmp.lt.s32.totalorder %s300, 8
      %s302 = scalar_select %p301, %s300, 8
      %s303 = smul.u32 64, %s302
      %s304 = smul.u32 %s303, 2
      %s305 = sadd.s32 %s21, 1
      %s306 = smul.u32 %s305, 4
      %s307 = smul.u32 2, %s306
      %p308 = scmp.lt.s32.totalorder %s20, 1
      %s309 = scalar_select %p308, %s20, 1
      %p310 = scmp.lt.s32.totalorder %s307, 9
      %s311 = scalar_select %p310, %s307, 9
      %s312 = smul.addr %s311, 2
      %s313 = smul.addr %s309, 20
      %s314 = sadd.s32 %s312, %s313
      %s315 = smul.addr %s314, 4
      %s316 = scalar_lea.vmem %s1, %s315
      %s317 = sadd.s32 %s21, 1
      %s318 = smul.u32 %s317, 4
      %s319 = smul.u32 2, %s318
      %s320 = smul.u32 8, %s21
      %p321 = scmp.lt.s32.totalorder %s20, 1
      %s322 = scalar_select %p321, %s20, 1
      %p323 = scmp.lt.s32.totalorder %s320, 7
      %s324 = scalar_select %p323, %s320, 7
      %s325 = smul.addr %s322, 8
      %s326 = sadd.s32 %s324, %s325
      %s327 = smul.addr %s326, 4
      %s328 = scalar_lea.vmem %s3, %s327
      %s329 = smul.u32 8, %s21
      %p330 = scmp.lt.s32.totalorder %s20, 1
      %s331 = scalar_select %p330, %s20, 1
      %p332 = scmp.lt.s32.totalorder %s21, 0
      %s333 = scalar_select %p332, %s21, 0
      %s334 = sadd.s32 %s333, %s331
      %s335 = smul.addr %s334, 2
      %s336 = scalar_lea.vmem %s4, %s335
      %v338 = vld [vmem:[%s298] sm:$0xf]
      %v339 = vld [vmem:[%s298 + $0x4] sm:$0x1]
      %v340 = vld [vmem:[%s298 + $0x8] sm:$0xf]
      %v341 = vld [vmem:[%s298 + $0xc] sm:$0x1]
      %v342 = vld [vmem:[%s298 + $0x10] sm:$0xf]
      %v343 = vld [vmem:[%s298 + $0x14] sm:$0x1]
      %v344 = vld [vmem:[%s298 + $0x18] sm:$0xf]
      %v345 = vld [vmem:[%s298 + $0x1c] sm:$0x1]
      %v346 = vld [vmem:[%s298 + $0x20] sm:$0xf]
      %v347 = vld [vmem:[%s298 + $0x24] sm:$0x1]
      %v348 = vld [vmem:[%s298 + $0x28] sm:$0xf]
      %v349 = vld [vmem:[%s298 + $0x2c] sm:$0x1]
      %v350 = vld [vmem:[%s298 + $0x30] sm:$0xf]
      %v351 = vld [vmem:[%s298 + $0x34] sm:$0x1]
      %v352 = vld [vmem:[%s298 + $0x38] sm:$0xf]
      %v353 = vld [vmem:[%s298 + $0x3c] sm:$0x1]
      %v354 = vld [vmem:[%s316] sm:$0xf]
      %v355 = vld [vmem:[%s316 + $0x4] sm:$0x1]
      %v356 = vld [vmem:[%s316 + $0x8] sm:$0xf]
      %v357 = vld [vmem:[%s316 + $0xc] sm:$0x1]
      %vm358 = vsmask.f32 3328
      %vm359 = vsmask.f32 7440
      %vm360 = vmor %vm358, %vm359
      %v362 = vshrl.u32 %v338, 16
      %v364 = vrot.slane %v362, 4
      %v365 = vshll.u32 %v338, 16
      %v367 = vrot.slane %v365, 5
      %v368 = vor.u32 %v364, %v367
      %v369 = vrot.slane %v368, 4
      %v371 = vshll.u32 %v339, 16
      %v373 = vrot.slane %v371, 5
      %v374 = vsel %vm360, %v369, %v373
      %v376 = vshrl.u32 %v340, 16
      %v378 = vrot.slane %v376, 4
      %v379 = vshll.u32 %v340, 16
      %v381 = vrot.slane %v379, 5
      %v382 = vor.u32 %v378, %v381
      %v383 = vrot.slane %v382, 4
      %v385 = vshll.u32 %v341, 16
      %v387 = vrot.slane %v385, 5
      %v388 = vsel %vm360, %v383, %v387
      %v390 = vshrl.u32 %v342, 16
      %v392 = vrot.slane %v390, 4
      %v393 = vshll.u32 %v342, 16
      %v395 = vrot.slane %v393, 5
      %v396 = vor.u32 %v392, %v395
      %v397 = vrot.slane %v396, 4
      %v399 = vshll.u32 %v343, 16
      %v401 = vrot.slane %v399, 5
      %v402 = vsel %vm360, %v397, %v401
      %v404 = vshrl.u32 %v344, 16
      %v406 = vrot.slane %v404, 4
      %v407 = vshll.u32 %v344, 16
      %v409 = vrot.slane %v407, 5
      %v410 = vor.u32 %v406, %v409
      %v411 = vrot.slane %v410, 4
      %v413 = vshll.u32 %v345, 16
      %v415 = vrot.slane %v413, 5
      %v416 = vsel %vm360, %v411, %v415
      %v418 = vshrl.u32 %v346, 16
      %v420 = vrot.slane %v418, 4
      %v421 = vshll.u32 %v346, 16
      %v423 = vrot.slane %v421, 5
      %v424 = vor.u32 %v420, %v423
      %v425 = vrot.slane %v424, 4
      %v427 = vshll.u32 %v347, 16
      %v429 = vrot.slane %v427, 5
      %v430 = vsel %vm360, %v425, %v429
      %v432 = vshrl.u32 %v348, 16
      %v434 = vrot.slane %v432, 4
      %v435 = vshll.u32 %v348, 16
      %v437 = vrot.slane %v435, 5
      %v438 = vor.u32 %v434, %v437
      %v439 = vrot.slane %v438, 4
      %v441 = vshll.u32 %v349, 16
      %v443 = vrot.slane %v441, 5
      %v444 = vsel %vm360, %v439, %v443
      %v446 = vshrl.u32 %v350, 16
      %v448 = vrot.slane %v446, 4
      %v449 = vshll.u32 %v350, 16
      %v451 = vrot.slane %v449, 5
      %v452 = vor.u32 %v448, %v451
      %v453 = vrot.slane %v452, 4
      %v455 = vshll.u32 %v351, 16
      %v457 = vrot.slane %v455, 5
      %v458 = vsel %vm360, %v453, %v457
      %v460 = vshrl.u32 %v352, 16
      %v462 = vrot.slane %v460, 4
      %v463 = vshll.u32 %v352, 16
      %v465 = vrot.slane %v463, 5
      %v466 = vor.u32 %v462, %v465
      %v467 = vrot.slane %v466, 4
      %v469 = vshll.u32 %v353, 16
      %v471 = vrot.slane %v469, 5
      %v472 = vsel %vm360, %v467, %v471
      %vm489 = vcmask 1042432
      %vm490 = vcmask 1046532
      %vm491 = vmor %vm489, %vm490
      %v492 = vrot.slane %v338, 5
      %v493 = vrot.slane %v492, 4
      %v494 = vrot.slane %v339, 5
      %v495 = vsel %vm491, %v493, %v494
      %v496 = vrot.slane %v340, 5
      %v497 = vrot.slane %v496, 4
      %v498 = vrot.slane %v341, 5
      %v499 = vsel %vm491, %v497, %v498
      %v500 = vrot.slane %v342, 5
      %v501 = vrot.slane %v500, 4
      %v502 = vrot.slane %v343, 5
      %v503 = vsel %vm491, %v501, %v502
      %v504 = vrot.slane %v344, 5
      %v505 = vrot.slane %v504, 4
      %v506 = vrot.slane %v345, 5
      %v507 = vsel %vm491, %v505, %v506
      %v508 = vrot.slane %v346, 5
      %v509 = vrot.slane %v508, 4
      %v510 = vrot.slane %v347, 5
      %v511 = vsel %vm491, %v509, %v510
      %v512 = vrot.slane %v348, 5
      %v513 = vrot.slane %v512, 4
      %v514 = vrot.slane %v349, 5
      %v515 = vsel %vm491, %v513, %v514
      %v516 = vrot.slane %v350, 5
      %v517 = vrot.slane %v516, 4
      %v518 = vrot.slane %v351, 5
      %v519 = vsel %vm491, %v517, %v518
      %v520 = vrot.slane %v352, 5
      %v521 = vrot.slane %v520, 4
      %v522 = vrot.slane %v353, 5
      %v523 = vsel %vm491, %v521, %v522
      %v525 = vshrl.u32 %v354, 16
      %v527 = vrot.slane %v525, 4
      %v528 = vshll.u32 %v354, 16
      %v530 = vrot.slane %v528, 5
      %v531 = vor.u32 %v527, %v530
      %v532 = vrot.slane %v531, 4
      %v534 = vshll.u32 %v355, 16
      %v536 = vrot.slane %v534, 5
      %v537 = vsel %vm360, %v532, %v536
      %v540 = vrot.slane %v354, 5
      %v541 = vrot.slane %v540, 4
      %v542 = vrot.slane %v355, 5
      %v543 = vsel %vm491, %v541, %v542
      %v545 = vshrl.u32 %v356, 16
      %v547 = vrot.slane %v545, 4
      %v548 = vshll.u32 %v356, 16
      %v550 = vrot.slane %v548, 5
      %v551 = vor.u32 %v547, %v550
      %v552 = vrot.slane %v551, 4
      %v554 = vshll.u32 %v357, 16
      %v556 = vrot.slane %v554, 5
      %v557 = vsel %vm360, %v552, %v556
      %v560 = vrot.slane %v356, 5
      %v561 = vrot.slane %v560, 4
      %v562 = vrot.slane %v357, 5
      %v563 = vsel %vm491, %v561, %v562
      %v564 = vunpack.c.l.b16 %v338
      %v565 = vunpack.c.l.b16 %v340
      %v566 = vunpack.c.l.b16 %v342
      %v567 = vunpack.c.l.b16 %v344
      %v568 = vunpack.c.l.b16 %v346
      %v569 = vunpack.c.l.b16 %v348
      %v570 = vunpack.c.l.b16 %v350
      %v571 = vunpack.c.l.b16 %v352
      %v572 = vpack.c.b16 %v565, %v564
      %v573 = vpack.c.b16 %v567, %v566
      %v574 = vpack.c.b16 %v569, %v568
      %v575 = vpack.c.b16 %v571, %v570
      %v576 = vunpack.c.l.b16 %v374
      %v577 = vunpack.c.l.b16 %v388
      %v578 = vunpack.c.l.b16 %v402
      %v579 = vunpack.c.l.b16 %v416
      %v580 = vunpack.c.l.b16 %v430
      %v581 = vunpack.c.l.b16 %v444
      %v582 = vunpack.c.l.b16 %v458
      %v583 = vunpack.c.l.b16 %v472
      %v584 = vpack.c.b16 %v577, %v576
      %v585 = vpack.c.b16 %v579, %v578
      %v586 = vpack.c.b16 %v581, %v580
      %v587 = vpack.c.b16 %v583, %v582
      %588 = vrot.lane.b32.xlu0 %v584, 8
      %v589 = vpop.permute.xlu0 %588
      %590 = vrot.lane.b32.xlu0 %v585, 8
      %v591 = vpop.permute.xlu0 %590
      %592 = vrot.lane.b32.xlu0 %v586, 8
      %v593 = vpop.permute.xlu0 %592
      %594 = vrot.lane.b32.xlu0 %v587, 8
      %v595 = vpop.permute.xlu0 %594
      %v596 = vunpack.c.l.b16 %v495
      %v597 = vunpack.c.l.b16 %v499
      %v598 = vunpack.c.l.b16 %v503
      %v599 = vunpack.c.l.b16 %v507
      %v600 = vunpack.c.l.b16 %v511
      %v601 = vunpack.c.l.b16 %v515
      %v602 = vunpack.c.l.b16 %v519
      %v603 = vunpack.c.l.b16 %v523
      %v604 = vpack.c.b16 %v597, %v596
      %v605 = vpack.c.b16 %v599, %v598
      %v606 = vpack.c.b16 %v601, %v600
      %v607 = vpack.c.b16 %v603, %v602
      %608 = vrot.lane.b32.xlu0 %v604, 16
      %v609 = vpop.permute.xlu0 %608
      %610 = vrot.lane.b32.xlu0 %v605, 16
      %v611 = vpop.permute.xlu0 %610
      %612 = vrot.lane.b32.xlu0 %v606, 16
      %v613 = vpop.permute.xlu0 %612
      %614 = vrot.lane.b32.xlu0 %v607, 16
      %v615 = vpop.permute.xlu0 %614
      %v616 = vunpack.c.l.b16 %v354
      %v617 = vpack.c.b16 %v566, %v565
      %v618 = vpack.c.b16 %v568, %v567
      %v619 = vpack.c.b16 %v570, %v569
      %v620 = vpack.c.b16 %v616, %v571
      %621 = vrot.lane.b32.xlu0 %v617, 24
      %v622 = vpop.permute.xlu0 %621
      %623 = vrot.lane.b32.xlu0 %v618, 24
      %v624 = vpop.permute.xlu0 %623
      %625 = vrot.lane.b32.xlu0 %v619, 24
      %v626 = vpop.permute.xlu0 %625
      %627 = vrot.lane.b32.xlu0 %v620, 24
      %v628 = vpop.permute.xlu0 %627
      %v629 = vunpack.c.l.b16 %v537
      %v630 = vpack.c.b16 %v578, %v577
      %v631 = vpack.c.b16 %v580, %v579
      %v632 = vpack.c.b16 %v582, %v581
      %v633 = vpack.c.b16 %v629, %v583
      %634 = vrot.lane.b32.xlu0 %v630, 32
      %v635 = vpop.permute.xlu0 %634
      %636 = vrot.lane.b32.xlu0 %v631, 32
      %v637 = vpop.permute.xlu0 %636
      %638 = vrot.lane.b32.xlu0 %v632, 32
      %v639 = vpop.permute.xlu0 %638
      %640 = vrot.lane.b32.xlu0 %v633, 32
      %v641 = vpop.permute.xlu0 %640
      %v642 = vunpack.c.l.b16 %v543
      %v643 = vpack.c.b16 %v598, %v597
      %v644 = vpack.c.b16 %v600, %v599
      %v645 = vpack.c.b16 %v602, %v601
      %v646 = vpack.c.b16 %v642, %v603
      %647 = vrot.lane.b32.xlu0 %v643, 40
      %v648 = vpop.permute.xlu0 %647
      %649 = vrot.lane.b32.xlu0 %v644, 40
      %v650 = vpop.permute.xlu0 %649
      %651 = vrot.lane.b32.xlu0 %v645, 40
      %v652 = vpop.permute.xlu0 %651
      %653 = vrot.lane.b32.xlu0 %v646, 40
      %v654 = vpop.permute.xlu0 %653
      %v655 = vunpack.c.l.b16 %v356
      %v656 = vpack.c.b16 %v655, %v616
      %657 = vrot.lane.b32.xlu0 %v573, 48
      %v658 = vpop.permute.xlu0 %657
      %659 = vrot.lane.b32.xlu0 %v574, 48
      %v660 = vpop.permute.xlu0 %659
      %661 = vrot.lane.b32.xlu0 %v575, 48
      %v662 = vpop.permute.xlu0 %661
      %663 = vrot.lane.b32.xlu0 %v656, 48
      %v664 = vpop.permute.xlu0 %663
      %v665 = vunpack.c.l.b16 %v557
      %v666 = vpack.c.b16 %v665, %v629
      %667 = vrot.lane.b32.xlu0 %v585, 56
      %v668 = vpop.permute.xlu0 %667
      %669 = vrot.lane.b32.xlu0 %v586, 56
      %v670 = vpop.permute.xlu0 %669
      %671 = vrot.lane.b32.xlu0 %v587, 56
      %v672 = vpop.permute.xlu0 %671
      %673 = vrot.lane.b32.xlu0 %v666, 56
      %v674 = vpop.permute.xlu0 %673
      %v675 = vunpack.c.l.b16 %v563
      %v676 = vpack.c.b16 %v675, %v642
      %677 = vrot.lane.b32.xlu0 %v605, 64
      %v678 = vpop.permute.xlu0 %677
      %679 = vrot.lane.b32.xlu0 %v606, 64
      %v680 = vpop.permute.xlu0 %679
      %681 = vrot.lane.b32.xlu0 %v607, 64
      %v682 = vpop.permute.xlu0 %681
      %683 = vrot.lane.b32.xlu0 %v676, 64
      %v684 = vpop.permute.xlu0 %683
      %vm685 = vcmask 64512
      %v688 = vsel %vm685, %v572, %v589
      %v691 = vsel %vm685, %v573, %v591
      %v694 = vsel %vm685, %v574, %v593
      %v697 = vsel %vm685, %v575, %v595
      %vm698 = vcmask 130048
      %v700 = vsel %vm698, %v688, %v609
      %v702 = vsel %vm698, %v691, %v611
      %v704 = vsel %vm698, %v694, %v613
      %v706 = vsel %vm698, %v697, %v615
      %vm707 = vcmask 195584
      %v709 = vsel %vm707, %v700, %v622
      %v711 = vsel %vm707, %v702, %v624
      %v713 = vsel %vm707, %v704, %v626
      %v715 = vsel %vm707, %v706, %v628
      %vm716 = vcmask 261120
      %v718 = vsel %vm716, %v709, %v635
      %v720 = vsel %vm716, %v711, %v637
      %v722 = vsel %vm716, %v713, %v639
      %v724 = vsel %vm716, %v715, %v641
      %vm725 = vcmask 326656
      %v727 = vsel %vm725, %v718, %v648
      %v729 = vsel %vm725, %v720, %v650
      %v731 = vsel %vm725, %v722, %v652
      %v733 = vsel %vm725, %v724, %v654
      %vm734 = vcmask 392192
      %v736 = vsel %vm734, %v727, %v658
      %v738 = vsel %vm734, %v729, %v660
      %v740 = vsel %vm734, %v731, %v662
      %v742 = vsel %vm734, %v733, %v664
      %vm743 = vcmask 457728
      %v745 = vsel %vm743, %v736, %v668
      %v747 = vsel %vm743, %v738, %v670
      %v749 = vsel %vm743, %v740, %v672
      %v751 = vsel %vm743, %v742, %v674
      %vm752 = vcmask 523264
      %v754 = vsel %vm752, %v745, %v678
      %v756 = vsel %vm752, %v747, %v680
      %v758 = vsel %vm752, %v749, %v682
      %v760 = vsel %vm752, %v751, %v684
      %v761 = vld [vmem:[%s2] sm:$0xf]
      %v762 = vld [vmem:[%s2 + $0x4] sm:$0xf]
      %v763 = vld [vmem:[%s2 + $0x8] sm:$0xf]
      %v764 = vld [vmem:[%s2 + $0xc] sm:$0xf]
      %v765 = vld [vmem:[%s2 + $0x10] sm:$0xf]
      %v766 = vld [vmem:[%s2 + $0x14] sm:$0xf]
      %v767 = vld [vmem:[%s2 + $0x18] sm:$0xf]
      %v768 = vld [vmem:[%s2 + $0x1c] sm:$0xf]
      %v769 = vld [vmem:[%s2 + $0x20] sm:$0xf]
      %v779 = vunpack.c.l.b16 %v761
      %v780 = vunpack.c.l.b16 %v762
      %v781 = vunpack.c.l.b16 %v763
      %v782 = vunpack.c.l.b16 %v764
      %v783 = vunpack.c.l.b16 %v765
      %v784 = vunpack.c.l.b16 %v766
      %v785 = vunpack.c.l.b16 %v767
      %v786 = vunpack.c.l.b16 %v768
      %v787 = vunpack.c.l.b16 %v769
      %v788 = vpack.c.b16 %v780, %v779
      %v789 = vpack.c.b16 %v782, %v781
      %v790 = vpack.c.b16 %v784, %v783
      %v791 = vpack.c.b16 %v786, %v785
      %v792 = vpack.c.b16 %v787, %v787
      %vm797 = vcmask 588800
      %v798 = vsel %vm797, %v754, 0
      %v800 = vsel %vm797, %v756, 0
      %v802 = vsel %vm797, %v758, 0
      %v804 = vsel %vm797, %v760, 0
      %vm806 = vcmask 1043456
      %v808 = vsel %vm806, %v792, 0
      %810 = vmatprep.subr.bf16.mxu0 0
      %811 = vmatpush1.bf16.msra.mxu0 %v788
      %812 = vmatprep.subr.bf16.mxu0 0
      %813 = vmatpush1.bf16.msra.mxu0 %v789
      %814 = vmatprep.subr.bf16.mxu0 0
      %815 = vmatpush1.bf16.msra.mxu0 %v790
      %816 = vmatprep.subr.bf16.mxu0 0
      %817 = vmatpush1.bf16.msra.mxu0 %v791
      %818 = vmatprep.subr.bf16.mxu0 0
      %819 = vmatpush1.bf16.msra.mxu0 %v808
      %820 = vmatprep.subr.bf16.mxu0 0
      %821 = vmatpush1.bf16.msra.mxu0 0
      %822 = vmatprep.subr.bf16.mxu0 0
      %823 = vmatpush1.bf16.msra.mxu0 0
      %824 = vmatprep.subr.bf16.mxu0 0
      %825 = vmatpush1.bf16.msra.mxu0 0
      %826 = vmatprep.subr.bf16.mxu0 0
      %827 = vmatpush1.bf16.msra.mxu0 0
      %828 = vmatprep.subr.bf16.mxu0 0
      %829 = vmatpush1.bf16.msra.mxu0 0
      %830 = vmatprep.subr.bf16.mxu0 0
      %831 = vmatpush1.bf16.msra.mxu0 0
      %832 = vmatprep.subr.bf16.mxu0 0
      %833 = vmatpush1.bf16.msra.mxu0 0
      %834 = vmatprep.subr.bf16.mxu0 0
      %835 = vmatpush1.bf16.msra.mxu0 0
      %836 = vmatprep.subr.bf16.mxu0 0
      %837 = vmatpush1.bf16.msra.mxu0 0
      %838 = vmatprep.subr.bf16.mxu0 0
      %839 = vmatpush1.bf16.msra.mxu0 0
      %840 = vmatprep.subr.bf16.mxu0 0
      %841 = vmatpush1.bf16.msra.mxu0 0
      %842 = vmatprep.mubr.bf16.mxu0 0
      %843 = vmatmul.mubr.bf16.gmra.mrb[0].mxu0 %v798
      %v844 = vpop.f32.mrb[0].mxu0
      %v845 = vadd.f32 0.0, %v844
      %v846 = vpop.f32.mrb[0].mxu0
      %v847 = vpop.f32.mrb[0].mxu0
      %v848 = vadd.f32 0.0, %v847
      %v849 = vpop.f32.mrb[0].mxu0
      %850 = vmatprep.mubr.bf16.mxu0 0
      %851 = vmatmul.mubr.bf16.gmra.mrb[0].mxu0 %v800
      %v852 = vpop.f32.mrb[0].mxu0
      %v853 = vadd.f32 0.0, %v852
      %v854 = vpop.f32.mrb[0].mxu0
      %v855 = vpop.f32.mrb[0].mxu0
      %v856 = vadd.f32 0.0, %v855
      %v857 = vpop.f32.mrb[0].mxu0
      %858 = vmatprep.mubr.bf16.mxu0 0
      %859 = vmatmul.mubr.bf16.gmra.mrb[0].mxu0 %v802
      %v860 = vpop.f32.mrb[0].mxu0
      %v861 = vadd.f32 0.0, %v860
      %v862 = vpop.f32.mrb[0].mxu0
      %v863 = vpop.f32.mrb[0].mxu0
      %v864 = vadd.f32 0.0, %v863
      %v865 = vpop.f32.mrb[0].mxu0
      %866 = vmatprep.mubr.bf16.mxu0 0
      %867 = vmatmul.mubr.bf16.gmra.mrb[0].mxu0 %v804
      %v868 = vpop.f32.mrb[0].mxu0
      %v869 = vadd.f32 0.0, %v868
      %v870 = vpop.f32.mrb[0].mxu0
      %v871 = vpop.f32.mrb[0].mxu0
      %v872 = vadd.f32 0.0, %v871
      %v873 = vpop.f32.mrb[0].mxu0
      %874 = vdwg.mxu0
      %v875 = vsel %vm685, %v845, 0.0
      %v876 = vsel %vm685, %v848, 0.0
      %v877 = vadd.f32 %v875, %v876
      %v878 = vsel %vm685, %v853, 0.0
      %v879 = vadd.f32 %v877, %v878
      %v880 = vsel %vm685, %v856, 0.0
      %v881 = vadd.f32 %v879, %v880
      %v882 = vsel %vm685, %v861, 0.0
      %v883 = vadd.f32 %v881, %v882
      %v884 = vsel %vm685, %v864, 0.0
      %v885 = vadd.f32 %v883, %v884
      %v886 = vsel %vm685, %v869, 0.0
      %v887 = vadd.f32 %v885, %v886
      %v888 = vsel %vm685, %v872, 0.0
      %v889 = vadd.f32 %v887, %v888
      %v890 = vrot.slane %v889, 4
      %v891 = vadd.f32 %v889, %v890
      %v892 = vrot.slane %v891, 2
      %v893 = vadd.f32 %v891, %v892
      %v894 = vrot.slane %v893, 1
      %v895 = vadd.f32 %v893, %v894
      %v896 = vmul.f32 %v845, %v845
      %v897 = vmul.f32 %v848, %v848
      %v898 = vmul.f32 %v853, %v853
      %v899 = vmul.f32 %v856, %v856
      %v900 = vmul.f32 %v861, %v861
      %v901 = vmul.f32 %v864, %v864
      %v902 = vmul.f32 %v869, %v869
      %v903 = vmul.f32 %v872, %v872
      %v904 = vsel %vm685, %v896, 0.0
      %v905 = vsel %vm685, %v897, 0.0
      %v906 = vadd.f32 %v904, %v905
      %v907 = vsel %vm685, %v898, 0.0
      %v908 = vadd.f32 %v906, %v907
      %v909 = vsel %vm685, %v899, 0.0
      %v910 = vadd.f32 %v908, %v909
      %v911 = vsel %vm685, %v900, 0.0
      %v912 = vadd.f32 %v910, %v911
      %v913 = vsel %vm685, %v901, 0.0
      %v914 = vadd.f32 %v912, %v913
      %v915 = vsel %vm685, %v902, 0.0
      %v916 = vadd.f32 %v914, %v915
      %v917 = vsel %vm685, %v903, 0.0
      %v918 = vadd.f32 %v916, %v917
      %v919 = vrot.slane %v918, 4
      %v920 = vadd.f32 %v918, %v919
      %v921 = vrot.slane %v920, 2
      %v922 = vadd.f32 %v920, %v921
      %v923 = vrot.slane %v922, 1
      %v924 = vadd.f32 %v922, %v923
      %vm925 = vcmask 1040384
      %v926 = vsel %vm925, %v895, %v924
      %vm927 = vcmask 58368
      %928 = vst.msk [vmem:[%s336] sm:$0x3] %vm927, %v926
      %v929 = vpack.c.bf16 %v845, %v845
      %v930 = vpack.c.bf16 %v848, %v848
      %v931 = vpack.c.bf16 %v853, %v853
      %v932 = vpack.c.bf16 %v856, %v856
      %v933 = vpack.c.bf16 %v861, %v861
      %v934 = vpack.c.bf16 %v864, %v864
      %v935 = vpack.c.bf16 %v869, %v869
      %v936 = vpack.c.bf16 %v872, %v872
      %vm937 = vcmask 60416
      %938 = vst.msk [vmem:[%s328] sm:$0xf] %vm937, %v929
      %939 = vst.msk [vmem:[%s328 + $0x4] sm:$0xf] %vm937, %v930
      %940 = vst.msk [vmem:[%s328 + $0x8] sm:$0xf] %vm937, %v931
      %941 = vst.msk [vmem:[%s328 + $0xc] sm:$0xf] %vm937, %v932
      %942 = vst.msk [vmem:[%s328 + $0x10] sm:$0xf] %vm937, %v933
      %943 = vst.msk [vmem:[%s328 + $0x14] sm:$0xf] %vm937, %v934
      %944 = vst.msk [vmem:[%s328 + $0x18] sm:$0xf] %vm937, %v935
      %945 = vst.msk [vmem:[%s328 + $0x1c] sm:$0xf] %vm937, %v936
      %s946 = smul.u32 8, %s21
      %p947 = scmp.lt.s32.totalorder %s20, 1
      %s948 = scalar_select %p947, %s20, 1
      %p949 = scmp.lt.s32.totalorder %s946, 7
      %s950 = scalar_select %p949, %s946, 7
      %s951 = smul.addr %s948, 8
      %s952 = sadd.s32 %s950, %s951
      %s953 = smul.addr %s952, 4
      %s954 = scalar_lea.vmem %s3, %s953
      %p955 = scmp.lt.s32.totalorder %s20, 1
      %s956 = scalar_select %p955, %s20, 1
      %p957 = scmp.lt.s32.totalorder %s21, 0
      %s958 = scalar_select %p957, %s21, 0
      %s959 = sadd.s32 %s958, %s956
      %s960 = smul.addr %s959, 2
      %s961 = scalar_lea.vmem %s4, %s960
      // Predicated region
      $region33: #{double_conv_forward.10} parent=31 // pred_check
        %p962 = pneg %p129
      $region34: #{double_conv_forward.10} parent=31 // pred_check_branch
        %964 = sbr.rel (%p962) target = $region36
      $region35: #{double_conv_forward.10} parent=31 // pred_region
        %s965 = smul.u32 8, %s21
      $region36: #{double_conv_forward.10} parent=31 // pred_fallthru
        _
      // Predicated region
      $region37: #{double_conv_forward.10} parent=31 // pred_check
        %p966 = pneg %p157
      $region38: #{double_conv_forward.10} parent=31 // pred_check_branch
        %968 = sbr.rel (%p966) target = $region40
      $region39: #{double_conv_forward.10} parent=31 // pred_region
        _
      $region40: #{double_conv_forward.10} parent=31 // pred_fallthru
        _
    $region32: #{double_conv_forward.10} parent=5 // pred_fallthru
      _
    %p969 = scmp.le.s32.totalorder 2, %s11
    // Predicated region
    $region41: #{double_conv_forward.10} parent=5 // pred_check
      %p970 = pneg %p969
    $region42: #{double_conv_forward.10} parent=5 // pred_check_branch
      %972 = sbr.rel (%p970) target = $region44
    $region43: #{double_conv_forward.10} parent=5 // pred_region
      %s973 = ssub.s32 %s11, 2
      // Predicated region
      $region45: #{double_conv_forward.10} parent=43 // pred_check
        %p974 = pneg %p135
      $region46: #{double_conv_forward.10} parent=43 // pred_check_branch
        %976 = sbr.rel (%p974) target = $region48
      $region47: #{double_conv_forward.10} parent=43 // pred_region
        %s977 = smul.u32 8, %s23
        %p978 = scmp.lt.s32.totalorder %s22, 1
        %s979 = scalar_select %p978, %s22, 1
        %p980 = scmp.lt.s32.totalorder %s977, 7
        %s981 = scalar_select %p980, %s977, 7
        %s982 = smul.addr %s979, 8
        %s983 = sadd.s32 %s981, %s982
        %s984 = smul.addr %s983, 4
        %s985 = scalar_lea.vmem %s3, %s984
      $region48: #{double_conv_forward.10} parent=43 // pred_fallthru
        _
      // Predicated region
      $region49: #{double_conv_forward.10} parent=43 // pred_check
        %p986 = pneg %p163
      $region50: #{double_conv_forward.10} parent=43 // pred_check_branch
        %988 = sbr.rel (%p986) target = $region52
      $region51: #{double_conv_forward.10} parent=43 // pred_region
        %p989 = scmp.lt.s32.totalorder %s22, 1
        %s990 = scalar_select %p989, %s22, 1
        %p991 = scmp.lt.s32.totalorder %s23, 0
        %s992 = scalar_select %p991, %s23, 0
        %s993 = sadd.s32 %s992, %s990
        %s994 = smul.addr %s993, 2
        %s995 = scalar_lea.vmem %s4, %s994
      $region52: #{double_conv_forward.10} parent=43 // pred_fallthru
        _
    $region44: #{double_conv_forward.10} parent=5 // pred_fallthru
      _
  $region6: #{double_conv_forward.10} parent=0 // loop_footer
    %s15 = sadd.s32 1, %s11
  $region7: #{double_conv_forward.10} parent=0 // loop_footer_branch
    %10 = sbr.rel target = $region3
  $region8: #{double_conv_forward.10} parent=0 // loop_exit
    _

// kernel: tile.43
$region0: #{tile.43}
  #allocation0 [shape = 's32[1]{0}', space=sflag, size = 0x4, scoped, tag = 'scoped memory for tile.43']
  %s0 = inlined_call_operand.vmem [shape: f32[8], index: 0, kind: input, shape index: {}]
  %s1 = inlined_call_operand.vmem [shape: f32[16,8], index: 1, kind: output, shape index: {}]
  // Predicated region
  $region2: #{tile.43} parent=0 // pred_check
    _
  $region3: #{tile.43} parent=0 // pred_check_branch
    %3 = sbr.rel (0) target = $region5
  $region4: #{tile.43} parent=0 // pred_region
    _
  $region5: #{tile.43} parent=0 // pred_fallthru
    _
  %v4 = vld [vmem:[%s0] ss:$0 sm:$0xff]
  %5 = vst [vmem:[%s1] sm:$0xff] %v4
  %s6 = scalar_lea.vmem %s1, 8
  %7 = vst [vmem:[%s6] sm:$0xff] %v4

// kernel: tile.44
$region0: #{tile.44}
  %s0 = inlined_call_operand.vmem [shape: f32[16,8], index: 0, kind: input, shape index: {}]
  %s1 = inlined_call_operand.vmem [shape: f32[1,128], index: 1, kind: output, shape index: {}]
  $region1: #{tile.44} parent=0
    #allocation0 [shape = 'u8[4096]{0}', space=vmem, size = 0x1000, scoped, tag = 'scoped mem for output reshape']
    %v2 = vld [vmem:[%s0] sm:$0x1]
    %vm3 = vcmask 64512
    %4 = vst.msk [vmem:[#allocation0] sm:$0x1] %vm3, %v2
    %s5 = scalar_lea.vmem %s0, 15
    %v6 = vld [vmem:[%s5] sm:$0x1]
    %7 = vrot.lane.b32.xlu0 %v6, 120
    %v8 = vpop.permute.xlu0 %7
    %vm9 = vcmask 1048512
    %10 = vst.msk [vmem:[#allocation0] sm:$0x1] %vm9, %v8
    %s11 = scalar_lea.vmem %s0, 14
    %v12 = vld [vmem:[%s11] sm:$0x1]
    %13 = vrot.lane.b32.xlu0 %v12, 112
    %v14 = vpop.permute.xlu0 %13
    %vm15 = vcmask 982912
    %16 = vst.msk [vmem:[#allocation0] sm:$0x1] %vm15, %v14
    %s17 = scalar_lea.vmem %s0, 13
    %v18 = vld [vmem:[%s17] sm:$0x1]
    %19 = vrot.lane.b32.xlu0 %v18, 104
    %v20 = vpop.permute.xlu0 %19
    %vm21 = vcmask 917312
    %22 = vst.msk [vmem:[#allocation0] sm:$0x1] %vm21, %v20
    %s23 = scalar_lea.vmem %s0, 12
    %v24 = vld [vmem:[%s23] sm:$0x1]
    %25 = vrot.lane.b32.xlu0 %v24, 96
    %v26 = vpop.permute.xlu0 %25
    %vm27 = vcmask 851712
    %28 = vst.msk [vmem:[#allocation0] sm:$0x1] %vm27, %v26
    %s29 = scalar_lea.vmem %s0, 11
    %v30 = vld [vmem:[%s29] sm:$0x1]
    %31 = vrot.lane.b32.xlu0 %v30, 88
    %v32 = vpop.permute.xlu0 %31
    %vm33 = vcmask 786112
    %34 = vst.msk [vmem:[#allocation0] sm:$0x1] %vm33, %v32
    %s35 = scalar_lea.vmem %s0, 10
    %v36 = vld [vmem:[%s35] sm:$0x1]
    %37 = vrot.lane.b32.xlu0 %v36, 80
    %v38 = vpop.permute.xlu0 %37
    %vm39 = vcmask 720512
    %40 = vst.msk [vmem:[#allocation0] sm:$0x1] %vm39, %v38
    %s41 = scalar_lea.vmem %s0, 9
    %v42 = vld [vmem:[%s41] sm:$0x1]
    %43 = vrot.lane.b32.xlu0 %v42, 72
    %v44 = vpop.permute.xlu0 %43
    %vm45 = vcmask 654912
    %46 = vst.msk [vmem:[#allocation0] sm:$0x1] %vm45, %v44
    %s47 = scalar_lea.vmem %s0, 8
    %v48 = vld [vmem:[%s47] sm:$0x1]
    %49 = vrot.lane.b32.xlu0 %v48, 64
    %v50 = vpop.permute.xlu0 %49
    %vm51 = vcmask 589312
    %52 = vst.msk [vmem:[#allocation0] sm:$0x1] %vm51, %v50
    %s53 = scalar_lea.vmem %s0, 7
    %v54 = vld [vmem:[%s53] sm:$0x1]
    %55 = vrot.lane.b32.xlu0 %v54, 56
    %v56 = vpop.permute.xlu0 %55
    %vm57 = vcmask 523712
    %58 = vst.msk [vmem:[#allocation0] sm:$0x1] %vm57, %v56
    %s59 = scalar_lea.vmem %s0, 6
    %v60 = vld [vmem:[%s59] sm:$0x1]
    %61 = vrot.lane.b32.xlu0 %v60, 48
    %v62 = vpop.permute.xlu0 %61
    %vm63 = vcmask 458112
    %64 = vst.msk [vmem:[#allocation0] sm:$0x1] %vm63, %v62
    %s65 = scalar_lea.vmem %s0, 5
    %v66 = vld [vmem:[%s65] sm:$0x1]
    %67 = vrot.lane.b32.xlu0 %v66, 40
    %v68 = vpop.permute.xlu0 %67
    %vm69 = vcmask 392512
    %70 = vst.msk [vmem:[#allocation0] sm:$0x1] %vm69, %v68
    %s71 = scalar_lea.vmem %s0, 4
    %v72 = vld [vmem:[%s71] sm:$0x1]
    %73 = vrot.lane.b32.xlu0 %v72, 32
    %v74 = vpop.permute.xlu0 %73
    %vm75 = vcmask 326912
    %76 = vst.msk [vmem:[#allocation0] sm:$0x1] %vm75, %v74
    %s77 = scalar_lea.vmem %s0, 3
    %v78 = vld [vmem:[%s77] sm:$0x1]
    %79 = vrot.lane.b32.xlu0 %v78, 24
    %v80 = vpop.permute.xlu0 %79
    %vm81 = vcmask 261312
    %82 = vst.msk [vmem:[#allocation0] sm:$0x1] %vm81, %v80
    %s83 = scalar_lea.vmem %s0, 2
    %v84 = vld [vmem:[%s83] sm:$0x1]
    %85 = vrot.lane.b32.xlu0 %v84, 16
    %v86 = vpop.permute.xlu0 %85
    %vm87 = vcmask 195712
    %88 = vst.msk [vmem:[#allocation0] sm:$0x1] %vm87, %v86
    %s89 = scalar_lea.vmem %s0, 1
    %v90 = vld [vmem:[%s89] sm:$0x1]
    %91 = vrot.lane.b32.xlu0 %v90, 8
    %v92 = vpop.permute.xlu0 %91
    %vm93 = vcmask 130112
    %94 = vst.msk [vmem:[#allocation0] sm:$0x1] %vm93, %v92
    %s96 = sshllo.u32 0, 1
    %v98 = vld [vmem:[#allocation0] sm:%s96]
    %s99 = sshllo.u32 0, 1
    %100 = vst [vmem:[%s1] sm:%s99] %v98

// kernel: double_conv_forward.11
$region0: #{double_conv_forward.11}
  #allocation0 [shape = 'u32[]', space=smem, size = 0x4, offset = 0x4, fixed_abs, tag = 'smem constant byte address 0x4 - core index']
  #allocation1 [shape = 'u32[144,128]{1,0:T(1,128)}', space=vmem, size = 0x12000, scoped, tag = 'internal scratch']
  %s0 = inlined_call_operand.vmem [shape: bf16[2,10,10,4], index: 0, kind: input, shape index: {}, may-alias: {0,1}]
  %s1 = inlined_call_operand.vmem [shape: bf16[2,10,10,4], index: 1, kind: input, shape index: {}, may-alias: {0,1}]
  %s2 = inlined_call_operand.vmem [shape: bf16[36,8], index: 2, kind: input, shape index: {}]
  %s3 = inlined_call_operand.vmem [shape: bf16[2,8,8,8], index: 3, kind: output, shape index: {0}]
  %s4 = inlined_call_operand.hbm [shape: f32[2,1,2,8], index: 4, kind: output, shape index: {1}]
  %5 = xla_tuple %s3, %s4
  %s6 = sld [smem:[#allocation0]]
  $region53: #{double_conv_forward.11} parent=0
    _
  %s8 = ssub.s32 1, %s6
  %s9 = scalar_select 0, %s8, %s6
  $region1: #{double_conv_forward.11} parent=0
    #allocation2 [shape = 'u8[2048]{0}', space=vmem, size = 0x800, scoped, tag = 'output window, operand 1']
    #allocation3 [shape = 's32[2]{0}', space=sflag, size = 0x8, scoped, tag = 'scoped memory for double_conv_forward.11']
    %10 = vsyncpa [#allocation3], 0
    %s11 = scalar_lea.sflag [#allocation3], 1
    %12 = vsyncpa %s11, 0
    loop: start=0, step=1, limit=4
    $region2: #{double_conv_forward.11} parent=1 // loop_pre_header
      _
    $region3: #{double_conv_forward.11} parent=1 // loop_header
      %s14 = sphi 0, %s18
      %p15 = scmp.ge.s32.totalorder %s14, 4
      %s21 = sphi 0, %s33
      %s22 = sphi 0, %s29
      %s23 = sphi 0, %s21
      %s24 = sphi 0, %s22
      %s25 = sphi 0, %s23
      %s26 = sphi 0, %s24
      %s38 = sphi 0, %s40
      %s41 = sphi 0, %s38
      %s42 = sphi 0, %s41
      %s58 = sphi 0, %s42
      %s70 = sphi 0, %s72
      %s73 = sphi 0, %s70
      %s74 = sphi 0, %s73
      %s90 = sphi 0, %s74
      %s94 = sphi 0, %s94
      %s96 = sphi 0, %s94
      %s97 = sphi 0, %s96
      %s111 = sphi 0, %s97
      %s119 = sphi 0, %s121
      %s122 = sphi 0, %s119
      %s123 = sphi 0, %s122
      %s139 = sphi 0, %s123
      %s147 = sphi 0, %s149
      %s150 = sphi 0, %s147
      %s151 = sphi 0, %s150
      %s167 = sphi 0, %s151
    $region4: #{double_conv_forward.11} parent=1 // loop_header_branch
      %17 = sbr.rel (%p15) target = $region8
    $region5: #{double_conv_forward.11} parent=1 // loop_body
      %s19 = ssub.s32 %s14, 1
      %s20 = ssub.s32 %s14, 2
      %s27 = sadd.s32 1, %s22
      %p28 = scmp.ge.s32.totalorder %s27, 1
      %s29 = scalar_select %p28, 0, %s27
      %s30 = sadd.s32 1, %s21
      %s31 = scalar_select %p28, %s30, %s21
      %p32 = scmp.ge.s32.totalorder %s31, 2
      %s33 = scalar_select %p32, 0, %s31
      %s34 = ssub.s32 %s21, %s33
      %s35 = ssub.s32 %s22, %s29
      %s36 = sor.u32 %s34, %s35
      %p37 = scmp.eq.s32.totalorder %s36, 0
      %s39 = sadd.s32 %s38, 1
      %s40 = scalar_select %p37, %s38, %s39
      %p43 = pneg %p37
      %p44 = scmp.eq.s32.totalorder %s14, 1
      %p45 = por %p43, %p44
      %p46 = scmp.ne.s32.totalorder %s38, %s41
      %p47 = scmp.eq.s32.totalorder %s14, 0
      %p48 = por %p46, %p47
      %p49 = scmp.ne.s32.totalorder %s38, %s41
      %p50 = scmp.eq.s32.totalorder %s19, 1
      %p51 = por %p49, %p50
      %p52 = scmp.ne.s32.totalorder %s41, %s42
      %p53 = scmp.eq.s32.totalorder %s19, 0
      %p54 = por %p52, %p53
      %p55 = scmp.ne.s32.totalorder %s41, %s42
      %p56 = scmp.eq.s32.totalorder %s20, 1
      %p57 = por %p55, %p56
      %p59 = scmp.ne.s32.totalorder %s42, %s58
      %p60 = scmp.eq.s32.totalorder %s20, 0
      %p61 = por %p59, %p60
      %s62 = sadd.s32 %s22, 1
      %s63 = smul.u32 %s62, 4
      %s64 = sadd.s32 %s29, 1
      %s65 = smul.u32 %s64, 4
      %s66 = ssub.s32 %s21, %s33
      %s67 = ssub.s32 %s63, %s65
      %s68 = sor.u32 %s66, %s67
      %p69 = scmp.eq.s32.totalorder %s68, 0
      %s71 = sadd.s32 %s70, 1
      %s72 = scalar_select %p69, %s70, %s71
      %p75 = pneg %p69
      %p76 = scmp.eq.s32.totalorder %s14, 1
      %p77 = por %p75, %p76
      %p78 = scmp.ne.s32.totalorder %s70, %s73
      %p79 = scmp.eq.s32.totalorder %s14, 0
      %p80 = por %p78, %p79
      %p81 = scmp.ne.s32.totalorder %s70, %s73
      %p82 = scmp.eq.s32.totalorder %s19, 1
      %p83 = por %p81, %p82
      %p84 = scmp.ne.s32.totalorder %s73, %s74
      %p85 = scmp.eq.s32.totalorder %s19, 0
      %p86 = por %p84, %p85
      %p87 = scmp.ne.s32.totalorder %s73, %s74
      %p88 = scmp.eq.s32.totalorder %s20, 1
      %p89 = por %p87, %p88
      %p91 = scmp.ne.s32.totalorder %s74, %s90
      %p92 = scmp.eq.s32.totalorder %s20, 0
      %p93 = por %p91, %p92
      %s95 = sadd.s32 %s94, 1
      %p98 = scmp.eq.s32.totalorder %s14, 1
      %p99 = scmp.ne.s32.totalorder %s94, %s96
      %p100 = scmp.eq.s32.totalorder %s14, 0
      %p101 = por %p99, %p100
      %p102 = scmp.ne.s32.totalorder %s94, %s96
      %p103 = scmp.eq.s32.totalorder %s19, 1
      %p104 = por %p102, %p103
      %p105 = scmp.ne.s32.totalorder %s96, %s97
      %p106 = scmp.eq.s32.totalorder %s19, 0
      %p107 = por %p105, %p106
      %p108 = scmp.ne.s32.totalorder %s96, %s97
      %p109 = scmp.eq.s32.totalorder %s20, 1
      %p110 = por %p108, %p109
      %p112 = scmp.ne.s32.totalorder %s97, %s111
      %p113 = scmp.eq.s32.totalorder %s20, 0
      %p114 = por %p112, %p113
      %s115 = ssub.s32 %s21, %s33
      %s116 = ssub.s32 %s22, %s29
      %s117 = sor.u32 %s115, %s116
      %p118 = scmp.eq.s32.totalorder %s117, 0
      %s120 = sadd.s32 %s119, 1
      %s121 = scalar_select %p118, %s119, %s120
      %p124 = pneg %p118
      %p125 = scmp.eq.s32.totalorder %s14, 1
      %p126 = por %p124, %p125
      %p127 = scmp.ne.s32.totalorder %s119, %s122
      %p128 = scmp.eq.s32.totalorder %s14, 0
      %p129 = por %p127, %p128
      %p130 = scmp.ne.s32.totalorder %s119, %s122
      %p131 = scmp.eq.s32.totalorder %s19, 1
      %p132 = por %p130, %p131
      %p133 = scmp.ne.s32.totalorder %s122, %s123
      %p134 = scmp.eq.s32.totalorder %s19, 0
      %p135 = por %p133, %p134
      %p136 = scmp.ne.s32.totalorder %s122, %s123
      %p137 = scmp.eq.s32.totalorder %s20, 1
      %p138 = por %p136, %p137
      %p140 = scmp.ne.s32.totalorder %s123, %s139
      %p141 = scmp.eq.s32.totalorder %s20, 0
      %p142 = por %p140, %p141
      %s143 = ssub.s32 %s21, %s33
      %s144 = ssub.s32 %s22, %s29
      %s145 = sor.u32 %s143, %s144
      %p146 = scmp.eq.s32.totalorder %s145, 0
      %s148 = sadd.s32 %s147, 1
      %s149 = scalar_select %p146, %s147, %s148
      %p152 = pneg %p146
      %p153 = scmp.eq.s32.totalorder %s14, 1
      %p154 = por %p152, %p153
      %p155 = scmp.ne.s32.totalorder %s147, %s150
      %p156 = scmp.eq.s32.totalorder %s14, 0
      %p157 = por %p155, %p156
      %p158 = scmp.ne.s32.totalorder %s147, %s150
      %p159 = scmp.eq.s32.totalorder %s19, 1
      %p160 = por %p158, %p159
      %p161 = scmp.ne.s32.totalorder %s150, %s151
      %p162 = scmp.eq.s32.totalorder %s19, 0
      %p163 = por %p161, %p162
      %p164 = scmp.ne.s32.totalorder %s150, %s151
      %p165 = scmp.eq.s32.totalorder %s20, 1
      %p166 = por %p164, %p165
      %p168 = scmp.ne.s32.totalorder %s151, %s167
      %p169 = scmp.eq.s32.totalorder %s20, 0
      %p170 = por %p168, %p169
      %p171 = scmp.le.s32.totalorder 1, %s14
      %p172 = scmp.lt.s32.totalorder %s14, 3
      %p173 = pnand %p171, %p172
      %p174 = pneg %p173
      // Predicated region
      $region9: #{double_conv_forward.11} parent=5 // pred_check
        _
      $region10: #{double_conv_forward.11} parent=5 // pred_check_branch
        %176 = sbr.rel (%p173) target = $region12
      $region11: #{double_conv_forward.11} parent=5 // pred_region
        %s177 = ssub.s32 %s14, 1
        // Predicated region
        $region13: #{double_conv_forward.11} parent=11 // pred_check
          %p178 = pneg %p107
        $region14: #{double_conv_forward.11} parent=11 // pred_check_branch
          %180 = sbr.rel (%p178) target = $region16
        $region15: #{double_conv_forward.11} parent=11 // pred_region
          _
        $region16: #{double_conv_forward.11} parent=11 // pred_fallthru
          _
      $region12: #{double_conv_forward.11} parent=5 // pred_fallthru
        _
      %p181 = scmp.lt.s32.totalorder %s14, 2
      // Predicated region
      $region17: #{double_conv_forward.11} parent=5 // pred_check
        %p182 = pneg %p181
      $region18: #{double_conv_forward.11} parent=5 // pred_check_branch
        %184 = sbr.rel (%p182) target = $region20
      $region19: #{double_conv_forward.11} parent=5 // pred_region
        // Predicated region
        $region21: #{double_conv_forward.11} parent=19 // pred_check
          %p185 = pneg %p48
        $region22: #{double_conv_forward.11} parent=19 // pred_check_branch
          %187 = sbr.rel (%p185) target = $region24
        $region23: #{double_conv_forward.11} parent=19 // pred_region
          %s188 = smul.u32 8, %s22
          %s189 = ssub.s32 10, %s188
          %p190 = scmp.lt.s32.totalorder %s189, 8
          %s191 = scalar_select %p190, %s189, 8
          %s192 = smul.u32 64, %s191
          %s193 = smul.u32 %s192, 2
          %p194 = scmp.lt.s32.totalorder %s21, 1
          %s195 = scalar_select %p194, %s21, 1
          %p196 = scmp.lt.s32.totalorder %s188, 9
          %s197 = scalar_select %p196, %s188, 9
          %s198 = smul.addr %s197, 2
          %s199 = smul.addr %s195, 20
          %s200 = sadd.s32 %s198, %s199
          %s201 = smul.addr %s200, 4
          %s202 = scalar_lea.vmem %s0, %s201
          %s203 = smul.u32 8, %s22
          %s204 = ssub.s32 10, %s203
          %p205 = scmp.lt.s32.totalorder %s204, 8
          %s206 = scalar_select %p205, %s204, 8
          %s207 = smul.u32 64, %s206
          %s208 = smul.u32 %s207, 2
        $region24: #{double_conv_forward.11} parent=19 // pred_fallthru
          _
        // Predicated region
        $region25: #{double_conv_forward.11} parent=19 // pred_check
          %p209 = pneg %p80
        $region26: #{double_conv_forward.11} parent=19 // pred_check_branch
          %211 = sbr.rel (%p209) target = $region28
        $region27: #{double_conv_forward.11} parent=19 // pred_region
          %s212 = sadd.s32 %s22, 1
          %s213 = smul.u32 %s212, 4
          %s214 = smul.u32 2, %s213
          %p215 = scmp.lt.s32.totalorder %s21, 1
          %s216 = scalar_select %p215, %s21, 1
          %p217 = scmp.lt.s32.totalorder %s214, 9
          %s218 = scalar_select %p217, %s214, 9
          %s219 = smul.addr %s218, 2
          %s220 = smul.addr %s216, 20
          %s221 = sadd.s32 %s219, %s220
          %s222 = smul.addr %s221, 4
          %s223 = scalar_lea.vmem %s1, %s222
          %s224 = sadd.s32 %s22, 1
          %s225 = smul.u32 %s224, 4
          %s226 = smul.u32 2, %s225
        $region28: #{double_conv_forward.11} parent=19 // pred_fallthru
          _
      $region20: #{double_conv_forward.11} parent=5 // pred_fallthru
        _
      %p227 = scmp.le.s32.totalorder 1, %s14
      %p228 = scmp.lt.s32.totalorder %s14, 3
      %p229 = pnand %p227, %p228
      %p230 = pneg %p229
      // Predicated region
      $region29: #{double_conv_forward.11} parent=5 // pred_check
        _
      $region30: #{double_conv_forward.11} parent=5 // pred_check_branch
        %232 = sbr.rel (%p229) target = $region32
      $region31: #{double_conv_forward.11} parent=5 // pred_region
        %s233 = ssub.s32 %s14, 1
        %s234 = smul.u32 8, %s24
        %s235 = ssub.s32 10, %s234
        %p236 = scmp.lt.s32.totalorder %s235, 8
        %s237 = scalar_select %p236, %s235, 8
        %s238 = smul.u32 64, %s237
        %s239 = smul.u32 %s238, 2
        %p240 = scmp.lt.s32.totalorder %s23, 1
        %s241 = scalar_select %p240, %s23, 1
        %p242 = scmp.lt.s32.totalorder %s234, 9
        %s243 = scalar_select %p242, %s234, 9
        %s244 = smul.addr %s243, 2
        %s245 = smul.addr %s241, 20
        %s246 = sadd.s32 %s244, %s245
        %s247 = smul.addr %s246, 4
        %s248 = scalar_lea.vmem %s0, %s247
        %p249 = pneg %p54
        %p250 = pneg %p51
        %s251 = sadd.s32 %s24, 1
        %s252 = smul.u32 %s251, 4
        %s253 = smul.u32 2, %s252
        %p254 = scmp.lt.s32.totalorder %s23, 1
        %s255 = scalar_select %p254, %s23, 1
        %p256 = scmp.lt.s32.totalorder %s253, 9
        %s257 = scalar_select %p256, %s253, 9
        %s258 = smul.addr %s257, 2
        %s259 = smul.addr %s255, 20
        %s260 = sadd.s32 %s258, %s259
        %s261 = smul.addr %s260, 4
        %s262 = scalar_lea.vmem %s1, %s261
        %p263 = pneg %p86
        %p264 = pneg %p83
        %p265 = pneg %p107
        %p266 = pneg %p104
        %p267 = pneg %p135
        %p268 = pneg %p132
        %s269 = smul.u32 8, %s24
        %p270 = scmp.lt.s32.totalorder %s23, 1
        %s271 = scalar_select %p270, %s23, 1
        %p272 = scmp.lt.s32.totalorder %s269, 7
        %s273 = scalar_select %p272, %s269, 7
        %s274 = smul.addr %s271, 8
        %s275 = sadd.s32 %s273, %s274
        %s276 = smul.addr %s275, 4
        %s277 = scalar_lea.vmem %s3, %s276
        %p278 = pneg %p163
        %p279 = pneg %p160
        %s280 = sand.u32 %s150, 1
        %s281 = scalar_lea.sflag [#allocation3], %s280
        %s282 = sand.u32 %s150, 1
        %s283 = smul.addr %s282, 2
        %s284 = scalar_lea.vmem [#allocation2], %s283
        %s285 = smul.u32 8, %s24
        %s286 = ssub.s32 10, %s285
        %p287 = scmp.lt.s32.totalorder %s286, 8
        %s288 = scalar_select %p287, %s286, 8
        %s289 = smul.u32 64, %s288
        %s290 = smul.u32 %s289, 2
        %p291 = scmp.lt.s32.totalorder %s23, 1
        %s292 = scalar_select %p291, %s23, 1
        %p293 = scmp.lt.s32.totalorder %s285, 9
        %s294 = scalar_select %p293, %s285, 9
        %s295 = smul.addr %s294, 2
        %s296 = smul.addr %s292, 20
        %s297 = sadd.s32 %s295, %s296
        %s298 = smul.addr %s297, 4
        %s299 = scalar_lea.vmem %s0, %s298
        %s300 = smul.u32 8, %s24
        %s301 = ssub.s32 10, %s300
        %p302 = scmp.lt.s32.totalorder %s301, 8
        %s303 = scalar_select %p302, %s301, 8
        %s304 = smul.u32 64, %s303
        %s305 = smul.u32 %s304, 2
        %s306 = sadd.s32 %s24, 1
        %s307 = smul.u32 %s306, 4
        %s308 = smul.u32 2, %s307
        %p309 = scmp.lt.s32.totalorder %s23, 1
        %s310 = scalar_select %p309, %s23, 1
        %p311 = scmp.lt.s32.totalorder %s308, 9
        %s312 = scalar_select %p311, %s308, 9
        %s313 = smul.addr %s312, 2
        %s314 = smul.addr %s310, 20
        %s315 = sadd.s32 %s313, %s314
        %s316 = smul.addr %s315, 4
        %s317 = scalar_lea.vmem %s1, %s316
        %s318 = sadd.s32 %s24, 1
        %s319 = smul.u32 %s318, 4
        %s320 = smul.u32 2, %s319
        %s321 = smul.u32 8, %s24
        %p322 = scmp.lt.s32.totalorder %s23, 1
        %s323 = scalar_select %p322, %s23, 1
        %p324 = scmp.lt.s32.totalorder %s321, 7
        %s325 = scalar_select %p324, %s321, 7
        %s326 = smul.addr %s323, 8
        %s327 = sadd.s32 %s325, %s326
        %s328 = smul.addr %s327, 4
        %s329 = scalar_lea.vmem %s3, %s328
        %s330 = smul.u32 8, %s24
        %v332 = vld [vmem:[%s299] sm:$0xf]
        %v333 = vld [vmem:[%s299 + $0x4] sm:$0x1]
        %v334 = vld [vmem:[%s299 + $0x8] sm:$0xf]
        %v335 = vld [vmem:[%s299 + $0xc] sm:$0x1]
        %v336 = vld [vmem:[%s299 + $0x10] sm:$0xf]
        %v337 = vld [vmem:[%s299 + $0x14] sm:$0x1]
        %v338 = vld [vmem:[%s299 + $0x18] sm:$0xf]
        %v339 = vld [vmem:[%s299 + $0x1c] sm:$0x1]
        %v340 = vld [vmem:[%s299 + $0x20] sm:$0xf]
        %v341 = vld [vmem:[%s299 + $0x24] sm:$0x1]
        %v342 = vld [vmem:[%s299 + $0x28] sm:$0xf]
        %v343 = vld [vmem:[%s299 + $0x2c] sm:$0x1]
        %v344 = vld [vmem:[%s299 + $0x30] sm:$0xf]
        %v345 = vld [vmem:[%s299 + $0x34] sm:$0x1]
        %v346 = vld [vmem:[%s299 + $0x38] sm:$0xf]
        %v347 = vld [vmem:[%s299 + $0x3c] sm:$0x1]
        %v348 = vld [vmem:[%s317] sm:$0xf]
        %v349 = vld [vmem:[%s317 + $0x4] sm:$0x1]
        %v350 = vld [vmem:[%s317 + $0x8] sm:$0xf]
        %v351 = vld [vmem:[%s317 + $0xc] sm:$0x1]
        %vm352 = vsmask.f32 3328
        %vm353 = vsmask.f32 7440
        %vm354 = vmor %vm352, %vm353
        %v356 = vshrl.u32 %v332, 16
        %v358 = vrot.slane %v356, 4
        %v359 = vshll.u32 %v332, 16
        %v361 = vrot.slane %v359, 5
        %v362 = vor.u32 %v358, %v361
        %v363 = vrot.slane %v362, 4
        %v365 = vshll.u32 %v333, 16
        %v367 = vrot.slane %v365, 5
        %v368 = vsel %vm354, %v363, %v367
        %v370 = vshrl.u32 %v334, 16
        %v372 = vrot.slane %v370, 4
        %v373 = vshll.u32 %v334, 16
        %v375 = vrot.slane %v373, 5
        %v376 = vor.u32 %v372, %v375
        %v377 = vrot.slane %v376, 4
        %v379 = vshll.u32 %v335, 16
        %v381 = vrot.slane %v379, 5
        %v382 = vsel %vm354, %v377, %v381
        %v384 = vshrl.u32 %v336, 16
        %v386 = vrot.slane %v384, 4
        %v387 = vshll.u32 %v336, 16
        %v389 = vrot.slane %v387, 5
        %v390 = vor.u32 %v386, %v389
        %v391 = vrot.slane %v390, 4
        %v393 = vshll.u32 %v337, 16
        %v395 = vrot.slane %v393, 5
        %v396 = vsel %vm354, %v391, %v395
        %v398 = vshrl.u32 %v338, 16
        %v400 = vrot.slane %v398, 4
        %v401 = vshll.u32 %v338, 16
        %v403 = vrot.slane %v401, 5
        %v404 = vor.u32 %v400, %v403
        %v405 = vrot.slane %v404, 4
        %v407 = vshll.u32 %v339, 16
        %v409 = vrot.slane %v407, 5
        %v410 = vsel %vm354, %v405, %v409
        %v412 = vshrl.u32 %v340, 16
        %v414 = vrot.slane %v412, 4
        %v415 = vshll.u32 %v340, 16
        %v417 = vrot.slane %v415, 5
        %v418 = vor.u32 %v414, %v417
        %v419 = vrot.slane %v418, 4
        %v421 = vshll.u32 %v341, 16
        %v423 = vrot.slane %v421, 5
        %v424 = vsel %vm354, %v419, %v423
        %v426 = vshrl.u32 %v342, 16
        %v428 = vrot.slane %v426, 4
        %v429 = vshll.u32 %v342, 16
        %v431 = vrot.slane %v429, 5
        %v432 = vor.u32 %v428, %v431
        %v433 = vrot.slane %v432, 4
        %v435 = vshll.u32 %v343, 16
        %v437 = vrot.slane %v435, 5
        %v438 = vsel %vm354, %v433, %v437
        %v440 = vshrl.u32 %v344, 16
        %v442 = vrot.slane %v440, 4
        %v443 = vshll.u32 %v344, 16
        %v445 = vrot.slane %v443, 5
        %v446 = vor.u32 %v442, %v445
        %v447 = vrot.slane %v446, 4
        %v449 = vshll.u32 %v345, 16
        %v451 = vrot.slane %v449, 5
        %v452 = vsel %vm354, %v447, %v451
        %v454 = vshrl.u32 %v346, 16
        %v456 = vrot.slane %v454, 4
        %v457 = vshll.u32 %v346, 16
        %v459 = vrot.slane %v457, 5
        %v460 = vor.u32 %v456, %v459
        %v461 = vrot.slane %v460, 4
        %v463 = vshll.u32 %v347, 16
        %v465 = vrot.slane %v463, 5
        %v466 = vsel %vm354, %v461, %v465
        %vm483 = vcmask 1042432
        %vm484 = vcmask 1046532
        %vm485 = vmor %vm483, %vm484
        %v486 = vrot.slane %v332, 5
        %v487 = vrot.slane %v486, 4
        %v488 = vrot.slane %v333, 5
        %v489 = vsel %vm485, %v487, %v488
        %v490 = vrot.slane %v334, 5
        %v491 = vrot.slane %v490, 4
        %v492 = vrot.slane %v335, 5
        %v493 = vsel %vm485, %v491, %v492
        %v494 = vrot.slane %v336, 5
        %v495 = vrot.slane %v494, 4
        %v496 = vrot.slane %v337, 5
        %v497 = vsel %vm485, %v495, %v496
        %v498 = vrot.slane %v338, 5
        %v499 = vrot.slane %v498, 4
        %v500 = vrot.slane %v339, 5
        %v501 = vsel %vm485, %v499, %v500
        %v502 = vrot.slane %v340, 5
        %v503 = vrot.slane %v502, 4
        %v504 = vrot.slane %v341, 5
        %v505 = vsel %vm485, %v503, %v504
        %v506 = vrot.slane %v342, 5
        %v507 = vrot.slane %v506, 4
        %v508 = vrot.slane %v343, 5
        %v509 = vsel %vm485, %v507, %v508
        %v510 = vrot.slane %v344, 5
        %v511 = vrot.slane %v510, 4
        %v512 = vrot.slane %v345, 5
        %v513 = vsel %vm485, %v511, %v512
        %v514 = vrot.slane %v346, 5
        %v515 = vrot.slane %v514, 4
        %v516 = vrot.slane %v347, 5
        %v517 = vsel %vm485, %v515, %v516
        %v519 = vshrl.u32 %v348, 16
        %v521 = vrot.slane %v519, 4
        %v522 = vshll.u32 %v348, 16
        %v524 = vrot.slane %v522, 5
        %v525 = vor.u32 %v521, %v524
        %v526 = vrot.slane %v525, 4
        %v528 = vshll.u32 %v349, 16
        %v530 = vrot.slane %v528, 5
        %v531 = vsel %vm354, %v526, %v530
        %v534 = vrot.slane %v348, 5
        %v535 = vrot.slane %v534, 4
        %v536 = vrot.slane %v349, 5
        %v537 = vsel %vm485, %v535, %v536
        %v539 = vshrl.u32 %v350, 16
        %v541 = vrot.slane %v539, 4
        %v542 = vshll.u32 %v350, 16
        %v544 = vrot.slane %v542, 5
        %v545 = vor.u32 %v541, %v544
        %v546 = vrot.slane %v545, 4
        %v548 = vshll.u32 %v351, 16
        %v550 = vrot.slane %v548, 5
        %v551 = vsel %vm354, %v546, %v550
        %v554 = vrot.slane %v350, 5
        %v555 = vrot.slane %v554, 4
        %v556 = vrot.slane %v351, 5
        %v557 = vsel %vm485, %v555, %v556
        %v558 = vunpack.c.l.b16 %v332
        %v559 = vunpack.c.l.b16 %v334
        %v560 = vunpack.c.l.b16 %v336
        %v561 = vunpack.c.l.b16 %v338
        %v562 = vunpack.c.l.b16 %v340
        %v563 = vunpack.c.l.b16 %v342
        %v564 = vunpack.c.l.b16 %v344
        %v565 = vunpack.c.l.b16 %v346
        %v566 = vpack.c.b16 %v559, %v558
        %v567 = vpack.c.b16 %v561, %v560
        %v568 = vpack.c.b16 %v563, %v562
        %v569 = vpack.c.b16 %v565, %v564
        %v570 = vunpack.c.l.b16 %v368
        %v571 = vunpack.c.l.b16 %v382
        %v572 = vunpack.c.l.b16 %v396
        %v573 = vunpack.c.l.b16 %v410
        %v574 = vunpack.c.l.b16 %v424
        %v575 = vunpack.c.l.b16 %v438
        %v576 = vunpack.c.l.b16 %v452
        %v577 = vunpack.c.l.b16 %v466
        %v578 = vpack.c.b16 %v571, %v570
        %v579 = vpack.c.b16 %v573, %v572
        %v580 = vpack.c.b16 %v575, %v574
        %v581 = vpack.c.b16 %v577, %v576
        %582 = vrot.lane.b32.xlu0 %v578, 4
        %v583 = vpop.permute.xlu0 %582
        %584 = vrot.lane.b32.xlu0 %v579, 4
        %v585 = vpop.permute.xlu0 %584
        %586 = vrot.lane.b32.xlu0 %v580, 4
        %v587 = vpop.permute.xlu0 %586
        %588 = vrot.lane.b32.xlu0 %v581, 4
        %v589 = vpop.permute.xlu0 %588
        %v590 = vunpack.c.l.b16 %v489
        %v591 = vunpack.c.l.b16 %v493
        %v592 = vunpack.c.l.b16 %v497
        %v593 = vunpack.c.l.b16 %v501
        %v594 = vunpack.c.l.b16 %v505
        %v595 = vunpack.c.l.b16 %v509
        %v596 = vunpack.c.l.b16 %v513
        %v597 = vunpack.c.l.b16 %v517
        %v598 = vpack.c.b16 %v591, %v590
        %v599 = vpack.c.b16 %v593, %v592
        %v600 = vpack.c.b16 %v595, %v594
        %v601 = vpack.c.b16 %v597, %v596
        %602 = vrot.lane.b32.xlu0 %v598, 8
        %v603 = vpop.permute.xlu0 %602
        %604 = vrot.lane.b32.xlu0 %v599, 8
        %v605 = vpop.permute.xlu0 %604
        %606 = vrot.lane.b32.xlu0 %v600, 8
        %v607 = vpop.permute.xlu0 %606
        %608 = vrot.lane.b32.xlu0 %v601, 8
        %v609 = vpop.permute.xlu0 %608
        %v610 = vunpack.c.l.b16 %v348
        %v611 = vpack.c.b16 %v560, %v559
        %v612 = vpack.c.b16 %v562, %v561
        %v613 = vpack.c.b16 %v564, %v563
        %v614 = vpack.c.b16 %v610, %v565
        %615 = vrot.lane.b32.xlu0 %v611, 12
        %v616 = vpop.permute.xlu0 %615
        %617 = vrot.lane.b32.xlu0 %v612, 12
        %v618 = vpop.permute.xlu0 %617
        %619 = vrot.lane.b32.xlu0 %v613, 12
        %v620 = vpop.permute.xlu0 %619
        %621 = vrot.lane.b32.xlu0 %v614, 12
        %v622 = vpop.permute.xlu0 %621
        %v623 = vunpack.c.l.b16 %v531
        %v624 = vpack.c.b16 %v572, %v571
        %v625 = vpack.c.b16 %v574, %v573
        %v626 = vpack.c.b16 %v576, %v575
        %v627 = vpack.c.b16 %v623, %v577
        %628 = vrot.lane.b32.xlu0 %v624, 16
        %v629 = vpop.permute.xlu0 %628
        %630 = vrot.lane.b32.xlu0 %v625, 16
        %v631 = vpop.permute.xlu0 %630
        %632 = vrot.lane.b32.xlu0 %v626, 16
        %v633 = vpop.permute.xlu0 %632
        %634 = vrot.lane.b32.xlu0 %v627, 16
        %v635 = vpop.permute.xlu0 %634
        %v636 = vunpack.c.l.b16 %v537
        %v637 = vpack.c.b16 %v592, %v591
        %v638 = vpack.c.b16 %v594, %v593
        %v639 = vpack.c.b16 %v596, %v595
        %v640 = vpack.c.b16 %v636, %v597
        %641 = vrot.lane.b32.xlu0 %v637, 20
        %v642 = vpop.permute.xlu0 %641
        %643 = vrot.lane.b32.xlu0 %v638, 20
        %v644 = vpop.permute.xlu0 %643
        %645 = vrot.lane.b32.xlu0 %v639, 20
        %v646 = vpop.permute.xlu0 %645
        %647 = vrot.lane.b32.xlu0 %v640, 20
        %v648 = vpop.permute.xlu0 %647
        %v649 = vunpack.c.l.b16 %v350
        %v650 = vpack.c.b16 %v649, %v610
        %651 = vrot.lane.b32.xlu0 %v567, 24
        %v652 = vpop.permute.xlu0 %651
        %653 = vrot.lane.b32.xlu0 %v568, 24
        %v654 = vpop.permute.xlu0 %653
        %655 = vrot.lane.b32.xlu0 %v569, 24
        %v656 = vpop.permute.xlu0 %655
        %657 = vrot.lane.b32.xlu0 %v650, 24
        %v658 = vpop.permute.xlu0 %657
        %v659 = vunpack.c.l.b16 %v551
        %v660 = vpack.c.b16 %v659, %v623
        %661 = vrot.lane.b32.xlu0 %v579, 28
        %v662 = vpop.permute.xlu0 %661
        %663 = vrot.lane.b32.xlu0 %v580, 28
        %v664 = vpop.permute.xlu0 %663
        %665 = vrot.lane.b32.xlu0 %v581, 28
        %v666 = vpop.permute.xlu0 %665
        %667 = vrot.lane.b32.xlu0 %v660, 28
        %v668 = vpop.permute.xlu0 %667
        %v669 = vunpack.c.l.b16 %v557
        %v670 = vpack.c.b16 %v669, %v636
        %671 = vrot.lane.b32.xlu0 %v599, 32
        %v672 = vpop.permute.xlu0 %671
        %673 = vrot.lane.b32.xlu0 %v600, 32
        %v674 = vpop.permute.xlu0 %673
        %675 = vrot.lane.b32.xlu0 %v601, 32
        %v676 = vpop.permute.xlu0 %675
        %677 = vrot.lane.b32.xlu0 %v670, 32
        %v678 = vpop.permute.xlu0 %677
        %vm679 = vcmask 31744
        %v682 = vsel %vm679, %v566, %v583
        %v685 = vsel %vm679, %v567, %v585
        %v688 = vsel %vm679, %v568, %v587
        %v691 = vsel %vm679, %v569, %v589
        %vm692 = vcmask 64512
        %v694 = vsel %vm692, %v682, %v603
        %v696 = vsel %vm692, %v685, %v605
        %v698 = vsel %vm692, %v688, %v607
        %v700 = vsel %vm692, %v691, %v609
        %vm701 = vcmask 97280
        %v703 = vsel %vm701, %v694, %v616
        %v705 = vsel %vm701, %v696, %v618
        %v707 = vsel %vm701, %v698, %v620
        %v709 = vsel %vm701, %v700, %v622
        %vm710 = vcmask 130048
        %v712 = vsel %vm710, %v703, %v629
        %v714 = vsel %vm710, %v705, %v631
        %v716 = vsel %vm710, %v707, %v633
        %v718 = vsel %vm710, %v709, %v635
        %vm719 = vcmask 162816
        %v721 = vsel %vm719, %v712, %v642
        %v723 = vsel %vm719, %v714, %v644
        %v725 = vsel %vm719, %v716, %v646
        %v727 = vsel %vm719, %v718, %v648
        %vm728 = vcmask 195584
        %v730 = vsel %vm728, %v721, %v652
        %v732 = vsel %vm728, %v723, %v654
        %v734 = vsel %vm728, %v725, %v656
        %v736 = vsel %vm728, %v727, %v658
        %vm737 = vcmask 228352
        %v739 = vsel %vm737, %v730, %v662
        %v741 = vsel %vm737, %v732, %v664
        %v743 = vsel %vm737, %v734, %v666
        %v745 = vsel %vm737, %v736, %v668
        %vm746 = vcmask 261120
        %v748 = vsel %vm746, %v739, %v672
        %v750 = vsel %vm746, %v741, %v674
        %v752 = vsel %vm746, %v743, %v676
        %v754 = vsel %vm746, %v745, %v678
        %v755 = vld [vmem:[%s2] sm:$0xf]
        %v756 = vld [vmem:[%s2 + $0x4] sm:$0xf]
        %v757 = vld [vmem:[%s2 + $0x8] sm:$0xf]
        %v758 = vld [vmem:[%s2 + $0xc] sm:$0xf]
        %v759 = vld [vmem:[%s2 + $0x10] sm:$0x3]
        %v765 = vunpack.c.l.b16 %v755
        %v766 = vunpack.c.l.b16 %v756
        %v767 = vunpack.c.l.b16 %v757
        %v768 = vunpack.c.l.b16 %v758
        %v769 = vunpack.c.l.b16 %v759
        %v770 = vpack.c.b16 %v766, %v765
        %v771 = vpack.c.b16 %v768, %v767
        %v772 = vpack.c.b16 %v769, %v769
        %vm775 = vcmask 293888
        %v776 = vsel %vm775, %v748, 0
        %v778 = vsel %vm775, %v750, 0
        %v780 = vsel %vm775, %v752, 0
        %v782 = vsel %vm775, %v754, 0
        %vm784 = vcmask 1041408
        %v786 = vsel %vm784, %v772, 0
        %788 = vmatprep.subr.bf16.mxu0 0
        %789 = vmatpush1.bf16.msra.mxu0 %v770
        %790 = vmatprep.subr.bf16.mxu0 0
        %791 = vmatpush1.bf16.msra.mxu0 %v771
        %792 = vmatprep.subr.bf16.mxu0 0
        %793 = vmatpush1.bf16.msra.mxu0 %v786
        %794 = vmatprep.subr.bf16.mxu0 0
        %795 = vmatpush1.bf16.msra.mxu0 0
        %796 = vmatprep.subr.bf16.mxu0 0
        %797 = vmatpush1.bf16.msra.mxu0 0
        %798 = vmatprep.subr.bf16.mxu0 0
        %799 = vmatpush1.bf16.msra.mxu0 0
        %800 = vmatprep.subr.bf16.mxu0 0
        %801 = vmatpush1.bf16.msra.mxu0 0
        %802 = vmatprep.subr.bf16.mxu0 0
        %803 = vmatpush1.bf16.msra.mxu0 0
        %804 = vmatprep.subr.bf16.mxu0 0
        %805 = vmatpush1.bf16.msra.mxu0 0
        %806 = vmatprep.subr.bf16.mxu0 0
        %807 = vmatpush1.bf16.msra.mxu0 0
        %808 = vmatprep.subr.bf16.mxu0 0
        %809 = vmatpush1.bf16.msra.mxu0 0
        %810 = vmatprep.subr.bf16.mxu0 0
        %811 = vmatpush1.bf16.msra.mxu0 0
        %812 = vmatprep.subr.bf16.mxu0 0
        %813 = vmatpush1.bf16.msra.mxu0 0
        %814 = vmatprep.subr.bf16.mxu0 0
        %815 = vmatpush1.bf16.msra.mxu0 0
        %816 = vmatprep.subr.bf16.mxu0 0
        %817 = vmatpush1.bf16.msra.mxu0 0
        %818 = vmatprep.subr.bf16.mxu0 0
        %819 = vmatpush1.bf16.msra.mxu0 0
        %820 = vmatprep.mubr.bf16.mxu0 0
        %821 = vmatmul.mubr.bf16.gmra.mrb[0].mxu0 %v776
        %v822 = vpop.f32.mrb[0].mxu0
        %v823 = vadd.f32 0.0, %v822
        %v824 = vpop.f32.mrb[0].mxu0
        %v825 = vpop.f32.mrb[0].mxu0
        %v826 = vadd.f32 0.0, %v825
        %v827 = vpop.f32.mrb[0].mxu0
        %828 = vmatprep.mubr.bf16.mxu0 0
        %829 = vmatmul.mubr.bf16.gmra.mrb[0].mxu0 %v778
        %v830 = vpop.f32.mrb[0].mxu0
        %v831 = vadd.f32 0.0, %v830
        %v832 = vpop.f32.mrb[0].mxu0
        %v833 = vpop.f32.mrb[0].mxu0
        %v834 = vadd.f32 0.0, %v833
        %v835 = vpop.f32.mrb[0].mxu0
        %836 = vmatprep.mubr.bf16.mxu0 0
        %837 = vmatmul.mubr.bf16.gmra.mrb[0].mxu0 %v780
        %v838 = vpop.f32.mrb[0].mxu0
        %v839 = vadd.f32 0.0, %v838
        %v840 = vpop.f32.mrb[0].mxu0
        %v841 = vpop.f32.mrb[0].mxu0
        %v842 = vadd.f32 0.0, %v841
        %v843 = vpop.f32.mrb[0].mxu0
        %844 = vmatprep.mubr.bf16.mxu0 0
        %845 = vmatmul.mubr.bf16.gmra.mrb[0].mxu0 %v782
        %v846 = vpop.f32.mrb[0].mxu0
        %v847 = vadd.f32 0.0, %v846
        %v848 = vpop.f32.mrb[0].mxu0
        %v849 = vpop.f32.mrb[0].mxu0
        %v850 = vadd.f32 0.0, %v849
        %v851 = vpop.f32.mrb[0].mxu0
        %852 = vdwg.mxu0
        %v853 = vsel %vm692, %v823, 0.0
        %v854 = vsel %vm692, %v826, 0.0
        %v855 = vadd.f32 %v853, %v854
        %v856 = vsel %vm692, %v831, 0.0
        %v857 = vadd.f32 %v855, %v856
        %v858 = vsel %vm692, %v834, 0.0
        %v859 = vadd.f32 %v857, %v858
        %v860 = vsel %vm692, %v839, 0.0
        %v861 = vadd.f32 %v859, %v860
        %v862 = vsel %vm692, %v842, 0.0
        %v863 = vadd.f32 %v861, %v862
        %v864 = vsel %vm692, %v847, 0.0
        %v865 = vadd.f32 %v863, %v864
        %v866 = vsel %vm692, %v850, 0.0
        %v867 = vadd.f32 %v865, %v866
        %v868 = vrot.slane %v867, 4
        %v869 = vadd.f32 %v867, %v868
        %v870 = vrot.slane %v869, 2
        %v871 = vadd.f32 %v869, %v870
        %v872 = vrot.slane %v871, 1
        %v873 = vadd.f32 %v871, %v872
        %v874 = vmul.f32 %v823, %v823
        %v875 = vmul.f32 %v826, %v826
        %v876 = vmul.f32 %v831, %v831
        %v877 = vmul.f32 %v834, %v834
        %v878 = vmul.f32 %v839, %v839
        %v879 = vmul.f32 %v842, %v842
        %v880 = vmul.f32 %v847, %v847
        %v881 = vmul.f32 %v850, %v850
        %v882 = vsel %vm692, %v874, 0.0
        %v883 = vsel %vm692, %v875, 0.0
        %v884 = vadd.f32 %v882, %v883
        %v885 = vsel %vm692, %v876, 0.0
        %v886 = vadd.f32 %v884, %v885
        %v887 = vsel %vm692, %v877, 0.0
        %v888 = vadd.f32 %v886, %v887
        %v889 = vsel %vm692, %v878, 0.0
        %v890 = vadd.f32 %v888, %v889
        %v891 = vsel %vm692, %v879, 0.0
        %v892 = vadd.f32 %v890, %v891
        %v893 = vsel %vm692, %v880, 0.0
        %v894 = vadd.f32 %v892, %v893
        %v895 = vsel %vm692, %v881, 0.0
        %v896 = vadd.f32 %v894, %v895
        %v897 = vrot.slane %v896, 4
        %v898 = vadd.f32 %v896, %v897
        %v899 = vrot.slane %v898, 2
        %v900 = vadd.f32 %v898, %v899
        %v901 = vrot.slane %v900, 1
        %v902 = vadd.f32 %v900, %v901
        %vm903 = vcmask 1040384
        %v904 = vsel %vm903, %v873, %v902
        %vm905 = vcmask 58368
        %906 = vst.msk [vmem:[%s284] sm:$0x3] %vm905, %v904
        %v907 = vpack.c.bf16 %v823, %v823
        %v908 = vpack.c.bf16 %v826, %v826
        %v909 = vpack.c.bf16 %v831, %v831
        %v910 = vpack.c.bf16 %v834, %v834
        %v911 = vpack.c.bf16 %v839, %v839
        %v912 = vpack.c.bf16 %v842, %v842
        %v913 = vpack.c.bf16 %v847, %v847
        %v914 = vpack.c.bf16 %v850, %v850
        %vm915 = vcmask 60416
        %916 = vst.msk [vmem:[%s329] sm:$0xf] %vm915, %v907
        %917 = vst.msk [vmem:[%s329 + $0x4] sm:$0xf] %vm915, %v908
        %918 = vst.msk [vmem:[%s329 + $0x8] sm:$0xf] %vm915, %v909
        %919 = vst.msk [vmem:[%s329 + $0xc] sm:$0xf] %vm915, %v910
        %920 = vst.msk [vmem:[%s329 + $0x10] sm:$0xf] %vm915, %v911
        %921 = vst.msk [vmem:[%s329 + $0x14] sm:$0xf] %vm915, %v912
        %922 = vst.msk [vmem:[%s329 + $0x18] sm:$0xf] %vm915, %v913
        %923 = vst.msk [vmem:[%s329 + $0x1c] sm:$0xf] %vm915, %v914
        %s924 = smul.u32 8, %s24
        %p925 = scmp.lt.s32.totalorder %s23, 1
        %s926 = scalar_select %p925, %s23, 1
        %p927 = scmp.lt.s32.totalorder %s924, 7
        %s928 = scalar_select %p927, %s924, 7
        %s929 = smul.addr %s926, 8
        %s930 = sadd.s32 %s928, %s929
        %s931 = smul.addr %s930, 4
        %s932 = scalar_lea.vmem %s3, %s931
        %s933 = sand.u32 %s150, 1
        %s934 = scalar_lea.sflag [#allocation3], %s933
        %s935 = sand.u32 %s150, 1
        %s936 = smul.addr %s935, 2
        %s937 = scalar_lea.vmem [#allocation2], %s936
        // Predicated region
        $region33: #{double_conv_forward.11} parent=31 // pred_check
          %p938 = pneg %p132
        $region34: #{double_conv_forward.11} parent=31 // pred_check_branch
          %940 = sbr.rel (%p938) target = $region36
        $region35: #{double_conv_forward.11} parent=31 // pred_region
          %s941 = smul.u32 8, %s24
        $region36: #{double_conv_forward.11} parent=31 // pred_fallthru
          _
        // Predicated region
        $region37: #{double_conv_forward.11} parent=31 // pred_check
          %p942 = pneg %p160
        $region38: #{double_conv_forward.11} parent=31 // pred_check_branch
          %944 = sbr.rel (%p942) target = $region40
        $region39: #{double_conv_forward.11} parent=31 // pred_region
          %s946 = ssub.s32 32, 32
          %947 = vsyncadd %s934, %s946
          %s948 = sadd.s32 %s24, %s23
          %s949 = smul.addr %s948, 32
          %s950 = scalar_lea.hbm %s4, %s949
          %s952 = sshll.u32 %s937, 4
          %s953 = int_to_ptr.vmem [resolvable:$true] %s952
          %955 = dma.vmem_to_hbm [thread:$0]  %s953, 32, %s950, %s934
        $region40: #{double_conv_forward.11} parent=31 // pred_fallthru
          _
      $region32: #{double_conv_forward.11} parent=5 // pred_fallthru
        _
      %p956 = scmp.le.s32.totalorder 2, %s14
      // Predicated region
      $region41: #{double_conv_forward.11} parent=5 // pred_check
        %p957 = pneg %p956
      $region42: #{double_conv_forward.11} parent=5 // pred_check_branch
        %959 = sbr.rel (%p957) target = $region44
      $region43: #{double_conv_forward.11} parent=5 // pred_region
        %s960 = ssub.s32 %s14, 2
        // Predicated region
        $region45: #{double_conv_forward.11} parent=43 // pred_check
          %p961 = pneg %p138
        $region46: #{double_conv_forward.11} parent=43 // pred_check_branch
          %963 = sbr.rel (%p961) target = $region48
        $region47: #{double_conv_forward.11} parent=43 // pred_region
          %s964 = smul.u32 8, %s26
          %p965 = scmp.lt.s32.totalorder %s25, 1
          %s966 = scalar_select %p965, %s25, 1
          %p967 = scmp.lt.s32.totalorder %s964, 7
          %s968 = scalar_select %p967, %s964, 7
          %s969 = smul.addr %s966, 8
          %s970 = sadd.s32 %s968, %s969
          %s971 = smul.addr %s970, 4
          %s972 = scalar_lea.vmem %s3, %s971
        $region48: #{double_conv_forward.11} parent=43 // pred_fallthru
          _
        // Predicated region
        $region49: #{double_conv_forward.11} parent=43 // pred_check
          %p973 = pneg %p166
        $region50: #{double_conv_forward.11} parent=43 // pred_check_branch
          %975 = sbr.rel (%p973) target = $region52
        $region51: #{double_conv_forward.11} parent=43 // pred_region
          %s976 = sand.u32 %s151, 1
          %s977 = scalar_lea.sflag [#allocation3], %s976
          %s978 = sand.u32 %s151, 1
          %s979 = smul.addr %s978, 2
          %s980 = scalar_lea.vmem [#allocation2], %s979
          %981 = dma.done %s977, 32
        $region52: #{double_conv_forward.11} parent=43 // pred_fallthru
          _
      $region44: #{double_conv_forward.11} parent=5 // pred_fallthru
        _
    $region6: #{double_conv_forward.11} parent=1 // loop_footer
      %s18 = sadd.s32 1, %s14
    $region7: #{double_conv_forward.11} parent=1 // loop_footer_branch
      %13 = sbr.rel target = $region3
    $region8: #{double_conv_forward.11} parent=1 // loop_exit
      _
    %982 = vsyncpa [#allocation3], 1
    %s983 = scalar_lea.sflag [#allocation3], 1
    %984 = vsyncpa %s983, 1

// kernel: double_conv_forward.13
$region0: #{double_conv_forward.13}
  #allocation0 [shape = 'u32[]', space=smem, size = 0x4, offset = 0x4, fixed_abs, tag = 'smem constant byte address 0x4 - core index']
  #allocation1 [shape = 'u32[144,128]{1,0:T(1,128)}', space=vmem, size = 0x12000, scoped, tag = 'internal scratch']
  %s0 = inlined_call_operand.vmem [shape: bf16[2,16,128], index: 0, kind: input, shape index: {}]
  %s1 = inlined_call_operand.vmem [shape: f32[1,128], index: 1, kind: input, shape index: {}]
  %s2 = inlined_call_operand.vmem [shape: f32[1,128], index: 2, kind: input, shape index: {}]
  %s3 = inlined_call_operand.vmem [shape: bf16[2,16,128], index: 3, kind: output, shape index: {}]
  %s4 = sld [smem:[#allocation0]]
  $region45: #{double_conv_forward.13} parent=0
    _
  %s6 = ssub.s32 1, %s4
  %s7 = scalar_select 0, %s6, %s4
  loop: start=0, step=1, limit=4
  $region2: #{double_conv_forward.13} parent=0 // loop_pre_header
    _
  $region3: #{double_conv_forward.13} parent=0 // loop_header
    %s9 = sphi 0, %s13
    %p10 = scmp.ge.s32.totalorder %s9, 4
    %s16 = sphi 0, %s28
    %s17 = sphi 0, %s24
    %s18 = sphi 0, %s16
    %s19 = sphi 0, %s17
    %s20 = sphi 0, %s18
    %s21 = sphi 0, %s19
    %s33 = sphi 0, %s35
    %s36 = sphi 0, %s33
    %s37 = sphi 0, %s36
    %s53 = sphi 0, %s37
    %s57 = sphi 0, %s57
    %s59 = sphi 0, %s57
    %s60 = sphi 0, %s59
    %s74 = sphi 0, %s60
    %s78 = sphi 0, %s78
    %s80 = sphi 0, %s78
    %s81 = sphi 0, %s80
    %s95 = sphi 0, %s81
    %s103 = sphi 0, %s105
    %s106 = sphi 0, %s103
    %s107 = sphi 0, %s106
    %s123 = sphi 0, %s107
  $region4: #{double_conv_forward.13} parent=0 // loop_header_branch
    %12 = sbr.rel (%p10) target = $region8
  $region5: #{double_conv_forward.13} parent=0 // loop_body
    %s14 = ssub.s32 %s9, 1
    %s15 = ssub.s32 %s9, 2
    %s22 = sadd.s32 1, %s17
    %p23 = scmp.ge.s32.totalorder %s22, 1
    %s24 = scalar_select %p23, 0, %s22
    %s25 = sadd.s32 1, %s16
    %s26 = scalar_select %p23, %s25, %s16
    %p27 = scmp.ge.s32.totalorder %s26, 2
    %s28 = scalar_select %p27, 0, %s26
    %s29 = ssub.s32 %s16, %s28
    %s30 = ssub.s32 %s17, %s24
    %s31 = sor.u32 %s29, %s30
    %p32 = scmp.eq.s32.totalorder %s31, 0
    %s34 = sadd.s32 %s33, 1
    %s35 = scalar_select %p32, %s33, %s34
    %p38 = pneg %p32
    %p39 = scmp.eq.s32.totalorder %s9, 1
    %p40 = por %p38, %p39
    %p41 = scmp.ne.s32.totalorder %s33, %s36
    %p42 = scmp.eq.s32.totalorder %s9, 0
    %p43 = por %p41, %p42
    %p44 = scmp.ne.s32.totalorder %s33, %s36
    %p45 = scmp.eq.s32.totalorder %s14, 1
    %p46 = por %p44, %p45
    %p47 = scmp.ne.s32.totalorder %s36, %s37
    %p48 = scmp.eq.s32.totalorder %s14, 0
    %p49 = por %p47, %p48
    %p50 = scmp.ne.s32.totalorder %s36, %s37
    %p51 = scmp.eq.s32.totalorder %s15, 1
    %p52 = por %p50, %p51
    %p54 = scmp.ne.s32.totalorder %s37, %s53
    %p55 = scmp.eq.s32.totalorder %s15, 0
    %p56 = por %p54, %p55
    %s58 = sadd.s32 %s57, 1
    %p61 = scmp.eq.s32.totalorder %s9, 1
    %p62 = scmp.ne.s32.totalorder %s57, %s59
    %p63 = scmp.eq.s32.totalorder %s9, 0
    %p64 = por %p62, %p63
    %p65 = scmp.ne.s32.totalorder %s57, %s59
    %p66 = scmp.eq.s32.totalorder %s14, 1
    %p67 = por %p65, %p66
    %p68 = scmp.ne.s32.totalorder %s59, %s60
    %p69 = scmp.eq.s32.totalorder %s14, 0
    %p70 = por %p68, %p69
    %p71 = scmp.ne.s32.totalorder %s59, %s60
    %p72 = scmp.eq.s32.totalorder %s15, 1
    %p73 = por %p71, %p72
    %p75 = scmp.ne.s32.totalorder %s60, %s74
    %p76 = scmp.eq.s32.totalorder %s15, 0
    %p77 = por %p75, %p76
    %s79 = sadd.s32 %s78, 1
    %p82 = scmp.eq.s32.totalorder %s9, 1
    %p83 = scmp.ne.s32.totalorder %s78, %s80
    %p84 = scmp.eq.s32.totalorder %s9, 0
    %p85 = por %p83, %p84
    %p86 = scmp.ne.s32.totalorder %s78, %s80
    %p87 = scmp.eq.s32.totalorder %s14, 1
    %p88 = por %p86, %p87
    %p89 = scmp.ne.s32.totalorder %s80, %s81
    %p90 = scmp.eq.s32.totalorder %s14, 0
    %p91 = por %p89, %p90
    %p92 = scmp.ne.s32.totalorder %s80, %s81
    %p93 = scmp.eq.s32.totalorder %s15, 1
    %p94 = por %p92, %p93
    %p96 = scmp.ne.s32.totalorder %s81, %s95
    %p97 = scmp.eq.s32.totalorder %s15, 0
    %p98 = por %p96, %p97
    %s99 = ssub.s32 %s16, %s28
    %s100 = ssub.s32 %s17, %s24
    %s101 = sor.u32 %s99, %s100
    %p102 = scmp.eq.s32.totalorder %s101, 0
    %s104 = sadd.s32 %s103, 1
    %s105 = scalar_select %p102, %s103, %s104
    %p108 = pneg %p102
    %p109 = scmp.eq.s32.totalorder %s9, 1
    %p110 = por %p108, %p109
    %p111 = scmp.ne.s32.totalorder %s103, %s106
    %p112 = scmp.eq.s32.totalorder %s9, 0
    %p113 = por %p111, %p112
    %p114 = scmp.ne.s32.totalorder %s103, %s106
    %p115 = scmp.eq.s32.totalorder %s14, 1
    %p116 = por %p114, %p115
    %p117 = scmp.ne.s32.totalorder %s106, %s107
    %p118 = scmp.eq.s32.totalorder %s14, 0
    %p119 = por %p117, %p118
    %p120 = scmp.ne.s32.totalorder %s106, %s107
    %p121 = scmp.eq.s32.totalorder %s15, 1
    %p122 = por %p120, %p121
    %p124 = scmp.ne.s32.totalorder %s107, %s123
    %p125 = scmp.eq.s32.totalorder %s15, 0
    %p126 = por %p124, %p125
    %p127 = scmp.le.s32.totalorder 1, %s9
    %p128 = scmp.lt.s32.totalorder %s9, 3
    %p129 = pnand %p127, %p128
    %p130 = pneg %p129
    // Predicated region
    $region9: #{double_conv_forward.13} parent=5 // pred_check
      _
    $region10: #{double_conv_forward.13} parent=5 // pred_check_branch
      %132 = sbr.rel (%p129) target = $region12
    $region11: #{double_conv_forward.13} parent=5 // pred_region
      %s133 = ssub.s32 %s9, 1
      // Predicated region
      $region13: #{double_conv_forward.13} parent=11 // pred_check
        %p134 = pneg %p70
      $region14: #{double_conv_forward.13} parent=11 // pred_check_branch
        %136 = sbr.rel (%p134) target = $region16
      $region15: #{double_conv_forward.13} parent=11 // pred_region
        _
      $region16: #{double_conv_forward.13} parent=11 // pred_fallthru
        _
      // Predicated region
      $region17: #{double_conv_forward.13} parent=11 // pred_check
        %p137 = pneg %p91
      $region18: #{double_conv_forward.13} parent=11 // pred_check_branch
        %139 = sbr.rel (%p137) target = $region20
      $region19: #{double_conv_forward.13} parent=11 // pred_region
        _
      $region20: #{double_conv_forward.13} parent=11 // pred_fallthru
        _
    $region12: #{double_conv_forward.13} parent=5 // pred_fallthru
      _
    %p140 = scmp.lt.s32.totalorder %s9, 2
    // Predicated region
    $region21: #{double_conv_forward.13} parent=5 // pred_check
      %p141 = pneg %p140
    $region22: #{double_conv_forward.13} parent=5 // pred_check_branch
      %143 = sbr.rel (%p141) target = $region24
    $region23: #{double_conv_forward.13} parent=5 // pred_region
      // Predicated region
      $region25: #{double_conv_forward.13} parent=23 // pred_check
        %p144 = pneg %p43
      $region26: #{double_conv_forward.13} parent=23 // pred_check_branch
        %146 = sbr.rel (%p144) target = $region28
      $region27: #{double_conv_forward.13} parent=23 // pred_region
        %s147 = smul.u32 2, %s17
        %p148 = scmp.lt.s32.totalorder %s16, 1
        %s149 = scalar_select %p148, %s16, 1
        %p150 = scmp.lt.s32.totalorder %s147, 1
        %s151 = scalar_select %p150, %s147, 1
        %s152 = smul.addr %s149, 2
        %s153 = sadd.s32 %s151, %s152
        %s154 = smul.addr %s153, 4
        %s155 = scalar_lea.vmem %s0, %s154
        %s156 = smul.u32 2, %s17
      $region28: #{double_conv_forward.13} parent=23 // pred_fallthru
        _
    $region24: #{double_conv_forward.13} parent=5 // pred_fallthru
      _
    %p157 = scmp.le.s32.totalorder 1, %s9
    %p158 = scmp.lt.s32.totalorder %s9, 3
    %p159 = pnand %p157, %p158
    %p160 = pneg %p159
    // Predicated region
    $region29: #{double_conv_forward.13} parent=5 // pred_check
      _
    $region30: #{double_conv_forward.13} parent=5 // pred_check_branch
      %162 = sbr.rel (%p159) target = $region32
    $region31: #{double_conv_forward.13} parent=5 // pred_region
      %s163 = ssub.s32 %s9, 1
      %s164 = smul.u32 2, %s19
      %p165 = scmp.lt.s32.totalorder %s18, 1
      %s166 = scalar_select %p165, %s18, 1
      %p167 = scmp.lt.s32.totalorder %s164, 1
      %s168 = scalar_select %p167, %s164, 1
      %s169 = smul.addr %s166, 2
      %s170 = sadd.s32 %s168, %s169
      %s171 = smul.addr %s170, 4
      %s172 = scalar_lea.vmem %s0, %s171
      %p173 = pneg %p49
      %p174 = pneg %p46
      %p175 = pneg %p70
      %p176 = pneg %p67
      %p177 = pneg %p91
      %p178 = pneg %p88
      %p179 = pneg %p119
      %p180 = pneg %p116
      %s181 = smul.u32 2, %s19
      %p182 = scmp.lt.s32.totalorder %s18, 1
      %s183 = scalar_select %p182, %s18, 1
      %p184 = scmp.lt.s32.totalorder %s181, 1
      %s185 = scalar_select %p184, %s181, 1
      %s186 = smul.addr %s183, 2
      %s187 = sadd.s32 %s185, %s186
      %s188 = smul.addr %s187, 4
      %s189 = scalar_lea.vmem %s3, %s188
      %s190 = smul.u32 2, %s19
      %p191 = scmp.lt.s32.totalorder %s18, 1
      %s192 = scalar_select %p191, %s18, 1
      %p193 = scmp.lt.s32.totalorder %s190, 1
      %s194 = scalar_select %p193, %s190, 1
      %s195 = smul.addr %s192, 2
      %s196 = sadd.s32 %s194, %s195
      %s197 = smul.addr %s196, 4
      %s198 = scalar_lea.vmem %s0, %s197
      %s199 = smul.u32 2, %s19
      %s200 = smul.u32 2, %s19
      %p201 = scmp.lt.s32.totalorder %s18, 1
      %s202 = scalar_select %p201, %s18, 1
      %p203 = scmp.lt.s32.totalorder %s200, 1
      %s204 = scalar_select %p203, %s200, 1
      %s205 = smul.addr %s202, 2
      %s206 = sadd.s32 %s204, %s205
      %s207 = smul.addr %s206, 4
      %s208 = scalar_lea.vmem %s3, %s207
      %s209 = smul.u32 2, %s19
      %v210 = vld [vmem:[%s198] sm:$0xf]
      %v211 = vld [vmem:[%s198 + $0x4] sm:$0xf]
      %v212 = vunpack.c.l.bf16 %v210
      %v213 = vunpack.c.l.bf16 %v211
      %v214 = vld [vmem:[%s1] sm:$0x1]
      %v216 = vlaneseq
      %v217 = vshrl.u32 %v216, 7
      %v218 = vsub.s32 0, %v217
      %v219 = vrot.slane %v214, %v218
      %v221 = vmul.f32 %v212, %v219
      %v222 = vmul.f32 %v213, %v219
      %v223 = vld [vmem:[%s2] sm:$0x1]
      %v225 = vlaneseq
      %v226 = vshrl.u32 %v225, 7
      %v227 = vsub.s32 0, %v226
      %v228 = vrot.slane %v223, %v227
      %v230 = vadd.f32 %v221, %v228
      %v231 = vadd.f32 %v222, %v228
      %v232 = vmax.f32 %v230, 0.0
      %v233 = vmax.f32 %v231, 0.0
      %v234 = vpack.c.bf16 %v233, %v232
      %v236 = vunpack.c.l.b16 %v234
      %v237 = vunpack.c.h.b16 %v234
      %v238 = vpack.c.b16 %v236, %v236
      %v239 = vpack.c.b16 %v237, %v237
      %242 = vst [vmem:[%s208] sm:$0xf] %v238
      %243 = vst [vmem:[%s208 + $0x4] sm:$0xf] %v239
      %s244 = smul.u32 2, %s19
      %p245 = scmp.lt.s32.totalorder %s18, 1
      %s246 = scalar_select %p245, %s18, 1
      %p247 = scmp.lt.s32.totalorder %s244, 1
      %s248 = scalar_select %p247, %s244, 1
      %s249 = smul.addr %s246, 2
      %s250 = sadd.s32 %s248, %s249
      %s251 = smul.addr %s250, 4
      %s252 = scalar_lea.vmem %s3, %s251
      // Predicated region
      $region33: #{double_conv_forward.13} parent=31 // pred_check
        %p253 = pneg %p116
      $region34: #{double_conv_forward.13} parent=31 // pred_check_branch
        %255 = sbr.rel (%p253) target = $region36
      $region35: #{double_conv_forward.13} parent=31 // pred_region
        %s256 = smul.u32 2, %s19
      $region36: #{double_conv_forward.13} parent=31 // pred_fallthru
        _
    $region32: #{double_conv_forward.13} parent=5 // pred_fallthru
      _
    %p257 = scmp.le.s32.totalorder 2, %s9
    // Predicated region
    $region37: #{double_conv_forward.13} parent=5 // pred_check
      %p258 = pneg %p257
    $region38: #{double_conv_forward.13} parent=5 // pred_check_branch
      %260 = sbr.rel (%p258) target = $region40
    $region39: #{double_conv_forward.13} parent=5 // pred_region
      %s261 = ssub.s32 %s9, 2
      // Predicated region
      $region41: #{double_conv_forward.13} parent=39 // pred_check
        %p262 = pneg %p122
      $region42: #{double_conv_forward.13} parent=39 // pred_check_branch
        %264 = sbr.rel (%p262) target = $region44
      $region43: #{double_conv_forward.13} parent=39 // pred_region
        %s265 = smul.u32 2, %s21
        %p266 = scmp.lt.s32.totalorder %s20, 1
        %s267 = scalar_select %p266, %s20, 1
        %p268 = scmp.lt.s32.totalorder %s265, 1
        %s269 = scalar_select %p268, %s265, 1
        %s270 = smul.addr %s267, 2
        %s271 = sadd.s32 %s269, %s270
        %s272 = smul.addr %s271, 4
        %s273 = scalar_lea.vmem %s3, %s272
      $region44: #{double_conv_forward.13} parent=39 // pred_fallthru
        _
    $region40: #{double_conv_forward.13} parent=5 // pred_fallthru
      _
  $region6: #{double_conv_forward.13} parent=0 // loop_footer
    %s13 = sadd.s32 1, %s9
  $region7: #{double_conv_forward.13} parent=0 // loop_footer_branch
    %8 = sbr.rel target = $region3
  $region8: #{double_conv_forward.13} parent=0 // loop_exit
    _

// kernel: double_conv_forward.12
$region0: #{double_conv_forward.12}
  #allocation0 [shape = 'u32[]', space=smem, size = 0x4, offset = 0x4, fixed_abs, tag = 'smem constant byte address 0x4 - core index']
  #allocation1 [shape = 'u32[144,128]{1,0:T(1,128)}', space=vmem, size = 0x12000, scoped, tag = 'internal scratch']
  %s0 = inlined_call_operand.vmem [shape: bf16[2,18,18,4], index: 0, kind: input, shape index: {}, may-alias: {0,1}]
  %s1 = inlined_call_operand.vmem [shape: bf16[2,18,18,4], index: 1, kind: input, shape index: {}, may-alias: {0,1}]
  %s2 = inlined_call_operand.vmem [shape: bf16[36,8], index: 2, kind: input, shape index: {}]
  %s3 = inlined_call_operand.vmem [shape: bf16[2,16,16,8], index: 3, kind: input, shape index: {}]
  %s4 = inlined_call_operand.vmem [shape: bf16[2,16,16,8], index: 4, kind: output, shape index: {0}]
  %s5 = inlined_call_operand.vmem [shape: f32[2,1,2,8], index: 5, kind: output, shape index: {1}]
  %6 = xla_tuple %s4, %s5
  %s7 = sld [smem:[#allocation0]]
  $region57: #{double_conv_forward.12} parent=0
    _
  %s9 = ssub.s32 1, %s7
  %s10 = scalar_select 0, %s9, %s7
  loop: start=0, step=1, limit=4
  $region2: #{double_conv_forward.12} parent=0 // loop_pre_header
    _
  $region3: #{double_conv_forward.12} parent=0 // loop_header
    %s12 = sphi 0, %s16
    %p13 = scmp.ge.s32.totalorder %s12, 4
    %s19 = sphi 0, %s31
    %s20 = sphi 0, %s27
    %s21 = sphi 0, %s19
    %s22 = sphi 0, %s20
    %s23 = sphi 0, %s21
    %s24 = sphi 0, %s22
    %s36 = sphi 0, %s38
    %s39 = sphi 0, %s36
    %s40 = sphi 0, %s39
    %s56 = sphi 0, %s40
    %s68 = sphi 0, %s70
    %s71 = sphi 0, %s68
    %s72 = sphi 0, %s71
    %s88 = sphi 0, %s72
    %s92 = sphi 0, %s92
    %s94 = sphi 0, %s92
    %s95 = sphi 0, %s94
    %s109 = sphi 0, %s95
    %s117 = sphi 0, %s119
    %s120 = sphi 0, %s117
    %s121 = sphi 0, %s120
    %s137 = sphi 0, %s121
    %s145 = sphi 0, %s147
    %s148 = sphi 0, %s145
    %s149 = sphi 0, %s148
    %s165 = sphi 0, %s149
    %s173 = sphi 0, %s175
    %s176 = sphi 0, %s173
    %s177 = sphi 0, %s176
    %s193 = sphi 0, %s177
  $region4: #{double_conv_forward.12} parent=0 // loop_header_branch
    %15 = sbr.rel (%p13) target = $region8
  $region5: #{double_conv_forward.12} parent=0 // loop_body
    %s17 = ssub.s32 %s12, 1
    %s18 = ssub.s32 %s12, 2
    %s25 = sadd.s32 1, %s20
    %p26 = scmp.ge.s32.totalorder %s25, 1
    %s27 = scalar_select %p26, 0, %s25
    %s28 = sadd.s32 1, %s19
    %s29 = scalar_select %p26, %s28, %s19
    %p30 = scmp.ge.s32.totalorder %s29, 2
    %s31 = scalar_select %p30, 0, %s29
    %s32 = ssub.s32 %s19, %s31
    %s33 = ssub.s32 %s20, %s27
    %s34 = sor.u32 %s32, %s33
    %p35 = scmp.eq.s32.totalorder %s34, 0
    %s37 = sadd.s32 %s36, 1
    %s38 = scalar_select %p35, %s36, %s37
    %p41 = pneg %p35
    %p42 = scmp.eq.s32.totalorder %s12, 1
    %p43 = por %p41, %p42
    %p44 = scmp.ne.s32.totalorder %s36, %s39
    %p45 = scmp.eq.s32.totalorder %s12, 0
    %p46 = por %p44, %p45
    %p47 = scmp.ne.s32.totalorder %s36, %s39
    %p48 = scmp.eq.s32.totalorder %s17, 1
    %p49 = por %p47, %p48
    %p50 = scmp.ne.s32.totalorder %s39, %s40
    %p51 = scmp.eq.s32.totalorder %s17, 0
    %p52 = por %p50, %p51
    %p53 = scmp.ne.s32.totalorder %s39, %s40
    %p54 = scmp.eq.s32.totalorder %s18, 1
    %p55 = por %p53, %p54
    %p57 = scmp.ne.s32.totalorder %s40, %s56
    %p58 = scmp.eq.s32.totalorder %s18, 0
    %p59 = por %p57, %p58
    %s60 = sadd.s32 %s20, 1
    %s61 = smul.u32 %s60, 8
    %s62 = sadd.s32 %s27, 1
    %s63 = smul.u32 %s62, 8
    %s64 = ssub.s32 %s19, %s31
    %s65 = ssub.s32 %s61, %s63
    %s66 = sor.u32 %s64, %s65
    %p67 = scmp.eq.s32.totalorder %s66, 0
    %s69 = sadd.s32 %s68, 1
    %s70 = scalar_select %p67, %s68, %s69
    %p73 = pneg %p67
    %p74 = scmp.eq.s32.totalorder %s12, 1
    %p75 = por %p73, %p74
    %p76 = scmp.ne.s32.totalorder %s68, %s71
    %p77 = scmp.eq.s32.totalorder %s12, 0
    %p78 = por %p76, %p77
    %p79 = scmp.ne.s32.totalorder %s68, %s71
    %p80 = scmp.eq.s32.totalorder %s17, 1
    %p81 = por %p79, %p80
    %p82 = scmp.ne.s32.totalorder %s71, %s72
    %p83 = scmp.eq.s32.totalorder %s17, 0
    %p84 = por %p82, %p83
    %p85 = scmp.ne.s32.totalorder %s71, %s72
    %p86 = scmp.eq.s32.totalorder %s18, 1
    %p87 = por %p85, %p86
    %p89 = scmp.ne.s32.totalorder %s72, %s88
    %p90 = scmp.eq.s32.totalorder %s18, 0
    %p91 = por %p89, %p90
    %s93 = sadd.s32 %s92, 1
    %p96 = scmp.eq.s32.totalorder %s12, 1
    %p97 = scmp.ne.s32.totalorder %s92, %s94
    %p98 = scmp.eq.s32.totalorder %s12, 0
    %p99 = por %p97, %p98
    %p100 = scmp.ne.s32.totalorder %s92, %s94
    %p101 = scmp.eq.s32.totalorder %s17, 1
    %p102 = por %p100, %p101
    %p103 = scmp.ne.s32.totalorder %s94, %s95
    %p104 = scmp.eq.s32.totalorder %s17, 0
    %p105 = por %p103, %p104
    %p106 = scmp.ne.s32.totalorder %s94, %s95
    %p107 = scmp.eq.s32.totalorder %s18, 1
    %p108 = por %p106, %p107
    %p110 = scmp.ne.s32.totalorder %s95, %s109
    %p111 = scmp.eq.s32.totalorder %s18, 0
    %p112 = por %p110, %p111
    %s113 = ssub.s32 %s19, %s31
    %s114 = ssub.s32 %s20, %s27
    %s115 = sor.u32 %s113, %s114
    %p116 = scmp.eq.s32.totalorder %s115, 0
    %s118 = sadd.s32 %s117, 1
    %s119 = scalar_select %p116, %s117, %s118
    %p122 = pneg %p116
    %p123 = scmp.eq.s32.totalorder %s12, 1
    %p124 = por %p122, %p123
    %p125 = scmp.ne.s32.totalorder %s117, %s120
    %p126 = scmp.eq.s32.totalorder %s12, 0
    %p127 = por %p125, %p126
    %p128 = scmp.ne.s32.totalorder %s117, %s120
    %p129 = scmp.eq.s32.totalorder %s17, 1
    %p130 = por %p128, %p129
    %p131 = scmp.ne.s32.totalorder %s120, %s121
    %p132 = scmp.eq.s32.totalorder %s17, 0
    %p133 = por %p131, %p132
    %p134 = scmp.ne.s32.totalorder %s120, %s121
    %p135 = scmp.eq.s32.totalorder %s18, 1
    %p136 = por %p134, %p135
    %p138 = scmp.ne.s32.totalorder %s121, %s137
    %p139 = scmp.eq.s32.totalorder %s18, 0
    %p140 = por %p138, %p139
    %s141 = ssub.s32 %s19, %s31
    %s142 = ssub.s32 %s20, %s27
    %s143 = sor.u32 %s141, %s142
    %p144 = scmp.eq.s32.totalorder %s143, 0
    %s146 = sadd.s32 %s145, 1
    %s147 = scalar_select %p144, %s145, %s146
    %p150 = pneg %p144
    %p151 = scmp.eq.s32.totalorder %s12, 1
    %p152 = por %p150, %p151
    %p153 = scmp.ne.s32.totalorder %s145, %s148
    %p154 = scmp.eq.s32.totalorder %s12, 0
    %p155 = por %p153, %p154
    %p156 = scmp.ne.s32.totalorder %s145, %s148
    %p157 = scmp.eq.s32.totalorder %s17, 1
    %p158 = por %p156, %p157
    %p159 = scmp.ne.s32.totalorder %s148, %s149
    %p160 = scmp.eq.s32.totalorder %s17, 0
    %p161 = por %p159, %p160
    %p162 = scmp.ne.s32.totalorder %s148, %s149
    %p163 = scmp.eq.s32.totalorder %s18, 1
    %p164 = por %p162, %p163
    %p166 = scmp.ne.s32.totalorder %s149, %s165
    %p167 = scmp.eq.s32.totalorder %s18, 0
    %p168 = por %p166, %p167
    %s169 = ssub.s32 %s19, %s31
    %s170 = ssub.s32 %s20, %s27
    %s171 = sor.u32 %s169, %s170
    %p172 = scmp.eq.s32.totalorder %s171, 0
    %s174 = sadd.s32 %s173, 1
    %s175 = scalar_select %p172, %s173, %s174
    %p178 = pneg %p172
    %p179 = scmp.eq.s32.totalorder %s12, 1
    %p180 = por %p178, %p179
    %p181 = scmp.ne.s32.totalorder %s173, %s176
    %p182 = scmp.eq.s32.totalorder %s12, 0
    %p183 = por %p181, %p182
    %p184 = scmp.ne.s32.totalorder %s173, %s176
    %p185 = scmp.eq.s32.totalorder %s17, 1
    %p186 = por %p184, %p185
    %p187 = scmp.ne.s32.totalorder %s176, %s177
    %p188 = scmp.eq.s32.totalorder %s17, 0
    %p189 = por %p187, %p188
    %p190 = scmp.ne.s32.totalorder %s176, %s177
    %p191 = scmp.eq.s32.totalorder %s18, 1
    %p192 = por %p190, %p191
    %p194 = scmp.ne.s32.totalorder %s177, %s193
    %p195 = scmp.eq.s32.totalorder %s18, 0
    %p196 = por %p194, %p195
    %p197 = scmp.le.s32.totalorder 1, %s12
    %p198 = scmp.lt.s32.totalorder %s12, 3
    %p199 = pnand %p197, %p198
    %p200 = pneg %p199
    // Predicated region
    $region9: #{double_conv_forward.12} parent=5 // pred_check
      _
    $region10: #{double_conv_forward.12} parent=5 // pred_check_branch
      %202 = sbr.rel (%p199) target = $region12
    $region11: #{double_conv_forward.12} parent=5 // pred_region
      %s203 = ssub.s32 %s12, 1
      // Predicated region
      $region13: #{double_conv_forward.12} parent=11 // pred_check
        %p204 = pneg %p105
      $region14: #{double_conv_forward.12} parent=11 // pred_check_branch
        %206 = sbr.rel (%p204) target = $region16
      $region15: #{double_conv_forward.12} parent=11 // pred_region
        _
      $region16: #{double_conv_forward.12} parent=11 // pred_fallthru
        _
    $region12: #{double_conv_forward.12} parent=5 // pred_fallthru
      _
    %p207 = scmp.lt.s32.totalorder %s12, 2
    // Predicated region
    $region17: #{double_conv_forward.12} parent=5 // pred_check
      %p208 = pneg %p207
    $region18: #{double_conv_forward.12} parent=5 // pred_check_branch
      %210 = sbr.rel (%p208) target = $region20
    $region19: #{double_conv_forward.12} parent=5 // pred_region
      // Predicated region
      $region21: #{double_conv_forward.12} parent=19 // pred_check
        %p211 = pneg %p46
      $region22: #{double_conv_forward.12} parent=19 // pred_check_branch
        %213 = sbr.rel (%p211) target = $region24
      $region23: #{double_conv_forward.12} parent=19 // pred_region
        %s214 = smul.u32 16, %s20
        %s215 = ssub.s32 18, %s214
        %p216 = scmp.lt.s32.totalorder %s215, 16
        %s217 = scalar_select %p216, %s215, 16
        %s218 = smul.u32 64, %s217
        %s219 = smul.u32 %s218, 3
        %p220 = scmp.lt.s32.totalorder %s19, 1
        %s221 = scalar_select %p220, %s19, 1
        %p222 = scmp.lt.s32.totalorder %s214, 17
        %s223 = scalar_select %p222, %s214, 17
        %s224 = smul.addr %s223, 3
        %s225 = smul.addr %s221, 54
        %s226 = sadd.s32 %s224, %s225
        %s227 = smul.addr %s226, 4
        %s228 = scalar_lea.vmem %s0, %s227
        %s229 = smul.u32 16, %s20
        %s230 = ssub.s32 18, %s229
        %p231 = scmp.lt.s32.totalorder %s230, 16
        %s232 = scalar_select %p231, %s230, 16
        %s233 = smul.u32 64, %s232
        %s234 = smul.u32 %s233, 3
      $region24: #{double_conv_forward.12} parent=19 // pred_fallthru
        _
      // Predicated region
      $region25: #{double_conv_forward.12} parent=19 // pred_check
        %p235 = pneg %p78
      $region26: #{double_conv_forward.12} parent=19 // pred_check_branch
        %237 = sbr.rel (%p235) target = $region28
      $region27: #{double_conv_forward.12} parent=19 // pred_region
        %s238 = sadd.s32 %s20, 1
        %s239 = smul.u32 %s238, 8
        %s240 = smul.u32 2, %s239
        %p241 = scmp.lt.s32.totalorder %s19, 1
        %s242 = scalar_select %p241, %s19, 1
        %p243 = scmp.lt.s32.totalorder %s240, 17
        %s244 = scalar_select %p243, %s240, 17
        %s245 = smul.addr %s244, 3
        %s246 = smul.addr %s242, 54
        %s247 = sadd.s32 %s245, %s246
        %s248 = smul.addr %s247, 4
        %s249 = scalar_lea.vmem %s1, %s248
        %s250 = sadd.s32 %s20, 1
        %s251 = smul.u32 %s250, 8
        %s252 = smul.u32 2, %s251
      $region28: #{double_conv_forward.12} parent=19 // pred_fallthru
        _
      // Predicated region
      $region29: #{double_conv_forward.12} parent=19 // pred_check
        %p253 = pneg %p127
      $region30: #{double_conv_forward.12} parent=19 // pred_check_branch
        %255 = sbr.rel (%p253) target = $region32
      $region31: #{double_conv_forward.12} parent=19 // pred_region
        %s256 = smul.u32 16, %s20
        %p257 = scmp.lt.s32.totalorder %s19, 1
        %s258 = scalar_select %p257, %s19, 1
        %p259 = scmp.lt.s32.totalorder %s256, 15
        %s260 = scalar_select %p259, %s256, 15
        %s261 = smul.addr %s260, 2
        %s262 = smul.addr %s258, 32
        %s263 = sadd.s32 %s261, %s262
        %s264 = smul.addr %s263, 4
        %s265 = scalar_lea.vmem %s3, %s264
        %s266 = smul.u32 16, %s20
      $region32: #{double_conv_forward.12} parent=19 // pred_fallthru
        _
    $region20: #{double_conv_forward.12} parent=5 // pred_fallthru
      _
    %p267 = scmp.le.s32.totalorder 1, %s12
    %p268 = scmp.lt.s32.totalorder %s12, 3
    %p269 = pnand %p267, %p268
    %p270 = pneg %p269
    // Predicated region
    $region33: #{double_conv_forward.12} parent=5 // pred_check
      _
    $region34: #{double_conv_forward.12} parent=5 // pred_check_branch
      %272 = sbr.rel (%p269) target = $region36
    $region35: #{double_conv_forward.12} parent=5 // pred_region
      %s273 = ssub.s32 %s12, 1
      %s274 = smul.u32 16, %s22
      %s275 = ssub.s32 18, %s274
      %p276 = scmp.lt.s32.totalorder %s275, 16
      %s277 = scalar_select %p276, %s275, 16
      %s278 = smul.u32 64, %s277
      %s279 = smul.u32 %s278, 3
      %p280 = scmp.lt.s32.totalorder %s21, 1
      %s281 = scalar_select %p280, %s21, 1
      %p282 = scmp.lt.s32.totalorder %s274, 17
      %s283 = scalar_select %p282, %s274, 17
      %s284 = smul.addr %s283, 3
      %s285 = smul.addr %s281, 54
      %s286 = sadd.s32 %s284, %s285
      %s287 = smul.addr %s286, 4
      %s288 = scalar_lea.vmem %s0, %s287
      %p289 = pneg %p52
      %p290 = pneg %p49
      %s291 = sadd.s32 %s22, 1
      %s292 = smul.u32 %s291, 8
      %s293 = smul.u32 2, %s292
      %p294 = scmp.lt.s32.totalorder %s21, 1
      %s295 = scalar_select %p294, %s21, 1
      %p296 = scmp.lt.s32.totalorder %s293, 17
      %s297 = scalar_select %p296, %s293, 17
      %s298 = smul.addr %s297, 3
      %s299 = smul.addr %s295, 54
      %s300 = sadd.s32 %s298, %s299
      %s301 = smul.addr %s300, 4
      %s302 = scalar_lea.vmem %s1, %s301
      %p303 = pneg %p84
      %p304 = pneg %p81
      %p305 = pneg %p105
      %p306 = pneg %p102
      %s307 = smul.u32 16, %s22
      %p308 = scmp.lt.s32.totalorder %s21, 1
      %s309 = scalar_select %p308, %s21, 1
      %p310 = scmp.lt.s32.totalorder %s307, 15
      %s311 = scalar_select %p310, %s307, 15
      %s312 = smul.addr %s311, 2
      %s313 = smul.addr %s309, 32
      %s314 = sadd.s32 %s312, %s313
      %s315 = smul.addr %s314, 4
      %s316 = scalar_lea.vmem %s3, %s315
      %p317 = pneg %p133
      %p318 = pneg %p130
      %p319 = pneg %p161
      %p320 = pneg %p158
      %s321 = smul.u32 16, %s22
      %p322 = scmp.lt.s32.totalorder %s21, 1
      %s323 = scalar_select %p322, %s21, 1
      %p324 = scmp.lt.s32.totalorder %s321, 15
      %s325 = scalar_select %p324, %s321, 15
      %s326 = smul.addr %s325, 2
      %s327 = smul.addr %s323, 32
      %s328 = sadd.s32 %s326, %s327
      %s329 = smul.addr %s328, 4
      %s330 = scalar_lea.vmem %s4, %s329
      %p331 = pneg %p189
      %p332 = pneg %p186
      %p333 = scmp.lt.s32.totalorder %s21, 1
      %s334 = scalar_select %p333, %s21, 1
      %p335 = scmp.lt.s32.totalorder %s22, 0
      %s336 = scalar_select %p335, %s22, 0
      %s337 = sadd.s32 %s336, %s334
      %s338 = smul.addr %s337, 2
      %s339 = scalar_lea.vmem %s5, %s338
      %s340 = smul.u32 16, %s22
      %s341 = ssub.s32 18, %s340
      %p342 = scmp.lt.s32.totalorder %s341, 16
      %s343 = scalar_select %p342, %s341, 16
      %s344 = smul.u32 64, %s343
      %s345 = smul.u32 %s344, 3
      %p346 = scmp.lt.s32.totalorder %s21, 1
      %s347 = scalar_select %p346, %s21, 1
      %p348 = scmp.lt.s32.totalorder %s340, 17
      %s349 = scalar_select %p348, %s340, 17
      %s350 = smul.addr %s349, 3
      %s351 = smul.addr %s347, 54
      %s352 = sadd.s32 %s350, %s351
      %s353 = smul.addr %s352, 4
      %s354 = scalar_lea.vmem %s0, %s353
      %s355 = smul.u32 16, %s22
      %s356 = ssub.s32 18, %s355
      %p357 = scmp.lt.s32.totalorder %s356, 16
      %s358 = scalar_select %p357, %s356, 16
      %s359 = smul.u32 64, %s358
      %s360 = smul.u32 %s359, 3
      %s361 = sadd.s32 %s22, 1
      %s362 = smul.u32 %s361, 8
      %s363 = smul.u32 2, %s362
      %p364 = scmp.lt.s32.totalorder %s21, 1
      %s365 = scalar_select %p364, %s21, 1
      %p366 = scmp.lt.s32.totalorder %s363, 17
      %s367 = scalar_select %p366, %s363, 17
      %s368 = smul.addr %s367, 3
      %s369 = smul.addr %s365, 54
      %s370 = sadd.s32 %s368, %s369
      %s371 = smul.addr %s370, 4
      %s372 = scalar_lea.vmem %s1, %s371
      %s373 = sadd.s32 %s22, 1
      %s374 = smul.u32 %s373, 8
      %s375 = smul.u32 2, %s374
      %s376 = smul.u32 16, %s22
      %p377 = scmp.lt.s32.totalorder %s21, 1
      %s378 = scalar_select %p377, %s21, 1
      %p379 = scmp.lt.s32.totalorder %s376, 15
      %s380 = scalar_select %p379, %s376, 15
      %s381 = smul.addr %s380, 2
      %s382 = smul.addr %s378, 32
      %s383 = sadd.s32 %s381, %s382
      %s384 = smul.addr %s383, 4
      %s385 = scalar_lea.vmem %s3, %s384
      %s386 = smul.u32 16, %s22
      %s387 = smul.u32 16, %s22
      %p388 = scmp.lt.s32.totalorder %s21, 1
      %s389 = scalar_select %p388, %s21, 1
      %p390 = scmp.lt.s32.totalorder %s387, 15
      %s391 = scalar_select %p390, %s387, 15
      %s392 = smul.addr %s391, 2
      %s393 = smul.addr %s389, 32
      %s394 = sadd.s32 %s392, %s393
      %s395 = smul.addr %s394, 4
      %s396 = scalar_lea.vmem %s4, %s395
      %s397 = smul.u32 16, %s22
      %p398 = scmp.lt.s32.totalorder %s21, 1
      %s399 = scalar_select %p398, %s21, 1
      %p400 = scmp.lt.s32.totalorder %s22, 0
      %s401 = scalar_select %p400, %s22, 0
      %s402 = sadd.s32 %s401, %s399
      %s403 = smul.addr %s402, 2
      %s404 = scalar_lea.vmem %s5, %s403
      %v406 = vld [vmem:[%s354] sm:$0xf]
      %v407 = vld [vmem:[%s354 + $0x4] sm:$0xf]
      %v408 = vld [vmem:[%s354 + $0x8] sm:$0x1]
      %v409 = vld [vmem:[%s354 + $0xc] sm:$0xf]
      %v410 = vld [vmem:[%s354 + $0x10] sm:$0xf]
      %v411 = vld [vmem:[%s354 + $0x14] sm:$0x1]
      %v412 = vld [vmem:[%s354 + $0x18] sm:$0xf]
      %v413 = vld [vmem:[%s354 + $0x1c] sm:$0xf]
      %v414 = vld [vmem:[%s354 + $0x20] sm:$0x1]
      %v415 = vld [vmem:[%s354 + $0x24] sm:$0xf]
      %v416 = vld [vmem:[%s354 + $0x28] sm:$0xf]
      %v417 = vld [vmem:[%s354 + $0x2c] sm:$0x1]
      %v418 = vld [vmem:[%s354 + $0x30] sm:$0xf]
      %v419 = vld [vmem:[%s354 + $0x34] sm:$0xf]
      %v420 = vld [vmem:[%s354 + $0x38] sm:$0x1]
      %v421 = vld [vmem:[%s354 + $0x3c] sm:$0xf]
      %v422 = vld [vmem:[%s354 + $0x40] sm:$0xf]
      %v423 = vld [vmem:[%s354 + $0x44] sm:$0x1]
      %v424 = vld [vmem:[%s354 + $0x48] sm:$0xf]
      %v425 = vld [vmem:[%s354 + $0x4c] sm:$0xf]
      %v426 = vld [vmem:[%s354 + $0x50] sm:$0x1]
      %v427 = vld [vmem:[%s354 + $0x54] sm:$0xf]
      %v428 = vld [vmem:[%s354 + $0x58] sm:$0xf]
      %v429 = vld [vmem:[%s354 + $0x5c] sm:$0x1]
      %v430 = vld [vmem:[%s354 + $0x60] sm:$0xf]
      %v431 = vld [vmem:[%s354 + $0x64] sm:$0xf]
      %v432 = vld [vmem:[%s354 + $0x68] sm:$0x1]
      %v433 = vld [vmem:[%s354 + $0x6c] sm:$0xf]
      %v434 = vld [vmem:[%s354 + $0x70] sm:$0xf]
      %v435 = vld [vmem:[%s354 + $0x74] sm:$0x1]
      %v436 = vld [vmem:[%s354 + $0x78] sm:$0xf]
      %v437 = vld [vmem:[%s354 + $0x7c] sm:$0xf]
      %v438 = vld [vmem:[%s354 + $0x80] sm:$0x1]
      %v439 = vld [vmem:[%s354 + $0x84] sm:$0xf]
      %v440 = vld [vmem:[%s354 + $0x88] sm:$0xf]
      %v441 = vld [vmem:[%s354 + $0x8c] sm:$0x1]
      %v442 = vld [vmem:[%s354 + $0x90] sm:$0xf]
      %v443 = vld [vmem:[%s354 + $0x94] sm:$0xf]
      %v444 = vld [vmem:[%s354 + $0x98] sm:$0x1]
      %v445 = vld [vmem:[%s354 + $0x9c] sm:$0xf]
      %v446 = vld [vmem:[%s354 + $0xa0] sm:$0xf]
      %v447 = vld [vmem:[%s354 + $0xa4] sm:$0x1]
      %v448 = vld [vmem:[%s354 + $0xa8] sm:$0xf]
      %v449 = vld [vmem:[%s354 + $0xac] sm:$0xf]
      %v450 = vld [vmem:[%s354 + $0xb0] sm:$0x1]
      %v451 = vld [vmem:[%s354 + $0xb4] sm:$0xf]
      %v452 = vld [vmem:[%s354 + $0xb8] sm:$0xf]
      %v453 = vld [vmem:[%s354 + $0xbc] sm:$0x1]
      %v454 = vld [vmem:[%s372] sm:$0xf]
      %v455 = vld [vmem:[%s372 + $0x4] sm:$0xf]
      %v456 = vld [vmem:[%s372 + $0x8] sm:$0x1]
      %v457 = vld [vmem:[%s372 + $0xc] sm:$0xf]
      %v458 = vld [vmem:[%s372 + $0x10] sm:$0xf]
      %v459 = vld [vmem:[%s372 + $0x14] sm:$0x1]
      %vm460 = vsmask.f32 3328
      %vm461 = vsmask.f32 7440
      %vm462 = vmor %vm460, %vm461
      %v464 = vshrl.u32 %v406, 16
      %v466 = vrot.slane %v464, 4
      %v467 = vshll.u32 %v406, 16
      %v469 = vrot.slane %v467, 5
      %v470 = vor.u32 %v466, %v469
      %v471 = vrot.slane %v470, 4
      %v473 = vshll.u32 %v407, 16
      %v475 = vrot.slane %v473, 5
      %v476 = vsel %vm462, %v471, %v475
      %v477 = vshrl.u32 %v407, 16
      %v479 = vrot.slane %v477, 4
      %v480 = vor.u32 %v479, %v475
      %v481 = vrot.slane %v480, 4
      %v483 = vshll.u32 %v408, 16
      %v485 = vrot.slane %v483, 5
      %v486 = vsel %vm462, %v481, %v485
      %v488 = vshrl.u32 %v409, 16
      %v490 = vrot.slane %v488, 4
      %v491 = vshll.u32 %v409, 16
      %v493 = vrot.slane %v491, 5
      %v494 = vor.u32 %v490, %v493
      %v495 = vrot.slane %v494, 4
      %v497 = vshll.u32 %v410, 16
      %v499 = vrot.slane %v497, 5
      %v500 = vsel %vm462, %v495, %v499
      %v501 = vshrl.u32 %v410, 16
      %v503 = vrot.slane %v501, 4
      %v504 = vor.u32 %v503, %v499
      %v505 = vrot.slane %v504, 4
      %v507 = vshll.u32 %v411, 16
      %v509 = vrot.slane %v507, 5
      %v510 = vsel %vm462, %v505, %v509
      %v512 = vshrl.u32 %v412, 16
      %v514 = vrot.slane %v512, 4
      %v515 = vshll.u32 %v412, 16
      %v517 = vrot.slane %v515, 5
      %v518 = vor.u32 %v514, %v517
      %v519 = vrot.slane %v518, 4
      %v521 = vshll.u32 %v413, 16
      %v523 = vrot.slane %v521, 5
      %v524 = vsel %vm462, %v519, %v523
      %v525 = vshrl.u32 %v413, 16
      %v527 = vrot.slane %v525, 4
      %v528 = vor.u32 %v527, %v523
      %v529 = vrot.slane %v528, 4
      %v531 = vshll.u32 %v414, 16
      %v533 = vrot.slane %v531, 5
      %v534 = vsel %vm462, %v529, %v533
      %v536 = vshrl.u32 %v415, 16
      %v538 = vrot.slane %v536, 4
      %v539 = vshll.u32 %v415, 16
      %v541 = vrot.slane %v539, 5
      %v542 = vor.u32 %v538, %v541
      %v543 = vrot.slane %v542, 4
      %v545 = vshll.u32 %v416, 16
      %v547 = vrot.slane %v545, 5
      %v548 = vsel %vm462, %v543, %v547
      %v549 = vshrl.u32 %v416, 16
      %v551 = vrot.slane %v549, 4
      %v552 = vor.u32 %v551, %v547
      %v553 = vrot.slane %v552, 4
      %v555 = vshll.u32 %v417, 16
      %v557 = vrot.slane %v555, 5
      %v558 = vsel %vm462, %v553, %v557
      %v560 = vshrl.u32 %v418, 16
      %v562 = vrot.slane %v560, 4
      %v563 = vshll.u32 %v418, 16
      %v565 = vrot.slane %v563, 5
      %v566 = vor.u32 %v562, %v565
      %v567 = vrot.slane %v566, 4
      %v569 = vshll.u32 %v419, 16
      %v571 = vrot.slane %v569, 5
      %v572 = vsel %vm462, %v567, %v571
      %v573 = vshrl.u32 %v419, 16
      %v575 = vrot.slane %v573, 4
      %v576 = vor.u32 %v575, %v571
      %v577 = vrot.slane %v576, 4
      %v579 = vshll.u32 %v420, 16
      %v581 = vrot.slane %v579, 5
      %v582 = vsel %vm462, %v577, %v581
      %v584 = vshrl.u32 %v421, 16
      %v586 = vrot.slane %v584, 4
      %v587 = vshll.u32 %v421, 16
      %v589 = vrot.slane %v587, 5
      %v590 = vor.u32 %v586, %v589
      %v591 = vrot.slane %v590, 4
      %v593 = vshll.u32 %v422, 16
      %v595 = vrot.slane %v593, 5
      %v596 = vsel %vm462, %v591, %v595
      %v597 = vshrl.u32 %v422, 16
      %v599 = vrot.slane %v597, 4
      %v600 = vor.u32 %v599, %v595
      %v601 = vrot.slane %v600, 4
      %v603 = vshll.u32 %v423, 16
      %v605 = vrot.slane %v603, 5
      %v606 = vsel %vm462, %v601, %v605
      %v608 = vshrl.u32 %v424, 16
      %v610 = vrot.slane %v608, 4
      %v611 = vshll.u32 %v424, 16
      %v613 = vrot.slane %v611, 5
      %v614 = vor.u32 %v610, %v613
      %v615 = vrot.slane %v614, 4
      %v617 = vshll.u32 %v425, 16
      %v619 = vrot.slane %v617, 5
      %v620 = vsel %vm462, %v615, %v619
      %v621 = vshrl.u32 %v425, 16
      %v623 = vrot.slane %v621, 4
      %v624 = vor.u32 %v623, %v619
      %v625 = vrot.slane %v624, 4
      %v627 = vshll.u32 %v426, 16
      %v629 = vrot.slane %v627, 5
      %v630 = vsel %vm462, %v625, %v629
      %v632 = vshrl.u32 %v427, 16
      %v634 = vrot.slane %v632, 4
      %v635 = vshll.u32 %v427, 16
      %v637 = vrot.slane %v635, 5
      %v638 = vor.u32 %v634, %v637
      %v639 = vrot.slane %v638, 4
      %v641 = vshll.u32 %v428, 16
      %v643 = vrot.slane %v641, 5
      %v644 = vsel %vm462, %v639, %v643
      %v645 = vshrl.u32 %v428, 16
      %v647 = vrot.slane %v645, 4
      %v648 = vor.u32 %v647, %v643
      %v649 = vrot.slane %v648, 4
      %v651 = vshll.u32 %v429, 16
      %v653 = vrot.slane %v651, 5
      %v654 = vsel %vm462, %v649, %v653
      %v656 = vshrl.u32 %v430, 16
      %v658 = vrot.slane %v656, 4
      %v659 = vshll.u32 %v430, 16
      %v661 = vrot.slane %v659, 5
      %v662 = vor.u32 %v658, %v661
      %v663 = vrot.slane %v662, 4
      %v665 = vshll.u32 %v431, 16
      %v667 = vrot.slane %v665, 5
      %v668 = vsel %vm462, %v663, %v667
      %v669 = vshrl.u32 %v431, 16
      %v671 = vrot.slane %v669, 4
      %v672 = vor.u32 %v671, %v667
      %v673 = vrot.slane %v672, 4
      %v675 = vshll.u32 %v432, 16
      %v677 = vrot.slane %v675, 5
      %v678 = vsel %vm462, %v673, %v677
      %v680 = vshrl.u32 %v433, 16
      %v682 = vrot.slane %v680, 4
      %v683 = vshll.u32 %v433, 16
      %v685 = vrot.slane %v683, 5
      %v686 = vor.u32 %v682, %v685
      %v687 = vrot.slane %v686, 4
      %v689 = vshll.u32 %v434, 16
      %v691 = vrot.slane %v689, 5
      %v692 = vsel %vm462, %v687, %v691
      %v693 = vshrl.u32 %v434, 16
      %v695 = vrot.slane %v693, 4
      %v696 = vor.u32 %v695, %v691
      %v697 = vrot.slane %v696, 4
      %v699 = vshll.u32 %v435, 16
      %v701 = vrot.slane %v699, 5
      %v702 = vsel %vm462, %v697, %v701
      %v704 = vshrl.u32 %v436, 16
      %v706 = vrot.slane %v704, 4
      %v707 = vshll.u32 %v436, 16
      %v709 = vrot.slane %v707, 5
      %v710 = vor.u32 %v706, %v709
      %v711 = vrot.slane %v710, 4
      %v713 = vshll.u32 %v437, 16
      %v715 = vrot.slane %v713, 5
      %v716 = vsel %vm462, %v711, %v715
      %v717 = vshrl.u32 %v437, 16
      %v719 = vrot.slane %v717, 4
      %v720 = vor.u32 %v719, %v715
      %v721 = vrot.slane %v720, 4
      %v723 = vshll.u32 %v438, 16
      %v725 = vrot.slane %v723, 5
      %v726 = vsel %vm462, %v721, %v725
      %v728 = vshrl.u32 %v439, 16
      %v730 = vrot.slane %v728, 4
      %v731 = vshll.u32 %v439, 16
      %v733 = vrot.slane %v731, 5
      %v734 = vor.u32 %v730, %v733
      %v735 = vrot.slane %v734, 4
      %v737 = vshll.u32 %v440, 16
      %v739 = vrot.slane %v737, 5
      %v740 = vsel %vm462, %v735, %v739
      %v741 = vshrl.u32 %v440, 16
      %v743 = vrot.slane %v741, 4
      %v744 = vor.u32 %v743, %v739
      %v745 = vrot.slane %v744, 4
      %v747 = vshll.u32 %v441, 16
      %v749 = vrot.slane %v747, 5
      %v750 = vsel %vm462, %v745, %v749
      %v752 = vshrl.u32 %v442, 16
      %v754 = vrot.slane %v752, 4
      %v755 = vshll.u32 %v442, 16
      %v757 = vrot.slane %v755, 5
      %v758 = vor.u32 %v754, %v757
      %v759 = vrot.slane %v758, 4
      %v761 = vshll.u32 %v443, 16
      %v763 = vrot.slane %v761, 5
      %v764 = vsel %vm462, %v759, %v763
      %v765 = vshrl.u32 %v443, 16
      %v767 = vrot.slane %v765, 4
      %v768 = vor.u32 %v767, %v763
      %v769 = vrot.slane %v768, 4
      %v771 = vshll.u32 %v444, 16
      %v773 = vrot.slane %v771, 5
      %v774 = vsel %vm462, %v769, %v773
      %v776 = vshrl.u32 %v445, 16
      %v778 = vrot.slane %v776, 4
      %v779 = vshll.u32 %v445, 16
      %v781 = vrot.slane %v779, 5
      %v782 = vor.u32 %v778, %v781
      %v783 = vrot.slane %v782, 4
      %v785 = vshll.u32 %v446, 16
      %v787 = vrot.slane %v785, 5
      %v788 = vsel %vm462, %v783, %v787
      %v789 = vshrl.u32 %v446, 16
      %v791 = vrot.slane %v789, 4
      %v792 = vor.u32 %v791, %v787
      %v793 = vrot.slane %v792, 4
      %v795 = vshll.u32 %v447, 16
      %v797 = vrot.slane %v795, 5
      %v798 = vsel %vm462, %v793, %v797
      %v800 = vshrl.u32 %v448, 16
      %v802 = vrot.slane %v800, 4
      %v803 = vshll.u32 %v448, 16
      %v805 = vrot.slane %v803, 5
      %v806 = vor.u32 %v802, %v805
      %v807 = vrot.slane %v806, 4
      %v809 = vshll.u32 %v449, 16
      %v811 = vrot.slane %v809, 5
      %v812 = vsel %vm462, %v807, %v811
      %v813 = vshrl.u32 %v449, 16
      %v815 = vrot.slane %v813, 4
      %v816 = vor.u32 %v815, %v811
      %v817 = vrot.slane %v816, 4
      %v819 = vshll.u32 %v450, 16
      %v821 = vrot.slane %v819, 5
      %v822 = vsel %vm462, %v817, %v821
      %v824 = vshrl.u32 %v451, 16
      %v826 = vrot.slane %v824, 4
      %v827 = vshll.u32 %v451, 16
      %v829 = vrot.slane %v827, 5
      %v830 = vor.u32 %v826, %v829
      %v831 = vrot.slane %v830, 4
      %v833 = vshll.u32 %v452, 16
      %v835 = vrot.slane %v833, 5
      %v836 = vsel %vm462, %v831, %v835
      %v837 = vshrl.u32 %v452, 16
      %v839 = vrot.slane %v837, 4
      %v840 = vor.u32 %v839, %v835
      %v841 = vrot.slane %v840, 4
      %v843 = vshll.u32 %v453, 16
      %v845 = vrot.slane %v843, 5
      %v846 = vsel %vm462, %v841, %v845
      %vm895 = vcmask 1042432
      %vm896 = vcmask 1046532
      %vm897 = vmor %vm895, %vm896
      %v898 = vrot.slane %v406, 5
      %v899 = vrot.slane %v898, 4
      %v900 = vrot.slane %v407, 5
      %v901 = vsel %vm897, %v899, %v900
      %v902 = vrot.slane %v900, 4
      %v903 = vrot.slane %v408, 5
      %v904 = vsel %vm897, %v902, %v903
      %v905 = vrot.slane %v409, 5
      %v906 = vrot.slane %v905, 4
      %v907 = vrot.slane %v410, 5
      %v908 = vsel %vm897, %v906, %v907
      %v909 = vrot.slane %v907, 4
      %v910 = vrot.slane %v411, 5
      %v911 = vsel %vm897, %v909, %v910
      %v912 = vrot.slane %v412, 5
      %v913 = vrot.slane %v912, 4
      %v914 = vrot.slane %v413, 5
      %v915 = vsel %vm897, %v913, %v914
      %v916 = vrot.slane %v914, 4
      %v917 = vrot.slane %v414, 5
      %v918 = vsel %vm897, %v916, %v917
      %v919 = vrot.slane %v415, 5
      %v920 = vrot.slane %v919, 4
      %v921 = vrot.slane %v416, 5
      %v922 = vsel %vm897, %v920, %v921
      %v923 = vrot.slane %v921, 4
      %v924 = vrot.slane %v417, 5
      %v925 = vsel %vm897, %v923, %v924
      %v926 = vrot.slane %v418, 5
      %v927 = vrot.slane %v926, 4
      %v928 = vrot.slane %v419, 5
      %v929 = vsel %vm897, %v927, %v928
      %v930 = vrot.slane %v928, 4
      %v931 = vrot.slane %v420, 5
      %v932 = vsel %vm897, %v930, %v931
      %v933 = vrot.slane %v421, 5
      %v934 = vrot.slane %v933, 4
      %v935 = vrot.slane %v422, 5
      %v936 = vsel %vm897, %v934, %v935
      %v937 = vrot.slane %v935, 4
      %v938 = vrot.slane %v423, 5
      %v939 = vsel %vm897, %v937, %v938
      %v940 = vrot.slane %v424, 5
      %v941 = vrot.slane %v940, 4
      %v942 = vrot.slane %v425, 5
      %v943 = vsel %vm897, %v941, %v942
      %v944 = vrot.slane %v942, 4
      %v945 = vrot.slane %v426, 5
      %v946 = vsel %vm897, %v944, %v945
      %v947 = vrot.slane %v427, 5
      %v948 = vrot.slane %v947, 4
      %v949 = vrot.slane %v428, 5
      %v950 = vsel %vm897, %v948, %v949
      %v951 = vrot.slane %v949, 4
      %v952 = vrot.slane %v429, 5
      %v953 = vsel %vm897, %v951, %v952
      %v954 = vrot.slane %v430, 5
      %v955 = vrot.slane %v954, 4
      %v956 = vrot.slane %v431, 5
      %v957 = vsel %vm897, %v955, %v956
      %v958 = vrot.slane %v956, 4
      %v959 = vrot.slane %v432, 5
      %v960 = vsel %vm897, %v958, %v959
      %v961 = vrot.slane %v433, 5
      %v962 = vrot.slane %v961, 4
      %v963 = vrot.slane %v434, 5
      %v964 = vsel %vm897, %v962, %v963
      %v965 = vrot.slane %v963, 4
      %v966 = vrot.slane %v435, 5
      %v967 = vsel %vm897, %v965, %v966
      %v968 = vrot.slane %v436, 5
      %v969 = vrot.slane %v968, 4
      %v970 = vrot.slane %v437, 5
      %v971 = vsel %vm897, %v969, %v970
      %v972 = vrot.slane %v970, 4
      %v973 = vrot.slane %v438, 5
      %v974 = vsel %vm897, %v972, %v973
      %v975 = vrot.slane %v439, 5
      %v976 = vrot.slane %v975, 4
      %v977 = vrot.slane %v440, 5
      %v978 = vsel %vm897, %v976, %v977
      %v979 = vrot.slane %v977, 4
      %v980 = vrot.slane %v441, 5
      %v981 = vsel %vm897, %v979, %v980
      %v982 = vrot.slane %v442, 5
      %v983 = vrot.slane %v982, 4
      %v984 = vrot.slane %v443, 5
      %v985 = vsel %vm897, %v983, %v984
      %v986 = vrot.slane %v984, 4
      %v987 = vrot.slane %v444, 5
      %v988 = vsel %vm897, %v986, %v987
      %v989 = vrot.slane %v445, 5
      %v990 = vrot.slane %v989, 4
      %v991 = vrot.slane %v446, 5
      %v992 = vsel %vm897, %v990, %v991
      %v993 = vrot.slane %v991, 4
      %v994 = vrot.slane %v447, 5
      %v995 = vsel %vm897, %v993, %v994
      %v996 = vrot.slane %v448, 5
      %v997 = vrot.slane %v996, 4
      %v998 = vrot.slane %v449, 5
      %v999 = vsel %vm897, %v997, %v998
      %v1000 = vrot.slane %v998, 4
      %v1001 = vrot.slane %v450, 5
      %v1002 = vsel %vm897, %v1000, %v1001
      %v1003 = vrot.slane %v451, 5
      %v1004 = vrot.slane %v1003, 4
      %v1005 = vrot.slane %v452, 5
      %v1006 = vsel %vm897, %v1004, %v1005
      %v1007 = vrot.slane %v1005, 4
      %v1008 = vrot.slane %v453, 5
      %v1009 = vsel %vm897, %v1007, %v1008
      %v1011 = vshrl.u32 %v454, 16
      %v1013 = vrot.slane %v1011, 4
      %v1014 = vshll.u32 %v454, 16
      %v1016 = vrot.slane %v1014, 5
      %v1017 = vor.u32 %v1013, %v1016
      %v1018 = vrot.slane %v1017, 4
      %v1020 = vshll.u32 %v455, 16
      %v1022 = vrot.slane %v1020, 5
      %v1023 = vsel %vm462, %v1018, %v1022
      %v1024 = vshrl.u32 %v455, 16
      %v1026 = vrot.slane %v1024, 4
      %v1027 = vor.u32 %v1026, %v1022
      %v1028 = vrot.slane %v1027, 4
      %v1030 = vshll.u32 %v456, 16
      %v1032 = vrot.slane %v1030, 5
      %v1033 = vsel %vm462, %v1028, %v1032
      %v1037 = vrot.slane %v454, 5
      %v1038 = vrot.slane %v1037, 4
      %v1039 = vrot.slane %v455, 5
      %v1040 = vsel %vm897, %v1038, %v1039
      %v1041 = vrot.slane %v1039, 4
      %v1042 = vrot.slane %v456, 5
      %v1043 = vsel %vm897, %v1041, %v1042
      %v1045 = vshrl.u32 %v457, 16
      %v1047 = vrot.slane %v1045, 4
      %v1048 = vshll.u32 %v457, 16
      %v1050 = vrot.slane %v1048, 5
      %v1051 = vor.u32 %v1047, %v1050
      %v1052 = vrot.slane %v1051, 4
      %v1054 = vshll.u32 %v458, 16
      %v1056 = vrot.slane %v1054, 5
      %v1057 = vsel %vm462, %v1052, %v1056
      %v1058 = vshrl.u32 %v458, 16
      %v1060 = vrot.slane %v1058, 4
      %v1061 = vor.u32 %v1060, %v1056
      %v1062 = vrot.slane %v1061, 4
      %v1064 = vshll.u32 %v459, 16
      %v1066 = vrot.slane %v1064, 5
      %v1067 = vsel %vm462, %v1062, %v1066
      %v1071 = vrot.slane %v457, 5
      %v1072 = vrot.slane %v1071, 4
      %v1073 = vrot.slane %v458, 5
      %v1074 = vsel %vm897, %v1072, %v1073
      %v1075 = vrot.slane %v1073, 4
      %v1076 = vrot.slane %v459, 5
      %v1077 = vsel %vm897, %v1075, %v1076
      %v1078 = vunpack.c.l.b16 %v406
      %v1079 = vunpack.c.l.b16 %v407
      %v1080 = vunpack.c.l.b16 %v409
      %v1081 = vunpack.c.l.b16 %v410
      %v1082 = vunpack.c.l.b16 %v412
      %v1083 = vunpack.c.l.b16 %v413
      %v1084 = vunpack.c.l.b16 %v415
      %v1085 = vunpack.c.l.b16 %v416
      %v1086 = vunpack.c.l.b16 %v418
      %v1087 = vunpack.c.l.b16 %v419
      %v1088 = vunpack.c.l.b16 %v421
      %v1089 = vunpack.c.l.b16 %v422
      %v1090 = vunpack.c.l.b16 %v424
      %v1091 = vunpack.c.l.b16 %v425
      %v1092 = vunpack.c.l.b16 %v427
      %v1093 = vunpack.c.l.b16 %v428
      %v1094 = vunpack.c.l.b16 %v430
      %v1095 = vunpack.c.l.b16 %v431
      %v1096 = vunpack.c.l.b16 %v433
      %v1097 = vunpack.c.l.b16 %v434
      %v1098 = vunpack.c.l.b16 %v436
      %v1099 = vunpack.c.l.b16 %v437
      %v1100 = vunpack.c.l.b16 %v439
      %v1101 = vunpack.c.l.b16 %v440
      %v1102 = vunpack.c.l.b16 %v442
      %v1103 = vunpack.c.l.b16 %v443
      %v1104 = vunpack.c.l.b16 %v445
      %v1105 = vunpack.c.l.b16 %v446
      %v1106 = vunpack.c.l.b16 %v448
      %v1107 = vunpack.c.l.b16 %v449
      %v1108 = vunpack.c.l.b16 %v451
      %v1109 = vunpack.c.l.b16 %v452
      %v1110 = vpack.c.b16 %v1079, %v1078
      %v1111 = vpack.c.b16 %v1081, %v1080
      %v1112 = vpack.c.b16 %v1083, %v1082
      %v1113 = vpack.c.b16 %v1085, %v1084
      %v1114 = vpack.c.b16 %v1087, %v1086
      %v1115 = vpack.c.b16 %v1089, %v1088
      %v1116 = vpack.c.b16 %v1091, %v1090
      %v1117 = vpack.c.b16 %v1093, %v1092
      %v1118 = vpack.c.b16 %v1095, %v1094
      %v1119 = vpack.c.b16 %v1097, %v1096
      %v1120 = vpack.c.b16 %v1099, %v1098
      %v1121 = vpack.c.b16 %v1101, %v1100
      %v1122 = vpack.c.b16 %v1103, %v1102
      %v1123 = vpack.c.b16 %v1105, %v1104
      %v1124 = vpack.c.b16 %v1107, %v1106
      %v1125 = vpack.c.b16 %v1109, %v1108
      %v1126 = vunpack.c.l.b16 %v476
      %v1127 = vunpack.c.l.b16 %v486
      %v1128 = vunpack.c.l.b16 %v500
      %v1129 = vunpack.c.l.b16 %v510
      %v1130 = vunpack.c.l.b16 %v524
      %v1131 = vunpack.c.l.b16 %v534
      %v1132 = vunpack.c.l.b16 %v548
      %v1133 = vunpack.c.l.b16 %v558
      %v1134 = vunpack.c.l.b16 %v572
      %v1135 = vunpack.c.l.b16 %v582
      %v1136 = vunpack.c.l.b16 %v596
      %v1137 = vunpack.c.l.b16 %v606
      %v1138 = vunpack.c.l.b16 %v620
      %v1139 = vunpack.c.l.b16 %v630
      %v1140 = vunpack.c.l.b16 %v644
      %v1141 = vunpack.c.l.b16 %v654
      %v1142 = vunpack.c.l.b16 %v668
      %v1143 = vunpack.c.l.b16 %v678
      %v1144 = vunpack.c.l.b16 %v692
      %v1145 = vunpack.c.l.b16 %v702
      %v1146 = vunpack.c.l.b16 %v716
      %v1147 = vunpack.c.l.b16 %v726
      %v1148 = vunpack.c.l.b16 %v740
      %v1149 = vunpack.c.l.b16 %v750
      %v1150 = vunpack.c.l.b16 %v764
      %v1151 = vunpack.c.l.b16 %v774
      %v1152 = vunpack.c.l.b16 %v788
      %v1153 = vunpack.c.l.b16 %v798
      %v1154 = vunpack.c.l.b16 %v812
      %v1155 = vunpack.c.l.b16 %v822
      %v1156 = vunpack.c.l.b16 %v836
      %v1157 = vunpack.c.l.b16 %v846
      %v1158 = vpack.c.b16 %v1127, %v1126
      %v1159 = vpack.c.b16 %v1129, %v1128
      %v1160 = vpack.c.b16 %v1131, %v1130
      %v1161 = vpack.c.b16 %v1133, %v1132
      %v1162 = vpack.c.b16 %v1135, %v1134
      %v1163 = vpack.c.b16 %v1137, %v1136
      %v1164 = vpack.c.b16 %v1139, %v1138
      %v1165 = vpack.c.b16 %v1141, %v1140
      %v1166 = vpack.c.b16 %v1143, %v1142
      %v1167 = vpack.c.b16 %v1145, %v1144
      %v1168 = vpack.c.b16 %v1147, %v1146
      %v1169 = vpack.c.b16 %v1149, %v1148
      %v1170 = vpack.c.b16 %v1151, %v1150
      %v1171 = vpack.c.b16 %v1153, %v1152
      %v1172 = vpack.c.b16 %v1155, %v1154
      %v1173 = vpack.c.b16 %v1157, %v1156
      %1174 = vrot.lane.b32.xlu0 %v1158, 4
      %v1175 = vpop.permute.xlu0 %1174
      %1176 = vrot.lane.b32.xlu0 %v1159, 4
      %v1177 = vpop.permute.xlu0 %1176
      %1178 = vrot.lane.b32.xlu0 %v1160, 4
      %v1179 = vpop.permute.xlu0 %1178
      %1180 = vrot.lane.b32.xlu0 %v1161, 4
      %v1181 = vpop.permute.xlu0 %1180
      %1182 = vrot.lane.b32.xlu0 %v1162, 4
      %v1183 = vpop.permute.xlu0 %1182
      %1184 = vrot.lane.b32.xlu0 %v1163, 4
      %v1185 = vpop.permute.xlu0 %1184
      %1186 = vrot.lane.b32.xlu0 %v1164, 4
      %v1187 = vpop.permute.xlu0 %1186
      %1188 = vrot.lane.b32.xlu0 %v1165, 4
      %v1189 = vpop.permute.xlu0 %1188
      %1190 = vrot.lane.b32.xlu0 %v1166, 4
      %v1191 = vpop.permute.xlu0 %1190
      %1192 = vrot.lane.b32.xlu0 %v1167, 4
      %v1193 = vpop.permute.xlu0 %1192
      %1194 = vrot.lane.b32.xlu0 %v1168, 4
      %v1195 = vpop.permute.xlu0 %1194
      %1196 = vrot.lane.b32.xlu0 %v1169, 4
      %v1197 = vpop.permute.xlu0 %1196
      %1198 = vrot.lane.b32.xlu0 %v1170, 4
      %v1199 = vpop.permute.xlu0 %1198
      %1200 = vrot.lane.b32.xlu0 %v1171, 4
      %v1201 = vpop.permute.xlu0 %1200
      %1202 = vrot.lane.b32.xlu0 %v1172, 4
      %v1203 = vpop.permute.xlu0 %1202
      %1204 = vrot.lane.b32.xlu0 %v1173, 4
      %v1205 = vpop.permute.xlu0 %1204
      %v1206 = vunpack.c.l.b16 %v901
      %v1207 = vunpack.c.l.b16 %v904
      %v1208 = vunpack.c.l.b16 %v908
      %v1209 = vunpack.c.l.b16 %v911
      %v1210 = vunpack.c.l.b16 %v915
      %v1211 = vunpack.c.l.b16 %v918
      %v1212 = vunpack.c.l.b16 %v922
      %v1213 = vunpack.c.l.b16 %v925
      %v1214 = vunpack.c.l.b16 %v929
      %v1215 = vunpack.c.l.b16 %v932
      %v1216 = vunpack.c.l.b16 %v936
      %v1217 = vunpack.c.l.b16 %v939
      %v1218 = vunpack.c.l.b16 %v943
      %v1219 = vunpack.c.l.b16 %v946
      %v1220 = vunpack.c.l.b16 %v950
      %v1221 = vunpack.c.l.b16 %v953
      %v1222 = vunpack.c.l.b16 %v957
      %v1223 = vunpack.c.l.b16 %v960
      %v1224 = vunpack.c.l.b16 %v964
      %v1225 = vunpack.c.l.b16 %v967
      %v1226 = vunpack.c.l.b16 %v971
      %v1227 = vunpack.c.l.b16 %v974
      %v1228 = vunpack.c.l.b16 %v978
      %v1229 = vunpack.c.l.b16 %v981
      %v1230 = vunpack.c.l.b16 %v985
      %v1231 = vunpack.c.l.b16 %v988
      %v1232 = vunpack.c.l.b16 %v992
      %v1233 = vunpack.c.l.b16 %v995
      %v1234 = vunpack.c.l.b16 %v999
      %v1235 = vunpack.c.l.b16 %v1002
      %v1236 = vunpack.c.l.b16 %v1006
      %v1237 = vunpack.c.l.b16 %v1009
      %v1238 = vpack.c.b16 %v1207, %v1206
      %v1239 = vpack.c.b16 %v1209, %v1208
      %v1240 = vpack.c.b16 %v1211, %v1210
      %v1241 = vpack.c.b16 %v1213, %v1212
      %v1242 = vpack.c.b16 %v1215, %v1214
      %v1243 = vpack.c.b16 %v1217, %v1216
      %v1244 = vpack.c.b16 %v1219, %v1218
      %v1245 = vpack.c.b16 %v1221, %v1220
      %v1246 = vpack.c.b16 %v1223, %v1222
      %v1247 = vpack.c.b16 %v1225, %v1224
      %v1248 = vpack.c.b16 %v1227, %v1226
      %v1249 = vpack.c.b16 %v1229, %v1228
      %v1250 = vpack.c.b16 %v1231, %v1230
      %v1251 = vpack.c.b16 %v1233, %v1232
      %v1252 = vpack.c.b16 %v1235, %v1234
      %v1253 = vpack.c.b16 %v1237, %v1236
      %1254 = vrot.lane.b32.xlu0 %v1238, 8
      %v1255 = vpop.permute.xlu0 %1254
      %1256 = vrot.lane.b32.xlu0 %v1239, 8
      %v1257 = vpop.permute.xlu0 %1256
      %1258 = vrot.lane.b32.xlu0 %v1240, 8
      %v1259 = vpop.permute.xlu0 %1258
      %1260 = vrot.lane.b32.xlu0 %v1241, 8
      %v1261 = vpop.permute.xlu0 %1260
      %1262 = vrot.lane.b32.xlu0 %v1242, 8
      %v1263 = vpop.permute.xlu0 %1262
      %1264 = vrot.lane.b32.xlu0 %v1243, 8
      %v1265 = vpop.permute.xlu0 %1264
      %1266 = vrot.lane.b32.xlu0 %v1244, 8
      %v1267 = vpop.permute.xlu0 %1266
      %1268 = vrot.lane.b32.xlu0 %v1245, 8
      %v1269 = vpop.permute.xlu0 %1268
      %1270 = vrot.lane.b32.xlu0 %v1246, 8
      %v1271 = vpop.permute.xlu0 %1270
      %1272 = vrot.lane.b32.xlu0 %v1247, 8
      %v1273 = vpop.permute.xlu0 %1272
      %1274 = vrot.lane.b32.xlu0 %v1248, 8
      %v1275 = vpop.permute.xlu0 %1274
      %1276 = vrot.lane.b32.xlu0 %v1249, 8
      %v1277 = vpop.permute.xlu0 %1276
      %1278 = vrot.lane.b32.xlu0 %v1250, 8
      %v1279 = vpop.permute.xlu0 %1278
      %1280 = vrot.lane.b32.xlu0 %v1251, 8
      %v1281 = vpop.permute.xlu0 %1280
      %1282 = vrot.lane.b32.xlu0 %v1252, 8
      %v1283 = vpop.permute.xlu0 %1282
      %1284 = vrot.lane.b32.xlu0 %v1253, 8
      %v1285 = vpop.permute.xlu0 %1284
      %v1286 = vunpack.c.l.b16 %v454
      %v1287 = vunpack.c.l.b16 %v455
      %v1288 = vpack.c.b16 %v1287, %v1286
      %1289 = vrot.lane.b32.xlu0 %v1111, 12
      %v1290 = vpop.permute.xlu0 %1289
      %1291 = vrot.lane.b32.xlu0 %v1112, 12
      %v1292 = vpop.permute.xlu0 %1291
      %1293 = vrot.lane.b32.xlu0 %v1113, 12
      %v1294 = vpop.permute.xlu0 %1293
      %1295 = vrot.lane.b32.xlu0 %v1114, 12
      %v1296 = vpop.permute.xlu0 %1295
      %1297 = vrot.lane.b32.xlu0 %v1115, 12
      %v1298 = vpop.permute.xlu0 %1297
      %1299 = vrot.lane.b32.xlu0 %v1116, 12
      %v1300 = vpop.permute.xlu0 %1299
      %1301 = vrot.lane.b32.xlu0 %v1117, 12
      %v1302 = vpop.permute.xlu0 %1301
      %1303 = vrot.lane.b32.xlu0 %v1118, 12
      %v1304 = vpop.permute.xlu0 %1303
      %1305 = vrot.lane.b32.xlu0 %v1119, 12
      %v1306 = vpop.permute.xlu0 %1305
      %1307 = vrot.lane.b32.xlu0 %v1120, 12
      %v1308 = vpop.permute.xlu0 %1307
      %1309 = vrot.lane.b32.xlu0 %v1121, 12
      %v1310 = vpop.permute.xlu0 %1309
      %1311 = vrot.lane.b32.xlu0 %v1122, 12
      %v1312 = vpop.permute.xlu0 %1311
      %1313 = vrot.lane.b32.xlu0 %v1123, 12
      %v1314 = vpop.permute.xlu0 %1313
      %1315 = vrot.lane.b32.xlu0 %v1124, 12
      %v1316 = vpop.permute.xlu0 %1315
      %1317 = vrot.lane.b32.xlu0 %v1125, 12
      %v1318 = vpop.permute.xlu0 %1317
      %1319 = vrot.lane.b32.xlu0 %v1288, 12
      %v1320 = vpop.permute.xlu0 %1319
      %v1321 = vunpack.c.l.b16 %v1023
      %v1322 = vunpack.c.l.b16 %v1033
      %v1323 = vpack.c.b16 %v1322, %v1321
      %1324 = vrot.lane.b32.xlu0 %v1159, 16
      %v1325 = vpop.permute.xlu0 %1324
      %1326 = vrot.lane.b32.xlu0 %v1160, 16
      %v1327 = vpop.permute.xlu0 %1326
      %1328 = vrot.lane.b32.xlu0 %v1161, 16
      %v1329 = vpop.permute.xlu0 %1328
      %1330 = vrot.lane.b32.xlu0 %v1162, 16
      %v1331 = vpop.permute.xlu0 %1330
      %1332 = vrot.lane.b32.xlu0 %v1163, 16
      %v1333 = vpop.permute.xlu0 %1332
      %1334 = vrot.lane.b32.xlu0 %v1164, 16
      %v1335 = vpop.permute.xlu0 %1334
      %1336 = vrot.lane.b32.xlu0 %v1165, 16
      %v1337 = vpop.permute.xlu0 %1336
      %1338 = vrot.lane.b32.xlu0 %v1166, 16
      %v1339 = vpop.permute.xlu0 %1338
      %1340 = vrot.lane.b32.xlu0 %v1167, 16
      %v1341 = vpop.permute.xlu0 %1340
      %1342 = vrot.lane.b32.xlu0 %v1168, 16
      %v1343 = vpop.permute.xlu0 %1342
      %1344 = vrot.lane.b32.xlu0 %v1169, 16
      %v1345 = vpop.permute.xlu0 %1344
      %1346 = vrot.lane.b32.xlu0 %v1170, 16
      %v1347 = vpop.permute.xlu0 %1346
      %1348 = vrot.lane.b32.xlu0 %v1171, 16
      %v1349 = vpop.permute.xlu0 %1348
      %1350 = vrot.lane.b32.xlu0 %v1172, 16
      %v1351 = vpop.permute.xlu0 %1350
      %1352 = vrot.lane.b32.xlu0 %v1173, 16
      %v1353 = vpop.permute.xlu0 %1352
      %1354 = vrot.lane.b32.xlu0 %v1323, 16
      %v1355 = vpop.permute.xlu0 %1354
      %v1356 = vunpack.c.l.b16 %v1040
      %v1357 = vunpack.c.l.b16 %v1043
      %v1358 = vpack.c.b16 %v1357, %v1356
      %1359 = vrot.lane.b32.xlu0 %v1239, 20
      %v1360 = vpop.permute.xlu0 %1359
      %1361 = vrot.lane.b32.xlu0 %v1240, 20
      %v1362 = vpop.permute.xlu0 %1361
      %1363 = vrot.lane.b32.xlu0 %v1241, 20
      %v1364 = vpop.permute.xlu0 %1363
      %1365 = vrot.lane.b32.xlu0 %v1242, 20
      %v1366 = vpop.permute.xlu0 %1365
      %1367 = vrot.lane.b32.xlu0 %v1243, 20
      %v1368 = vpop.permute.xlu0 %1367
      %1369 = vrot.lane.b32.xlu0 %v1244, 20
      %v1370 = vpop.permute.xlu0 %1369
      %1371 = vrot.lane.b32.xlu0 %v1245, 20
      %v1372 = vpop.permute.xlu0 %1371
      %1373 = vrot.lane.b32.xlu0 %v1246, 20
      %v1374 = vpop.permute.xlu0 %1373
      %1375 = vrot.lane.b32.xlu0 %v1247, 20
      %v1376 = vpop.permute.xlu0 %1375
      %1377 = vrot.lane.b32.xlu0 %v1248, 20
      %v1378 = vpop.permute.xlu0 %1377
      %1379 = vrot.lane.b32.xlu0 %v1249, 20
      %v1380 = vpop.permute.xlu0 %1379
      %1381 = vrot.lane.b32.xlu0 %v1250, 20
      %v1382 = vpop.permute.xlu0 %1381
      %1383 = vrot.lane.b32.xlu0 %v1251, 20
      %v1384 = vpop.permute.xlu0 %1383
      %1385 = vrot.lane.b32.xlu0 %v1252, 20
      %v1386 = vpop.permute.xlu0 %1385
      %1387 = vrot.lane.b32.xlu0 %v1253, 20
      %v1388 = vpop.permute.xlu0 %1387
      %1389 = vrot.lane.b32.xlu0 %v1358, 20
      %v1390 = vpop.permute.xlu0 %1389
      %v1391 = vunpack.c.l.b16 %v457
      %v1392 = vunpack.c.l.b16 %v458
      %v1393 = vpack.c.b16 %v1392, %v1391
      %1394 = vrot.lane.b32.xlu0 %v1112, 24
      %v1395 = vpop.permute.xlu0 %1394
      %1396 = vrot.lane.b32.xlu0 %v1113, 24
      %v1397 = vpop.permute.xlu0 %1396
      %1398 = vrot.lane.b32.xlu0 %v1114, 24
      %v1399 = vpop.permute.xlu0 %1398
      %1400 = vrot.lane.b32.xlu0 %v1115, 24
      %v1401 = vpop.permute.xlu0 %1400
      %1402 = vrot.lane.b32.xlu0 %v1116, 24
      %v1403 = vpop.permute.xlu0 %1402
      %1404 = vrot.lane.b32.xlu0 %v1117, 24
      %v1405 = vpop.permute.xlu0 %1404
      %1406 = vrot.lane.b32.xlu0 %v1118, 24
      %v1407 = vpop.permute.xlu0 %1406
      %1408 = vrot.lane.b32.xlu0 %v1119, 24
      %v1409 = vpop.permute.xlu0 %1408
      %1410 = vrot.lane.b32.xlu0 %v1120, 24
      %v1411 = vpop.permute.xlu0 %1410
      %1412 = vrot.lane.b32.xlu0 %v1121, 24
      %v1413 = vpop.permute.xlu0 %1412
      %1414 = vrot.lane.b32.xlu0 %v1122, 24
      %v1415 = vpop.permute.xlu0 %1414
      %1416 = vrot.lane.b32.xlu0 %v1123, 24
      %v1417 = vpop.permute.xlu0 %1416
      %1418 = vrot.lane.b32.xlu0 %v1124, 24
      %v1419 = vpop.permute.xlu0 %1418
      %1420 = vrot.lane.b32.xlu0 %v1125, 24
      %v1421 = vpop.permute.xlu0 %1420
      %1422 = vrot.lane.b32.xlu0 %v1288, 24
      %v1423 = vpop.permute.xlu0 %1422
      %1424 = vrot.lane.b32.xlu0 %v1393, 24
      %v1425 = vpop.permute.xlu0 %1424
      %v1426 = vunpack.c.l.b16 %v1057
      %v1427 = vunpack.c.l.b16 %v1067
      %v1428 = vpack.c.b16 %v1427, %v1426
      %1429 = vrot.lane.b32.xlu0 %v1160, 28
      %v1430 = vpop.permute.xlu0 %1429
      %1431 = vrot.lane.b32.xlu0 %v1161, 28
      %v1432 = vpop.permute.xlu0 %1431
      %1433 = vrot.lane.b32.xlu0 %v1162, 28
      %v1434 = vpop.permute.xlu0 %1433
      %1435 = vrot.lane.b32.xlu0 %v1163, 28
      %v1436 = vpop.permute.xlu0 %1435
      %1437 = vrot.lane.b32.xlu0 %v1164, 28
      %v1438 = vpop.permute.xlu0 %1437
      %1439 = vrot.lane.b32.xlu0 %v1165, 28
      %v1440 = vpop.permute.xlu0 %1439
      %1441 = vrot.lane.b32.xlu0 %v1166, 28
      %v1442 = vpop.permute.xlu0 %1441
      %1443 = vrot.lane.b32.xlu0 %v1167, 28
      %v1444 = vpop.permute.xlu0 %1443
      %1445 = vrot.lane.b32.xlu0 %v1168, 28
      %v1446 = vpop.permute.xlu0 %1445
      %1447 = vrot.lane.b32.xlu0 %v1169, 28
      %v1448 = vpop.permute.xlu0 %1447
      %1449 = vrot.lane.b32.xlu0 %v1170, 28
      %v1450 = vpop.permute.xlu0 %1449
      %1451 = vrot.lane.b32.xlu0 %v1171, 28
      %v1452 = vpop.permute.xlu0 %1451
      %1453 = vrot.lane.b32.xlu0 %v1172, 28
      %v1454 = vpop.permute.xlu0 %1453
      %1455 = vrot.lane.b32.xlu0 %v1173, 28
      %v1456 = vpop.permute.xlu0 %1455
      %1457 = vrot.lane.b32.xlu0 %v1323, 28
      %v1458 = vpop.permute.xlu0 %1457
      %1459 = vrot.lane.b32.xlu0 %v1428, 28
      %v1460 = vpop.permute.xlu0 %1459
      %v1461 = vunpack.c.l.b16 %v1074
      %v1462 = vunpack.c.l.b16 %v1077
      %v1463 = vpack.c.b16 %v1462, %v1461
      %1464 = vrot.lane.b32.xlu0 %v1240, 32
      %v1465 = vpop.permute.xlu0 %1464
      %1466 = vrot.lane.b32.xlu0 %v1241, 32
      %v1467 = vpop.permute.xlu0 %1466
      %1468 = vrot.lane.b32.xlu0 %v1242, 32
      %v1469 = vpop.permute.xlu0 %1468
      %1470 = vrot.lane.b32.xlu0 %v1243, 32
      %v1471 = vpop.permute.xlu0 %1470
      %1472 = vrot.lane.b32.xlu0 %v1244, 32
      %v1473 = vpop.permute.xlu0 %1472
      %1474 = vrot.lane.b32.xlu0 %v1245, 32
      %v1475 = vpop.permute.xlu0 %1474
      %1476 = vrot.lane.b32.xlu0 %v1246, 32
      %v1477 = vpop.permute.xlu0 %1476
      %1478 = vrot.lane.b32.xlu0 %v1247, 32
      %v1479 = vpop.permute.xlu0 %1478
      %1480 = vrot.lane.b32.xlu0 %v1248, 32
      %v1481 = vpop.permute.xlu0 %1480
      %1482 = vrot.lane.b32.xlu0 %v1249, 32
      %v1483 = vpop.permute.xlu0 %1482
      %1484 = vrot.lane.b32.xlu0 %v1250, 32
      %v1485 = vpop.permute.xlu0 %1484
      %1486 = vrot.lane.b32.xlu0 %v1251, 32
      %v1487 = vpop.permute.xlu0 %1486
      %1488 = vrot.lane.b32.xlu0 %v1252, 32
      %v1489 = vpop.permute.xlu0 %1488
      %1490 = vrot.lane.b32.xlu0 %v1253, 32
      %v1491 = vpop.permute.xlu0 %1490
      %1492 = vrot.lane.b32.xlu0 %v1358, 32
      %v1493 = vpop.permute.xlu0 %1492
      %1494 = vrot.lane.b32.xlu0 %v1463, 32
      %v1495 = vpop.permute.xlu0 %1494
      %vm1496 = vcmask 31744
      %v1499 = vsel %vm1496, %v1110, %v1175
      %v1502 = vsel %vm1496, %v1111, %v1177
      %v1505 = vsel %vm1496, %v1112, %v1179
      %v1508 = vsel %vm1496, %v1113, %v1181
      %v1511 = vsel %vm1496, %v1114, %v1183
      %v1514 = vsel %vm1496, %v1115, %v1185
      %v1517 = vsel %vm1496, %v1116, %v1187
      %v1520 = vsel %vm1496, %v1117, %v1189
      %v1523 = vsel %vm1496, %v1118, %v1191
      %v1526 = vsel %vm1496, %v1119, %v1193
      %v1529 = vsel %vm1496, %v1120, %v1195
      %v1532 = vsel %vm1496, %v1121, %v1197
      %v1535 = vsel %vm1496, %v1122, %v1199
      %v1538 = vsel %vm1496, %v1123, %v1201
      %v1541 = vsel %vm1496, %v1124, %v1203
      %v1544 = vsel %vm1496, %v1125, %v1205
      %vm1545 = vcmask 64512
      %v1547 = vsel %vm1545, %v1499, %v1255
      %v1549 = vsel %vm1545, %v1502, %v1257
      %v1551 = vsel %vm1545, %v1505, %v1259
      %v1553 = vsel %vm1545, %v1508, %v1261
      %v1555 = vsel %vm1545, %v1511, %v1263
      %v1557 = vsel %vm1545, %v1514, %v1265
      %v1559 = vsel %vm1545, %v1517, %v1267
      %v1561 = vsel %vm1545, %v1520, %v1269
      %v1563 = vsel %vm1545, %v1523, %v1271
      %v1565 = vsel %vm1545, %v1526, %v1273
      %v1567 = vsel %vm1545, %v1529, %v1275
      %v1569 = vsel %vm1545, %v1532, %v1277
      %v1571 = vsel %vm1545, %v1535, %v1279
      %v1573 = vsel %vm1545, %v1538, %v1281
      %v1575 = vsel %vm1545, %v1541, %v1283
      %v1577 = vsel %vm1545, %v1544, %v1285
      %vm1578 = vcmask 97280
      %v1580 = vsel %vm1578, %v1547, %v1290
      %v1582 = vsel %vm1578, %v1549, %v1292
      %v1584 = vsel %vm1578, %v1551, %v1294
      %v1586 = vsel %vm1578, %v1553, %v1296
      %v1588 = vsel %vm1578, %v1555, %v1298
      %v1590 = vsel %vm1578, %v1557, %v1300
      %v1592 = vsel %vm1578, %v1559, %v1302
      %v1594 = vsel %vm1578, %v1561, %v1304
      %v1596 = vsel %vm1578, %v1563, %v1306
      %v1598 = vsel %vm1578, %v1565, %v1308
      %v1600 = vsel %vm1578, %v1567, %v1310
      %v1602 = vsel %vm1578, %v1569, %v1312
      %v1604 = vsel %vm1578, %v1571, %v1314
      %v1606 = vsel %vm1578, %v1573, %v1316
      %v1608 = vsel %vm1578, %v1575, %v1318
      %v1610 = vsel %vm1578, %v1577, %v1320
      %vm1611 = vcmask 130048
      %v1613 = vsel %vm1611, %v1580, %v1325
      %v1615 = vsel %vm1611, %v1582, %v1327
      %v1617 = vsel %vm1611, %v1584, %v1329
      %v1619 = vsel %vm1611, %v1586, %v1331
      %v1621 = vsel %vm1611, %v1588, %v1333
      %v1623 = vsel %vm1611, %v1590, %v1335
      %v1625 = vsel %vm1611, %v1592, %v1337
      %v1627 = vsel %vm1611, %v1594, %v1339
      %v1629 = vsel %vm1611, %v1596, %v1341
      %v1631 = vsel %vm1611, %v1598, %v1343
      %v1633 = vsel %vm1611, %v1600, %v1345
      %v1635 = vsel %vm1611, %v1602, %v1347
      %v1637 = vsel %vm1611, %v1604, %v1349
      %v1639 = vsel %vm1611, %v1606, %v1351
      %v1641 = vsel %vm1611, %v1608, %v1353
      %v1643 = vsel %vm1611, %v1610, %v1355
      %vm1644 = vcmask 162816
      %v1646 = vsel %vm1644, %v1613, %v1360
      %v1648 = vsel %vm1644, %v1615, %v1362
      %v1650 = vsel %vm1644, %v1617, %v1364
      %v1652 = vsel %vm1644, %v1619, %v1366
      %v1654 = vsel %vm1644, %v1621, %v1368
      %v1656 = vsel %vm1644, %v1623, %v1370
      %v1658 = vsel %vm1644, %v1625, %v1372
      %v1660 = vsel %vm1644, %v1627, %v1374
      %v1662 = vsel %vm1644, %v1629, %v1376
      %v1664 = vsel %vm1644, %v1631, %v1378
      %v1666 = vsel %vm1644, %v1633, %v1380
      %v1668 = vsel %vm1644, %v1635, %v1382
      %v1670 = vsel %vm1644, %v1637, %v1384
      %v1672 = vsel %vm1644, %v1639, %v1386
      %v1674 = vsel %vm1644, %v1641, %v1388
      %v1676 = vsel %vm1644, %v1643, %v1390
      %vm1677 = vcmask 195584
      %v1679 = vsel %vm1677, %v1646, %v1395
      %v1681 = vsel %vm1677, %v1648, %v1397
      %v1683 = vsel %vm1677, %v1650, %v1399
      %v1685 = vsel %vm1677, %v1652, %v1401
      %v1687 = vsel %vm1677, %v1654, %v1403
      %v1689 = vsel %vm1677, %v1656, %v1405
      %v1691 = vsel %vm1677, %v1658, %v1407
      %v1693 = vsel %vm1677, %v1660, %v1409
      %v1695 = vsel %vm1677, %v1662, %v1411
      %v1697 = vsel %vm1677, %v1664, %v1413
      %v1699 = vsel %vm1677, %v1666, %v1415
      %v1701 = vsel %vm1677, %v1668, %v1417
      %v1703 = vsel %vm1677, %v1670, %v1419
      %v1705 = vsel %vm1677, %v1672, %v1421
      %v1707 = vsel %vm1677, %v1674, %v1423
      %v1709 = vsel %vm1677, %v1676, %v1425
      %vm1710 = vcmask 228352
      %v1712 = vsel %vm1710, %v1679, %v1430
      %v1714 = vsel %vm1710, %v1681, %v1432
      %v1716 = vsel %vm1710, %v1683, %v1434
      %v1718 = vsel %vm1710, %v1685, %v1436
      %v1720 = vsel %vm1710, %v1687, %v1438
      %v1722 = vsel %vm1710, %v1689, %v1440
      %v1724 = vsel %vm1710, %v1691, %v1442
      %v1726 = vsel %vm1710, %v1693, %v1444
      %v1728 = vsel %vm1710, %v1695, %v1446
      %v1730 = vsel %vm1710, %v1697, %v1448
      %v1732 = vsel %vm1710, %v1699, %v1450
      %v1734 = vsel %vm1710, %v1701, %v1452
      %v1736 = vsel %vm1710, %v1703, %v1454
      %v1738 = vsel %vm1710, %v1705, %v1456
      %v1740 = vsel %vm1710, %v1707, %v1458
      %v1742 = vsel %vm1710, %v1709, %v1460
      %vm1743 = vcmask 261120
      %v1745 = vsel %vm1743, %v1712, %v1465
      %v1747 = vsel %vm1743, %v1714, %v1467
      %v1749 = vsel %vm1743, %v1716, %v1469
      %v1751 = vsel %vm1743, %v1718, %v1471
      %v1753 = vsel %vm1743, %v1720, %v1473
      %v1755 = vsel %vm1743, %v1722, %v1475
      %v1757 = vsel %vm1743, %v1724, %v1477
      %v1759 = vsel %vm1743, %v1726, %v1479
      %v1761 = vsel %vm1743, %v1728, %v1481
      %v1763 = vsel %vm1743, %v1730, %v1483
      %v1765 = vsel %vm1743, %v1732, %v1485
      %v1767 = vsel %vm1743, %v1734, %v1487
      %v1769 = vsel %vm1743, %v1736, %v1489
      %v1771 = vsel %vm1743, %v1738, %v1491
      %v1773 = vsel %vm1743, %v1740, %v1493
      %v1775 = vsel %vm1743, %v1742, %v1495
      %v1776 = vld [vmem:[%s2] sm:$0xf]
      %v1777 = vld [vmem:[%s2 + $0x4] sm:$0xf]
      %v1778 = vld [vmem:[%s2 + $0x8] sm:$0xf]
      %v1779 = vld [vmem:[%s2 + $0xc] sm:$0xf]
      %v1780 = vld [vmem:[%s2 + $0x10] sm:$0x3]
      %v1781 = vld [vmem:[%s385] sm:$0xf]
      %v1782 = vld [vmem:[%s385 + $0x4] sm:$0xf]
      %v1783 = vld [vmem:[%s385 + $0x8] sm:$0xf]
      %v1784 = vld [vmem:[%s385 + $0xc] sm:$0xf]
      %v1785 = vld [vmem:[%s385 + $0x10] sm:$0xf]
      %v1786 = vld [vmem:[%s385 + $0x14] sm:$0xf]
      %v1787 = vld [vmem:[%s385 + $0x18] sm:$0xf]
      %v1788 = vld [vmem:[%s385 + $0x1c] sm:$0xf]
      %v1789 = vld [vmem:[%s385 + $0x20] sm:$0xf]
      %v1790 = vld [vmem:[%s385 + $0x24] sm:$0xf]
      %v1791 = vld [vmem:[%s385 + $0x28] sm:$0xf]
      %v1792 = vld [vmem:[%s385 + $0x2c] sm:$0xf]
      %v1793 = vld [vmem:[%s385 + $0x30] sm:$0xf]
      %v1794 = vld [vmem:[%s385 + $0x34] sm:$0xf]
      %v1795 = vld [vmem:[%s385 + $0x38] sm:$0xf]
      %v1796 = vld [vmem:[%s385 + $0x3c] sm:$0xf]
      %v1797 = vld [vmem:[%s385 + $0x40] sm:$0xf]
      %v1798 = vld [vmem:[%s385 + $0x44] sm:$0xf]
      %v1799 = vld [vmem:[%s385 + $0x48] sm:$0xf]
      %v1800 = vld [vmem:[%s385 + $0x4c] sm:$0xf]
      %v1801 = vld [vmem:[%s385 + $0x50] sm:$0xf]
      %v1802 = vld [vmem:[%s385 + $0x54] sm:$0xf]
      %v1803 = vld [vmem:[%s385 + $0x58] sm:$0xf]
      %v1804 = vld [vmem:[%s385 + $0x5c] sm:$0xf]
      %v1805 = vld [vmem:[%s385 + $0x60] sm:$0xf]
      %v1806 = vld [vmem:[%s385 + $0x64] sm:$0xf]
      %v1807 = vld [vmem:[%s385 + $0x68] sm:$0xf]
      %v1808 = vld [vmem:[%s385 + $0x6c] sm:$0xf]
      %v1809 = vld [vmem:[%s385 + $0x70] sm:$0xf]
      %v1810 = vld [vmem:[%s385 + $0x74] sm:$0xf]
      %v1811 = vld [vmem:[%s385 + $0x78] sm:$0xf]
      %v1812 = vld [vmem:[%s385 + $0x7c] sm:$0xf]
      %v1813 = vunpack.c.l.bf16 %v1781
      %v1814 = vunpack.c.l.bf16 %v1782
      %v1815 = vunpack.c.l.bf16 %v1783
      %v1816 = vunpack.c.l.bf16 %v1784
      %v1817 = vunpack.c.l.bf16 %v1785
      %v1818 = vunpack.c.l.bf16 %v1786
      %v1819 = vunpack.c.l.bf16 %v1787
      %v1820 = vunpack.c.l.bf16 %v1788
      %v1821 = vunpack.c.l.bf16 %v1789
      %v1822 = vunpack.c.l.bf16 %v1790
      %v1823 = vunpack.c.l.bf16 %v1791
      %v1824 = vunpack.c.l.bf16 %v1792
      %v1825 = vunpack.c.l.bf16 %v1793
      %v1826 = vunpack.c.l.bf16 %v1794
      %v1827 = vunpack.c.l.bf16 %v1795
      %v1828 = vunpack.c.l.bf16 %v1796
      %v1829 = vunpack.c.l.bf16 %v1797
      %v1830 = vunpack.c.l.bf16 %v1798
      %v1831 = vunpack.c.l.bf16 %v1799
      %v1832 = vunpack.c.l.bf16 %v1800
      %v1833 = vunpack.c.l.bf16 %v1801
      %v1834 = vunpack.c.l.bf16 %v1802
      %v1835 = vunpack.c.l.bf16 %v1803
      %v1836 = vunpack.c.l.bf16 %v1804
      %v1837 = vunpack.c.l.bf16 %v1805
      %v1838 = vunpack.c.l.bf16 %v1806
      %v1839 = vunpack.c.l.bf16 %v1807
      %v1840 = vunpack.c.l.bf16 %v1808
      %v1841 = vunpack.c.l.bf16 %v1809
      %v1842 = vunpack.c.l.bf16 %v1810
      %v1843 = vunpack.c.l.bf16 %v1811
      %v1844 = vunpack.c.l.bf16 %v1812
      %v1850 = vunpack.c.l.b16 %v1776
      %v1851 = vunpack.c.l.b16 %v1777
      %v1852 = vunpack.c.l.b16 %v1778
      %v1853 = vunpack.c.l.b16 %v1779
      %v1854 = vunpack.c.l.b16 %v1780
      %v1855 = vpack.c.b16 %v1851, %v1850
      %v1856 = vpack.c.b16 %v1853, %v1852
      %v1857 = vpack.c.b16 %v1854, %v1854
      %vm1860 = vcmask 293888
      %v1861 = vsel %vm1860, %v1745, 0
      %v1863 = vsel %vm1860, %v1747, 0
      %v1865 = vsel %vm1860, %v1749, 0
      %v1867 = vsel %vm1860, %v1751, 0
      %v1869 = vsel %vm1860, %v1753, 0
      %v1871 = vsel %vm1860, %v1755, 0
      %v1873 = vsel %vm1860, %v1757, 0
      %v1875 = vsel %vm1860, %v1759, 0
      %v1877 = vsel %vm1860, %v1761, 0
      %v1879 = vsel %vm1860, %v1763, 0
      %v1881 = vsel %vm1860, %v1765, 0
      %v1883 = vsel %vm1860, %v1767, 0
      %v1885 = vsel %vm1860, %v1769, 0
      %v1887 = vsel %vm1860, %v1771, 0
      %v1889 = vsel %vm1860, %v1773, 0
      %v1891 = vsel %vm1860, %v1775, 0
      %vm1893 = vcmask 1041408
      %v1895 = vsel %vm1893, %v1857, 0
      %1897 = vmatprep.subr.bf16.mxu0 0
      %1898 = vmatpush1.bf16.msra.mxu0 %v1855
      %1899 = vmatprep.subr.bf16.mxu0 0
      %1900 = vmatpush1.bf16.msra.mxu0 %v1856
      %1901 = vmatprep.subr.bf16.mxu0 0
      %1902 = vmatpush1.bf16.msra.mxu0 %v1895
      %1903 = vmatprep.subr.bf16.mxu0 0
      %1904 = vmatpush1.bf16.msra.mxu0 0
      %1905 = vmatprep.subr.bf16.mxu0 0
      %1906 = vmatpush1.bf16.msra.mxu0 0
      %1907 = vmatprep.subr.bf16.mxu0 0
      %1908 = vmatpush1.bf16.msra.mxu0 0
      %1909 = vmatprep.subr.bf16.mxu0 0
      %1910 = vmatpush1.bf16.msra.mxu0 0
      %1911 = vmatprep.subr.bf16.mxu0 0
      %1912 = vmatpush1.bf16.msra.mxu0 0
      %1913 = vmatprep.subr.bf16.mxu0 0
      %1914 = vmatpush1.bf16.msra.mxu0 0
      %1915 = vmatprep.subr.bf16.mxu0 0
      %1916 = vmatpush1.bf16.msra.mxu0 0
      %1917 = vmatprep.subr.bf16.mxu0 0
      %1918 = vmatpush1.bf16.msra.mxu0 0
      %1919 = vmatprep.subr.bf16.mxu0 0
      %1920 = vmatpush1.bf16.msra.mxu0 0
      %1921 = vmatprep.subr.bf16.mxu0 0
      %1922 = vmatpush1.bf16.msra.mxu0 0
      %1923 = vmatprep.subr.bf16.mxu0 0
      %1924 = vmatpush1.bf16.msra.mxu0 0
      %1925 = vmatprep.subr.bf16.mxu0 0
      %1926 = vmatpush1.bf16.msra.mxu0 0
      %1927 = vmatprep.subr.bf16.mxu0 0
      %1928 = vmatpush1.bf16.msra.mxu0 0
      %1929 = vmatprep.mubr.bf16.mxu0 0
      %1930 = vmatmul.mubr.bf16.gmra.mrb[0].mxu0 %v1861
      %v1931 = vpop.f32.mrb[0].mxu0
      %v1932 = vadd.f32 %v1813, %v1931
      %v1933 = vpop.f32.mrb[0].mxu0
      %v1934 = vpop.f32.mrb[0].mxu0
      %v1935 = vadd.f32 %v1814, %v1934
      %v1936 = vpop.f32.mrb[0].mxu0
      %1937 = vmatprep.mubr.bf16.mxu0 0
      %1938 = vmatmul.mubr.bf16.gmra.mrb[0].mxu0 %v1863
      %v1939 = vpop.f32.mrb[0].mxu0
      %v1940 = vadd.f32 %v1815, %v1939
      %v1941 = vpop.f32.mrb[0].mxu0
      %v1942 = vpop.f32.mrb[0].mxu0
      %v1943 = vadd.f32 %v1816, %v1942
      %v1944 = vpop.f32.mrb[0].mxu0
      %1945 = vmatprep.mubr.bf16.mxu0 0
      %1946 = vmatmul.mubr.bf16.gmra.mrb[0].mxu0 %v1865
      %v1947 = vpop.f32.mrb[0].mxu0
      %v1948 = vadd.f32 %v1817, %v1947
      %v1949 = vpop.f32.mrb[0].mxu0
      %v1950 = vpop.f32.mrb[0].mxu0
      %v1951 = vadd.f32 %v1818, %v1950
      %v1952 = vpop.f32.mrb[0].mxu0
      %1953 = vmatprep.mubr.bf16.mxu0 0
      %1954 = vmatmul.mubr.bf16.gmra.mrb[0].mxu0 %v1867
      %v1955 = vpop.f32.mrb[0].mxu0
      %v1956 = vadd.f32 %v1819, %v1955
      %v1957 = vpop.f32.mrb[0].mxu0
      %v1958 = vpop.f32.mrb[0].mxu0
      %v1959 = vadd.f32 %v1820, %v1958
      %v1960 = vpop.f32.mrb[0].mxu0
      %1961 = vmatprep.mubr.bf16.mxu0 0
      %1962 = vmatmul.mubr.bf16.gmra.mrb[0].mxu0 %v1869
      %v1963 = vpop.f32.mrb[0].mxu0
      %v1964 = vadd.f32 %v1821, %v1963
      %v1965 = vpop.f32.mrb[0].mxu0
      %v1966 = vpop.f32.mrb[0].mxu0
      %v1967 = vadd.f32 %v1822, %v1966
      %v1968 = vpop.f32.mrb[0].mxu0
      %1969 = vmatprep.mubr.bf16.mxu0 0
      %1970 = vmatmul.mubr.bf16.gmra.mrb[0].mxu0 %v1871
      %v1971 = vpop.f32.mrb[0].mxu0
      %v1972 = vadd.f32 %v1823, %v1971
      %v1973 = vpop.f32.mrb[0].mxu0
      %v1974 = vpop.f32.mrb[0].mxu0
      %v1975 = vadd.f32 %v1824, %v1974
      %v1976 = vpop.f32.mrb[0].mxu0
      %1977 = vmatprep.mubr.bf16.mxu0 0
      %1978 = vmatmul.mubr.bf16.gmra.mrb[0].mxu0 %v1873
      %v1979 = vpop.f32.mrb[0].mxu0
      %v1980 = vadd.f32 %v1825, %v1979
      %v1981 = vpop.f32.mrb[0].mxu0
      %v1982 = vpop.f32.mrb[0].mxu0
      %v1983 = vadd.f32 %v1826, %v1982
      %v1984 = vpop.f32.mrb[0].mxu0
      %1985 = vmatprep.mubr.bf16.mxu0 0
      %1986 = vmatmul.mubr.bf16.gmra.mrb[0].mxu0 %v1875
      %v1987 = vpop.f32.mrb[0].mxu0
      %v1988 = vadd.f32 %v1827, %v1987
      %v1989 = vpop.f32.mrb[0].mxu0
      %v1990 = vpop.f32.mrb[0].mxu0
      %v1991 = vadd.f32 %v1828, %v1990
      %v1992 = vpop.f32.mrb[0].mxu0
      %1993 = vmatprep.mubr.bf16.mxu0 0
      %1994 = vmatmul.mubr.bf16.gmra.mrb[0].mxu0 %v1877
      %v1995 = vpop.f32.mrb[0].mxu0
      %v1996 = vadd.f32 %v1829, %v1995
      %v1997 = vpop.f32.mrb[0].mxu0
      %v1998 = vpop.f32.mrb[0].mxu0
      %v1999 = vadd.f32 %v1830, %v1998
      %v2000 = vpop.f32.mrb[0].mxu0
      %2001 = vmatprep.mubr.bf16.mxu0 0
      %2002 = vmatmul.mubr.bf16.gmra.mrb[0].mxu0 %v1879
      %v2003 = vpop.f32.mrb[0].mxu0
      %v2004 = vadd.f32 %v1831, %v2003
      %v2005 = vpop.f32.mrb[0].mxu0
      %v2006 = vpop.f32.mrb[0].mxu0
      %v2007 = vadd.f32 %v1832, %v2006
      %v2008 = vpop.f32.mrb[0].mxu0
      %2009 = vmatprep.mubr.bf16.mxu0 0
      %2010 = vmatmul.mubr.bf16.gmra.mrb[0].mxu0 %v1881
      %v2011 = vpop.f32.mrb[0].mxu0
      %v2012 = vadd.f32 %v1833, %v2011
      %v2013 = vpop.f32.mrb[0].mxu0
      %v2014 = vpop.f32.mrb[0].mxu0
      %v2015 = vadd.f32 %v1834, %v2014
      %v2016 = vpop.f32.mrb[0].mxu0
      %2017 = vmatprep.mubr.bf16.mxu0 0
      %2018 = vmatmul.mubr.bf16.gmra.mrb[0].mxu0 %v1883
      %v2019 = vpop.f32.mrb[0].mxu0
      %v2020 = vadd.f32 %v1835, %v2019
      %v2021 = vpop.f32.mrb[0].mxu0
      %v2022 = vpop.f32.mrb[0].mxu0
      %v2023 = vadd.f32 %v1836, %v2022
      %v2024 = vpop.f32.mrb[0].mxu0
      %2025 = vmatprep.mubr.bf16.mxu0 0
      %2026 = vmatmul.mubr.bf16.gmra.mrb[0].mxu0 %v1885
      %v2027 = vpop.f32.mrb[0].mxu0
      %v2028 = vadd.f32 %v1837, %v2027
      %v2029 = vpop.f32.mrb[0].mxu0
      %v2030 = vpop.f32.mrb[0].mxu0
      %v2031 = vadd.f32 %v1838, %v2030
      %v2032 = vpop.f32.mrb[0].mxu0
      %2033 = vmatprep.mubr.bf16.mxu0 0
      %2034 = vmatmul.mubr.bf16.gmra.mrb[0].mxu0 %v1887
      %v2035 = vpop.f32.mrb[0].mxu0
      %v2036 = vadd.f32 %v1839, %v2035
      %v2037 = vpop.f32.mrb[0].mxu0
      %v2038 = vpop.f32.mrb[0].mxu0
      %v2039 = vadd.f32 %v1840, %v2038
      %v2040 = vpop.f32.mrb[0].mxu0
      %2041 = vmatprep.mubr.bf16.mxu0 0
      %2042 = vmatmul.mubr.bf16.gmra.mrb[0].mxu0 %v1889
      %v2043 = vpop.f32.mrb[0].mxu0
      %v2044 = vadd.f32 %v1841, %v2043
      %v2045 = vpop.f32.mrb[0].mxu0
      %v2046 = vpop.f32.mrb[0].mxu0
      %v2047 = vadd.f32 %v1842, %v2046
      %v2048 = vpop.f32.mrb[0].mxu0
      %2049 = vmatprep.mubr.bf16.mxu0 0
      %2050 = vmatmul.mubr.bf16.gmra.mrb[0].mxu0 %v1891
      %v2051 = vpop.f32.mrb[0].mxu0
      %v2052 = vadd.f32 %v1843, %v2051
      %v2053 = vpop.f32.mrb[0].mxu0
      %v2054 = vpop.f32.mrb[0].mxu0
      %v2055 = vadd.f32 %v1844, %v2054
      %v2056 = vpop.f32.mrb[0].mxu0
      %2057 = vdwg.mxu0
      %v2058 = vsel %vm1545, %v1932, 0.0
      %v2059 = vsel %vm1545, %v1935, 0.0
      %v2060 = vadd.f32 %v2058, %v2059
      %v2061 = vsel %vm1545, %v1940, 0.0
      %v2062 = vadd.f32 %v2060, %v2061
      %v2063 = vsel %vm1545, %v1943, 0.0
      %v2064 = vadd.f32 %v2062, %v2063
      %v2065 = vsel %vm1545, %v1948, 0.0
      %v2066 = vadd.f32 %v2064, %v2065
      %v2067 = vsel %vm1545, %v1951, 0.0
      %v2068 = vadd.f32 %v2066, %v2067
      %v2069 = vsel %vm1545, %v1956, 0.0
      %v2070 = vadd.f32 %v2068, %v2069
      %v2071 = vsel %vm1545, %v1959, 0.0
      %v2072 = vadd.f32 %v2070, %v2071
      %v2073 = vsel %vm1545, %v1964, 0.0
      %v2074 = vadd.f32 %v2072, %v2073
      %v2075 = vsel %vm1545, %v1967, 0.0
      %v2076 = vadd.f32 %v2074, %v2075
      %v2077 = vsel %vm1545, %v1972, 0.0
      %v2078 = vadd.f32 %v2076, %v2077
      %v2079 = vsel %vm1545, %v1975, 0.0
      %v2080 = vadd.f32 %v2078, %v2079
      %v2081 = vsel %vm1545, %v1980, 0.0
      %v2082 = vadd.f32 %v2080, %v2081
      %v2083 = vsel %vm1545, %v1983, 0.0
      %v2084 = vadd.f32 %v2082, %v2083
      %v2085 = vsel %vm1545, %v1988, 0.0
      %v2086 = vadd.f32 %v2084, %v2085
      %v2087 = vsel %vm1545, %v1991, 0.0
      %v2088 = vadd.f32 %v2086, %v2087
      %v2089 = vsel %vm1545, %v1996, 0.0
      %v2090 = vadd.f32 %v2088, %v2089
      %v2091 = vsel %vm1545, %v1999, 0.0
      %v2092 = vadd.f32 %v2090, %v2091
      %v2093 = vsel %vm1545, %v2004, 0.0
      %v2094 = vadd.f32 %v2092, %v2093
      %v2095 = vsel %vm1545, %v2007, 0.0
      %v2096 = vadd.f32 %v2094, %v2095
      %v2097 = vsel %vm1545, %v2012, 0.0
      %v2098 = vadd.f32 %v2096, %v2097
      %v2099 = vsel %vm1545, %v2015, 0.0
      %v2100 = vadd.f32 %v2098, %v2099
      %v2101 = vsel %vm1545, %v2020, 0.0
      %v2102 = vadd.f32 %v2100, %v2101
      %v2103 = vsel %vm1545, %v2023, 0.0
      %v2104 = vadd.f32 %v2102, %v2103
      %v2105 = vsel %vm1545, %v2028, 0.0
      %v2106 = vadd.f32 %v2104, %v2105
      %v2107 = vsel %vm1545, %v2031, 0.0
      %v2108 = vadd.f32 %v2106, %v2107
      %v2109 = vsel %vm1545, %v2036, 0.0
      %v2110 = vadd.f32 %v2108, %v2109
      %v2111 = vsel %vm1545, %v2039, 0.0
      %v2112 = vadd.f32 %v2110, %v2111
      %v2113 = vsel %vm1545, %v2044, 0.0
      %v2114 = vadd.f32 %v2112, %v2113
      %v2115 = vsel %vm1545, %v2047, 0.0
      %v2116 = vadd.f32 %v2114, %v2115
      %v2117 = vsel %vm1545, %v2052, 0.0
      %v2118 = vadd.f32 %v2116, %v2117
      %v2119 = vsel %vm1545, %v2055, 0.0
      %v2120 = vadd.f32 %v2118, %v2119
      %v2121 = vrot.slane %v2120, 4
      %v2122 = vadd.f32 %v2120, %v2121
      %v2123 = vrot.slane %v2122, 2
      %v2124 = vadd.f32 %v2122, %v2123
      %v2125 = vrot.slane %v2124, 1
      %v2126 = vadd.f32 %v2124, %v2125
      %v2127 = vmul.f32 %v1932, %v1932
      %v2128 = vmul.f32 %v1935, %v1935
      %v2129 = vmul.f32 %v1940, %v1940
      %v2130 = vmul.f32 %v1943, %v1943
      %v2131 = vmul.f32 %v1948, %v1948
      %v2132 = vmul.f32 %v1951, %v1951
      %v2133 = vmul.f32 %v1956, %v1956
      %v2134 = vmul.f32 %v1959, %v1959
      %v2135 = vmul.f32 %v1964, %v1964
      %v2136 = vmul.f32 %v1967, %v1967
      %v2137 = vmul.f32 %v1972, %v1972
      %v2138 = vmul.f32 %v1975, %v1975
      %v2139 = vmul.f32 %v1980, %v1980
      %v2140 = vmul.f32 %v1983, %v1983
      %v2141 = vmul.f32 %v1988, %v1988
      %v2142 = vmul.f32 %v1991, %v1991
      %v2143 = vmul.f32 %v1996, %v1996
      %v2144 = vmul.f32 %v1999, %v1999
      %v2145 = vmul.f32 %v2004, %v2004
      %v2146 = vmul.f32 %v2007, %v2007
      %v2147 = vmul.f32 %v2012, %v2012
      %v2148 = vmul.f32 %v2015, %v2015
      %v2149 = vmul.f32 %v2020, %v2020
      %v2150 = vmul.f32 %v2023, %v2023
      %v2151 = vmul.f32 %v2028, %v2028
      %v2152 = vmul.f32 %v2031, %v2031
      %v2153 = vmul.f32 %v2036, %v2036
      %v2154 = vmul.f32 %v2039, %v2039
      %v2155 = vmul.f32 %v2044, %v2044
      %v2156 = vmul.f32 %v2047, %v2047
      %v2157 = vmul.f32 %v2052, %v2052
      %v2158 = vmul.f32 %v2055, %v2055
      %v2159 = vsel %vm1545, %v2127, 0.0
      %v2160 = vsel %vm1545, %v2128, 0.0
      %v2161 = vadd.f32 %v2159, %v2160
      %v2162 = vsel %vm1545, %v2129, 0.0
      %v2163 = vadd.f32 %v2161, %v2162
      %v2164 = vsel %vm1545, %v2130, 0.0
      %v2165 = vadd.f32 %v2163, %v2164
      %v2166 = vsel %vm1545, %v2131, 0.0
      %v2167 = vadd.f32 %v2165, %v2166
      %v2168 = vsel %vm1545, %v2132, 0.0
      %v2169 = vadd.f32 %v2167, %v2168
      %v2170 = vsel %vm1545, %v2133, 0.0
      %v2171 = vadd.f32 %v2169, %v2170
      %v2172 = vsel %vm1545, %v2134, 0.0
      %v2173 = vadd.f32 %v2171, %v2172
      %v2174 = vsel %vm1545, %v2135, 0.0
      %v2175 = vadd.f32 %v2173, %v2174
      %v2176 = vsel %vm1545, %v2136, 0.0
      %v2177 = vadd.f32 %v2175, %v2176
      %v2178 = vsel %vm1545, %v2137, 0.0
      %v2179 = vadd.f32 %v2177, %v2178
      %v2180 = vsel %vm1545, %v2138, 0.0
      %v2181 = vadd.f32 %v2179, %v2180
      %v2182 = vsel %vm1545, %v2139, 0.0
      %v2183 = vadd.f32 %v2181, %v2182
      %v2184 = vsel %vm1545, %v2140, 0.0
      %v2185 = vadd.f32 %v2183, %v2184
      %v2186 = vsel %vm1545, %v2141, 0.0
      %v2187 = vadd.f32 %v2185, %v2186
      %v2188 = vsel %vm1545, %v2142, 0.0
      %v2189 = vadd.f32 %v2187, %v2188
      %v2190 = vsel %vm1545, %v2143, 0.0
      %v2191 = vadd.f32 %v2189, %v2190
      %v2192 = vsel %vm1545, %v2144, 0.0
      %v2193 = vadd.f32 %v2191, %v2192
      %v2194 = vsel %vm1545, %v2145, 0.0
      %v2195 = vadd.f32 %v2193, %v2194
      %v2196 = vsel %vm1545, %v2146, 0.0
      %v2197 = vadd.f32 %v2195, %v2196
      %v2198 = vsel %vm1545, %v2147, 0.0
      %v2199 = vadd.f32 %v2197, %v2198
      %v2200 = vsel %vm1545, %v2148, 0.0
      %v2201 = vadd.f32 %v2199, %v2200
      %v2202 = vsel %vm1545, %v2149, 0.0
      %v2203 = vadd.f32 %v2201, %v2202
      %v2204 = vsel %vm1545, %v2150, 0.0
      %v2205 = vadd.f32 %v2203, %v2204
      %v2206 = vsel %vm1545, %v2151, 0.0
      %v2207 = vadd.f32 %v2205, %v2206
      %v2208 = vsel %vm1545, %v2152, 0.0
      %v2209 = vadd.f32 %v2207, %v2208
      %v2210 = vsel %vm1545, %v2153, 0.0
      %v2211 = vadd.f32 %v2209, %v2210
      %v2212 = vsel %vm1545, %v2154, 0.0
      %v2213 = vadd.f32 %v2211, %v2212
      %v2214 = vsel %vm1545, %v2155, 0.0
      %v2215 = vadd.f32 %v2213, %v2214
      %v2216 = vsel %vm1545, %v2156, 0.0
      %v2217 = vadd.f32 %v2215, %v2216
      %v2218 = vsel %vm1545, %v2157, 0.0
      %v2219 = vadd.f32 %v2217, %v2218
      %v2220 = vsel %vm1545, %v2158, 0.0
      %v2221 = vadd.f32 %v2219, %v2220
      %v2222 = vrot.slane %v2221, 4
      %v2223 = vadd.f32 %v2221, %v2222
      %v2224 = vrot.slane %v2223, 2
      %v2225 = vadd.f32 %v2223, %v2224
      %v2226 = vrot.slane %v2225, 1
      %v2227 = vadd.f32 %v2225, %v2226
      %vm2228 = vcmask 1040384
      %v2229 = vsel %vm2228, %v2126, %v2227
      %vm2230 = vcmask 58368
      %2231 = vst.msk [vmem:[%s404] sm:$0x3] %vm2230, %v2229
      %v2232 = vpack.c.bf16 %v1935, %v1932
      %v2233 = vpack.c.bf16 %v1943, %v1940
      %v2234 = vpack.c.bf16 %v1951, %v1948
      %v2235 = vpack.c.bf16 %v1959, %v1956
      %v2236 = vpack.c.bf16 %v1967, %v1964
      %v2237 = vpack.c.bf16 %v1975, %v1972
      %v2238 = vpack.c.bf16 %v1983, %v1980
      %v2239 = vpack.c.bf16 %v1991, %v1988
      %v2240 = vpack.c.bf16 %v1999, %v1996
      %v2241 = vpack.c.bf16 %v2007, %v2004
      %v2242 = vpack.c.bf16 %v2015, %v2012
      %v2243 = vpack.c.bf16 %v2023, %v2020
      %v2244 = vpack.c.bf16 %v2031, %v2028
      %v2245 = vpack.c.bf16 %v2039, %v2036
      %v2246 = vpack.c.bf16 %v2047, %v2044
      %v2247 = vpack.c.bf16 %v2055, %v2052
      %v2264 = vunpack.c.l.b16 %v2232
      %v2265 = vunpack.c.h.b16 %v2232
      %v2266 = vunpack.c.l.b16 %v2233
      %v2267 = vunpack.c.h.b16 %v2233
      %v2268 = vunpack.c.l.b16 %v2234
      %v2269 = vunpack.c.h.b16 %v2234
      %v2270 = vunpack.c.l.b16 %v2235
      %v2271 = vunpack.c.h.b16 %v2235
      %v2272 = vunpack.c.l.b16 %v2236
      %v2273 = vunpack.c.h.b16 %v2236
      %v2274 = vunpack.c.l.b16 %v2237
      %v2275 = vunpack.c.h.b16 %v2237
      %v2276 = vunpack.c.l.b16 %v2238
      %v2277 = vunpack.c.h.b16 %v2238
      %v2278 = vunpack.c.l.b16 %v2239
      %v2279 = vunpack.c.h.b16 %v2239
      %v2280 = vunpack.c.l.b16 %v2240
      %v2281 = vunpack.c.h.b16 %v2240
      %v2282 = vunpack.c.l.b16 %v2241
      %v2283 = vunpack.c.h.b16 %v2241
      %v2284 = vunpack.c.l.b16 %v2242
      %v2285 = vunpack.c.h.b16 %v2242
      %v2286 = vunpack.c.l.b16 %v2243
      %v2287 = vunpack.c.h.b16 %v2243
      %v2288 = vunpack.c.l.b16 %v2244
      %v2289 = vunpack.c.h.b16 %v2244
      %v2290 = vunpack.c.l.b16 %v2245
      %v2291 = vunpack.c.h.b16 %v2245
      %v2292 = vunpack.c.l.b16 %v2246
      %v2293 = vunpack.c.h.b16 %v2246
      %v2294 = vunpack.c.l.b16 %v2247
      %v2295 = vunpack.c.h.b16 %v2247
      %v2296 = vpack.c.b16 %v2264, %v2264
      %v2297 = vpack.c.b16 %v2265, %v2265
      %v2298 = vpack.c.b16 %v2266, %v2266
      %v2299 = vpack.c.b16 %v2267, %v2267
      %v2300 = vpack.c.b16 %v2268, %v2268
      %v2301 = vpack.c.b16 %v2269, %v2269
      %v2302 = vpack.c.b16 %v2270, %v2270
      %v2303 = vpack.c.b16 %v2271, %v2271
      %v2304 = vpack.c.b16 %v2272, %v2272
      %v2305 = vpack.c.b16 %v2273, %v2273
      %v2306 = vpack.c.b16 %v2274, %v2274
      %v2307 = vpack.c.b16 %v2275, %v2275
      %v2308 = vpack.c.b16 %v2276, %v2276
      %v2309 = vpack.c.b16 %v2277, %v2277
      %v2310 = vpack.c.b16 %v2278, %v2278
      %v2311 = vpack.c.b16 %v2279, %v2279
      %v2312 = vpack.c.b16 %v2280, %v2280
      %v2313 = vpack.c.b16 %v2281, %v2281
      %v2314 = vpack.c.b16 %v2282, %v2282
      %v2315 = vpack.c.b16 %v2283, %v2283
      %v2316 = vpack.c.b16 %v2284, %v2284
      %v2317 = vpack.c.b16 %v2285, %v2285
      %v2318 = vpack.c.b16 %v2286, %v2286
      %v2319 = vpack.c.b16 %v2287, %v2287
      %v2320 = vpack.c.b16 %v2288, %v2288
      %v2321 = vpack.c.b16 %v2289, %v2289
      %v2322 = vpack.c.b16 %v2290, %v2290
      %v2323 = vpack.c.b16 %v2291, %v2291
      %v2324 = vpack.c.b16 %v2292, %v2292
      %v2325 = vpack.c.b16 %v2293, %v2293
      %v2326 = vpack.c.b16 %v2294, %v2294
      %v2327 = vpack.c.b16 %v2295, %v2295
      %vm2360 = vcmask 60416
      %2361 = vst.msk [vmem:[%s396] sm:$0xf] %vm2360, %v2296
      %2362 = vst.msk [vmem:[%s396 + $0x4] sm:$0xf] %vm2360, %v2297
      %2363 = vst.msk [vmem:[%s396 + $0x8] sm:$0xf] %vm2360, %v2298
      %2364 = vst.msk [vmem:[%s396 + $0xc] sm:$0xf] %vm2360, %v2299
      %2365 = vst.msk [vmem:[%s396 + $0x10] sm:$0xf] %vm2360, %v2300
      %2366 = vst.msk [vmem:[%s396 + $0x14] sm:$0xf] %vm2360, %v2301
      %2367 = vst.msk [vmem:[%s396 + $0x18] sm:$0xf] %vm2360, %v2302
      %2368 = vst.msk [vmem:[%s396 + $0x1c] sm:$0xf] %vm2360, %v2303
      %2369 = vst.msk [vmem:[%s396 + $0x20] sm:$0xf] %vm2360, %v2304
      %2370 = vst.msk [vmem:[%s396 + $0x24] sm:$0xf] %vm2360, %v2305
      %2371 = vst.msk [vmem:[%s396 + $0x28] sm:$0xf] %vm2360, %v2306
      %2372 = vst.msk [vmem:[%s396 + $0x2c] sm:$0xf] %vm2360, %v2307
      %2373 = vst.msk [vmem:[%s396 + $0x30] sm:$0xf] %vm2360, %v2308
      %2374 = vst.msk [vmem:[%s396 + $0x34] sm:$0xf] %vm2360, %v2309
      %2375 = vst.msk [vmem:[%s396 + $0x38] sm:$0xf] %vm2360, %v2310
      %2376 = vst.msk [vmem:[%s396 + $0x3c] sm:$0xf] %vm2360, %v2311
      %2377 = vst.msk [vmem:[%s396 + $0x40] sm:$0xf] %vm2360, %v2312
      %2378 = vst.msk [vmem:[%s396 + $0x44] sm:$0xf] %vm2360, %v2313
      %2379 = vst.msk [vmem:[%s396 + $0x48] sm:$0xf] %vm2360, %v2314
      %2380 = vst.msk [vmem:[%s396 + $0x4c] sm:$0xf] %vm2360, %v2315
      %2381 = vst.msk [vmem:[%s396 + $0x50] sm:$0xf] %vm2360, %v2316
      %2382 = vst.msk [vmem:[%s396 + $0x54] sm:$0xf] %vm2360, %v2317
      %2383 = vst.msk [vmem:[%s396 + $0x58] sm:$0xf] %vm2360, %v2318
      %2384 = vst.msk [vmem:[%s396 + $0x5c] sm:$0xf] %vm2360, %v2319
      %2385 = vst.msk [vmem:[%s396 + $0x60] sm:$0xf] %vm2360, %v2320
      %2386 = vst.msk [vmem:[%s396 + $0x64] sm:$0xf] %vm2360, %v2321
      %2387 = vst.msk [vmem:[%s396 + $0x68] sm:$0xf] %vm2360, %v2322
      %2388 = vst.msk [vmem:[%s396 + $0x6c] sm:$0xf] %vm2360, %v2323
      %2389 = vst.msk [vmem:[%s396 + $0x70] sm:$0xf] %vm2360, %v2324
      %2390 = vst.msk [vmem:[%s396 + $0x74] sm:$0xf] %vm2360, %v2325
      %2391 = vst.msk [vmem:[%s396 + $0x78] sm:$0xf] %vm2360, %v2326
      %2392 = vst.msk [vmem:[%s396 + $0x7c] sm:$0xf] %vm2360, %v2327
      %s2393 = smul.u32 16, %s22
      %p2394 = scmp.lt.s32.totalorder %s21, 1
      %s2395 = scalar_select %p2394, %s21, 1
      %p2396 = scmp.lt.s32.totalorder %s2393, 15
      %s2397 = scalar_select %p2396, %s2393, 15
      %s2398 = smul.addr %s2397, 2
      %s2399 = smul.addr %s2395, 32
      %s2400 = sadd.s32 %s2398, %s2399
      %s2401 = smul.addr %s2400, 4
      %s2402 = scalar_lea.vmem %s4, %s2401
      %p2403 = scmp.lt.s32.totalorder %s21, 1
      %s2404 = scalar_select %p2403, %s21, 1
      %p2405 = scmp.lt.s32.totalorder %s22, 0
      %s2406 = scalar_select %p2405, %s22, 0
      %s2407 = sadd.s32 %s2406, %s2404
      %s2408 = smul.addr %s2407, 2
      %s2409 = scalar_lea.vmem %s5, %s2408
      // Predicated region
      $region37: #{double_conv_forward.12} parent=35 // pred_check
        %p2410 = pneg %p158
      $region38: #{double_conv_forward.12} parent=35 // pred_check_branch
        %2412 = sbr.rel (%p2410) target = $region40
      $region39: #{double_conv_forward.12} parent=35 // pred_region
        %s2413 = smul.u32 16, %s22
      $region40: #{double_conv_forward.12} parent=35 // pred_fallthru
        _
      // Predicated region
      $region41: #{double_conv_forward.12} parent=35 // pred_check
        %p2414 = pneg %p186
      $region42: #{double_conv_forward.12} parent=35 // pred_check_branch
        %2416 = sbr.rel (%p2414) target = $region44
      $region43: #{double_conv_forward.12} parent=35 // pred_region
        _
      $region44: #{double_conv_forward.12} parent=35 // pred_fallthru
        _
    $region36: #{double_conv_forward.12} parent=5 // pred_fallthru
      _
    %p2417 = scmp.le.s32.totalorder 2, %s12
    // Predicated region
    $region45: #{double_conv_forward.12} parent=5 // pred_check
      %p2418 = pneg %p2417
    $region46: #{double_conv_forward.12} parent=5 // pred_check_branch
      %2420 = sbr.rel (%p2418) target = $region48
    $region47: #{double_conv_forward.12} parent=5 // pred_region
      %s2421 = ssub.s32 %s12, 2
      // Predicated region
      $region49: #{double_conv_forward.12} parent=47 // pred_check
        %p2422 = pneg %p164
      $region50: #{double_conv_forward.12} parent=47 // pred_check_branch
        %2424 = sbr.rel (%p2422) target = $region52
      $region51: #{double_conv_forward.12} parent=47 // pred_region
        %s2425 = smul.u32 16, %s24
        %p2426 = scmp.lt.s32.totalorder %s23, 1
        %s2427 = scalar_select %p2426, %s23, 1
        %p2428 = scmp.lt.s32.totalorder %s2425, 15
        %s2429 = scalar_select %p2428, %s2425, 15
        %s2430 = smul.addr %s2429, 2
        %s2431 = smul.addr %s2427, 32
        %s2432 = sadd.s32 %s2430, %s2431
        %s2433 = smul.addr %s2432, 4
        %s2434 = scalar_lea.vmem %s4, %s2433
      $region52: #{double_conv_forward.12} parent=47 // pred_fallthru
        _
      // Predicated region
      $region53: #{double_conv_forward.12} parent=47 // pred_check
        %p2435 = pneg %p192
      $region54: #{double_conv_forward.12} parent=47 // pred_check_branch
        %2437 = sbr.rel (%p2435) target = $region56
      $region55: #{double_conv_forward.12} parent=47 // pred_region
        %p2438 = scmp.lt.s32.totalorder %s23, 1
        %s2439 = scalar_select %p2438, %s23, 1
        %p2440 = scmp.lt.s32.totalorder %s24, 0
        %s2441 = scalar_select %p2440, %s24, 0
        %s2442 = sadd.s32 %s2441, %s2439
        %s2443 = smul.addr %s2442, 2
        %s2444 = scalar_lea.vmem %s5, %s2443
      $region56: #{double_conv_forward.12} parent=47 // pred_fallthru
        _
    $region48: #{double_conv_forward.12} parent=5 // pred_fallthru
      _
  $region6: #{double_conv_forward.12} parent=0 // loop_footer
    %s16 = sadd.s32 1, %s12
  $region7: #{double_conv_forward.12} parent=0 // loop_footer_branch
    %11 = sbr.rel target = $region3
  $region8: #{double_conv_forward.12} parent=0 // loop_exit
    _

// kernel: double_conv_forward.19
$region0: #{double_conv_forward.19}
  #allocation0 [shape = 'u32[]', space=smem, size = 0x4, offset = 0x4, fixed_abs, tag = 'smem constant byte address 0x4 - core index']
  #allocation1 [shape = 'u32[144,128]{1,0:T(1,128)}', space=vmem, size = 0x12000, scoped, tag = 'internal scratch']
  %s0 = inlined_call_operand.vmem [shape: bf16[2,8,64], index: 0, kind: input, shape index: {}]
  %s1 = inlined_call_operand.vmem [shape: f32[1,64], index: 1, kind: input, shape index: {}]
  %s2 = inlined_call_operand.vmem [shape: f32[1,64], index: 2, kind: input, shape index: {}]
  %s3 = inlined_call_operand.vmem [shape: f32[2,8,64], index: 3, kind: output, shape index: {}]
  %s4 = sld [smem:[#allocation0]]
  $region45: #{double_conv_forward.19} parent=0
    _
  %s6 = ssub.s32 1, %s4
  %s7 = scalar_select 0, %s6, %s4
  loop: start=0, step=1, limit=4
  $region2: #{double_conv_forward.19} parent=0 // loop_pre_header
    _
  $region3: #{double_conv_forward.19} parent=0 // loop_header
    %s9 = sphi 0, %s13
    %p10 = scmp.ge.s32.totalorder %s9, 4
    %s16 = sphi 0, %s28
    %s17 = sphi 0, %s24
    %s18 = sphi 0, %s16
    %s19 = sphi 0, %s17
    %s20 = sphi 0, %s18
    %s21 = sphi 0, %s19
    %s33 = sphi 0, %s35
    %s36 = sphi 0, %s33
    %s37 = sphi 0, %s36
    %s53 = sphi 0, %s37
    %s57 = sphi 0, %s57
    %s59 = sphi 0, %s57
    %s60 = sphi 0, %s59
    %s74 = sphi 0, %s60
    %s78 = sphi 0, %s78
    %s80 = sphi 0, %s78
    %s81 = sphi 0, %s80
    %s95 = sphi 0, %s81
    %s103 = sphi 0, %s105
    %s106 = sphi 0, %s103
    %s107 = sphi 0, %s106
    %s123 = sphi 0, %s107
  $region4: #{double_conv_forward.19} parent=0 // loop_header_branch
    %12 = sbr.rel (%p10) target = $region8
  $region5: #{double_conv_forward.19} parent=0 // loop_body
    %s14 = ssub.s32 %s9, 1
    %s15 = ssub.s32 %s9, 2
    %s22 = sadd.s32 1, %s17
    %p23 = scmp.ge.s32.totalorder %s22, 1
    %s24 = scalar_select %p23, 0, %s22
    %s25 = sadd.s32 1, %s16
    %s26 = scalar_select %p23, %s25, %s16
    %p27 = scmp.ge.s32.totalorder %s26, 2
    %s28 = scalar_select %p27, 0, %s26
    %s29 = ssub.s32 %s16, %s28
    %s30 = ssub.s32 %s17, %s24
    %s31 = sor.u32 %s29, %s30
    %p32 = scmp.eq.s32.totalorder %s31, 0
    %s34 = sadd.s32 %s33, 1
    %s35 = scalar_select %p32, %s33, %s34
    %p38 = pneg %p32
    %p39 = scmp.eq.s32.totalorder %s9, 1
    %p40 = por %p38, %p39
    %p41 = scmp.ne.s32.totalorder %s33, %s36
    %p42 = scmp.eq.s32.totalorder %s9, 0
    %p43 = por %p41, %p42
    %p44 = scmp.ne.s32.totalorder %s33, %s36
    %p45 = scmp.eq.s32.totalorder %s14, 1
    %p46 = por %p44, %p45
    %p47 = scmp.ne.s32.totalorder %s36, %s37
    %p48 = scmp.eq.s32.totalorder %s14, 0
    %p49 = por %p47, %p48
    %p50 = scmp.ne.s32.totalorder %s36, %s37
    %p51 = scmp.eq.s32.totalorder %s15, 1
    %p52 = por %p50, %p51
    %p54 = scmp.ne.s32.totalorder %s37, %s53
    %p55 = scmp.eq.s32.totalorder %s15, 0
    %p56 = por %p54, %p55
    %s58 = sadd.s32 %s57, 1
    %p61 = scmp.eq.s32.totalorder %s9, 1
    %p62 = scmp.ne.s32.totalorder %s57, %s59
    %p63 = scmp.eq.s32.totalorder %s9, 0
    %p64 = por %p62, %p63
    %p65 = scmp.ne.s32.totalorder %s57, %s59
    %p66 = scmp.eq.s32.totalorder %s14, 1
    %p67 = por %p65, %p66
    %p68 = scmp.ne.s32.totalorder %s59, %s60
    %p69 = scmp.eq.s32.totalorder %s14, 0
    %p70 = por %p68, %p69
    %p71 = scmp.ne.s32.totalorder %s59, %s60
    %p72 = scmp.eq.s32.totalorder %s15, 1
    %p73 = por %p71, %p72
    %p75 = scmp.ne.s32.totalorder %s60, %s74
    %p76 = scmp.eq.s32.totalorder %s15, 0
    %p77 = por %p75, %p76
    %s79 = sadd.s32 %s78, 1
    %p82 = scmp.eq.s32.totalorder %s9, 1
    %p83 = scmp.ne.s32.totalorder %s78, %s80
    %p84 = scmp.eq.s32.totalorder %s9, 0
    %p85 = por %p83, %p84
    %p86 = scmp.ne.s32.totalorder %s78, %s80
    %p87 = scmp.eq.s32.totalorder %s14, 1
    %p88 = por %p86, %p87
    %p89 = scmp.ne.s32.totalorder %s80, %s81
    %p90 = scmp.eq.s32.totalorder %s14, 0
    %p91 = por %p89, %p90
    %p92 = scmp.ne.s32.totalorder %s80, %s81
    %p93 = scmp.eq.s32.totalorder %s15, 1
    %p94 = por %p92, %p93
    %p96 = scmp.ne.s32.totalorder %s81, %s95
    %p97 = scmp.eq.s32.totalorder %s15, 0
    %p98 = por %p96, %p97
    %s99 = ssub.s32 %s16, %s28
    %s100 = ssub.s32 %s17, %s24
    %s101 = sor.u32 %s99, %s100
    %p102 = scmp.eq.s32.totalorder %s101, 0
    %s104 = sadd.s32 %s103, 1
    %s105 = scalar_select %p102, %s103, %s104
    %p108 = pneg %p102
    %p109 = scmp.eq.s32.totalorder %s9, 1
    %p110 = por %p108, %p109
    %p111 = scmp.ne.s32.totalorder %s103, %s106
    %p112 = scmp.eq.s32.totalorder %s9, 0
    %p113 = por %p111, %p112
    %p114 = scmp.ne.s32.totalorder %s103, %s106
    %p115 = scmp.eq.s32.totalorder %s14, 1
    %p116 = por %p114, %p115
    %p117 = scmp.ne.s32.totalorder %s106, %s107
    %p118 = scmp.eq.s32.totalorder %s14, 0
    %p119 = por %p117, %p118
    %p120 = scmp.ne.s32.totalorder %s106, %s107
    %p121 = scmp.eq.s32.totalorder %s15, 1
    %p122 = por %p120, %p121
    %p124 = scmp.ne.s32.totalorder %s107, %s123
    %p125 = scmp.eq.s32.totalorder %s15, 0
    %p126 = por %p124, %p125
    %p127 = scmp.le.s32.totalorder 1, %s9
    %p128 = scmp.lt.s32.totalorder %s9, 3
    %p129 = pnand %p127, %p128
    %p130 = pneg %p129
    // Predicated region
    $region9: #{double_conv_forward.19} parent=5 // pred_check
      _
    $region10: #{double_conv_forward.19} parent=5 // pred_check_branch
      %132 = sbr.rel (%p129) target = $region12
    $region11: #{double_conv_forward.19} parent=5 // pred_region
      %s133 = ssub.s32 %s9, 1
      // Predicated region
      $region13: #{double_conv_forward.19} parent=11 // pred_check
        %p134 = pneg %p70
      $region14: #{double_conv_forward.19} parent=11 // pred_check_branch
        %136 = sbr.rel (%p134) target = $region16
      $region15: #{double_conv_forward.19} parent=11 // pred_region
        _
      $region16: #{double_conv_forward.19} parent=11 // pred_fallthru
        _
      // Predicated region
      $region17: #{double_conv_forward.19} parent=11 // pred_check
        %p137 = pneg %p91
      $region18: #{double_conv_forward.19} parent=11 // pred_check_branch
        %139 = sbr.rel (%p137) target = $region20
      $region19: #{double_conv_forward.19} parent=11 // pred_region
        _
      $region20: #{double_conv_forward.19} parent=11 // pred_fallthru
        _
    $region12: #{double_conv_forward.19} parent=5 // pred_fallthru
      _
    %p140 = scmp.lt.s32.totalorder %s9, 2
    // Predicated region
    $region21: #{double_conv_forward.19} parent=5 // pred_check
      %p141 = pneg %p140
    $region22: #{double_conv_forward.19} parent=5 // pred_check_branch
      %143 = sbr.rel (%p141) target = $region24
    $region23: #{double_conv_forward.19} parent=5 // pred_region
      // Predicated region
      $region25: #{double_conv_forward.19} parent=23 // pred_check
        %p144 = pneg %p43
      $region26: #{double_conv_forward.19} parent=23 // pred_check_branch
        %146 = sbr.rel (%p144) target = $region28
      $region27: #{double_conv_forward.19} parent=23 // pred_region
        %p147 = scmp.lt.s32.totalorder %s16, 1
        %s148 = scalar_select %p147, %s16, 1
        %p149 = scmp.lt.s32.totalorder %s17, 0
        %s150 = scalar_select %p149, %s17, 0
        %s151 = sadd.s32 %s150, %s148
        %s152 = smul.addr %s151, 4
        %s153 = scalar_lea.vmem %s0, %s152
      $region28: #{double_conv_forward.19} parent=23 // pred_fallthru
        _
    $region24: #{double_conv_forward.19} parent=5 // pred_fallthru
      _
    %p154 = scmp.le.s32.totalorder 1, %s9
    %p155 = scmp.lt.s32.totalorder %s9, 3
    %p156 = pnand %p154, %p155
    %p157 = pneg %p156
    // Predicated region
    $region29: #{double_conv_forward.19} parent=5 // pred_check
      _
    $region30: #{double_conv_forward.19} parent=5 // pred_check_branch
      %159 = sbr.rel (%p156) target = $region32
    $region31: #{double_conv_forward.19} parent=5 // pred_region
      %s160 = ssub.s32 %s9, 1
      %p161 = scmp.lt.s32.totalorder %s18, 1
      %s162 = scalar_select %p161, %s18, 1
      %p163 = scmp.lt.s32.totalorder %s19, 0
      %s164 = scalar_select %p163, %s19, 0
      %s165 = sadd.s32 %s164, %s162
      %s166 = smul.addr %s165, 4
      %s167 = scalar_lea.vmem %s0, %s166
      %p168 = pneg %p49
      %p169 = pneg %p46
      %p170 = pneg %p70
      %p171 = pneg %p67
      %p172 = pneg %p91
      %p173 = pneg %p88
      %p174 = pneg %p119
      %p175 = pneg %p116
      %p176 = scmp.lt.s32.totalorder %s18, 1
      %s177 = scalar_select %p176, %s18, 1
      %p178 = scmp.lt.s32.totalorder %s19, 0
      %s179 = scalar_select %p178, %s19, 0
      %s180 = sadd.s32 %s179, %s177
      %s181 = smul.addr %s180, 8
      %s182 = scalar_lea.vmem %s3, %s181
      %p183 = scmp.lt.s32.totalorder %s18, 1
      %s184 = scalar_select %p183, %s18, 1
      %p185 = scmp.lt.s32.totalorder %s19, 0
      %s186 = scalar_select %p185, %s19, 0
      %s187 = sadd.s32 %s186, %s184
      %s188 = smul.addr %s187, 4
      %s189 = scalar_lea.vmem %s0, %s188
      %p190 = scmp.lt.s32.totalorder %s18, 1
      %s191 = scalar_select %p190, %s18, 1
      %p192 = scmp.lt.s32.totalorder %s19, 0
      %s193 = scalar_select %p192, %s19, 0
      %s194 = sadd.s32 %s193, %s191
      %s195 = smul.addr %s194, 8
      %s196 = scalar_lea.vmem %s3, %s195
      %v197 = vld [vmem:[%s189] sm:$0xf]
      %v198 = vunpack.c.l.bf16 %v197
      %v199 = vld [vmem:[%s1] sm:$0x1]
      %v201 = vlaneseq
      %v202 = vshrl.u32 %v201, 7
      %v203 = vsub.s32 0, %v202
      %v204 = vrot.slane %v199, %v203
      %v206 = vmul.f32 %v198, %v204
      %v207 = vld [vmem:[%s2] sm:$0x1]
      %v209 = vlaneseq
      %v210 = vshrl.u32 %v209, 7
      %v211 = vsub.s32 0, %v210
      %v212 = vrot.slane %v207, %v211
      %v214 = vadd.f32 %v206, %v212
      %v215 = vmax.f32 %v214, 0.0
      %vm216 = vcmask 523264
      %217 = vst.msk [vmem:[%s196] sm:$0xff] %vm216, %v215
      %p218 = scmp.lt.s32.totalorder %s18, 1
      %s219 = scalar_select %p218, %s18, 1
      %p220 = scmp.lt.s32.totalorder %s19, 0
      %s221 = scalar_select %p220, %s19, 0
      %s222 = sadd.s32 %s221, %s219
      %s223 = smul.addr %s222, 8
      %s224 = scalar_lea.vmem %s3, %s223
      // Predicated region
      $region33: #{double_conv_forward.19} parent=31 // pred_check
        %p225 = pneg %p116
      $region34: #{double_conv_forward.19} parent=31 // pred_check_branch
        %227 = sbr.rel (%p225) target = $region36
      $region35: #{double_conv_forward.19} parent=31 // pred_region
        _
      $region36: #{double_conv_forward.19} parent=31 // pred_fallthru
        _
    $region32: #{double_conv_forward.19} parent=5 // pred_fallthru
      _
    %p228 = scmp.le.s32.totalorder 2, %s9
    // Predicated region
    $region37: #{double_conv_forward.19} parent=5 // pred_check
      %p229 = pneg %p228
    $region38: #{double_conv_forward.19} parent=5 // pred_check_branch
      %231 = sbr.rel (%p229) target = $region40
    $region39: #{double_conv_forward.19} parent=5 // pred_region
      %s232 = ssub.s32 %s9, 2
      // Predicated region
      $region41: #{double_conv_forward.19} parent=39 // pred_check
        %p233 = pneg %p122
      $region42: #{double_conv_forward.19} parent=39 // pred_check_branch
        %235 = sbr.rel (%p233) target = $region44
      $region43: #{double_conv_forward.19} parent=39 // pred_region
        %p236 = scmp.lt.s32.totalorder %s20, 1
        %s237 = scalar_select %p236, %s20, 1
        %p238 = scmp.lt.s32.totalorder %s21, 0
        %s239 = scalar_select %p238, %s21, 0
        %s240 = sadd.s32 %s239, %s237
        %s241 = smul.addr %s240, 8
        %s242 = scalar_lea.vmem %s3, %s241
      $region44: #{double_conv_forward.19} parent=39 // pred_fallthru
        _
    $region40: #{double_conv_forward.19} parent=5 // pred_fallthru
      _
  $region6: #{double_conv_forward.19} parent=0 // loop_footer
    %s13 = sadd.s32 1, %s9
  $region7: #{double_conv_forward.19} parent=0 // loop_footer_branch
    %8 = sbr.rel target = $region3
  $region8: #{double_conv_forward.19} parent=0 // loop_exit
    _

// kernel: double_conv_forward.15
$region0: #{double_conv_forward.15}
  #allocation0 [shape = 'u32[]', space=smem, size = 0x4, offset = 0x4, fixed_abs, tag = 'smem constant byte address 0x4 - core index']
  #allocation1 [shape = 'u32[144,128]{1,0:T(1,128)}', space=vmem, size = 0x12000, scoped, tag = 'internal scratch']
  %s0 = inlined_call_operand.vmem [shape: bf16[2,10,10,16], index: 0, kind: input, shape index: {}, may-alias: {0,1}]
  %s1 = inlined_call_operand.vmem [shape: bf16[2,10,10,16], index: 1, kind: input, shape index: {}, may-alias: {0,1}]
  %s2 = inlined_call_operand.vmem [shape: bf16[144,8], index: 2, kind: input, shape index: {}]
  %s3 = inlined_call_operand.vmem [shape: bf16[2,8,8,8], index: 3, kind: output, shape index: {0}]
  %s4 = inlined_call_operand.vmem [shape: f32[2,1,2,8], index: 4, kind: output, shape index: {1}]
  %5 = xla_tuple %s3, %s4
  %s6 = sld [smem:[#allocation0]]
  $region53: #{double_conv_forward.15} parent=0
    _
  %s8 = ssub.s32 1, %s6
  %s9 = scalar_select 0, %s8, %s6
  loop: start=0, step=1, limit=4
  $region2: #{double_conv_forward.15} parent=0 // loop_pre_header
    _
  $region3: #{double_conv_forward.15} parent=0 // loop_header
    %s11 = sphi 0, %s15
    %p12 = scmp.ge.s32.totalorder %s11, 4
    %s18 = sphi 0, %s30
    %s19 = sphi 0, %s26
    %s20 = sphi 0, %s18
    %s21 = sphi 0, %s19
    %s22 = sphi 0, %s20
    %s23 = sphi 0, %s21
    %s35 = sphi 0, %s37
    %s38 = sphi 0, %s35
    %s39 = sphi 0, %s38
    %s55 = sphi 0, %s39
    %s67 = sphi 0, %s69
    %s70 = sphi 0, %s67
    %s71 = sphi 0, %s70
    %s87 = sphi 0, %s71
    %s91 = sphi 0, %s91
    %s93 = sphi 0, %s91
    %s94 = sphi 0, %s93
    %s108 = sphi 0, %s94
    %s116 = sphi 0, %s118
    %s119 = sphi 0, %s116
    %s120 = sphi 0, %s119
    %s136 = sphi 0, %s120
    %s144 = sphi 0, %s146
    %s147 = sphi 0, %s144
    %s148 = sphi 0, %s147
    %s164 = sphi 0, %s148
  $region4: #{double_conv_forward.15} parent=0 // loop_header_branch
    %14 = sbr.rel (%p12) target = $region8
  $region5: #{double_conv_forward.15} parent=0 // loop_body
    %s16 = ssub.s32 %s11, 1
    %s17 = ssub.s32 %s11, 2
    %s24 = sadd.s32 1, %s19
    %p25 = scmp.ge.s32.totalorder %s24, 1
    %s26 = scalar_select %p25, 0, %s24
    %s27 = sadd.s32 1, %s18
    %s28 = scalar_select %p25, %s27, %s18
    %p29 = scmp.ge.s32.totalorder %s28, 2
    %s30 = scalar_select %p29, 0, %s28
    %s31 = ssub.s32 %s18, %s30
    %s32 = ssub.s32 %s19, %s26
    %s33 = sor.u32 %s31, %s32
    %p34 = scmp.eq.s32.totalorder %s33, 0
    %s36 = sadd.s32 %s35, 1
    %s37 = scalar_select %p34, %s35, %s36
    %p40 = pneg %p34
    %p41 = scmp.eq.s32.totalorder %s11, 1
    %p42 = por %p40, %p41
    %p43 = scmp.ne.s32.totalorder %s35, %s38
    %p44 = scmp.eq.s32.totalorder %s11, 0
    %p45 = por %p43, %p44
    %p46 = scmp.ne.s32.totalorder %s35, %s38
    %p47 = scmp.eq.s32.totalorder %s16, 1
    %p48 = por %p46, %p47
    %p49 = scmp.ne.s32.totalorder %s38, %s39
    %p50 = scmp.eq.s32.totalorder %s16, 0
    %p51 = por %p49, %p50
    %p52 = scmp.ne.s32.totalorder %s38, %s39
    %p53 = scmp.eq.s32.totalorder %s17, 1
    %p54 = por %p52, %p53
    %p56 = scmp.ne.s32.totalorder %s39, %s55
    %p57 = scmp.eq.s32.totalorder %s17, 0
    %p58 = por %p56, %p57
    %s59 = sadd.s32 %s19, 1
    %s60 = smul.u32 %s59, 4
    %s61 = sadd.s32 %s26, 1
    %s62 = smul.u32 %s61, 4
    %s63 = ssub.s32 %s18, %s30
    %s64 = ssub.s32 %s60, %s62
    %s65 = sor.u32 %s63, %s64
    %p66 = scmp.eq.s32.totalorder %s65, 0
    %s68 = sadd.s32 %s67, 1
    %s69 = scalar_select %p66, %s67, %s68
    %p72 = pneg %p66
    %p73 = scmp.eq.s32.totalorder %s11, 1
    %p74 = por %p72, %p73
    %p75 = scmp.ne.s32.totalorder %s67, %s70
    %p76 = scmp.eq.s32.totalorder %s11, 0
    %p77 = por %p75, %p76
    %p78 = scmp.ne.s32.totalorder %s67, %s70
    %p79 = scmp.eq.s32.totalorder %s16, 1
    %p80 = por %p78, %p79
    %p81 = scmp.ne.s32.totalorder %s70, %s71
    %p82 = scmp.eq.s32.totalorder %s16, 0
    %p83 = por %p81, %p82
    %p84 = scmp.ne.s32.totalorder %s70, %s71
    %p85 = scmp.eq.s32.totalorder %s17, 1
    %p86 = por %p84, %p85
    %p88 = scmp.ne.s32.totalorder %s71, %s87
    %p89 = scmp.eq.s32.totalorder %s17, 0
    %p90 = por %p88, %p89
    %s92 = sadd.s32 %s91, 1
    %p95 = scmp.eq.s32.totalorder %s11, 1
    %p96 = scmp.ne.s32.totalorder %s91, %s93
    %p97 = scmp.eq.s32.totalorder %s11, 0
    %p98 = por %p96, %p97
    %p99 = scmp.ne.s32.totalorder %s91, %s93
    %p100 = scmp.eq.s32.totalorder %s16, 1
    %p101 = por %p99, %p100
    %p102 = scmp.ne.s32.totalorder %s93, %s94
    %p103 = scmp.eq.s32.totalorder %s16, 0
    %p104 = por %p102, %p103
    %p105 = scmp.ne.s32.totalorder %s93, %s94
    %p106 = scmp.eq.s32.totalorder %s17, 1
    %p107 = por %p105, %p106
    %p109 = scmp.ne.s32.totalorder %s94, %s108
    %p110 = scmp.eq.s32.totalorder %s17, 0
    %p111 = por %p109, %p110
    %s112 = ssub.s32 %s18, %s30
    %s113 = ssub.s32 %s19, %s26
    %s114 = sor.u32 %s112, %s113
    %p115 = scmp.eq.s32.totalorder %s114, 0
    %s117 = sadd.s32 %s116, 1
    %s118 = scalar_select %p115, %s116, %s117
    %p121 = pneg %p115
    %p122 = scmp.eq.s32.totalorder %s11, 1
    %p123 = por %p121, %p122
    %p124 = scmp.ne.s32.totalorder %s116, %s119
    %p125 = scmp.eq.s32.totalorder %s11, 0
    %p126 = por %p124, %p125
    %p127 = scmp.ne.s32.totalorder %s116, %s119
    %p128 = scmp.eq.s32.totalorder %s16, 1
    %p129 = por %p127, %p128
    %p130 = scmp.ne.s32.totalorder %s119, %s120
    %p131 = scmp.eq.s32.totalorder %s16, 0
    %p132 = por %p130, %p131
    %p133 = scmp.ne.s32.totalorder %s119, %s120
    %p134 = scmp.eq.s32.totalorder %s17, 1
    %p135 = por %p133, %p134
    %p137 = scmp.ne.s32.totalorder %s120, %s136
    %p138 = scmp.eq.s32.totalorder %s17, 0
    %p139 = por %p137, %p138
    %s140 = ssub.s32 %s18, %s30
    %s141 = ssub.s32 %s19, %s26
    %s142 = sor.u32 %s140, %s141
    %p143 = scmp.eq.s32.totalorder %s142, 0
    %s145 = sadd.s32 %s144, 1
    %s146 = scalar_select %p143, %s144, %s145
    %p149 = pneg %p143
    %p150 = scmp.eq.s32.totalorder %s11, 1
    %p151 = por %p149, %p150
    %p152 = scmp.ne.s32.totalorder %s144, %s147
    %p153 = scmp.eq.s32.totalorder %s11, 0
    %p154 = por %p152, %p153
    %p155 = scmp.ne.s32.totalorder %s144, %s147
    %p156 = scmp.eq.s32.totalorder %s16, 1
    %p157 = por %p155, %p156
    %p158 = scmp.ne.s32.totalorder %s147, %s148
    %p159 = scmp.eq.s32.totalorder %s16, 0
    %p160 = por %p158, %p159
    %p161 = scmp.ne.s32.totalorder %s147, %s148
    %p162 = scmp.eq.s32.totalorder %s17, 1
    %p163 = por %p161, %p162
    %p165 = scmp.ne.s32.totalorder %s148, %s164
    %p166 = scmp.eq.s32.totalorder %s17, 0
    %p167 = por %p165, %p166
    %p168 = scmp.le.s32.totalorder 1, %s11
    %p169 = scmp.lt.s32.totalorder %s11, 3
    %p170 = pnand %p168, %p169
    %p171 = pneg %p170
    // Predicated region
    $region9: #{double_conv_forward.15} parent=5 // pred_check
      _
    $region10: #{double_conv_forward.15} parent=5 // pred_check_branch
      %173 = sbr.rel (%p170) target = $region12
    $region11: #{double_conv_forward.15} parent=5 // pred_region
      %s174 = ssub.s32 %s11, 1
      // Predicated region
      $region13: #{double_conv_forward.15} parent=11 // pred_check
        %p175 = pneg %p104
      $region14: #{double_conv_forward.15} parent=11 // pred_check_branch
        %177 = sbr.rel (%p175) target = $region16
      $region15: #{double_conv_forward.15} parent=11 // pred_region
        _
      $region16: #{double_conv_forward.15} parent=11 // pred_fallthru
        _
    $region12: #{double_conv_forward.15} parent=5 // pred_fallthru
      _
    %p178 = scmp.lt.s32.totalorder %s11, 2
    // Predicated region
    $region17: #{double_conv_forward.15} parent=5 // pred_check
      %p179 = pneg %p178
    $region18: #{double_conv_forward.15} parent=5 // pred_check_branch
      %181 = sbr.rel (%p179) target = $region20
    $region19: #{double_conv_forward.15} parent=5 // pred_region
      // Predicated region
      $region21: #{double_conv_forward.15} parent=19 // pred_check
        %p182 = pneg %p45
      $region22: #{double_conv_forward.15} parent=19 // pred_check_branch
        %184 = sbr.rel (%p182) target = $region24
      $region23: #{double_conv_forward.15} parent=19 // pred_region
        %s185 = smul.u32 8, %s19
        %s186 = ssub.s32 10, %s185
        %p187 = scmp.lt.s32.totalorder %s186, 8
        %s188 = scalar_select %p187, %s186, 8
        %s189 = smul.u32 64, %s188
        %s190 = smul.u32 %s189, 2
        %p191 = scmp.lt.s32.totalorder %s18, 1
        %s192 = scalar_select %p191, %s18, 1
        %p193 = scmp.lt.s32.totalorder %s185, 9
        %s194 = scalar_select %p193, %s185, 9
        %s195 = smul.addr %s194, 2
        %s196 = smul.addr %s192, 20
        %s197 = sadd.s32 %s195, %s196
        %s198 = smul.addr %s197, 4
        %s199 = scalar_lea.vmem %s0, %s198
        %s200 = smul.u32 8, %s19
        %s201 = ssub.s32 10, %s200
        %p202 = scmp.lt.s32.totalorder %s201, 8
        %s203 = scalar_select %p202, %s201, 8
        %s204 = smul.u32 64, %s203
        %s205 = smul.u32 %s204, 2
      $region24: #{double_conv_forward.15} parent=19 // pred_fallthru
        _
      // Predicated region
      $region25: #{double_conv_forward.15} parent=19 // pred_check
        %p206 = pneg %p77
      $region26: #{double_conv_forward.15} parent=19 // pred_check_branch
        %208 = sbr.rel (%p206) target = $region28
      $region27: #{double_conv_forward.15} parent=19 // pred_region
        %s209 = sadd.s32 %s19, 1
        %s210 = smul.u32 %s209, 4
        %s211 = smul.u32 2, %s210
        %p212 = scmp.lt.s32.totalorder %s18, 1
        %s213 = scalar_select %p212, %s18, 1
        %p214 = scmp.lt.s32.totalorder %s211, 9
        %s215 = scalar_select %p214, %s211, 9
        %s216 = smul.addr %s215, 2
        %s217 = smul.addr %s213, 20
        %s218 = sadd.s32 %s216, %s217
        %s219 = smul.addr %s218, 4
        %s220 = scalar_lea.vmem %s1, %s219
        %s221 = sadd.s32 %s19, 1
        %s222 = smul.u32 %s221, 4
        %s223 = smul.u32 2, %s222
      $region28: #{double_conv_forward.15} parent=19 // pred_fallthru
        _
    $region20: #{double_conv_forward.15} parent=5 // pred_fallthru
      _
    %p224 = scmp.le.s32.totalorder 1, %s11
    %p225 = scmp.lt.s32.totalorder %s11, 3
    %p226 = pnand %p224, %p225
    %p227 = pneg %p226
    // Predicated region
    $region29: #{double_conv_forward.15} parent=5 // pred_check
      _
    $region30: #{double_conv_forward.15} parent=5 // pred_check_branch
      %229 = sbr.rel (%p226) target = $region32
    $region31: #{double_conv_forward.15} parent=5 // pred_region
      %s230 = ssub.s32 %s11, 1
      %s231 = smul.u32 8, %s21
      %s232 = ssub.s32 10, %s231
      %p233 = scmp.lt.s32.totalorder %s232, 8
      %s234 = scalar_select %p233, %s232, 8
      %s235 = smul.u32 64, %s234
      %s236 = smul.u32 %s235, 2
      %p237 = scmp.lt.s32.totalorder %s20, 1
      %s238 = scalar_select %p237, %s20, 1
      %p239 = scmp.lt.s32.totalorder %s231, 9
      %s240 = scalar_select %p239, %s231, 9
      %s241 = smul.addr %s240, 2
      %s242 = smul.addr %s238, 20
      %s243 = sadd.s32 %s241, %s242
      %s244 = smul.addr %s243, 4
      %s245 = scalar_lea.vmem %s0, %s244
      %p246 = pneg %p51
      %p247 = pneg %p48
      %s248 = sadd.s32 %s21, 1
      %s249 = smul.u32 %s248, 4
      %s250 = smul.u32 2, %s249
      %p251 = scmp.lt.s32.totalorder %s20, 1
      %s252 = scalar_select %p251, %s20, 1
      %p253 = scmp.lt.s32.totalorder %s250, 9
      %s254 = scalar_select %p253, %s250, 9
      %s255 = smul.addr %s254, 2
      %s256 = smul.addr %s252, 20
      %s257 = sadd.s32 %s255, %s256
      %s258 = smul.addr %s257, 4
      %s259 = scalar_lea.vmem %s1, %s258
      %p260 = pneg %p83
      %p261 = pneg %p80
      %p262 = pneg %p104
      %p263 = pneg %p101
      %p264 = pneg %p132
      %p265 = pneg %p129
      %s266 = smul.u32 8, %s21
      %p267 = scmp.lt.s32.totalorder %s20, 1
      %s268 = scalar_select %p267, %s20, 1
      %p269 = scmp.lt.s32.totalorder %s266, 7
      %s270 = scalar_select %p269, %s266, 7
      %s271 = smul.addr %s268, 8
      %s272 = sadd.s32 %s270, %s271
      %s273 = smul.addr %s272, 4
      %s274 = scalar_lea.vmem %s3, %s273
      %p275 = pneg %p160
      %p276 = pneg %p157
      %p277 = scmp.lt.s32.totalorder %s20, 1
      %s278 = scalar_select %p277, %s20, 1
      %p279 = scmp.lt.s32.totalorder %s21, 0
      %s280 = scalar_select %p279, %s21, 0
      %s281 = sadd.s32 %s280, %s278
      %s282 = smul.addr %s281, 2
      %s283 = scalar_lea.vmem %s4, %s282
      %s284 = smul.u32 8, %s21
      %s285 = ssub.s32 10, %s284
      %p286 = scmp.lt.s32.totalorder %s285, 8
      %s287 = scalar_select %p286, %s285, 8
      %s288 = smul.u32 64, %s287
      %s289 = smul.u32 %s288, 2
      %p290 = scmp.lt.s32.totalorder %s20, 1
      %s291 = scalar_select %p290, %s20, 1
      %p292 = scmp.lt.s32.totalorder %s284, 9
      %s293 = scalar_select %p292, %s284, 9
      %s294 = smul.addr %s293, 2
      %s295 = smul.addr %s291, 20
      %s296 = sadd.s32 %s294, %s295
      %s297 = smul.addr %s296, 4
      %s298 = scalar_lea.vmem %s0, %s297
      %s299 = smul.u32 8, %s21
      %s300 = ssub.s32 10, %s299
      %p301 = scmp.lt.s32.totalorder %s300, 8
      %s302 = scalar_select %p301, %s300, 8
      %s303 = smul.u32 64, %s302
      %s304 = smul.u32 %s303, 2
      %s305 = sadd.s32 %s21, 1
      %s306 = smul.u32 %s305, 4
      %s307 = smul.u32 2, %s306
      %p308 = scmp.lt.s32.totalorder %s20, 1
      %s309 = scalar_select %p308, %s20, 1
      %p310 = scmp.lt.s32.totalorder %s307, 9
      %s311 = scalar_select %p310, %s307, 9
      %s312 = smul.addr %s311, 2
      %s313 = smul.addr %s309, 20
      %s314 = sadd.s32 %s312, %s313
      %s315 = smul.addr %s314, 4
      %s316 = scalar_lea.vmem %s1, %s315
      %s317 = sadd.s32 %s21, 1
      %s318 = smul.u32 %s317, 4
      %s319 = smul.u32 2, %s318
      %s320 = smul.u32 8, %s21
      %p321 = scmp.lt.s32.totalorder %s20, 1
      %s322 = scalar_select %p321, %s20, 1
      %p323 = scmp.lt.s32.totalorder %s320, 7
      %s324 = scalar_select %p323, %s320, 7
      %s325 = smul.addr %s322, 8
      %s326 = sadd.s32 %s324, %s325
      %s327 = smul.addr %s326, 4
      %s328 = scalar_lea.vmem %s3, %s327
      %s329 = smul.u32 8, %s21
      %p330 = scmp.lt.s32.totalorder %s20, 1
      %s331 = scalar_select %p330, %s20, 1
      %p332 = scmp.lt.s32.totalorder %s21, 0
      %s333 = scalar_select %p332, %s21, 0
      %s334 = sadd.s32 %s333, %s331
      %s335 = smul.addr %s334, 2
      %s336 = scalar_lea.vmem %s4, %s335
      %v338 = vld [vmem:[%s298] sm:$0xf]
      %v339 = vld [vmem:[%s298 + $0x4] sm:$0x1]
      %v340 = vld [vmem:[%s298 + $0x8] sm:$0xf]
      %v341 = vld [vmem:[%s298 + $0xc] sm:$0x1]
      %v342 = vld [vmem:[%s298 + $0x10] sm:$0xf]
      %v343 = vld [vmem:[%s298 + $0x14] sm:$0x1]
      %v344 = vld [vmem:[%s298 + $0x18] sm:$0xf]
      %v345 = vld [vmem:[%s298 + $0x1c] sm:$0x1]
      %v346 = vld [vmem:[%s298 + $0x20] sm:$0xf]
      %v347 = vld [vmem:[%s298 + $0x24] sm:$0x1]
      %v348 = vld [vmem:[%s298 + $0x28] sm:$0xf]
      %v349 = vld [vmem:[%s298 + $0x2c] sm:$0x1]
      %v350 = vld [vmem:[%s298 + $0x30] sm:$0xf]
      %v351 = vld [vmem:[%s298 + $0x34] sm:$0x1]
      %v352 = vld [vmem:[%s298 + $0x38] sm:$0xf]
      %v353 = vld [vmem:[%s298 + $0x3c] sm:$0x1]
      %v354 = vld [vmem:[%s316] sm:$0xf]
      %v355 = vld [vmem:[%s316 + $0x4] sm:$0x1]
      %v356 = vld [vmem:[%s316 + $0x8] sm:$0xf]
      %v357 = vld [vmem:[%s316 + $0xc] sm:$0x1]
      %vm358 = vsmask.f32 3328
      %vm359 = vsmask.f32 7440
      %vm360 = vmor %vm358, %vm359
      %v362 = vshrl.u32 %v338, 16
      %v364 = vrot.slane %v362, 4
      %v365 = vshll.u32 %v338, 16
      %v367 = vrot.slane %v365, 5
      %v368 = vor.u32 %v364, %v367
      %v369 = vrot.slane %v368, 4
      %v371 = vshll.u32 %v339, 16
      %v373 = vrot.slane %v371, 5
      %v374 = vsel %vm360, %v369, %v373
      %v376 = vshrl.u32 %v340, 16
      %v378 = vrot.slane %v376, 4
      %v379 = vshll.u32 %v340, 16
      %v381 = vrot.slane %v379, 5
      %v382 = vor.u32 %v378, %v381
      %v383 = vrot.slane %v382, 4
      %v385 = vshll.u32 %v341, 16
      %v387 = vrot.slane %v385, 5
      %v388 = vsel %vm360, %v383, %v387
      %v390 = vshrl.u32 %v342, 16
      %v392 = vrot.slane %v390, 4
      %v393 = vshll.u32 %v342, 16
      %v395 = vrot.slane %v393, 5
      %v396 = vor.u32 %v392, %v395
      %v397 = vrot.slane %v396, 4
      %v399 = vshll.u32 %v343, 16
      %v401 = vrot.slane %v399, 5
      %v402 = vsel %vm360, %v397, %v401
      %v404 = vshrl.u32 %v344, 16
      %v406 = vrot.slane %v404, 4
      %v407 = vshll.u32 %v344, 16
      %v409 = vrot.slane %v407, 5
      %v410 = vor.u32 %v406, %v409
      %v411 = vrot.slane %v410, 4
      %v413 = vshll.u32 %v345, 16
      %v415 = vrot.slane %v413, 5
      %v416 = vsel %vm360, %v411, %v415
      %v418 = vshrl.u32 %v346, 16
      %v420 = vrot.slane %v418, 4
      %v421 = vshll.u32 %v346, 16
      %v423 = vrot.slane %v421, 5
      %v424 = vor.u32 %v420, %v423
      %v425 = vrot.slane %v424, 4
      %v427 = vshll.u32 %v347, 16
      %v429 = vrot.slane %v427, 5
      %v430 = vsel %vm360, %v425, %v429
      %v432 = vshrl.u32 %v348, 16
      %v434 = vrot.slane %v432, 4
      %v435 = vshll.u32 %v348, 16
      %v437 = vrot.slane %v435, 5
      %v438 = vor.u32 %v434, %v437
      %v439 = vrot.slane %v438, 4
      %v441 = vshll.u32 %v349, 16
      %v443 = vrot.slane %v441, 5
      %v444 = vsel %vm360, %v439, %v443
      %v446 = vshrl.u32 %v350, 16
      %v448 = vrot.slane %v446, 4
      %v449 = vshll.u32 %v350, 16
      %v451 = vrot.slane %v449, 5
      %v452 = vor.u32 %v448, %v451
      %v453 = vrot.slane %v452, 4
      %v455 = vshll.u32 %v351, 16
      %v457 = vrot.slane %v455, 5
      %v458 = vsel %vm360, %v453, %v457
      %v460 = vshrl.u32 %v352, 16
      %v462 = vrot.slane %v460, 4
      %v463 = vshll.u32 %v352, 16
      %v465 = vrot.slane %v463, 5
      %v466 = vor.u32 %v462, %v465
      %v467 = vrot.slane %v466, 4
      %v469 = vshll.u32 %v353, 16
      %v471 = vrot.slane %v469, 5
      %v472 = vsel %vm360, %v467, %v471
      %vm489 = vcmask 1042432
      %vm490 = vcmask 1046532
      %vm491 = vmor %vm489, %vm490
      %v492 = vrot.slane %v338, 5
      %v493 = vrot.slane %v492, 4
      %v494 = vrot.slane %v339, 5
      %v495 = vsel %vm491, %v493, %v494
      %v496 = vrot.slane %v340, 5
      %v497 = vrot.slane %v496, 4
      %v498 = vrot.slane %v341, 5
      %v499 = vsel %vm491, %v497, %v498
      %v500 = vrot.slane %v342, 5
      %v501 = vrot.slane %v500, 4
      %v502 = vrot.slane %v343, 5
      %v503 = vsel %vm491, %v501, %v502
      %v504 = vrot.slane %v344, 5
      %v505 = vrot.slane %v504, 4
      %v506 = vrot.slane %v345, 5
      %v507 = vsel %vm491, %v505, %v506
      %v508 = vrot.slane %v346, 5
      %v509 = vrot.slane %v508, 4
      %v510 = vrot.slane %v347, 5
      %v511 = vsel %vm491, %v509, %v510
      %v512 = vrot.slane %v348, 5
      %v513 = vrot.slane %v512, 4
      %v514 = vrot.slane %v349, 5
      %v515 = vsel %vm491, %v513, %v514
      %v516 = vrot.slane %v350, 5
      %v517 = vrot.slane %v516, 4
      %v518 = vrot.slane %v351, 5
      %v519 = vsel %vm491, %v517, %v518
      %v520 = vrot.slane %v352, 5
      %v521 = vrot.slane %v520, 4
      %v522 = vrot.slane %v353, 5
      %v523 = vsel %vm491, %v521, %v522
      %v525 = vshrl.u32 %v354, 16
      %v527 = vrot.slane %v525, 4
      %v528 = vshll.u32 %v354, 16
      %v530 = vrot.slane %v528, 5
      %v531 = vor.u32 %v527, %v530
      %v532 = vrot.slane %v531, 4
      %v534 = vshll.u32 %v355, 16
      %v536 = vrot.slane %v534, 5
      %v537 = vsel %vm360, %v532, %v536
      %v540 = vrot.slane %v354, 5
      %v541 = vrot.slane %v540, 4
      %v542 = vrot.slane %v355, 5
      %v543 = vsel %vm491, %v541, %v542
      %v545 = vshrl.u32 %v356, 16
      %v547 = vrot.slane %v545, 4
      %v548 = vshll.u32 %v356, 16
      %v550 = vrot.slane %v548, 5
      %v551 = vor.u32 %v547, %v550
      %v552 = vrot.slane %v551, 4
      %v554 = vshll.u32 %v357, 16
      %v556 = vrot.slane %v554, 5
      %v557 = vsel %vm360, %v552, %v556
      %v560 = vrot.slane %v356, 5
      %v561 = vrot.slane %v560, 4
      %v562 = vrot.slane %v357, 5
      %v563 = vsel %vm491, %v561, %v562
      %v564 = vunpack.c.l.b16 %v338
      %v565 = vunpack.c.l.b16 %v340
      %v566 = vunpack.c.l.b16 %v342
      %v567 = vunpack.c.l.b16 %v344
      %v568 = vunpack.c.l.b16 %v346
      %v569 = vunpack.c.l.b16 %v348
      %v570 = vunpack.c.l.b16 %v350
      %v571 = vunpack.c.l.b16 %v352
      %v572 = vpack.c.b16 %v565, %v564
      %v573 = vpack.c.b16 %v567, %v566
      %v574 = vpack.c.b16 %v569, %v568
      %v575 = vpack.c.b16 %v571, %v570
      %v576 = vunpack.c.l.b16 %v374
      %v577 = vunpack.c.l.b16 %v388
      %v578 = vunpack.c.l.b16 %v402
      %v579 = vunpack.c.l.b16 %v416
      %v580 = vunpack.c.l.b16 %v430
      %v581 = vunpack.c.l.b16 %v444
      %v582 = vunpack.c.l.b16 %v458
      %v583 = vunpack.c.l.b16 %v472
      %v584 = vpack.c.b16 %v577, %v576
      %v585 = vpack.c.b16 %v579, %v578
      %v586 = vpack.c.b16 %v581, %v580
      %v587 = vpack.c.b16 %v583, %v582
      %588 = vrot.lane.b32.xlu0 %v584, 16
      %v589 = vpop.permute.xlu0 %588
      %590 = vrot.lane.b32.xlu0 %v585, 16
      %v591 = vpop.permute.xlu0 %590
      %592 = vrot.lane.b32.xlu0 %v586, 16
      %v593 = vpop.permute.xlu0 %592
      %594 = vrot.lane.b32.xlu0 %v587, 16
      %v595 = vpop.permute.xlu0 %594
      %v596 = vunpack.c.l.b16 %v495
      %v597 = vunpack.c.l.b16 %v499
      %v598 = vunpack.c.l.b16 %v503
      %v599 = vunpack.c.l.b16 %v507
      %v600 = vunpack.c.l.b16 %v511
      %v601 = vunpack.c.l.b16 %v515
      %v602 = vunpack.c.l.b16 %v519
      %v603 = vunpack.c.l.b16 %v523
      %v604 = vpack.c.b16 %v597, %v596
      %v605 = vpack.c.b16 %v599, %v598
      %v606 = vpack.c.b16 %v601, %v600
      %v607 = vpack.c.b16 %v603, %v602
      %608 = vrot.lane.b32.xlu0 %v604, 32
      %v609 = vpop.permute.xlu0 %608
      %610 = vrot.lane.b32.xlu0 %v605, 32
      %v611 = vpop.permute.xlu0 %610
      %612 = vrot.lane.b32.xlu0 %v606, 32
      %v613 = vpop.permute.xlu0 %612
      %614 = vrot.lane.b32.xlu0 %v607, 32
      %v615 = vpop.permute.xlu0 %614
      %v616 = vunpack.c.l.b16 %v354
      %v617 = vpack.c.b16 %v566, %v565
      %v618 = vpack.c.b16 %v568, %v567
      %v619 = vpack.c.b16 %v570, %v569
      %v620 = vpack.c.b16 %v616, %v571
      %621 = vrot.lane.b32.xlu0 %v617, 48
      %v622 = vpop.permute.xlu0 %621
      %623 = vrot.lane.b32.xlu0 %v618, 48
      %v624 = vpop.permute.xlu0 %623
      %625 = vrot.lane.b32.xlu0 %v619, 48
      %v626 = vpop.permute.xlu0 %625
      %627 = vrot.lane.b32.xlu0 %v620, 48
      %v628 = vpop.permute.xlu0 %627
      %v629 = vunpack.c.l.b16 %v537
      %v630 = vpack.c.b16 %v578, %v577
      %v631 = vpack.c.b16 %v580, %v579
      %v632 = vpack.c.b16 %v582, %v581
      %v633 = vpack.c.b16 %v629, %v583
      %634 = vrot.lane.b32.xlu0 %v630, 64
      %v635 = vpop.permute.xlu0 %634
      %636 = vrot.lane.b32.xlu0 %v631, 64
      %v637 = vpop.permute.xlu0 %636
      %638 = vrot.lane.b32.xlu0 %v632, 64
      %v639 = vpop.permute.xlu0 %638
      %640 = vrot.lane.b32.xlu0 %v633, 64
      %v641 = vpop.permute.xlu0 %640
      %v642 = vunpack.c.l.b16 %v543
      %v643 = vpack.c.b16 %v598, %v597
      %v644 = vpack.c.b16 %v600, %v599
      %v645 = vpack.c.b16 %v602, %v601
      %v646 = vpack.c.b16 %v642, %v603
      %647 = vrot.lane.b32.xlu0 %v643, 80
      %v648 = vpop.permute.xlu0 %647
      %649 = vrot.lane.b32.xlu0 %v644, 80
      %v650 = vpop.permute.xlu0 %649
      %651 = vrot.lane.b32.xlu0 %v645, 80
      %v652 = vpop.permute.xlu0 %651
      %653 = vrot.lane.b32.xlu0 %v646, 80
      %v654 = vpop.permute.xlu0 %653
      %v655 = vunpack.c.l.b16 %v356
      %v656 = vpack.c.b16 %v655, %v616
      %657 = vrot.lane.b32.xlu0 %v573, 96
      %v658 = vpop.permute.xlu0 %657
      %659 = vrot.lane.b32.xlu0 %v574, 96
      %v660 = vpop.permute.xlu0 %659
      %661 = vrot.lane.b32.xlu0 %v575, 96
      %v662 = vpop.permute.xlu0 %661
      %663 = vrot.lane.b32.xlu0 %v656, 96
      %v664 = vpop.permute.xlu0 %663
      %v665 = vunpack.c.l.b16 %v557
      %v666 = vpack.c.b16 %v665, %v629
      %667 = vrot.lane.b32.xlu0 %v585, 112
      %v668 = vpop.permute.xlu0 %667
      %669 = vrot.lane.b32.xlu0 %v586, 112
      %v670 = vpop.permute.xlu0 %669
      %671 = vrot.lane.b32.xlu0 %v587, 112
      %v672 = vpop.permute.xlu0 %671
      %673 = vrot.lane.b32.xlu0 %v666, 112
      %v674 = vpop.permute.xlu0 %673
      %v675 = vunpack.c.l.b16 %v563
      %v676 = vpack.c.b16 %v675, %v642
      %vm677 = vcmask 130048
      %v680 = vsel %vm677, %v572, %v589
      %v683 = vsel %vm677, %v573, %v591
      %v686 = vsel %vm677, %v574, %v593
      %v689 = vsel %vm677, %v575, %v595
      %vm690 = vcmask 261120
      %v692 = vsel %vm690, %v680, %v609
      %v694 = vsel %vm690, %v683, %v611
      %v696 = vsel %vm690, %v686, %v613
      %v698 = vsel %vm690, %v689, %v615
      %vm699 = vcmask 392192
      %v701 = vsel %vm699, %v692, %v622
      %v703 = vsel %vm699, %v694, %v624
      %v705 = vsel %vm699, %v696, %v626
      %v707 = vsel %vm699, %v698, %v628
      %vm708 = vcmask 523264
      %v710 = vsel %vm708, %v701, %v635
      %v712 = vsel %vm708, %v703, %v637
      %v714 = vsel %vm708, %v705, %v639
      %v716 = vsel %vm708, %v707, %v641
      %vm717 = vcmask 654336
      %v719 = vsel %vm717, %v710, %v648
      %v721 = vsel %vm717, %v712, %v650
      %v723 = vsel %vm717, %v714, %v652
      %v725 = vsel %vm717, %v716, %v654
      %vm726 = vcmask 785408
      %v728 = vsel %vm726, %v719, %v658
      %v730 = vsel %vm726, %v721, %v660
      %v732 = vsel %vm726, %v723, %v662
      %v734 = vsel %vm726, %v725, %v664
      %vm735 = vcmask 916480
      %v737 = vsel %vm735, %v728, %v668
      %v740 = vsel %vm735, %v730, %v670
      %v743 = vsel %vm735, %v732, %v672
      %v746 = vsel %vm735, %v734, %v674
      %v748 = vld [vmem:[%s2] sm:$0xf]
      %v749 = vld [vmem:[%s2 + $0x4] sm:$0xf]
      %v750 = vld [vmem:[%s2 + $0x8] sm:$0xf]
      %v751 = vld [vmem:[%s2 + $0xc] sm:$0xf]
      %v752 = vld [vmem:[%s2 + $0x10] sm:$0xf]
      %v753 = vld [vmem:[%s2 + $0x14] sm:$0xf]
      %v754 = vld [vmem:[%s2 + $0x18] sm:$0xf]
      %v755 = vld [vmem:[%s2 + $0x1c] sm:$0xf]
      %v756 = vld [vmem:[%s2 + $0x20] sm:$0xf]
      %v757 = vld [vmem:[%s2 + $0x24] sm:$0xf]
      %v758 = vld [vmem:[%s2 + $0x28] sm:$0xf]
      %v759 = vld [vmem:[%s2 + $0x2c] sm:$0xf]
      %v760 = vld [vmem:[%s2 + $0x30] sm:$0xf]
      %v761 = vld [vmem:[%s2 + $0x34] sm:$0xf]
      %v762 = vld [vmem:[%s2 + $0x38] sm:$0xf]
      %v763 = vld [vmem:[%s2 + $0x3c] sm:$0xf]
      %v764 = vld [vmem:[%s2 + $0x40] sm:$0xf]
      %v765 = vld [vmem:[%s2 + $0x44] sm:$0xf]
      %v784 = vunpack.c.l.b16 %v748
      %v785 = vunpack.c.l.b16 %v749
      %v786 = vunpack.c.l.b16 %v750
      %v787 = vunpack.c.l.b16 %v751
      %v788 = vunpack.c.l.b16 %v752
      %v789 = vunpack.c.l.b16 %v753
      %v790 = vunpack.c.l.b16 %v754
      %v791 = vunpack.c.l.b16 %v755
      %v792 = vunpack.c.l.b16 %v756
      %v793 = vunpack.c.l.b16 %v757
      %v794 = vunpack.c.l.b16 %v758
      %v795 = vunpack.c.l.b16 %v759
      %v796 = vunpack.c.l.b16 %v760
      %v797 = vunpack.c.l.b16 %v761
      %v798 = vunpack.c.l.b16 %v762
      %v799 = vunpack.c.l.b16 %v763
      %v800 = vunpack.c.l.b16 %v764
      %v801 = vunpack.c.l.b16 %v765
      %v802 = vpack.c.b16 %v785, %v784
      %v803 = vpack.c.b16 %v787, %v786
      %v804 = vpack.c.b16 %v789, %v788
      %v805 = vpack.c.b16 %v791, %v790
      %v806 = vpack.c.b16 %v793, %v792
      %v807 = vpack.c.b16 %v795, %v794
      %v808 = vpack.c.b16 %v797, %v796
      %v809 = vpack.c.b16 %v799, %v798
      %v810 = vpack.c.b16 %v801, %v800
      %v821 = vsel %vm677, %v605, 0
      %v824 = vsel %vm677, %v606, 0
      %v827 = vsel %vm677, %v607, 0
      %v830 = vsel %vm677, %v676, 0
      %832 = vmatprep.subr.bf16.mxu0 0
      %833 = vmatpush1.bf16.msra.mxu0 %v802
      %834 = vmatprep.subr.bf16.mxu0 0
      %835 = vmatpush1.bf16.msra.mxu0 %v803
      %836 = vmatprep.subr.bf16.mxu0 0
      %837 = vmatpush1.bf16.msra.mxu0 %v804
      %838 = vmatprep.subr.bf16.mxu0 0
      %839 = vmatpush1.bf16.msra.mxu0 %v805
      %840 = vmatprep.subr.bf16.mxu0 0
      %841 = vmatpush1.bf16.msra.mxu0 %v806
      %842 = vmatprep.subr.bf16.mxu0 0
      %843 = vmatpush1.bf16.msra.mxu0 %v807
      %844 = vmatprep.subr.bf16.mxu0 0
      %845 = vmatpush1.bf16.msra.mxu0 %v808
      %846 = vmatprep.subr.bf16.mxu0 0
      %847 = vmatpush1.bf16.msra.mxu0 %v809
      %848 = vmatprep.subr.bf16.mxu0 0
      %849 = vmatpush1.bf16.msra.mxu0 %v810
      %850 = vmatprep.subr.bf16.mxu0 0
      %851 = vmatpush1.bf16.msra.mxu0 0
      %852 = vmatprep.subr.bf16.mxu0 0
      %853 = vmatpush1.bf16.msra.mxu0 0
      %854 = vmatprep.subr.bf16.mxu0 0
      %855 = vmatpush1.bf16.msra.mxu0 0
      %856 = vmatprep.subr.bf16.mxu0 0
      %857 = vmatpush1.bf16.msra.mxu0 0
      %858 = vmatprep.subr.bf16.mxu0 0
      %859 = vmatpush1.bf16.msra.mxu0 0
      %860 = vmatprep.subr.bf16.mxu0 0
      %861 = vmatpush1.bf16.msra.mxu0 0
      %862 = vmatprep.subr.bf16.mxu0 0
      %863 = vmatpush1.bf16.msra.mxu0 0
      %864 = vmatprep.mubr.bf16.mxu0 %v821
      %865 = vmatmul.mubr.bf16.gmra.mrb[0].mxu0 %v737
      %v866 = vpop.f32.mrb[0].mxu0
      %v867 = vadd.f32 0.0, %v866
      %v868 = vpop.f32.mrb[0].mxu0
      %v869 = vpop.f32.mrb[0].mxu0
      %v870 = vadd.f32 0.0, %v869
      %v871 = vpop.f32.mrb[0].mxu0
      %872 = vmatprep.mubr.bf16.mxu0 %v824
      %873 = vmatmul.mubr.bf16.gmra.mrb[0].mxu0 %v740
      %v874 = vpop.f32.mrb[0].mxu0
      %v875 = vadd.f32 0.0, %v874
      %v876 = vpop.f32.mrb[0].mxu0
      %v877 = vpop.f32.mrb[0].mxu0
      %v878 = vadd.f32 0.0, %v877
      %v879 = vpop.f32.mrb[0].mxu0
      %880 = vmatprep.mubr.bf16.mxu0 %v827
      %881 = vmatmul.mubr.bf16.gmra.mrb[0].mxu0 %v743
      %v882 = vpop.f32.mrb[0].mxu0
      %v883 = vadd.f32 0.0, %v882
      %v884 = vpop.f32.mrb[0].mxu0
      %v885 = vpop.f32.mrb[0].mxu0
      %v886 = vadd.f32 0.0, %v885
      %v887 = vpop.f32.mrb[0].mxu0
      %888 = vmatprep.mubr.bf16.mxu0 %v830
      %889 = vmatmul.mubr.bf16.gmra.mrb[0].mxu0 %v746
      %v890 = vpop.f32.mrb[0].mxu0
      %v891 = vadd.f32 0.0, %v890
      %v892 = vpop.f32.mrb[0].mxu0
      %v893 = vpop.f32.mrb[0].mxu0
      %v894 = vadd.f32 0.0, %v893
      %v895 = vpop.f32.mrb[0].mxu0
      %896 = vdwg.mxu0
      %vm897 = vcmask 64512
      %v898 = vsel %vm897, %v867, 0.0
      %v899 = vsel %vm897, %v870, 0.0
      %v900 = vadd.f32 %v898, %v899
      %v901 = vsel %vm897, %v875, 0.0
      %v902 = vadd.f32 %v900, %v901
      %v903 = vsel %vm897, %v878, 0.0
      %v904 = vadd.f32 %v902, %v903
      %v905 = vsel %vm897, %v883, 0.0
      %v906 = vadd.f32 %v904, %v905
      %v907 = vsel %vm897, %v886, 0.0
      %v908 = vadd.f32 %v906, %v907
      %v909 = vsel %vm897, %v891, 0.0
      %v910 = vadd.f32 %v908, %v909
      %v911 = vsel %vm897, %v894, 0.0
      %v912 = vadd.f32 %v910, %v911
      %v913 = vrot.slane %v912, 4
      %v914 = vadd.f32 %v912, %v913
      %v915 = vrot.slane %v914, 2
      %v916 = vadd.f32 %v914, %v915
      %v917 = vrot.slane %v916, 1
      %v918 = vadd.f32 %v916, %v917
      %v919 = vmul.f32 %v867, %v867
      %v920 = vmul.f32 %v870, %v870
      %v921 = vmul.f32 %v875, %v875
      %v922 = vmul.f32 %v878, %v878
      %v923 = vmul.f32 %v883, %v883
      %v924 = vmul.f32 %v886, %v886
      %v925 = vmul.f32 %v891, %v891
      %v926 = vmul.f32 %v894, %v894
      %v927 = vsel %vm897, %v919, 0.0
      %v928 = vsel %vm897, %v920, 0.0
      %v929 = vadd.f32 %v927, %v928
      %v930 = vsel %vm897, %v921, 0.0
      %v931 = vadd.f32 %v929, %v930
      %v932 = vsel %vm897, %v922, 0.0
      %v933 = vadd.f32 %v931, %v932
      %v934 = vsel %vm897, %v923, 0.0
      %v935 = vadd.f32 %v933, %v934
      %v936 = vsel %vm897, %v924, 0.0
      %v937 = vadd.f32 %v935, %v936
      %v938 = vsel %vm897, %v925, 0.0
      %v939 = vadd.f32 %v937, %v938
      %v940 = vsel %vm897, %v926, 0.0
      %v941 = vadd.f32 %v939, %v940
      %v942 = vrot.slane %v941, 4
      %v943 = vadd.f32 %v941, %v942
      %v944 = vrot.slane %v943, 2
      %v945 = vadd.f32 %v943, %v944
      %v946 = vrot.slane %v945, 1
      %v947 = vadd.f32 %v945, %v946
      %vm948 = vcmask 1040384
      %v949 = vsel %vm948, %v918, %v947
      %vm950 = vcmask 58368
      %951 = vst.msk [vmem:[%s336] sm:$0x3] %vm950, %v949
      %v952 = vpack.c.bf16 %v867, %v867
      %v953 = vpack.c.bf16 %v870, %v870
      %v954 = vpack.c.bf16 %v875, %v875
      %v955 = vpack.c.bf16 %v878, %v878
      %v956 = vpack.c.bf16 %v883, %v883
      %v957 = vpack.c.bf16 %v886, %v886
      %v958 = vpack.c.bf16 %v891, %v891
      %v959 = vpack.c.bf16 %v894, %v894
      %vm960 = vcmask 60416
      %961 = vst.msk [vmem:[%s328] sm:$0xf] %vm960, %v952
      %962 = vst.msk [vmem:[%s328 + $0x4] sm:$0xf] %vm960, %v953
      %963 = vst.msk [vmem:[%s328 + $0x8] sm:$0xf] %vm960, %v954
      %964 = vst.msk [vmem:[%s328 + $0xc] sm:$0xf] %vm960, %v955
      %965 = vst.msk [vmem:[%s328 + $0x10] sm:$0xf] %vm960, %v956
      %966 = vst.msk [vmem:[%s328 + $0x14] sm:$0xf] %vm960, %v957
      %967 = vst.msk [vmem:[%s328 + $0x18] sm:$0xf] %vm960, %v958
      %968 = vst.msk [vmem:[%s328 + $0x1c] sm:$0xf] %vm960, %v959
      %s969 = smul.u32 8, %s21
      %p970 = scmp.lt.s32.totalorder %s20, 1
      %s971 = scalar_select %p970, %s20, 1
      %p972 = scmp.lt.s32.totalorder %s969, 7
      %s973 = scalar_select %p972, %s969, 7
      %s974 = smul.addr %s971, 8
      %s975 = sadd.s32 %s973, %s974
      %s976 = smul.addr %s975, 4
      %s977 = scalar_lea.vmem %s3, %s976
      %p978 = scmp.lt.s32.totalorder %s20, 1
      %s979 = scalar_select %p978, %s20, 1
      %p980 = scmp.lt.s32.totalorder %s21, 0
      %s981 = scalar_select %p980, %s21, 0
      %s982 = sadd.s32 %s981, %s979
      %s983 = smul.addr %s982, 2
      %s984 = scalar_lea.vmem %s4, %s983
      // Predicated region
      $region33: #{double_conv_forward.15} parent=31 // pred_check
        %p985 = pneg %p129
      $region34: #{double_conv_forward.15} parent=31 // pred_check_branch
        %987 = sbr.rel (%p985) target = $region36
      $region35: #{double_conv_forward.15} parent=31 // pred_region
        %s988 = smul.u32 8, %s21
      $region36: #{double_conv_forward.15} parent=31 // pred_fallthru
        _
      // Predicated region
      $region37: #{double_conv_forward.15} parent=31 // pred_check
        %p989 = pneg %p157
      $region38: #{double_conv_forward.15} parent=31 // pred_check_branch
        %991 = sbr.rel (%p989) target = $region40
      $region39: #{double_conv_forward.15} parent=31 // pred_region
        _
      $region40: #{double_conv_forward.15} parent=31 // pred_fallthru
        _
    $region32: #{double_conv_forward.15} parent=5 // pred_fallthru
      _
    %p992 = scmp.le.s32.totalorder 2, %s11
    // Predicated region
    $region41: #{double_conv_forward.15} parent=5 // pred_check
      %p993 = pneg %p992
    $region42: #{double_conv_forward.15} parent=5 // pred_check_branch
      %995 = sbr.rel (%p993) target = $region44
    $region43: #{double_conv_forward.15} parent=5 // pred_region
      %s996 = ssub.s32 %s11, 2
      // Predicated region
      $region45: #{double_conv_forward.15} parent=43 // pred_check
        %p997 = pneg %p135
      $region46: #{double_conv_forward.15} parent=43 // pred_check_branch
        %999 = sbr.rel (%p997) target = $region48
      $region47: #{double_conv_forward.15} parent=43 // pred_region
        %s1000 = smul.u32 8, %s23
        %p1001 = scmp.lt.s32.totalorder %s22, 1
        %s1002 = scalar_select %p1001, %s22, 1
        %p1003 = scmp.lt.s32.totalorder %s1000, 7
        %s1004 = scalar_select %p1003, %s1000, 7
        %s1005 = smul.addr %s1002, 8
        %s1006 = sadd.s32 %s1004, %s1005
        %s1007 = smul.addr %s1006, 4
        %s1008 = scalar_lea.vmem %s3, %s1007
      $region48: #{double_conv_forward.15} parent=43 // pred_fallthru
        _
      // Predicated region
      $region49: #{double_conv_forward.15} parent=43 // pred_check
        %p1009 = pneg %p163
      $region50: #{double_conv_forward.15} parent=43 // pred_check_branch
        %1011 = sbr.rel (%p1009) target = $region52
      $region51: #{double_conv_forward.15} parent=43 // pred_region
        %p1012 = scmp.lt.s32.totalorder %s22, 1
        %s1013 = scalar_select %p1012, %s22, 1
        %p1014 = scmp.lt.s32.totalorder %s23, 0
        %s1015 = scalar_select %p1014, %s23, 0
        %s1016 = sadd.s32 %s1015, %s1013
        %s1017 = smul.addr %s1016, 2
        %s1018 = scalar_lea.vmem %s4, %s1017
      $region52: #{double_conv_forward.15} parent=43 // pred_fallthru
        _
    $region44: #{double_conv_forward.15} parent=5 // pred_fallthru
      _
  $region6: #{double_conv_forward.15} parent=0 // loop_footer
    %s15 = sadd.s32 1, %s11
  $region7: #{double_conv_forward.15} parent=0 // loop_footer_branch
    %10 = sbr.rel target = $region3
  $region8: #{double_conv_forward.15} parent=0 // loop_exit
    _

// kernel: double_conv_forward.16
$region0: #{double_conv_forward.16}
  #allocation0 [shape = 'u32[]', space=smem, size = 0x4, offset = 0x4, fixed_abs, tag = 'smem constant byte address 0x4 - core index']
  #allocation1 [shape = 'u32[144,128]{1,0:T(1,128)}', space=vmem, size = 0x12000, scoped, tag = 'internal scratch']
  %s0 = inlined_call_operand.vmem [shape: bf16[2,10,10,8], index: 0, kind: input, shape index: {}, may-alias: {0,1}]
  %s1 = inlined_call_operand.vmem [shape: bf16[2,10,10,8], index: 1, kind: input, shape index: {}, may-alias: {0,1}]
  %s2 = inlined_call_operand.vmem [shape: bf16[72,8], index: 2, kind: input, shape index: {}]
  %s3 = inlined_call_operand.vmem [shape: bf16[2,8,8,8], index: 3, kind: output, shape index: {0}]
  %s4 = inlined_call_operand.hbm [shape: f32[2,1,2,8], index: 4, kind: output, shape index: {1}]
  %5 = xla_tuple %s3, %s4
  %s6 = sld [smem:[#allocation0]]
  $region53: #{double_conv_forward.16} parent=0
    _
  %s8 = ssub.s32 1, %s6
  %s9 = scalar_select 0, %s8, %s6
  $region1: #{double_conv_forward.16} parent=0
    #allocation2 [shape = 'u8[2048]{0}', space=vmem, size = 0x800, scoped, tag = 'output window, operand 1']
    #allocation3 [shape = 's32[2]{0}', space=sflag, size = 0x8, scoped, tag = 'scoped memory for double_conv_forward.16']
    %10 = vsyncpa [#allocation3], 0
    %s11 = scalar_lea.sflag [#allocation3], 1
    %12 = vsyncpa %s11, 0
    loop: start=0, step=1, limit=4
    $region2: #{double_conv_forward.16} parent=1 // loop_pre_header
      _
    $region3: #{double_conv_forward.16} parent=1 // loop_header
      %s14 = sphi 0, %s18
      %p15 = scmp.ge.s32.totalorder %s14, 4
      %s21 = sphi 0, %s33
      %s22 = sphi 0, %s29
      %s23 = sphi 0, %s21
      %s24 = sphi 0, %s22
      %s25 = sphi 0, %s23
      %s26 = sphi 0, %s24
      %s38 = sphi 0, %s40
      %s41 = sphi 0, %s38
      %s42 = sphi 0, %s41
      %s58 = sphi 0, %s42
      %s70 = sphi 0, %s72
      %s73 = sphi 0, %s70
      %s74 = sphi 0, %s73
      %s90 = sphi 0, %s74
      %s94 = sphi 0, %s94
      %s96 = sphi 0, %s94
      %s97 = sphi 0, %s96
      %s111 = sphi 0, %s97
      %s119 = sphi 0, %s121
      %s122 = sphi 0, %s119
      %s123 = sphi 0, %s122
      %s139 = sphi 0, %s123
      %s147 = sphi 0, %s149
      %s150 = sphi 0, %s147
      %s151 = sphi 0, %s150
      %s167 = sphi 0, %s151
    $region4: #{double_conv_forward.16} parent=1 // loop_header_branch
      %17 = sbr.rel (%p15) target = $region8
    $region5: #{double_conv_forward.16} parent=1 // loop_body
      %s19 = ssub.s32 %s14, 1
      %s20 = ssub.s32 %s14, 2
      %s27 = sadd.s32 1, %s22
      %p28 = scmp.ge.s32.totalorder %s27, 1
      %s29 = scalar_select %p28, 0, %s27
      %s30 = sadd.s32 1, %s21
      %s31 = scalar_select %p28, %s30, %s21
      %p32 = scmp.ge.s32.totalorder %s31, 2
      %s33 = scalar_select %p32, 0, %s31
      %s34 = ssub.s32 %s21, %s33
      %s35 = ssub.s32 %s22, %s29
      %s36 = sor.u32 %s34, %s35
      %p37 = scmp.eq.s32.totalorder %s36, 0
      %s39 = sadd.s32 %s38, 1
      %s40 = scalar_select %p37, %s38, %s39
      %p43 = pneg %p37
      %p44 = scmp.eq.s32.totalorder %s14, 1
      %p45 = por %p43, %p44
      %p46 = scmp.ne.s32.totalorder %s38, %s41
      %p47 = scmp.eq.s32.totalorder %s14, 0
      %p48 = por %p46, %p47
      %p49 = scmp.ne.s32.totalorder %s38, %s41
      %p50 = scmp.eq.s32.totalorder %s19, 1
      %p51 = por %p49, %p50
      %p52 = scmp.ne.s32.totalorder %s41, %s42
      %p53 = scmp.eq.s32.totalorder %s19, 0
      %p54 = por %p52, %p53
      %p55 = scmp.ne.s32.totalorder %s41, %s42
      %p56 = scmp.eq.s32.totalorder %s20, 1
      %p57 = por %p55, %p56
      %p59 = scmp.ne.s32.totalorder %s42, %s58
      %p60 = scmp.eq.s32.totalorder %s20, 0
      %p61 = por %p59, %p60
      %s62 = sadd.s32 %s22, 1
      %s63 = smul.u32 %s62, 4
      %s64 = sadd.s32 %s29, 1
      %s65 = smul.u32 %s64, 4
      %s66 = ssub.s32 %s21, %s33
      %s67 = ssub.s32 %s63, %s65
      %s68 = sor.u32 %s66, %s67
      %p69 = scmp.eq.s32.totalorder %s68, 0
      %s71 = sadd.s32 %s70, 1
      %s72 = scalar_select %p69, %s70, %s71
      %p75 = pneg %p69
      %p76 = scmp.eq.s32.totalorder %s14, 1
      %p77 = por %p75, %p76
      %p78 = scmp.ne.s32.totalorder %s70, %s73
      %p79 = scmp.eq.s32.totalorder %s14, 0
      %p80 = por %p78, %p79
      %p81 = scmp.ne.s32.totalorder %s70, %s73
      %p82 = scmp.eq.s32.totalorder %s19, 1
      %p83 = por %p81, %p82
      %p84 = scmp.ne.s32.totalorder %s73, %s74
      %p85 = scmp.eq.s32.totalorder %s19, 0
      %p86 = por %p84, %p85
      %p87 = scmp.ne.s32.totalorder %s73, %s74
      %p88 = scmp.eq.s32.totalorder %s20, 1
      %p89 = por %p87, %p88
      %p91 = scmp.ne.s32.totalorder %s74, %s90
      %p92 = scmp.eq.s32.totalorder %s20, 0
      %p93 = por %p91, %p92
      %s95 = sadd.s32 %s94, 1
      %p98 = scmp.eq.s32.totalorder %s14, 1
      %p99 = scmp.ne.s32.totalorder %s94, %s96
      %p100 = scmp.eq.s32.totalorder %s14, 0
      %p101 = por %p99, %p100
      %p102 = scmp.ne.s32.totalorder %s94, %s96
      %p103 = scmp.eq.s32.totalorder %s19, 1
      %p104 = por %p102, %p103
      %p105 = scmp.ne.s32.totalorder %s96, %s97
      %p106 = scmp.eq.s32.totalorder %s19, 0
      %p107 = por %p105, %p106
      %p108 = scmp.ne.s32.totalorder %s96, %s97
      %p109 = scmp.eq.s32.totalorder %s20, 1
      %p110 = por %p108, %p109
      %p112 = scmp.ne.s32.totalorder %s97, %s111
      %p113 = scmp.eq.s32.totalorder %s20, 0
      %p114 = por %p112, %p113
      %s115 = ssub.s32 %s21, %s33
      %s116 = ssub.s32 %s22, %s29
      %s117 = sor.u32 %s115, %s116
      %p118 = scmp.eq.s32.totalorder %s117, 0
      %s120 = sadd.s32 %s119, 1
      %s121 = scalar_select %p118, %s119, %s120
      %p124 = pneg %p118
      %p125 = scmp.eq.s32.totalorder %s14, 1
      %p126 = por %p124, %p125
      %p127 = scmp.ne.s32.totalorder %s119, %s122
      %p128 = scmp.eq.s32.totalorder %s14, 0
      %p129 = por %p127, %p128
      %p130 = scmp.ne.s32.totalorder %s119, %s122
      %p131 = scmp.eq.s32.totalorder %s19, 1
      %p132 = por %p130, %p131
      %p133 = scmp.ne.s32.totalorder %s122, %s123
      %p134 = scmp.eq.s32.totalorder %s19, 0
      %p135 = por %p133, %p134
      %p136 = scmp.ne.s32.totalorder %s122, %s123
      %p137 = scmp.eq.s32.totalorder %s20, 1
      %p138 = por %p136, %p137
      %p140 = scmp.ne.s32.totalorder %s123, %s139
      %p141 = scmp.eq.s32.totalorder %s20, 0
      %p142 = por %p140, %p141
      %s143 = ssub.s32 %s21, %s33
      %s144 = ssub.s32 %s22, %s29
      %s145 = sor.u32 %s143, %s144
      %p146 = scmp.eq.s32.totalorder %s145, 0
      %s148 = sadd.s32 %s147, 1
      %s149 = scalar_select %p146, %s147, %s148
      %p152 = pneg %p146
      %p153 = scmp.eq.s32.totalorder %s14, 1
      %p154 = por %p152, %p153
      %p155 = scmp.ne.s32.totalorder %s147, %s150
      %p156 = scmp.eq.s32.totalorder %s14, 0
      %p157 = por %p155, %p156
      %p158 = scmp.ne.s32.totalorder %s147, %s150
      %p159 = scmp.eq.s32.totalorder %s19, 1
      %p160 = por %p158, %p159
      %p161 = scmp.ne.s32.totalorder %s150, %s151
      %p162 = scmp.eq.s32.totalorder %s19, 0
      %p163 = por %p161, %p162
      %p164 = scmp.ne.s32.totalorder %s150, %s151
      %p165 = scmp.eq.s32.totalorder %s20, 1
      %p166 = por %p164, %p165
      %p168 = scmp.ne.s32.totalorder %s151, %s167
      %p169 = scmp.eq.s32.totalorder %s20, 0
      %p170 = por %p168, %p169
      %p171 = scmp.le.s32.totalorder 1, %s14
      %p172 = scmp.lt.s32.totalorder %s14, 3
      %p173 = pnand %p171, %p172
      %p174 = pneg %p173
      // Predicated region
      $region9: #{double_conv_forward.16} parent=5 // pred_check
        _
      $region10: #{double_conv_forward.16} parent=5 // pred_check_branch
        %176 = sbr.rel (%p173) target = $region12
      $region11: #{double_conv_forward.16} parent=5 // pred_region
        %s177 = ssub.s32 %s14, 1
        // Predicated region
        $region13: #{double_conv_forward.16} parent=11 // pred_check
          %p178 = pneg %p107
        $region14: #{double_conv_forward.16} parent=11 // pred_check_branch
          %180 = sbr.rel (%p178) target = $region16
        $region15: #{double_conv_forward.16} parent=11 // pred_region
          _
        $region16: #{double_conv_forward.16} parent=11 // pred_fallthru
          _
      $region12: #{double_conv_forward.16} parent=5 // pred_fallthru
        _
      %p181 = scmp.lt.s32.totalorder %s14, 2
      // Predicated region
      $region17: #{double_conv_forward.16} parent=5 // pred_check
        %p182 = pneg %p181
      $region18: #{double_conv_forward.16} parent=5 // pred_check_branch
        %184 = sbr.rel (%p182) target = $region20
      $region19: #{double_conv_forward.16} parent=5 // pred_region
        // Predicated region
        $region21: #{double_conv_forward.16} parent=19 // pred_check
          %p185 = pneg %p48
        $region22: #{double_conv_forward.16} parent=19 // pred_check_branch
          %187 = sbr.rel (%p185) target = $region24
        $region23: #{double_conv_forward.16} parent=19 // pred_region
          %s188 = smul.u32 8, %s22
          %s189 = ssub.s32 10, %s188
          %p190 = scmp.lt.s32.totalorder %s189, 8
          %s191 = scalar_select %p190, %s189, 8
          %s192 = smul.u32 64, %s191
          %s193 = smul.u32 %s192, 2
          %p194 = scmp.lt.s32.totalorder %s21, 1
          %s195 = scalar_select %p194, %s21, 1
          %p196 = scmp.lt.s32.totalorder %s188, 9
          %s197 = scalar_select %p196, %s188, 9
          %s198 = smul.addr %s197, 2
          %s199 = smul.addr %s195, 20
          %s200 = sadd.s32 %s198, %s199
          %s201 = smul.addr %s200, 4
          %s202 = scalar_lea.vmem %s0, %s201
          %s203 = smul.u32 8, %s22
          %s204 = ssub.s32 10, %s203
          %p205 = scmp.lt.s32.totalorder %s204, 8
          %s206 = scalar_select %p205, %s204, 8
          %s207 = smul.u32 64, %s206
          %s208 = smul.u32 %s207, 2
        $region24: #{double_conv_forward.16} parent=19 // pred_fallthru
          _
        // Predicated region
        $region25: #{double_conv_forward.16} parent=19 // pred_check
          %p209 = pneg %p80
        $region26: #{double_conv_forward.16} parent=19 // pred_check_branch
          %211 = sbr.rel (%p209) target = $region28
        $region27: #{double_conv_forward.16} parent=19 // pred_region
          %s212 = sadd.s32 %s22, 1
          %s213 = smul.u32 %s212, 4
          %s214 = smul.u32 2, %s213
          %p215 = scmp.lt.s32.totalorder %s21, 1
          %s216 = scalar_select %p215, %s21, 1
          %p217 = scmp.lt.s32.totalorder %s214, 9
          %s218 = scalar_select %p217, %s214, 9
          %s219 = smul.addr %s218, 2
          %s220 = smul.addr %s216, 20
          %s221 = sadd.s32 %s219, %s220
          %s222 = smul.addr %s221, 4
          %s223 = scalar_lea.vmem %s1, %s222
          %s224 = sadd.s32 %s22, 1
          %s225 = smul.u32 %s224, 4
          %s226 = smul.u32 2, %s225
        $region28: #{double_conv_forward.16} parent=19 // pred_fallthru
          _
      $region20: #{double_conv_forward.16} parent=5 // pred_fallthru
        _
      %p227 = scmp.le.s32.totalorder 1, %s14
      %p228 = scmp.lt.s32.totalorder %s14, 3
      %p229 = pnand %p227, %p228
      %p230 = pneg %p229
      // Predicated region
      $region29: #{double_conv_forward.16} parent=5 // pred_check
        _
      $region30: #{double_conv_forward.16} parent=5 // pred_check_branch
        %232 = sbr.rel (%p229) target = $region32
      $region31: #{double_conv_forward.16} parent=5 // pred_region
        %s233 = ssub.s32 %s14, 1
        %s234 = smul.u32 8, %s24
        %s235 = ssub.s32 10, %s234
        %p236 = scmp.lt.s32.totalorder %s235, 8
        %s237 = scalar_select %p236, %s235, 8
        %s238 = smul.u32 64, %s237
        %s239 = smul.u32 %s238, 2
        %p240 = scmp.lt.s32.totalorder %s23, 1
        %s241 = scalar_select %p240, %s23, 1
        %p242 = scmp.lt.s32.totalorder %s234, 9
        %s243 = scalar_select %p242, %s234, 9
        %s244 = smul.addr %s243, 2
        %s245 = smul.addr %s241, 20
        %s246 = sadd.s32 %s244, %s245
        %s247 = smul.addr %s246, 4
        %s248 = scalar_lea.vmem %s0, %s247
        %p249 = pneg %p54
        %p250 = pneg %p51
        %s251 = sadd.s32 %s24, 1
        %s252 = smul.u32 %s251, 4
        %s253 = smul.u32 2, %s252
        %p254 = scmp.lt.s32.totalorder %s23, 1
        %s255 = scalar_select %p254, %s23, 1
        %p256 = scmp.lt.s32.totalorder %s253, 9
        %s257 = scalar_select %p256, %s253, 9
        %s258 = smul.addr %s257, 2
        %s259 = smul.addr %s255, 20
        %s260 = sadd.s32 %s258, %s259
        %s261 = smul.addr %s260, 4
        %s262 = scalar_lea.vmem %s1, %s261
        %p263 = pneg %p86
        %p264 = pneg %p83
        %p265 = pneg %p107
        %p266 = pneg %p104
        %p267 = pneg %p135
        %p268 = pneg %p132
        %s269 = smul.u32 8, %s24
        %p270 = scmp.lt.s32.totalorder %s23, 1
        %s271 = scalar_select %p270, %s23, 1
        %p272 = scmp.lt.s32.totalorder %s269, 7
        %s273 = scalar_select %p272, %s269, 7
        %s274 = smul.addr %s271, 8
        %s275 = sadd.s32 %s273, %s274
        %s276 = smul.addr %s275, 4
        %s277 = scalar_lea.vmem %s3, %s276
        %p278 = pneg %p163
        %p279 = pneg %p160
        %s280 = sand.u32 %s150, 1
        %s281 = scalar_lea.sflag [#allocation3], %s280
        %s282 = sand.u32 %s150, 1
        %s283 = smul.addr %s282, 2
        %s284 = scalar_lea.vmem [#allocation2], %s283
        %s285 = smul.u32 8, %s24
        %s286 = ssub.s32 10, %s285
        %p287 = scmp.lt.s32.totalorder %s286, 8
        %s288 = scalar_select %p287, %s286, 8
        %s289 = smul.u32 64, %s288
        %s290 = smul.u32 %s289, 2
        %p291 = scmp.lt.s32.totalorder %s23, 1
        %s292 = scalar_select %p291, %s23, 1
        %p293 = scmp.lt.s32.totalorder %s285, 9
        %s294 = scalar_select %p293, %s285, 9
        %s295 = smul.addr %s294, 2
        %s296 = smul.addr %s292, 20
        %s297 = sadd.s32 %s295, %s296
        %s298 = smul.addr %s297, 4
        %s299 = scalar_lea.vmem %s0, %s298
        %s300 = smul.u32 8, %s24
        %s301 = ssub.s32 10, %s300
        %p302 = scmp.lt.s32.totalorder %s301, 8
        %s303 = scalar_select %p302, %s301, 8
        %s304 = smul.u32 64, %s303
        %s305 = smul.u32 %s304, 2
        %s306 = sadd.s32 %s24, 1
        %s307 = smul.u32 %s306, 4
        %s308 = smul.u32 2, %s307
        %p309 = scmp.lt.s32.totalorder %s23, 1
        %s310 = scalar_select %p309, %s23, 1
        %p311 = scmp.lt.s32.totalorder %s308, 9
        %s312 = scalar_select %p311, %s308, 9
        %s313 = smul.addr %s312, 2
        %s314 = smul.addr %s310, 20
        %s315 = sadd.s32 %s313, %s314
        %s316 = smul.addr %s315, 4
        %s317 = scalar_lea.vmem %s1, %s316
        %s318 = sadd.s32 %s24, 1
        %s319 = smul.u32 %s318, 4
        %s320 = smul.u32 2, %s319
        %s321 = smul.u32 8, %s24
        %p322 = scmp.lt.s32.totalorder %s23, 1
        %s323 = scalar_select %p322, %s23, 1
        %p324 = scmp.lt.s32.totalorder %s321, 7
        %s325 = scalar_select %p324, %s321, 7
        %s326 = smul.addr %s323, 8
        %s327 = sadd.s32 %s325, %s326
        %s328 = smul.addr %s327, 4
        %s329 = scalar_lea.vmem %s3, %s328
        %s330 = smul.u32 8, %s24
        %v332 = vld [vmem:[%s299] sm:$0xf]
        %v333 = vld [vmem:[%s299 + $0x4] sm:$0x1]
        %v334 = vld [vmem:[%s299 + $0x8] sm:$0xf]
        %v335 = vld [vmem:[%s299 + $0xc] sm:$0x1]
        %v336 = vld [vmem:[%s299 + $0x10] sm:$0xf]
        %v337 = vld [vmem:[%s299 + $0x14] sm:$0x1]
        %v338 = vld [vmem:[%s299 + $0x18] sm:$0xf]
        %v339 = vld [vmem:[%s299 + $0x1c] sm:$0x1]
        %v340 = vld [vmem:[%s299 + $0x20] sm:$0xf]
        %v341 = vld [vmem:[%s299 + $0x24] sm:$0x1]
        %v342 = vld [vmem:[%s299 + $0x28] sm:$0xf]
        %v343 = vld [vmem:[%s299 + $0x2c] sm:$0x1]
        %v344 = vld [vmem:[%s299 + $0x30] sm:$0xf]
        %v345 = vld [vmem:[%s299 + $0x34] sm:$0x1]
        %v346 = vld [vmem:[%s299 + $0x38] sm:$0xf]
        %v347 = vld [vmem:[%s299 + $0x3c] sm:$0x1]
        %v348 = vld [vmem:[%s317] sm:$0xf]
        %v349 = vld [vmem:[%s317 + $0x4] sm:$0x1]
        %v350 = vld [vmem:[%s317 + $0x8] sm:$0xf]
        %v351 = vld [vmem:[%s317 + $0xc] sm:$0x1]
        %vm352 = vsmask.f32 3328
        %vm353 = vsmask.f32 7440
        %vm354 = vmor %vm352, %vm353
        %v356 = vshrl.u32 %v332, 16
        %v358 = vrot.slane %v356, 4
        %v359 = vshll.u32 %v332, 16
        %v361 = vrot.slane %v359, 5
        %v362 = vor.u32 %v358, %v361
        %v363 = vrot.slane %v362, 4
        %v365 = vshll.u32 %v333, 16
        %v367 = vrot.slane %v365, 5
        %v368 = vsel %vm354, %v363, %v367
        %v370 = vshrl.u32 %v334, 16
        %v372 = vrot.slane %v370, 4
        %v373 = vshll.u32 %v334, 16
        %v375 = vrot.slane %v373, 5
        %v376 = vor.u32 %v372, %v375
        %v377 = vrot.slane %v376, 4
        %v379 = vshll.u32 %v335, 16
        %v381 = vrot.slane %v379, 5
        %v382 = vsel %vm354, %v377, %v381
        %v384 = vshrl.u32 %v336, 16
        %v386 = vrot.slane %v384, 4
        %v387 = vshll.u32 %v336, 16
        %v389 = vrot.slane %v387, 5
        %v390 = vor.u32 %v386, %v389
        %v391 = vrot.slane %v390, 4
        %v393 = vshll.u32 %v337, 16
        %v395 = vrot.slane %v393, 5
        %v396 = vsel %vm354, %v391, %v395
        %v398 = vshrl.u32 %v338, 16
        %v400 = vrot.slane %v398, 4
        %v401 = vshll.u32 %v338, 16
        %v403 = vrot.slane %v401, 5
        %v404 = vor.u32 %v400, %v403
        %v405 = vrot.slane %v404, 4
        %v407 = vshll.u32 %v339, 16
        %v409 = vrot.slane %v407, 5
        %v410 = vsel %vm354, %v405, %v409
        %v412 = vshrl.u32 %v340, 16
        %v414 = vrot.slane %v412, 4
        %v415 = vshll.u32 %v340, 16
        %v417 = vrot.slane %v415, 5
        %v418 = vor.u32 %v414, %v417
        %v419 = vrot.slane %v418, 4
        %v421 = vshll.u32 %v341, 16
        %v423 = vrot.slane %v421, 5
        %v424 = vsel %vm354, %v419, %v423
        %v426 = vshrl.u32 %v342, 16
        %v428 = vrot.slane %v426, 4
        %v429 = vshll.u32 %v342, 16
        %v431 = vrot.slane %v429, 5
        %v432 = vor.u32 %v428, %v431
        %v433 = vrot.slane %v432, 4
        %v435 = vshll.u32 %v343, 16
        %v437 = vrot.slane %v435, 5
        %v438 = vsel %vm354, %v433, %v437
        %v440 = vshrl.u32 %v344, 16
        %v442 = vrot.slane %v440, 4
        %v443 = vshll.u32 %v344, 16
        %v445 = vrot.slane %v443, 5
        %v446 = vor.u32 %v442, %v445
        %v447 = vrot.slane %v446, 4
        %v449 = vshll.u32 %v345, 16
        %v451 = vrot.slane %v449, 5
        %v452 = vsel %vm354, %v447, %v451
        %v454 = vshrl.u32 %v346, 16
        %v456 = vrot.slane %v454, 4
        %v457 = vshll.u32 %v346, 16
        %v459 = vrot.slane %v457, 5
        %v460 = vor.u32 %v456, %v459
        %v461 = vrot.slane %v460, 4
        %v463 = vshll.u32 %v347, 16
        %v465 = vrot.slane %v463, 5
        %v466 = vsel %vm354, %v461, %v465
        %vm483 = vcmask 1042432
        %vm484 = vcmask 1046532
        %vm485 = vmor %vm483, %vm484
        %v486 = vrot.slane %v332, 5
        %v487 = vrot.slane %v486, 4
        %v488 = vrot.slane %v333, 5
        %v489 = vsel %vm485, %v487, %v488
        %v490 = vrot.slane %v334, 5
        %v491 = vrot.slane %v490, 4
        %v492 = vrot.slane %v335, 5
        %v493 = vsel %vm485, %v491, %v492
        %v494 = vrot.slane %v336, 5
        %v495 = vrot.slane %v494, 4
        %v496 = vrot.slane %v337, 5
        %v497 = vsel %vm485, %v495, %v496
        %v498 = vrot.slane %v338, 5
        %v499 = vrot.slane %v498, 4
        %v500 = vrot.slane %v339, 5
        %v501 = vsel %vm485, %v499, %v500
        %v502 = vrot.slane %v340, 5
        %v503 = vrot.slane %v502, 4
        %v504 = vrot.slane %v341, 5
        %v505 = vsel %vm485, %v503, %v504
        %v506 = vrot.slane %v342, 5
        %v507 = vrot.slane %v506, 4
        %v508 = vrot.slane %v343, 5
        %v509 = vsel %vm485, %v507, %v508
        %v510 = vrot.slane %v344, 5
        %v511 = vrot.slane %v510, 4
        %v512 = vrot.slane %v345, 5
        %v513 = vsel %vm485, %v511, %v512
        %v514 = vrot.slane %v346, 5
        %v515 = vrot.slane %v514, 4
        %v516 = vrot.slane %v347, 5
        %v517 = vsel %vm485, %v515, %v516
        %v519 = vshrl.u32 %v348, 16
        %v521 = vrot.slane %v519, 4
        %v522 = vshll.u32 %v348, 16
        %v524 = vrot.slane %v522, 5
        %v525 = vor.u32 %v521, %v524
        %v526 = vrot.slane %v525, 4
        %v528 = vshll.u32 %v349, 16
        %v530 = vrot.slane %v528, 5
        %v531 = vsel %vm354, %v526, %v530
        %v534 = vrot.slane %v348, 5
        %v535 = vrot.slane %v534, 4
        %v536 = vrot.slane %v349, 5
        %v537 = vsel %vm485, %v535, %v536
        %v539 = vshrl.u32 %v350, 16
        %v541 = vrot.slane %v539, 4
        %v542 = vshll.u32 %v350, 16
        %v544 = vrot.slane %v542, 5
        %v545 = vor.u32 %v541, %v544
        %v546 = vrot.slane %v545, 4
        %v548 = vshll.u32 %v351, 16
        %v550 = vrot.slane %v548, 5
        %v551 = vsel %vm354, %v546, %v550
        %v554 = vrot.slane %v350, 5
        %v555 = vrot.slane %v554, 4
        %v556 = vrot.slane %v351, 5
        %v557 = vsel %vm485, %v555, %v556
        %v558 = vunpack.c.l.b16 %v332
        %v559 = vunpack.c.l.b16 %v334
        %v560 = vunpack.c.l.b16 %v336
        %v561 = vunpack.c.l.b16 %v338
        %v562 = vunpack.c.l.b16 %v340
        %v563 = vunpack.c.l.b16 %v342
        %v564 = vunpack.c.l.b16 %v344
        %v565 = vunpack.c.l.b16 %v346
        %v566 = vpack.c.b16 %v559, %v558
        %v567 = vpack.c.b16 %v561, %v560
        %v568 = vpack.c.b16 %v563, %v562
        %v569 = vpack.c.b16 %v565, %v564
        %v570 = vunpack.c.l.b16 %v368
        %v571 = vunpack.c.l.b16 %v382
        %v572 = vunpack.c.l.b16 %v396
        %v573 = vunpack.c.l.b16 %v410
        %v574 = vunpack.c.l.b16 %v424
        %v575 = vunpack.c.l.b16 %v438
        %v576 = vunpack.c.l.b16 %v452
        %v577 = vunpack.c.l.b16 %v466
        %v578 = vpack.c.b16 %v571, %v570
        %v579 = vpack.c.b16 %v573, %v572
        %v580 = vpack.c.b16 %v575, %v574
        %v581 = vpack.c.b16 %v577, %v576
        %582 = vrot.lane.b32.xlu0 %v578, 8
        %v583 = vpop.permute.xlu0 %582
        %584 = vrot.lane.b32.xlu0 %v579, 8
        %v585 = vpop.permute.xlu0 %584
        %586 = vrot.lane.b32.xlu0 %v580, 8
        %v587 = vpop.permute.xlu0 %586
        %588 = vrot.lane.b32.xlu0 %v581, 8
        %v589 = vpop.permute.xlu0 %588
        %v590 = vunpack.c.l.b16 %v489
        %v591 = vunpack.c.l.b16 %v493
        %v592 = vunpack.c.l.b16 %v497
        %v593 = vunpack.c.l.b16 %v501
        %v594 = vunpack.c.l.b16 %v505
        %v595 = vunpack.c.l.b16 %v509
        %v596 = vunpack.c.l.b16 %v513
        %v597 = vunpack.c.l.b16 %v517
        %v598 = vpack.c.b16 %v591, %v590
        %v599 = vpack.c.b16 %v593, %v592
        %v600 = vpack.c.b16 %v595, %v594
        %v601 = vpack.c.b16 %v597, %v596
        %602 = vrot.lane.b32.xlu0 %v598, 16
        %v603 = vpop.permute.xlu0 %602
        %604 = vrot.lane.b32.xlu0 %v599, 16
        %v605 = vpop.permute.xlu0 %604
        %606 = vrot.lane.b32.xlu0 %v600, 16
        %v607 = vpop.permute.xlu0 %606
        %608 = vrot.lane.b32.xlu0 %v601, 16
        %v609 = vpop.permute.xlu0 %608
        %v610 = vunpack.c.l.b16 %v348
        %v611 = vpack.c.b16 %v560, %v559
        %v612 = vpack.c.b16 %v562, %v561
        %v613 = vpack.c.b16 %v564, %v563
        %v614 = vpack.c.b16 %v610, %v565
        %615 = vrot.lane.b32.xlu0 %v611, 24
        %v616 = vpop.permute.xlu0 %615
        %617 = vrot.lane.b32.xlu0 %v612, 24
        %v618 = vpop.permute.xlu0 %617
        %619 = vrot.lane.b32.xlu0 %v613, 24
        %v620 = vpop.permute.xlu0 %619
        %621 = vrot.lane.b32.xlu0 %v614, 24
        %v622 = vpop.permute.xlu0 %621
        %v623 = vunpack.c.l.b16 %v531
        %v624 = vpack.c.b16 %v572, %v571
        %v625 = vpack.c.b16 %v574, %v573
        %v626 = vpack.c.b16 %v576, %v575
        %v627 = vpack.c.b16 %v623, %v577
        %628 = vrot.lane.b32.xlu0 %v624, 32
        %v629 = vpop.permute.xlu0 %628
        %630 = vrot.lane.b32.xlu0 %v625, 32
        %v631 = vpop.permute.xlu0 %630
        %632 = vrot.lane.b32.xlu0 %v626, 32
        %v633 = vpop.permute.xlu0 %632
        %634 = vrot.lane.b32.xlu0 %v627, 32
        %v635 = vpop.permute.xlu0 %634
        %v636 = vunpack.c.l.b16 %v537
        %v637 = vpack.c.b16 %v592, %v591
        %v638 = vpack.c.b16 %v594, %v593
        %v639 = vpack.c.b16 %v596, %v595
        %v640 = vpack.c.b16 %v636, %v597
        %641 = vrot.lane.b32.xlu0 %v637, 40
        %v642 = vpop.permute.xlu0 %641
        %643 = vrot.lane.b32.xlu0 %v638, 40
        %v644 = vpop.permute.xlu0 %643
        %645 = vrot.lane.b32.xlu0 %v639, 40
        %v646 = vpop.permute.xlu0 %645
        %647 = vrot.lane.b32.xlu0 %v640, 40
        %v648 = vpop.permute.xlu0 %647
        %v649 = vunpack.c.l.b16 %v350
        %v650 = vpack.c.b16 %v649, %v610
        %651 = vrot.lane.b32.xlu0 %v567, 48
        %v652 = vpop.permute.xlu0 %651
        %653 = vrot.lane.b32.xlu0 %v568, 48
        %v654 = vpop.permute.xlu0 %653
        %655 = vrot.lane.b32.xlu0 %v569, 48
        %v656 = vpop.permute.xlu0 %655
        %657 = vrot.lane.b32.xlu0 %v650, 48
        %v658 = vpop.permute.xlu0 %657
        %v659 = vunpack.c.l.b16 %v551
        %v660 = vpack.c.b16 %v659, %v623
        %661 = vrot.lane.b32.xlu0 %v579, 56
        %v662 = vpop.permute.xlu0 %661
        %663 = vrot.lane.b32.xlu0 %v580, 56
        %v664 = vpop.permute.xlu0 %663
        %665 = vrot.lane.b32.xlu0 %v581, 56
        %v666 = vpop.permute.xlu0 %665
        %667 = vrot.lane.b32.xlu0 %v660, 56
        %v668 = vpop.permute.xlu0 %667
        %v669 = vunpack.c.l.b16 %v557
        %v670 = vpack.c.b16 %v669, %v636
        %671 = vrot.lane.b32.xlu0 %v599, 64
        %v672 = vpop.permute.xlu0 %671
        %673 = vrot.lane.b32.xlu0 %v600, 64
        %v674 = vpop.permute.xlu0 %673
        %675 = vrot.lane.b32.xlu0 %v601, 64
        %v676 = vpop.permute.xlu0 %675
        %677 = vrot.lane.b32.xlu0 %v670, 64
        %v678 = vpop.permute.xlu0 %677
        %vm679 = vcmask 64512
        %v682 = vsel %vm679, %v566, %v583
        %v685 = vsel %vm679, %v567, %v585
        %v688 = vsel %vm679, %v568, %v587
        %v691 = vsel %vm679, %v569, %v589
        %vm692 = vcmask 130048
        %v694 = vsel %vm692, %v682, %v603
        %v696 = vsel %vm692, %v685, %v605
        %v698 = vsel %vm692, %v688, %v607
        %v700 = vsel %vm692, %v691, %v609
        %vm701 = vcmask 195584
        %v703 = vsel %vm701, %v694, %v616
        %v705 = vsel %vm701, %v696, %v618
        %v707 = vsel %vm701, %v698, %v620
        %v709 = vsel %vm701, %v700, %v622
        %vm710 = vcmask 261120
        %v712 = vsel %vm710, %v703, %v629
        %v714 = vsel %vm710, %v705, %v631
        %v716 = vsel %vm710, %v707, %v633
        %v718 = vsel %vm710, %v709, %v635
        %vm719 = vcmask 326656
        %v721 = vsel %vm719, %v712, %v642
        %v723 = vsel %vm719, %v714, %v644
        %v725 = vsel %vm719, %v716, %v646
        %v727 = vsel %vm719, %v718, %v648
        %vm728 = vcmask 392192
        %v730 = vsel %vm728, %v721, %v652
        %v732 = vsel %vm728, %v723, %v654
        %v734 = vsel %vm728, %v725, %v656
        %v736 = vsel %vm728, %v727, %v658
        %vm737 = vcmask 457728
        %v739 = vsel %vm737, %v730, %v662
        %v741 = vsel %vm737, %v732, %v664
        %v743 = vsel %vm737, %v734, %v666
        %v745 = vsel %vm737, %v736, %v668
        %vm746 = vcmask 523264
        %v748 = vsel %vm746, %v739, %v672
        %v750 = vsel %vm746, %v741, %v674
        %v752 = vsel %vm746, %v743, %v676
        %v754 = vsel %vm746, %v745, %v678
        %v755 = vld [vmem:[%s2] sm:$0xf]
        %v756 = vld [vmem:[%s2 + $0x4] sm:$0xf]
        %v757 = vld [vmem:[%s2 + $0x8] sm:$0xf]
        %v758 = vld [vmem:[%s2 + $0xc] sm:$0xf]
        %v759 = vld [vmem:[%s2 + $0x10] sm:$0xf]
        %v760 = vld [vmem:[%s2 + $0x14] sm:$0xf]
        %v761 = vld [vmem:[%s2 + $0x18] sm:$0xf]
        %v762 = vld [vmem:[%s2 + $0x1c] sm:$0xf]
        %v763 = vld [vmem:[%s2 + $0x20] sm:$0xf]
        %v773 = vunpack.c.l.b16 %v755
        %v774 = vunpack.c.l.b16 %v756
        %v775 = vunpack.c.l.b16 %v757
        %v776 = vunpack.c.l.b16 %v758
        %v777 = vunpack.c.l.b16 %v759
        %v778 = vunpack.c.l.b16 %v760
        %v779 = vunpack.c.l.b16 %v761
        %v780 = vunpack.c.l.b16 %v762
        %v781 = vunpack.c.l.b16 %v763
        %v782 = vpack.c.b16 %v774, %v773
        %v783 = vpack.c.b16 %v776, %v775
        %v784 = vpack.c.b16 %v778, %v777
        %v785 = vpack.c.b16 %v780, %v779
        %v786 = vpack.c.b16 %v781, %v781
        %vm791 = vcmask 588800
        %v792 = vsel %vm791, %v748, 0
        %v794 = vsel %vm791, %v750, 0
        %v796 = vsel %vm791, %v752, 0
        %v798 = vsel %vm791, %v754, 0
        %vm800 = vcmask 1043456
        %v802 = vsel %vm800, %v786, 0
        %804 = vmatprep.subr.bf16.mxu0 0
        %805 = vmatpush1.bf16.msra.mxu0 %v782
        %806 = vmatprep.subr.bf16.mxu0 0
        %807 = vmatpush1.bf16.msra.mxu0 %v783
        %808 = vmatprep.subr.bf16.mxu0 0
        %809 = vmatpush1.bf16.msra.mxu0 %v784
        %810 = vmatprep.subr.bf16.mxu0 0
        %811 = vmatpush1.bf16.msra.mxu0 %v785
        %812 = vmatprep.subr.bf16.mxu0 0
        %813 = vmatpush1.bf16.msra.mxu0 %v802
        %814 = vmatprep.subr.bf16.mxu0 0
        %815 = vmatpush1.bf16.msra.mxu0 0
        %816 = vmatprep.subr.bf16.mxu0 0
        %817 = vmatpush1.bf16.msra.mxu0 0
        %818 = vmatprep.subr.bf16.mxu0 0
        %819 = vmatpush1.bf16.msra.mxu0 0
        %820 = vmatprep.subr.bf16.mxu0 0
        %821 = vmatpush1.bf16.msra.mxu0 0
        %822 = vmatprep.subr.bf16.mxu0 0
        %823 = vmatpush1.bf16.msra.mxu0 0
        %824 = vmatprep.subr.bf16.mxu0 0
        %825 = vmatpush1.bf16.msra.mxu0 0
        %826 = vmatprep.subr.bf16.mxu0 0
        %827 = vmatpush1.bf16.msra.mxu0 0
        %828 = vmatprep.subr.bf16.mxu0 0
        %829 = vmatpush1.bf16.msra.mxu0 0
        %830 = vmatprep.subr.bf16.mxu0 0
        %831 = vmatpush1.bf16.msra.mxu0 0
        %832 = vmatprep.subr.bf16.mxu0 0
        %833 = vmatpush1.bf16.msra.mxu0 0
        %834 = vmatprep.subr.bf16.mxu0 0
        %835 = vmatpush1.bf16.msra.mxu0 0
        %836 = vmatprep.mubr.bf16.mxu0 0
        %837 = vmatmul.mubr.bf16.gmra.mrb[0].mxu0 %v792
        %v838 = vpop.f32.mrb[0].mxu0
        %v839 = vadd.f32 0.0, %v838
        %v840 = vpop.f32.mrb[0].mxu0
        %v841 = vpop.f32.mrb[0].mxu0
        %v842 = vadd.f32 0.0, %v841
        %v843 = vpop.f32.mrb[0].mxu0
        %844 = vmatprep.mubr.bf16.mxu0 0
        %845 = vmatmul.mubr.bf16.gmra.mrb[0].mxu0 %v794
        %v846 = vpop.f32.mrb[0].mxu0
        %v847 = vadd.f32 0.0, %v846
        %v848 = vpop.f32.mrb[0].mxu0
        %v849 = vpop.f32.mrb[0].mxu0
        %v850 = vadd.f32 0.0, %v849
        %v851 = vpop.f32.mrb[0].mxu0
        %852 = vmatprep.mubr.bf16.mxu0 0
        %853 = vmatmul.mubr.bf16.gmra.mrb[0].mxu0 %v796
        %v854 = vpop.f32.mrb[0].mxu0
        %v855 = vadd.f32 0.0, %v854
        %v856 = vpop.f32.mrb[0].mxu0
        %v857 = vpop.f32.mrb[0].mxu0
        %v858 = vadd.f32 0.0, %v857
        %v859 = vpop.f32.mrb[0].mxu0
        %860 = vmatprep.mubr.bf16.mxu0 0
        %861 = vmatmul.mubr.bf16.gmra.mrb[0].mxu0 %v798
        %v862 = vpop.f32.mrb[0].mxu0
        %v863 = vadd.f32 0.0, %v862
        %v864 = vpop.f32.mrb[0].mxu0
        %v865 = vpop.f32.mrb[0].mxu0
        %v866 = vadd.f32 0.0, %v865
        %v867 = vpop.f32.mrb[0].mxu0
        %868 = vdwg.mxu0
        %v869 = vsel %vm679, %v839, 0.0
        %v870 = vsel %vm679, %v842, 0.0
        %v871 = vadd.f32 %v869, %v870
        %v872 = vsel %vm679, %v847, 0.0
        %v873 = vadd.f32 %v871, %v872
        %v874 = vsel %vm679, %v850, 0.0
        %v875 = vadd.f32 %v873, %v874
        %v876 = vsel %vm679, %v855, 0.0
        %v877 = vadd.f32 %v875, %v876
        %v878 = vsel %vm679, %v858, 0.0
        %v879 = vadd.f32 %v877, %v878
        %v880 = vsel %vm679, %v863, 0.0
        %v881 = vadd.f32 %v879, %v880
        %v882 = vsel %vm679, %v866, 0.0
        %v883 = vadd.f32 %v881, %v882
        %v884 = vrot.slane %v883, 4
        %v885 = vadd.f32 %v883, %v884
        %v886 = vrot.slane %v885, 2
        %v887 = vadd.f32 %v885, %v886
        %v888 = vrot.slane %v887, 1
        %v889 = vadd.f32 %v887, %v888
        %v890 = vmul.f32 %v839, %v839
        %v891 = vmul.f32 %v842, %v842
        %v892 = vmul.f32 %v847, %v847
        %v893 = vmul.f32 %v850, %v850
        %v894 = vmul.f32 %v855, %v855
        %v895 = vmul.f32 %v858, %v858
        %v896 = vmul.f32 %v863, %v863
        %v897 = vmul.f32 %v866, %v866
        %v898 = vsel %vm679, %v890, 0.0
        %v899 = vsel %vm679, %v891, 0.0
        %v900 = vadd.f32 %v898, %v899
        %v901 = vsel %vm679, %v892, 0.0
        %v902 = vadd.f32 %v900, %v901
        %v903 = vsel %vm679, %v893, 0.0
        %v904 = vadd.f32 %v902, %v903
        %v905 = vsel %vm679, %v894, 0.0
        %v906 = vadd.f32 %v904, %v905
        %v907 = vsel %vm679, %v895, 0.0
        %v908 = vadd.f32 %v906, %v907
        %v909 = vsel %vm679, %v896, 0.0
        %v910 = vadd.f32 %v908, %v909
        %v911 = vsel %vm679, %v897, 0.0
        %v912 = vadd.f32 %v910, %v911
        %v913 = vrot.slane %v912, 4
        %v914 = vadd.f32 %v912, %v913
        %v915 = vrot.slane %v914, 2
        %v916 = vadd.f32 %v914, %v915
        %v917 = vrot.slane %v916, 1
        %v918 = vadd.f32 %v916, %v917
        %vm919 = vcmask 1040384
        %v920 = vsel %vm919, %v889, %v918
        %vm921 = vcmask 58368
        %922 = vst.msk [vmem:[%s284] sm:$0x3] %vm921, %v920
        %v923 = vpack.c.bf16 %v839, %v839
        %v924 = vpack.c.bf16 %v842, %v842
        %v925 = vpack.c.bf16 %v847, %v847
        %v926 = vpack.c.bf16 %v850, %v850
        %v927 = vpack.c.bf16 %v855, %v855
        %v928 = vpack.c.bf16 %v858, %v858
        %v929 = vpack.c.bf16 %v863, %v863
        %v930 = vpack.c.bf16 %v866, %v866
        %vm931 = vcmask 60416
        %932 = vst.msk [vmem:[%s329] sm:$0xf] %vm931, %v923
        %933 = vst.msk [vmem:[%s329 + $0x4] sm:$0xf] %vm931, %v924
        %934 = vst.msk [vmem:[%s329 + $0x8] sm:$0xf] %vm931, %v925
        %935 = vst.msk [vmem:[%s329 + $0xc] sm:$0xf] %vm931, %v926
        %936 = vst.msk [vmem:[%s329 + $0x10] sm:$0xf] %vm931, %v927
        %937 = vst.msk [vmem:[%s329 + $0x14] sm:$0xf] %vm931, %v928
        %938 = vst.msk [vmem:[%s329 + $0x18] sm:$0xf] %vm931, %v929
        %939 = vst.msk [vmem:[%s329 + $0x1c] sm:$0xf] %vm931, %v930
        %s940 = smul.u32 8, %s24
        %p941 = scmp.lt.s32.totalorder %s23, 1
        %s942 = scalar_select %p941, %s23, 1
        %p943 = scmp.lt.s32.totalorder %s940, 7
        %s944 = scalar_select %p943, %s940, 7
        %s945 = smul.addr %s942, 8
        %s946 = sadd.s32 %s944, %s945
        %s947 = smul.addr %s946, 4
        %s948 = scalar_lea.vmem %s3, %s947
        %s949 = sand.u32 %s150, 1
        %s950 = scalar_lea.sflag [#allocation3], %s949
        %s951 = sand.u32 %s150, 1
        %s952 = smul.addr %s951, 2
        %s953 = scalar_lea.vmem [#allocation2], %s952
        // Predicated region
        $region33: #{double_conv_forward.16} parent=31 // pred_check
          %p954 = pneg %p132
        $region34: #{double_conv_forward.16} parent=31 // pred_check_branch
          %956 = sbr.rel (%p954) target = $region36
        $region35: #{double_conv_forward.16} parent=31 // pred_region
          %s957 = smul.u32 8, %s24
        $region36: #{double_conv_forward.16} parent=31 // pred_fallthru
          _
        // Predicated region
        $region37: #{double_conv_forward.16} parent=31 // pred_check
          %p958 = pneg %p160
        $region38: #{double_conv_forward.16} parent=31 // pred_check_branch
          %960 = sbr.rel (%p958) target = $region40
        $region39: #{double_conv_forward.16} parent=31 // pred_region
          %s962 = ssub.s32 32, 32
          %963 = vsyncadd %s950, %s962
          %s964 = sadd.s32 %s24, %s23
          %s965 = smul.addr %s964, 32
          %s966 = scalar_lea.hbm %s4, %s965
          %s968 = sshll.u32 %s953, 4
          %s969 = int_to_ptr.vmem [resolvable:$true] %s968
          %971 = dma.vmem_to_hbm [thread:$0]  %s969, 32, %s966, %s950
        $region40: #{double_conv_forward.16} parent=31 // pred_fallthru
          _
      $region32: #{double_conv_forward.16} parent=5 // pred_fallthru
        _
      %p972 = scmp.le.s32.totalorder 2, %s14
      // Predicated region
      $region41: #{double_conv_forward.16} parent=5 // pred_check
        %p973 = pneg %p972
      $region42: #{double_conv_forward.16} parent=5 // pred_check_branch
        %975 = sbr.rel (%p973) target = $region44
      $region43: #{double_conv_forward.16} parent=5 // pred_region
        %s976 = ssub.s32 %s14, 2
        // Predicated region
        $region45: #{double_conv_forward.16} parent=43 // pred_check
          %p977 = pneg %p138
        $region46: #{double_conv_forward.16} parent=43 // pred_check_branch
          %979 = sbr.rel (%p977) target = $region48
        $region47: #{double_conv_forward.16} parent=43 // pred_region
          %s980 = smul.u32 8, %s26
          %p981 = scmp.lt.s32.totalorder %s25, 1
          %s982 = scalar_select %p981, %s25, 1
          %p983 = scmp.lt.s32.totalorder %s980, 7
          %s984 = scalar_select %p983, %s980, 7
          %s985 = smul.addr %s982, 8
          %s986 = sadd.s32 %s984, %s985
          %s987 = smul.addr %s986, 4
          %s988 = scalar_lea.vmem %s3, %s987
        $region48: #{double_conv_forward.16} parent=43 // pred_fallthru
          _
        // Predicated region
        $region49: #{double_conv_forward.16} parent=43 // pred_check
          %p989 = pneg %p166
        $region50: #{double_conv_forward.16} parent=43 // pred_check_branch
          %991 = sbr.rel (%p989) target = $region52
        $region51: #{double_conv_forward.16} parent=43 // pred_region
          %s992 = sand.u32 %s151, 1
          %s993 = scalar_lea.sflag [#allocation3], %s992
          %s994 = sand.u32 %s151, 1
          %s995 = smul.addr %s994, 2
          %s996 = scalar_lea.vmem [#allocation2], %s995
          %997 = dma.done %s993, 32
        $region52: #{double_conv_forward.16} parent=43 // pred_fallthru
          _
      $region44: #{double_conv_forward.16} parent=5 // pred_fallthru
        _
    $region6: #{double_conv_forward.16} parent=1 // loop_footer
      %s18 = sadd.s32 1, %s14
    $region7: #{double_conv_forward.16} parent=1 // loop_footer_branch
      %13 = sbr.rel target = $region3
    $region8: #{double_conv_forward.16} parent=1 // loop_exit
      _
    %998 = vsyncpa [#allocation3], 1
    %s999 = scalar_lea.sflag [#allocation3], 1
    %1000 = vsyncpa %s999, 1

// kernel: double_conv_forward.18
$region0: #{double_conv_forward.18}
  #allocation0 [shape = 'u32[]', space=smem, size = 0x4, offset = 0x4, fixed_abs, tag = 'smem constant byte address 0x4 - core index']
  #allocation1 [shape = 'u32[144,128]{1,0:T(1,128)}', space=vmem, size = 0x12000, scoped, tag = 'internal scratch']
  %s0 = inlined_call_operand.vmem [shape: bf16[2,16,128], index: 0, kind: input, shape index: {}]
  %s1 = inlined_call_operand.vmem [shape: f32[1,128], index: 1, kind: input, shape index: {}]
  %s2 = inlined_call_operand.vmem [shape: f32[1,128], index: 2, kind: input, shape index: {}]
  %s3 = inlined_call_operand.vmem [shape: f32[2,16,128], index: 3, kind: output, shape index: {}]
  %s4 = sld [smem:[#allocation0]]
  $region45: #{double_conv_forward.18} parent=0
    _
  %s6 = ssub.s32 1, %s4
  %s7 = scalar_select 0, %s6, %s4
  loop: start=0, step=1, limit=4
  $region2: #{double_conv_forward.18} parent=0 // loop_pre_header
    _
  $region3: #{double_conv_forward.18} parent=0 // loop_header
    %s9 = sphi 0, %s13
    %p10 = scmp.ge.s32.totalorder %s9, 4
    %s16 = sphi 0, %s28
    %s17 = sphi 0, %s24
    %s18 = sphi 0, %s16
    %s19 = sphi 0, %s17
    %s20 = sphi 0, %s18
    %s21 = sphi 0, %s19
    %s33 = sphi 0, %s35
    %s36 = sphi 0, %s33
    %s37 = sphi 0, %s36
    %s53 = sphi 0, %s37
    %s57 = sphi 0, %s57
    %s59 = sphi 0, %s57
    %s60 = sphi 0, %s59
    %s74 = sphi 0, %s60
    %s78 = sphi 0, %s78
    %s80 = sphi 0, %s78
    %s81 = sphi 0, %s80
    %s95 = sphi 0, %s81
    %s103 = sphi 0, %s105
    %s106 = sphi 0, %s103
    %s107 = sphi 0, %s106
    %s123 = sphi 0, %s107
  $region4: #{double_conv_forward.18} parent=0 // loop_header_branch
    %12 = sbr.rel (%p10) target = $region8
  $region5: #{double_conv_forward.18} parent=0 // loop_body
    %s14 = ssub.s32 %s9, 1
    %s15 = ssub.s32 %s9, 2
    %s22 = sadd.s32 1, %s17
    %p23 = scmp.ge.s32.totalorder %s22, 1
    %s24 = scalar_select %p23, 0, %s22
    %s25 = sadd.s32 1, %s16
    %s26 = scalar_select %p23, %s25, %s16
    %p27 = scmp.ge.s32.totalorder %s26, 2
    %s28 = scalar_select %p27, 0, %s26
    %s29 = ssub.s32 %s16, %s28
    %s30 = ssub.s32 %s17, %s24
    %s31 = sor.u32 %s29, %s30
    %p32 = scmp.eq.s32.totalorder %s31, 0
    %s34 = sadd.s32 %s33, 1
    %s35 = scalar_select %p32, %s33, %s34
    %p38 = pneg %p32
    %p39 = scmp.eq.s32.totalorder %s9, 1
    %p40 = por %p38, %p39
    %p41 = scmp.ne.s32.totalorder %s33, %s36
    %p42 = scmp.eq.s32.totalorder %s9, 0
    %p43 = por %p41, %p42
    %p44 = scmp.ne.s32.totalorder %s33, %s36
    %p45 = scmp.eq.s32.totalorder %s14, 1
    %p46 = por %p44, %p45
    %p47 = scmp.ne.s32.totalorder %s36, %s37
    %p48 = scmp.eq.s32.totalorder %s14, 0
    %p49 = por %p47, %p48
    %p50 = scmp.ne.s32.totalorder %s36, %s37
    %p51 = scmp.eq.s32.totalorder %s15, 1
    %p52 = por %p50, %p51
    %p54 = scmp.ne.s32.totalorder %s37, %s53
    %p55 = scmp.eq.s32.totalorder %s15, 0
    %p56 = por %p54, %p55
    %s58 = sadd.s32 %s57, 1
    %p61 = scmp.eq.s32.totalorder %s9, 1
    %p62 = scmp.ne.s32.totalorder %s57, %s59
    %p63 = scmp.eq.s32.totalorder %s9, 0
    %p64 = por %p62, %p63
    %p65 = scmp.ne.s32.totalorder %s57, %s59
    %p66 = scmp.eq.s32.totalorder %s14, 1
    %p67 = por %p65, %p66
    %p68 = scmp.ne.s32.totalorder %s59, %s60
    %p69 = scmp.eq.s32.totalorder %s14, 0
    %p70 = por %p68, %p69
    %p71 = scmp.ne.s32.totalorder %s59, %s60
    %p72 = scmp.eq.s32.totalorder %s15, 1
    %p73 = por %p71, %p72
    %p75 = scmp.ne.s32.totalorder %s60, %s74
    %p76 = scmp.eq.s32.totalorder %s15, 0
    %p77 = por %p75, %p76
    %s79 = sadd.s32 %s78, 1
    %p82 = scmp.eq.s32.totalorder %s9, 1
    %p83 = scmp.ne.s32.totalorder %s78, %s80
    %p84 = scmp.eq.s32.totalorder %s9, 0
    %p85 = por %p83, %p84
    %p86 = scmp.ne.s32.totalorder %s78, %s80
    %p87 = scmp.eq.s32.totalorder %s14, 1
    %p88 = por %p86, %p87
    %p89 = scmp.ne.s32.totalorder %s80, %s81
    %p90 = scmp.eq.s32.totalorder %s14, 0
    %p91 = por %p89, %p90
    %p92 = scmp.ne.s32.totalorder %s80, %s81
    %p93 = scmp.eq.s32.totalorder %s15, 1
    %p94 = por %p92, %p93
    %p96 = scmp.ne.s32.totalorder %s81, %s95
    %p97 = scmp.eq.s32.totalorder %s15, 0
    %p98 = por %p96, %p97
    %s99 = ssub.s32 %s16, %s28
    %s100 = ssub.s32 %s17, %s24
    %s101 = sor.u32 %s99, %s100
    %p102 = scmp.eq.s32.totalorder %s101, 0
    %s104 = sadd.s32 %s103, 1
    %s105 = scalar_select %p102, %s103, %s104
    %p108 = pneg %p102
    %p109 = scmp.eq.s32.totalorder %s9, 1
    %p110 = por %p108, %p109
    %p111 = scmp.ne.s32.totalorder %s103, %s106
    %p112 = scmp.eq.s32.totalorder %s9, 0
    %p113 = por %p111, %p112
    %p114 = scmp.ne.s32.totalorder %s103, %s106
    %p115 = scmp.eq.s32.totalorder %s14, 1
    %p116 = por %p114, %p115
    %p117 = scmp.ne.s32.totalorder %s106, %s107
    %p118 = scmp.eq.s32.totalorder %s14, 0
    %p119 = por %p117, %p118
    %p120 = scmp.ne.s32.totalorder %s106, %s107
    %p121 = scmp.eq.s32.totalorder %s15, 1
    %p122 = por %p120, %p121
    %p124 = scmp.ne.s32.totalorder %s107, %s123
    %p125 = scmp.eq.s32.totalorder %s15, 0
    %p126 = por %p124, %p125
    %p127 = scmp.le.s32.totalorder 1, %s9
    %p128 = scmp.lt.s32.totalorder %s9, 3
    %p129 = pnand %p127, %p128
    %p130 = pneg %p129
    // Predicated region
    $region9: #{double_conv_forward.18} parent=5 // pred_check
      _
    $region10: #{double_conv_forward.18} parent=5 // pred_check_branch
      %132 = sbr.rel (%p129) target = $region12
    $region11: #{double_conv_forward.18} parent=5 // pred_region
      %s133 = ssub.s32 %s9, 1
      // Predicated region
      $region13: #{double_conv_forward.18} parent=11 // pred_check
        %p134 = pneg %p70
      $region14: #{double_conv_forward.18} parent=11 // pred_check_branch
        %136 = sbr.rel (%p134) target = $region16
      $region15: #{double_conv_forward.18} parent=11 // pred_region
        _
      $region16: #{double_conv_forward.18} parent=11 // pred_fallthru
        _
      // Predicated region
      $region17: #{double_conv_forward.18} parent=11 // pred_check
        %p137 = pneg %p91
      $region18: #{double_conv_forward.18} parent=11 // pred_check_branch
        %139 = sbr.rel (%p137) target = $region20
      $region19: #{double_conv_forward.18} parent=11 // pred_region
        _
      $region20: #{double_conv_forward.18} parent=11 // pred_fallthru
        _
    $region12: #{double_conv_forward.18} parent=5 // pred_fallthru
      _
    %p140 = scmp.lt.s32.totalorder %s9, 2
    // Predicated region
    $region21: #{double_conv_forward.18} parent=5 // pred_check
      %p141 = pneg %p140
    $region22: #{double_conv_forward.18} parent=5 // pred_check_branch
      %143 = sbr.rel (%p141) target = $region24
    $region23: #{double_conv_forward.18} parent=5 // pred_region
      // Predicated region
      $region25: #{double_conv_forward.18} parent=23 // pred_check
        %p144 = pneg %p43
      $region26: #{double_conv_forward.18} parent=23 // pred_check_branch
        %146 = sbr.rel (%p144) target = $region28
      $region27: #{double_conv_forward.18} parent=23 // pred_region
        %s147 = smul.u32 2, %s17
        %p148 = scmp.lt.s32.totalorder %s16, 1
        %s149 = scalar_select %p148, %s16, 1
        %p150 = scmp.lt.s32.totalorder %s147, 1
        %s151 = scalar_select %p150, %s147, 1
        %s152 = smul.addr %s149, 2
        %s153 = sadd.s32 %s151, %s152
        %s154 = smul.addr %s153, 4
        %s155 = scalar_lea.vmem %s0, %s154
        %s156 = smul.u32 2, %s17
      $region28: #{double_conv_forward.18} parent=23 // pred_fallthru
        _
    $region24: #{double_conv_forward.18} parent=5 // pred_fallthru
      _
    %p157 = scmp.le.s32.totalorder 1, %s9
    %p158 = scmp.lt.s32.totalorder %s9, 3
    %p159 = pnand %p157, %p158
    %p160 = pneg %p159
    // Predicated region
    $region29: #{double_conv_forward.18} parent=5 // pred_check
      _
    $region30: #{double_conv_forward.18} parent=5 // pred_check_branch
      %162 = sbr.rel (%p159) target = $region32
    $region31: #{double_conv_forward.18} parent=5 // pred_region
      %s163 = ssub.s32 %s9, 1
      %s164 = smul.u32 2, %s19
      %p165 = scmp.lt.s32.totalorder %s18, 1
      %s166 = scalar_select %p165, %s18, 1
      %p167 = scmp.lt.s32.totalorder %s164, 1
      %s168 = scalar_select %p167, %s164, 1
      %s169 = smul.addr %s166, 2
      %s170 = sadd.s32 %s168, %s169
      %s171 = smul.addr %s170, 4
      %s172 = scalar_lea.vmem %s0, %s171
      %p173 = pneg %p49
      %p174 = pneg %p46
      %p175 = pneg %p70
      %p176 = pneg %p67
      %p177 = pneg %p91
      %p178 = pneg %p88
      %p179 = pneg %p119
      %p180 = pneg %p116
      %s181 = smul.u32 2, %s19
      %p182 = scmp.lt.s32.totalorder %s18, 1
      %s183 = scalar_select %p182, %s18, 1
      %p184 = scmp.lt.s32.totalorder %s181, 1
      %s185 = scalar_select %p184, %s181, 1
      %s186 = smul.addr %s183, 2
      %s187 = sadd.s32 %s185, %s186
      %s188 = smul.addr %s187, 8
      %s189 = scalar_lea.vmem %s3, %s188
      %s190 = smul.u32 2, %s19
      %p191 = scmp.lt.s32.totalorder %s18, 1
      %s192 = scalar_select %p191, %s18, 1
      %p193 = scmp.lt.s32.totalorder %s190, 1
      %s194 = scalar_select %p193, %s190, 1
      %s195 = smul.addr %s192, 2
      %s196 = sadd.s32 %s194, %s195
      %s197 = smul.addr %s196, 4
      %s198 = scalar_lea.vmem %s0, %s197
      %s199 = smul.u32 2, %s19
      %s200 = smul.u32 2, %s19
      %p201 = scmp.lt.s32.totalorder %s18, 1
      %s202 = scalar_select %p201, %s18, 1
      %p203 = scmp.lt.s32.totalorder %s200, 1
      %s204 = scalar_select %p203, %s200, 1
      %s205 = smul.addr %s202, 2
      %s206 = sadd.s32 %s204, %s205
      %s207 = smul.addr %s206, 8
      %s208 = scalar_lea.vmem %s3, %s207
      %s209 = smul.u32 2, %s19
      %v210 = vld [vmem:[%s198] sm:$0xf]
      %v211 = vld [vmem:[%s198 + $0x4] sm:$0xf]
      %v212 = vunpack.c.l.bf16 %v210
      %v213 = vunpack.c.l.bf16 %v211
      %v214 = vld [vmem:[%s1] sm:$0x1]
      %v216 = vlaneseq
      %v217 = vshrl.u32 %v216, 7
      %v218 = vsub.s32 0, %v217
      %v219 = vrot.slane %v214, %v218
      %v221 = vmul.f32 %v212, %v219
      %v222 = vmul.f32 %v213, %v219
      %v223 = vld [vmem:[%s2] sm:$0x1]
      %v225 = vlaneseq
      %v226 = vshrl.u32 %v225, 7
      %v227 = vsub.s32 0, %v226
      %v228 = vrot.slane %v223, %v227
      %v230 = vadd.f32 %v221, %v228
      %v231 = vadd.f32 %v222, %v228
      %v232 = vmax.f32 %v230, 0.0
      %v233 = vmax.f32 %v231, 0.0
      %234 = vst [vmem:[%s208] sm:$0xff] %v232
      %235 = vst [vmem:[%s208 + $0x8] sm:$0xff] %v233
      %s236 = smul.u32 2, %s19
      %p237 = scmp.lt.s32.totalorder %s18, 1
      %s238 = scalar_select %p237, %s18, 1
      %p239 = scmp.lt.s32.totalorder %s236, 1
      %s240 = scalar_select %p239, %s236, 1
      %s241 = smul.addr %s238, 2
      %s242 = sadd.s32 %s240, %s241
      %s243 = smul.addr %s242, 8
      %s244 = scalar_lea.vmem %s3, %s243
      // Predicated region
      $region33: #{double_conv_forward.18} parent=31 // pred_check
        %p245 = pneg %p116
      $region34: #{double_conv_forward.18} parent=31 // pred_check_branch
        %247 = sbr.rel (%p245) target = $region36
      $region35: #{double_conv_forward.18} parent=31 // pred_region
        %s248 = smul.u32 2, %s19
      $region36: #{double_conv_forward.18} parent=31 // pred_fallthru
        _
    $region32: #{double_conv_forward.18} parent=5 // pred_fallthru
      _
    %p249 = scmp.le.s32.totalorder 2, %s9
    // Predicated region
    $region37: #{double_conv_forward.18} parent=5 // pred_check
      %p250 = pneg %p249
    $region38: #{double_conv_forward.18} parent=5 // pred_check_branch
      %252 = sbr.rel (%p250) target = $region40
    $region39: #{double_conv_forward.18} parent=5 // pred_region
      %s253 = ssub.s32 %s9, 2
      // Predicated region
      $region41: #{double_conv_forward.18} parent=39 // pred_check
        %p254 = pneg %p122
      $region42: #{double_conv_forward.18} parent=39 // pred_check_branch
        %256 = sbr.rel (%p254) target = $region44
      $region43: #{double_conv_forward.18} parent=39 // pred_region
        %s257 = smul.u32 2, %s21
        %p258 = scmp.lt.s32.totalorder %s20, 1
        %s259 = scalar_select %p258, %s20, 1
        %p260 = scmp.lt.s32.totalorder %s257, 1
        %s261 = scalar_select %p260, %s257, 1
        %s262 = smul.addr %s259, 2
        %s263 = sadd.s32 %s261, %s262
        %s264 = smul.addr %s263, 8
        %s265 = scalar_lea.vmem %s3, %s264
      $region44: #{double_conv_forward.18} parent=39 // pred_fallthru
        _
    $region40: #{double_conv_forward.18} parent=5 // pred_fallthru
      _
  $region6: #{double_conv_forward.18} parent=0 // loop_footer
    %s13 = sadd.s32 1, %s9
  $region7: #{double_conv_forward.18} parent=0 // loop_footer_branch
    %8 = sbr.rel target = $region3
  $region8: #{double_conv_forward.18} parent=0 // loop_exit
    _

// kernel: double_conv_forward.17
$region0: #{double_conv_forward.17}
  #allocation0 [shape = 'u32[]', space=smem, size = 0x4, offset = 0x4, fixed_abs, tag = 'smem constant byte address 0x4 - core index']
  #allocation1 [shape = 'u32[144,128]{1,0:T(1,128)}', space=vmem, size = 0x12000, scoped, tag = 'internal scratch']
  %s0 = inlined_call_operand.vmem [shape: bf16[2,18,18,8], index: 0, kind: input, shape index: {}, may-alias: {0,1}]
  %s1 = inlined_call_operand.vmem [shape: bf16[2,18,18,8], index: 1, kind: input, shape index: {}, may-alias: {0,1}]
  %s2 = inlined_call_operand.vmem [shape: bf16[72,8], index: 2, kind: input, shape index: {}]
  %s3 = inlined_call_operand.vmem [shape: bf16[2,16,16,8], index: 3, kind: input, shape index: {}]
  %s4 = inlined_call_operand.vmem [shape: bf16[2,16,16,8], index: 4, kind: output, shape index: {0}]
  %s5 = inlined_call_operand.vmem [shape: f32[2,1,2,8], index: 5, kind: output, shape index: {1}]
  %6 = xla_tuple %s4, %s5
  %s7 = sld [smem:[#allocation0]]
  $region57: #{double_conv_forward.17} parent=0
    _
  %s9 = ssub.s32 1, %s7
  %s10 = scalar_select 0, %s9, %s7
  loop: start=0, step=1, limit=4
  $region2: #{double_conv_forward.17} parent=0 // loop_pre_header
    _
  $region3: #{double_conv_forward.17} parent=0 // loop_header
    %s12 = sphi 0, %s16
    %p13 = scmp.ge.s32.totalorder %s12, 4
    %s19 = sphi 0, %s31
    %s20 = sphi 0, %s27
    %s21 = sphi 0, %s19
    %s22 = sphi 0, %s20
    %s23 = sphi 0, %s21
    %s24 = sphi 0, %s22
    %s36 = sphi 0, %s38
    %s39 = sphi 0, %s36
    %s40 = sphi 0, %s39
    %s56 = sphi 0, %s40
    %s68 = sphi 0, %s70
    %s71 = sphi 0, %s68
    %s72 = sphi 0, %s71
    %s88 = sphi 0, %s72
    %s92 = sphi 0, %s92
    %s94 = sphi 0, %s92
    %s95 = sphi 0, %s94
    %s109 = sphi 0, %s95
    %s117 = sphi 0, %s119
    %s120 = sphi 0, %s117
    %s121 = sphi 0, %s120
    %s137 = sphi 0, %s121
    %s145 = sphi 0, %s147
    %s148 = sphi 0, %s145
    %s149 = sphi 0, %s148
    %s165 = sphi 0, %s149
    %s173 = sphi 0, %s175
    %s176 = sphi 0, %s173
    %s177 = sphi 0, %s176
    %s193 = sphi 0, %s177
  $region4: #{double_conv_forward.17} parent=0 // loop_header_branch
    %15 = sbr.rel (%p13) target = $region8
  $region5: #{double_conv_forward.17} parent=0 // loop_body
    %s17 = ssub.s32 %s12, 1
    %s18 = ssub.s32 %s12, 2
    %s25 = sadd.s32 1, %s20
    %p26 = scmp.ge.s32.totalorder %s25, 1
    %s27 = scalar_select %p26, 0, %s25
    %s28 = sadd.s32 1, %s19
    %s29 = scalar_select %p26, %s28, %s19
    %p30 = scmp.ge.s32.totalorder %s29, 2
    %s31 = scalar_select %p30, 0, %s29
    %s32 = ssub.s32 %s19, %s31
    %s33 = ssub.s32 %s20, %s27
    %s34 = sor.u32 %s32, %s33
    %p35 = scmp.eq.s32.totalorder %s34, 0
    %s37 = sadd.s32 %s36, 1
    %s38 = scalar_select %p35, %s36, %s37
    %p41 = pneg %p35
    %p42 = scmp.eq.s32.totalorder %s12, 1
    %p43 = por %p41, %p42
    %p44 = scmp.ne.s32.totalorder %s36, %s39
    %p45 = scmp.eq.s32.totalorder %s12, 0
    %p46 = por %p44, %p45
    %p47 = scmp.ne.s32.totalorder %s36, %s39
    %p48 = scmp.eq.s32.totalorder %s17, 1
    %p49 = por %p47, %p48
    %p50 = scmp.ne.s32.totalorder %s39, %s40
    %p51 = scmp.eq.s32.totalorder %s17, 0
    %p52 = por %p50, %p51
    %p53 = scmp.ne.s32.totalorder %s39, %s40
    %p54 = scmp.eq.s32.totalorder %s18, 1
    %p55 = por %p53, %p54
    %p57 = scmp.ne.s32.totalorder %s40, %s56
    %p58 = scmp.eq.s32.totalorder %s18, 0
    %p59 = por %p57, %p58
    %s60 = sadd.s32 %s20, 1
    %s61 = smul.u32 %s60, 8
    %s62 = sadd.s32 %s27, 1
    %s63 = smul.u32 %s62, 8
    %s64 = ssub.s32 %s19, %s31
    %s65 = ssub.s32 %s61, %s63
    %s66 = sor.u32 %s64, %s65
    %p67 = scmp.eq.s32.totalorder %s66, 0
    %s69 = sadd.s32 %s68, 1
    %s70 = scalar_select %p67, %s68, %s69
    %p73 = pneg %p67
    %p74 = scmp.eq.s32.totalorder %s12, 1
    %p75 = por %p73, %p74
    %p76 = scmp.ne.s32.totalorder %s68, %s71
    %p77 = scmp.eq.s32.totalorder %s12, 0
    %p78 = por %p76, %p77
    %p79 = scmp.ne.s32.totalorder %s68, %s71
    %p80 = scmp.eq.s32.totalorder %s17, 1
    %p81 = por %p79, %p80
    %p82 = scmp.ne.s32.totalorder %s71, %s72
    %p83 = scmp.eq.s32.totalorder %s17, 0
    %p84 = por %p82, %p83
    %p85 = scmp.ne.s32.totalorder %s71, %s72
    %p86 = scmp.eq.s32.totalorder %s18, 1
    %p87 = por %p85, %p86
    %p89 = scmp.ne.s32.totalorder %s72, %s88
    %p90 = scmp.eq.s32.totalorder %s18, 0
    %p91 = por %p89, %p90
    %s93 = sadd.s32 %s92, 1
    %p96 = scmp.eq.s32.totalorder %s12, 1
    %p97 = scmp.ne.s32.totalorder %s92, %s94
    %p98 = scmp.eq.s32.totalorder %s12, 0
    %p99 = por %p97, %p98
    %p100 = scmp.ne.s32.totalorder %s92, %s94
    %p101 = scmp.eq.s32.totalorder %s17, 1
    %p102 = por %p100, %p101
    %p103 = scmp.ne.s32.totalorder %s94, %s95
    %p104 = scmp.eq.s32.totalorder %s17, 0
    %p105 = por %p103, %p104
    %p106 = scmp.ne.s32.totalorder %s94, %s95
    %p107 = scmp.eq.s32.totalorder %s18, 1
    %p108 = por %p106, %p107
    %p110 = scmp.ne.s32.totalorder %s95, %s109
    %p111 = scmp.eq.s32.totalorder %s18, 0
    %p112 = por %p110, %p111
    %s113 = ssub.s32 %s19, %s31
    %s114 = ssub.s32 %s20, %s27
    %s115 = sor.u32 %s113, %s114
    %p116 = scmp.eq.s32.totalorder %s115, 0
    %s118 = sadd.s32 %s117, 1
    %s119 = scalar_select %p116, %s117, %s118
    %p122 = pneg %p116
    %p123 = scmp.eq.s32.totalorder %s12, 1
    %p124 = por %p122, %p123
    %p125 = scmp.ne.s32.totalorder %s117, %s120
    %p126 = scmp.eq.s32.totalorder %s12, 0
    %p127 = por %p125, %p126
    %p128 = scmp.ne.s32.totalorder %s117, %s120
    %p129 = scmp.eq.s32.totalorder %s17, 1
    %p130 = por %p128, %p129
    %p131 = scmp.ne.s32.totalorder %s120, %s121
    %p132 = scmp.eq.s32.totalorder %s17, 0
    %p133 = por %p131, %p132
    %p134 = scmp.ne.s32.totalorder %s120, %s121
    %p135 = scmp.eq.s32.totalorder %s18, 1
    %p136 = por %p134, %p135
    %p138 = scmp.ne.s32.totalorder %s121, %s137
    %p139 = scmp.eq.s32.totalorder %s18, 0
    %p140 = por %p138, %p139
    %s141 = ssub.s32 %s19, %s31
    %s142 = ssub.s32 %s20, %s27
    %s143 = sor.u32 %s141, %s142
    %p144 = scmp.eq.s32.totalorder %s143, 0
    %s146 = sadd.s32 %s145, 1
    %s147 = scalar_select %p144, %s145, %s146
    %p150 = pneg %p144
    %p151 = scmp.eq.s32.totalorder %s12, 1
    %p152 = por %p150, %p151
    %p153 = scmp.ne.s32.totalorder %s145, %s148
    %p154 = scmp.eq.s32.totalorder %s12, 0
    %p155 = por %p153, %p154
    %p156 = scmp.ne.s32.totalorder %s145, %s148
    %p157 = scmp.eq.s32.totalorder %s17, 1
    %p158 = por %p156, %p157
    %p159 = scmp.ne.s32.totalorder %s148, %s149
    %p160 = scmp.eq.s32.totalorder %s17, 0
    %p161 = por %p159, %p160
    %p162 = scmp.ne.s32.totalorder %s148, %s149
    %p163 = scmp.eq.s32.totalorder %s18, 1
    %p164 = por %p162, %p163
    %p166 = scmp.ne.s32.totalorder %s149, %s165
    %p167 = scmp.eq.s32.totalorder %s18, 0
    %p168 = por %p166, %p167
    %s169 = ssub.s32 %s19, %s31
    %s170 = ssub.s32 %s20, %s27
    %s171 = sor.u32 %s169, %s170
    %p172 = scmp.eq.s32.totalorder %s171, 0
    %s174 = sadd.s32 %s173, 1
    %s175 = scalar_select %p172, %s173, %s174
    %p178 = pneg %p172
    %p179 = scmp.eq.s32.totalorder %s12, 1
    %p180 = por %p178, %p179
    %p181 = scmp.ne.s32.totalorder %s173, %s176
    %p182 = scmp.eq.s32.totalorder %s12, 0
    %p183 = por %p181, %p182
    %p184 = scmp.ne.s32.totalorder %s173, %s176
    %p185 = scmp.eq.s32.totalorder %s17, 1
    %p186 = por %p184, %p185
    %p187 = scmp.ne.s32.totalorder %s176, %s177
    %p188 = scmp.eq.s32.totalorder %s17, 0
    %p189 = por %p187, %p188
    %p190 = scmp.ne.s32.totalorder %s176, %s177
    %p191 = scmp.eq.s32.totalorder %s18, 1
    %p192 = por %p190, %p191
    %p194 = scmp.ne.s32.totalorder %s177, %s193
    %p195 = scmp.eq.s32.totalorder %s18, 0
    %p196 = por %p194, %p195
    %p197 = scmp.le.s32.totalorder 1, %s12
    %p198 = scmp.lt.s32.totalorder %s12, 3
    %p199 = pnand %p197, %p198
    %p200 = pneg %p199
    // Predicated region
    $region9: #{double_conv_forward.17} parent=5 // pred_check
      _
    $region10: #{double_conv_forward.17} parent=5 // pred_check_branch
      %202 = sbr.rel (%p199) target = $region12
    $region11: #{double_conv_forward.17} parent=5 // pred_region
      %s203 = ssub.s32 %s12, 1
      // Predicated region
      $region13: #{double_conv_forward.17} parent=11 // pred_check
        %p204 = pneg %p105
      $region14: #{double_conv_forward.17} parent=11 // pred_check_branch
        %206 = sbr.rel (%p204) target = $region16
      $region15: #{double_conv_forward.17} parent=11 // pred_region
        _
      $region16: #{double_conv_forward.17} parent=11 // pred_fallthru
        _
    $region12: #{double_conv_forward.17} parent=5 // pred_fallthru
      _
    %p207 = scmp.lt.s32.totalorder %s12, 2
    // Predicated region
    $region17: #{double_conv_forward.17} parent=5 // pred_check
      %p208 = pneg %p207
    $region18: #{double_conv_forward.17} parent=5 // pred_check_branch
      %210 = sbr.rel (%p208) target = $region20
    $region19: #{double_conv_forward.17} parent=5 // pred_region
      // Predicated region
      $region21: #{double_conv_forward.17} parent=19 // pred_check
        %p211 = pneg %p46
      $region22: #{double_conv_forward.17} parent=19 // pred_check_branch
        %213 = sbr.rel (%p211) target = $region24
      $region23: #{double_conv_forward.17} parent=19 // pred_region
        %s214 = smul.u32 16, %s20
        %s215 = ssub.s32 18, %s214
        %p216 = scmp.lt.s32.totalorder %s215, 16
        %s217 = scalar_select %p216, %s215, 16
        %s218 = smul.u32 64, %s217
        %s219 = smul.u32 %s218, 3
        %p220 = scmp.lt.s32.totalorder %s19, 1
        %s221 = scalar_select %p220, %s19, 1
        %p222 = scmp.lt.s32.totalorder %s214, 17
        %s223 = scalar_select %p222, %s214, 17
        %s224 = smul.addr %s223, 3
        %s225 = smul.addr %s221, 54
        %s226 = sadd.s32 %s224, %s225
        %s227 = smul.addr %s226, 4
        %s228 = scalar_lea.vmem %s0, %s227
        %s229 = smul.u32 16, %s20
        %s230 = ssub.s32 18, %s229
        %p231 = scmp.lt.s32.totalorder %s230, 16
        %s232 = scalar_select %p231, %s230, 16
        %s233 = smul.u32 64, %s232
        %s234 = smul.u32 %s233, 3
      $region24: #{double_conv_forward.17} parent=19 // pred_fallthru
        _
      // Predicated region
      $region25: #{double_conv_forward.17} parent=19 // pred_check
        %p235 = pneg %p78
      $region26: #{double_conv_forward.17} parent=19 // pred_check_branch
        %237 = sbr.rel (%p235) target = $region28
      $region27: #{double_conv_forward.17} parent=19 // pred_region
        %s238 = sadd.s32 %s20, 1
        %s239 = smul.u32 %s238, 8
        %s240 = smul.u32 2, %s239
        %p241 = scmp.lt.s32.totalorder %s19, 1
        %s242 = scalar_select %p241, %s19, 1
        %p243 = scmp.lt.s32.totalorder %s240, 17
        %s244 = scalar_select %p243, %s240, 17
        %s245 = smul.addr %s244, 3
        %s246 = smul.addr %s242, 54
        %s247 = sadd.s32 %s245, %s246
        %s248 = smul.addr %s247, 4
        %s249 = scalar_lea.vmem %s1, %s248
        %s250 = sadd.s32 %s20, 1
        %s251 = smul.u32 %s250, 8
        %s252 = smul.u32 2, %s251
      $region28: #{double_conv_forward.17} parent=19 // pred_fallthru
        _
      // Predicated region
      $region29: #{double_conv_forward.17} parent=19 // pred_check
        %p253 = pneg %p127
      $region30: #{double_conv_forward.17} parent=19 // pred_check_branch
        %255 = sbr.rel (%p253) target = $region32
      $region31: #{double_conv_forward.17} parent=19 // pred_region
        %s256 = smul.u32 16, %s20
        %p257 = scmp.lt.s32.totalorder %s19, 1
        %s258 = scalar_select %p257, %s19, 1
        %p259 = scmp.lt.s32.totalorder %s256, 15
        %s260 = scalar_select %p259, %s256, 15
        %s261 = smul.addr %s260, 2
        %s262 = smul.addr %s258, 32
        %s263 = sadd.s32 %s261, %s262
        %s264 = smul.addr %s263, 4
        %s265 = scalar_lea.vmem %s3, %s264
        %s266 = smul.u32 16, %s20
      $region32: #{double_conv_forward.17} parent=19 // pred_fallthru
        _
    $region20: #{double_conv_forward.17} parent=5 // pred_fallthru
      _
    %p267 = scmp.le.s32.totalorder 1, %s12
    %p268 = scmp.lt.s32.totalorder %s12, 3
    %p269 = pnand %p267, %p268
    %p270 = pneg %p269
    // Predicated region
    $region33: #{double_conv_forward.17} parent=5 // pred_check
      _
    $region34: #{double_conv_forward.17} parent=5 // pred_check_branch
      %272 = sbr.rel (%p269) target = $region36
    $region35: #{double_conv_forward.17} parent=5 // pred_region
      %s273 = ssub.s32 %s12, 1
      %s274 = smul.u32 16, %s22
      %s275 = ssub.s32 18, %s274
      %p276 = scmp.lt.s32.totalorder %s275, 16
      %s277 = scalar_select %p276, %s275, 16
      %s278 = smul.u32 64, %s277
      %s279 = smul.u32 %s278, 3
      %p280 = scmp.lt.s32.totalorder %s21, 1
      %s281 = scalar_select %p280, %s21, 1
      %p282 = scmp.lt.s32.totalorder %s274, 17
      %s283 = scalar_select %p282, %s274, 17
      %s284 = smul.addr %s283, 3
      %s285 = smul.addr %s281, 54
      %s286 = sadd.s32 %s284, %s285
      %s287 = smul.addr %s286, 4
      %s288 = scalar_lea.vmem %s0, %s287
      %p289 = pneg %p52
      %p290 = pneg %p49
      %s291 = sadd.s32 %s22, 1
      %s292 = smul.u32 %s291, 8
      %s293 = smul.u32 2, %s292
      %p294 = scmp.lt.s32.totalorder %s21, 1
      %s295 = scalar_select %p294, %s21, 1
      %p296 = scmp.lt.s32.totalorder %s293, 17
      %s297 = scalar_select %p296, %s293, 17
      %s298 = smul.addr %s297, 3
      %s299 = smul.addr %s295, 54
      %s300 = sadd.s32 %s298, %s299
      %s301 = smul.addr %s300, 4
      %s302 = scalar_lea.vmem %s1, %s301
      %p303 = pneg %p84
      %p304 = pneg %p81
      %p305 = pneg %p105
      %p306 = pneg %p102
      %s307 = smul.u32 16, %s22
      %p308 = scmp.lt.s32.totalorder %s21, 1
      %s309 = scalar_select %p308, %s21, 1
      %p310 = scmp.lt.s32.totalorder %s307, 15
      %s311 = scalar_select %p310, %s307, 15
      %s312 = smul.addr %s311, 2
      %s313 = smul.addr %s309, 32
      %s314 = sadd.s32 %s312, %s313
      %s315 = smul.addr %s314, 4
      %s316 = scalar_lea.vmem %s3, %s315
      %p317 = pneg %p133
      %p318 = pneg %p130
      %p319 = pneg %p161
      %p320 = pneg %p158
      %s321 = smul.u32 16, %s22
      %p322 = scmp.lt.s32.totalorder %s21, 1
      %s323 = scalar_select %p322, %s21, 1
      %p324 = scmp.lt.s32.totalorder %s321, 15
      %s325 = scalar_select %p324, %s321, 15
      %s326 = smul.addr %s325, 2
      %s327 = smul.addr %s323, 32
      %s328 = sadd.s32 %s326, %s327
      %s329 = smul.addr %s328, 4
      %s330 = scalar_lea.vmem %s4, %s329
      %p331 = pneg %p189
      %p332 = pneg %p186
      %p333 = scmp.lt.s32.totalorder %s21, 1
      %s334 = scalar_select %p333, %s21, 1
      %p335 = scmp.lt.s32.totalorder %s22, 0
      %s336 = scalar_select %p335, %s22, 0
      %s337 = sadd.s32 %s336, %s334
      %s338 = smul.addr %s337, 2
      %s339 = scalar_lea.vmem %s5, %s338
      %s340 = smul.u32 16, %s22
      %s341 = ssub.s32 18, %s340
      %p342 = scmp.lt.s32.totalorder %s341, 16
      %s343 = scalar_select %p342, %s341, 16
      %s344 = smul.u32 64, %s343
      %s345 = smul.u32 %s344, 3
      %p346 = scmp.lt.s32.totalorder %s21, 1
      %s347 = scalar_select %p346, %s21, 1
      %p348 = scmp.lt.s32.totalorder %s340, 17
      %s349 = scalar_select %p348, %s340, 17
      %s350 = smul.addr %s349, 3
      %s351 = smul.addr %s347, 54
      %s352 = sadd.s32 %s350, %s351
      %s353 = smul.addr %s352, 4
      %s354 = scalar_lea.vmem %s0, %s353
      %s355 = smul.u32 16, %s22
      %s356 = ssub.s32 18, %s355
      %p357 = scmp.lt.s32.totalorder %s356, 16
      %s358 = scalar_select %p357, %s356, 16
      %s359 = smul.u32 64, %s358
      %s360 = smul.u32 %s359, 3
      %s361 = sadd.s32 %s22, 1
      %s362 = smul.u32 %s361, 8
      %s363 = smul.u32 2, %s362
      %p364 = scmp.lt.s32.totalorder %s21, 1
      %s365 = scalar_select %p364, %s21, 1
      %p366 = scmp.lt.s32.totalorder %s363, 17
      %s367 = scalar_select %p366, %s363, 17
      %s368 = smul.addr %s367, 3
      %s369 = smul.addr %s365, 54
      %s370 = sadd.s32 %s368, %s369
      %s371 = smul.addr %s370, 4
      %s372 = scalar_lea.vmem %s1, %s371
      %s373 = sadd.s32 %s22, 1
      %s374 = smul.u32 %s373, 8
      %s375 = smul.u32 2, %s374
      %s376 = smul.u32 16, %s22
      %p377 = scmp.lt.s32.totalorder %s21, 1
      %s378 = scalar_select %p377, %s21, 1
      %p379 = scmp.lt.s32.totalorder %s376, 15
      %s380 = scalar_select %p379, %s376, 15
      %s381 = smul.addr %s380, 2
      %s382 = smul.addr %s378, 32
      %s383 = sadd.s32 %s381, %s382
      %s384 = smul.addr %s383, 4
      %s385 = scalar_lea.vmem %s3, %s384
      %s386 = smul.u32 16, %s22
      %s387 = smul.u32 16, %s22
      %p388 = scmp.lt.s32.totalorder %s21, 1
      %s389 = scalar_select %p388, %s21, 1
      %p390 = scmp.lt.s32.totalorder %s387, 15
      %s391 = scalar_select %p390, %s387, 15
      %s392 = smul.addr %s391, 2
      %s393 = smul.addr %s389, 32
      %s394 = sadd.s32 %s392, %s393
      %s395 = smul.addr %s394, 4
      %s396 = scalar_lea.vmem %s4, %s395
      %s397 = smul.u32 16, %s22
      %p398 = scmp.lt.s32.totalorder %s21, 1
      %s399 = scalar_select %p398, %s21, 1
      %p400 = scmp.lt.s32.totalorder %s22, 0
      %s401 = scalar_select %p400, %s22, 0
      %s402 = sadd.s32 %s401, %s399
      %s403 = smul.addr %s402, 2
      %s404 = scalar_lea.vmem %s5, %s403
      %v406 = vld [vmem:[%s354] sm:$0xf]
      %v407 = vld [vmem:[%s354 + $0x4] sm:$0xf]
      %v408 = vld [vmem:[%s354 + $0x8] sm:$0x1]
      %v409 = vld [vmem:[%s354 + $0xc] sm:$0xf]
      %v410 = vld [vmem:[%s354 + $0x10] sm:$0xf]
      %v411 = vld [vmem:[%s354 + $0x14] sm:$0x1]
      %v412 = vld [vmem:[%s354 + $0x18] sm:$0xf]
      %v413 = vld [vmem:[%s354 + $0x1c] sm:$0xf]
      %v414 = vld [vmem:[%s354 + $0x20] sm:$0x1]
      %v415 = vld [vmem:[%s354 + $0x24] sm:$0xf]
      %v416 = vld [vmem:[%s354 + $0x28] sm:$0xf]
      %v417 = vld [vmem:[%s354 + $0x2c] sm:$0x1]
      %v418 = vld [vmem:[%s354 + $0x30] sm:$0xf]
      %v419 = vld [vmem:[%s354 + $0x34] sm:$0xf]
      %v420 = vld [vmem:[%s354 + $0x38] sm:$0x1]
      %v421 = vld [vmem:[%s354 + $0x3c] sm:$0xf]
      %v422 = vld [vmem:[%s354 + $0x40] sm:$0xf]
      %v423 = vld [vmem:[%s354 + $0x44] sm:$0x1]
      %v424 = vld [vmem:[%s354 + $0x48] sm:$0xf]
      %v425 = vld [vmem:[%s354 + $0x4c] sm:$0xf]
      %v426 = vld [vmem:[%s354 + $0x50] sm:$0x1]
      %v427 = vld [vmem:[%s354 + $0x54] sm:$0xf]
      %v428 = vld [vmem:[%s354 + $0x58] sm:$0xf]
      %v429 = vld [vmem:[%s354 + $0x5c] sm:$0x1]
      %v430 = vld [vmem:[%s354 + $0x60] sm:$0xf]
      %v431 = vld [vmem:[%s354 + $0x64] sm:$0xf]
      %v432 = vld [vmem:[%s354 + $0x68] sm:$0x1]
      %v433 = vld [vmem:[%s354 + $0x6c] sm:$0xf]
      %v434 = vld [vmem:[%s354 + $0x70] sm:$0xf]
      %v435 = vld [vmem:[%s354 + $0x74] sm:$0x1]
      %v436 = vld [vmem:[%s354 + $0x78] sm:$0xf]
      %v437 = vld [vmem:[%s354 + $0x7c] sm:$0xf]
      %v438 = vld [vmem:[%s354 + $0x80] sm:$0x1]
      %v439 = vld [vmem:[%s354 + $0x84] sm:$0xf]
      %v440 = vld [vmem:[%s354 + $0x88] sm:$0xf]
      %v441 = vld [vmem:[%s354 + $0x8c] sm:$0x1]
      %v442 = vld [vmem:[%s354 + $0x90] sm:$0xf]
      %v443 = vld [vmem:[%s354 + $0x94] sm:$0xf]
      %v444 = vld [vmem:[%s354 + $0x98] sm:$0x1]
      %v445 = vld [vmem:[%s354 + $0x9c] sm:$0xf]
      %v446 = vld [vmem:[%s354 + $0xa0] sm:$0xf]
      %v447 = vld [vmem:[%s354 + $0xa4] sm:$0x1]
      %v448 = vld [vmem:[%s354 + $0xa8] sm:$0xf]
      %v449 = vld [vmem:[%s354 + $0xac] sm:$0xf]
      %v450 = vld [vmem:[%s354 + $0xb0] sm:$0x1]
      %v451 = vld [vmem:[%s354 + $0xb4] sm:$0xf]
      %v452 = vld [vmem:[%s354 + $0xb8] sm:$0xf]
      %v453 = vld [vmem:[%s354 + $0xbc] sm:$0x1]
      %v454 = vld [vmem:[%s372] sm:$0xf]
      %v455 = vld [vmem:[%s372 + $0x4] sm:$0xf]
      %v456 = vld [vmem:[%s372 + $0x8] sm:$0x1]
      %v457 = vld [vmem:[%s372 + $0xc] sm:$0xf]
      %v458 = vld [vmem:[%s372 + $0x10] sm:$0xf]
      %v459 = vld [vmem:[%s372 + $0x14] sm:$0x1]
      %vm460 = vsmask.f32 3328
      %vm461 = vsmask.f32 7440
      %vm462 = vmor %vm460, %vm461
      %v464 = vshrl.u32 %v406, 16
      %v466 = vrot.slane %v464, 4
      %v467 = vshll.u32 %v406, 16
      %v469 = vrot.slane %v467, 5
      %v470 = vor.u32 %v466, %v469
      %v471 = vrot.slane %v470, 4
      %v473 = vshll.u32 %v407, 16
      %v475 = vrot.slane %v473, 5
      %v476 = vsel %vm462, %v471, %v475
      %v477 = vshrl.u32 %v407, 16
      %v479 = vrot.slane %v477, 4
      %v480 = vor.u32 %v479, %v475
      %v481 = vrot.slane %v480, 4
      %v483 = vshll.u32 %v408, 16
      %v485 = vrot.slane %v483, 5
      %v486 = vsel %vm462, %v481, %v485
      %v488 = vshrl.u32 %v409, 16
      %v490 = vrot.slane %v488, 4
      %v491 = vshll.u32 %v409, 16
      %v493 = vrot.slane %v491, 5
      %v494 = vor.u32 %v490, %v493
      %v495 = vrot.slane %v494, 4
      %v497 = vshll.u32 %v410, 16
      %v499 = vrot.slane %v497, 5
      %v500 = vsel %vm462, %v495, %v499
      %v501 = vshrl.u32 %v410, 16
      %v503 = vrot.slane %v501, 4
      %v504 = vor.u32 %v503, %v499
      %v505 = vrot.slane %v504, 4
      %v507 = vshll.u32 %v411, 16
      %v509 = vrot.slane %v507, 5
      %v510 = vsel %vm462, %v505, %v509
      %v512 = vshrl.u32 %v412, 16
      %v514 = vrot.slane %v512, 4
      %v515 = vshll.u32 %v412, 16
      %v517 = vrot.slane %v515, 5
      %v518 = vor.u32 %v514, %v517
      %v519 = vrot.slane %v518, 4
      %v521 = vshll.u32 %v413, 16
      %v523 = vrot.slane %v521, 5
      %v524 = vsel %vm462, %v519, %v523
      %v525 = vshrl.u32 %v413, 16
      %v527 = vrot.slane %v525, 4
      %v528 = vor.u32 %v527, %v523
      %v529 = vrot.slane %v528, 4
      %v531 = vshll.u32 %v414, 16
      %v533 = vrot.slane %v531, 5
      %v534 = vsel %vm462, %v529, %v533
      %v536 = vshrl.u32 %v415, 16
      %v538 = vrot.slane %v536, 4
      %v539 = vshll.u32 %v415, 16
      %v541 = vrot.slane %v539, 5
      %v542 = vor.u32 %v538, %v541
      %v543 = vrot.slane %v542, 4
      %v545 = vshll.u32 %v416, 16
      %v547 = vrot.slane %v545, 5
      %v548 = vsel %vm462, %v543, %v547
      %v549 = vshrl.u32 %v416, 16
      %v551 = vrot.slane %v549, 4
      %v552 = vor.u32 %v551, %v547
      %v553 = vrot.slane %v552, 4
      %v555 = vshll.u32 %v417, 16
      %v557 = vrot.slane %v555, 5
      %v558 = vsel %vm462, %v553, %v557
      %v560 = vshrl.u32 %v418, 16
      %v562 = vrot.slane %v560, 4
      %v563 = vshll.u32 %v418, 16
      %v565 = vrot.slane %v563, 5
      %v566 = vor.u32 %v562, %v565
      %v567 = vrot.slane %v566, 4
      %v569 = vshll.u32 %v419, 16
      %v571 = vrot.slane %v569, 5
      %v572 = vsel %vm462, %v567, %v571
      %v573 = vshrl.u32 %v419, 16
      %v575 = vrot.slane %v573, 4
      %v576 = vor.u32 %v575, %v571
      %v577 = vrot.slane %v576, 4
      %v579 = vshll.u32 %v420, 16
      %v581 = vrot.slane %v579, 5
      %v582 = vsel %vm462, %v577, %v581
      %v584 = vshrl.u32 %v421, 16
      %v586 = vrot.slane %v584, 4
      %v587 = vshll.u32 %v421, 16
      %v589 = vrot.slane %v587, 5
      %v590 = vor.u32 %v586, %v589
      %v591 = vrot.slane %v590, 4
      %v593 = vshll.u32 %v422, 16
      %v595 = vrot.slane %v593, 5
      %v596 = vsel %vm462, %v591, %v595
      %v597 = vshrl.u32 %v422, 16
      %v599 = vrot.slane %v597, 4
      %v600 = vor.u32 %v599, %v595
      %v601 = vrot.slane %v600, 4
      %v603 = vshll.u32 %v423, 16
      %v605 = vrot.slane %v603, 5
      %v606 = vsel %vm462, %v601, %v605
      %v608 = vshrl.u32 %v424, 16
      %v610 = vrot.slane %v608, 4
      %v611 = vshll.u32 %v424, 16
      %v613 = vrot.slane %v611, 5
      %v614 = vor.u32 %v610, %v613
      %v615 = vrot.slane %v614, 4
      %v617 = vshll.u32 %v425, 16
      %v619 = vrot.slane %v617, 5
      %v620 = vsel %vm462, %v615, %v619
      %v621 = vshrl.u32 %v425, 16
      %v623 = vrot.slane %v621, 4
      %v624 = vor.u32 %v623, %v619
      %v625 = vrot.slane %v624, 4
      %v627 = vshll.u32 %v426, 16
      %v629 = vrot.slane %v627, 5
      %v630 = vsel %vm462, %v625, %v629
      %v632 = vshrl.u32 %v427, 16
      %v634 = vrot.slane %v632, 4
      %v635 = vshll.u32 %v427, 16
      %v637 = vrot.slane %v635, 5
      %v638 = vor.u32 %v634, %v637
      %v639 = vrot.slane %v638, 4
      %v641 = vshll.u32 %v428, 16
      %v643 = vrot.slane %v641, 5
      %v644 = vsel %vm462, %v639, %v643
      %v645 = vshrl.u32 %v428, 16
      %v647 = vrot.slane %v645, 4
      %v648 = vor.u32 %v647, %v643
      %v649 = vrot.slane %v648, 4
      %v651 = vshll.u32 %v429, 16
      %v653 = vrot.slane %v651, 5
      %v654 = vsel %vm462, %v649, %v653
      %v656 = vshrl.u32 %v430, 16
      %v658 = vrot.slane %v656, 4
      %v659 = vshll.u32 %v430, 16
      %v661 = vrot.slane %v659, 5
      %v662 = vor.u32 %v658, %v661
      %v663 = vrot.slane %v662, 4
      %v665 = vshll.u32 %v431, 16
      %v667 = vrot.slane %v665, 5
      %v668 = vsel %vm462, %v663, %v667
      %v669 = vshrl.u32 %v431, 16
      %v671 = vrot.slane %v669, 4
      %v672 = vor.u32 %v671, %v667
      %v673 = vrot.slane %v672, 4
      %v675 = vshll.u32 %v432, 16
      %v677 = vrot.slane %v675, 5
      %v678 = vsel %vm462, %v673, %v677
      %v680 = vshrl.u32 %v433, 16
      %v682 = vrot.slane %v680, 4
      %v683 = vshll.u32 %v433, 16
      %v685 = vrot.slane %v683, 5
      %v686 = vor.u32 %v682, %v685
      %v687 = vrot.slane %v686, 4
      %v689 = vshll.u32 %v434, 16
      %v691 = vrot.slane %v689, 5
      %v692 = vsel %vm462, %v687, %v691
      %v693 = vshrl.u32 %v434, 16
      %v695 = vrot.slane %v693, 4
      %v696 = vor.u32 %v695, %v691
      %v697 = vrot.slane %v696, 4
      %v699 = vshll.u32 %v435, 16
      %v701 = vrot.slane %v699, 5
      %v702 = vsel %vm462, %v697, %v701
      %v704 = vshrl.u32 %v436, 16
      %v706 = vrot.slane %v704, 4
      %v707 = vshll.u32 %v436, 16
      %v709 = vrot.slane %v707, 5
      %v710 = vor.u32 %v706, %v709
      %v711 = vrot.slane %v710, 4
      %v713 = vshll.u32 %v437, 16
      %v715 = vrot.slane %v713, 5
      %v716 = vsel %vm462, %v711, %v715
      %v717 = vshrl.u32 %v437, 16
      %v719 = vrot.slane %v717, 4
      %v720 = vor.u32 %v719, %v715
      %v721 = vrot.slane %v720, 4
      %v723 = vshll.u32 %v438, 16
      %v725 = vrot.slane %v723, 5
      %v726 = vsel %vm462, %v721, %v725
      %v728 = vshrl.u32 %v439, 16
      %v730 = vrot.slane %v728, 4
      %v731 = vshll.u32 %v439, 16
      %v733 = vrot.slane %v731, 5
      %v734 = vor.u32 %v730, %v733
      %v735 = vrot.slane %v734, 4
      %v737 = vshll.u32 %v440, 16
      %v739 = vrot.slane %v737, 5
      %v740 = vsel %vm462, %v735, %v739
      %v741 = vshrl.u32 %v440, 16
      %v743 = vrot.slane %v741, 4
      %v744 = vor.u32 %v743, %v739
      %v745 = vrot.slane %v744, 4
      %v747 = vshll.u32 %v441, 16
      %v749 = vrot.slane %v747, 5
      %v750 = vsel %vm462, %v745, %v749
      %v752 = vshrl.u32 %v442, 16
      %v754 = vrot.slane %v752, 4
      %v755 = vshll.u32 %v442, 16
      %v757 = vrot.slane %v755, 5
      %v758 = vor.u32 %v754, %v757
      %v759 = vrot.slane %v758, 4
      %v761 = vshll.u32 %v443, 16
      %v763 = vrot.slane %v761, 5
      %v764 = vsel %vm462, %v759, %v763
      %v765 = vshrl.u32 %v443, 16
      %v767 = vrot.slane %v765, 4
      %v768 = vor.u32 %v767, %v763
      %v769 = vrot.slane %v768, 4
      %v771 = vshll.u32 %v444, 16
      %v773 = vrot.slane %v771, 5
      %v774 = vsel %vm462, %v769, %v773
      %v776 = vshrl.u32 %v445, 16
      %v778 = vrot.slane %v776, 4
      %v779 = vshll.u32 %v445, 16
      %v781 = vrot.slane %v779, 5
      %v782 = vor.u32 %v778, %v781
      %v783 = vrot.slane %v782, 4
      %v785 = vshll.u32 %v446, 16
      %v787 = vrot.slane %v785, 5
      %v788 = vsel %vm462, %v783, %v787
      %v789 = vshrl.u32 %v446, 16
      %v791 = vrot.slane %v789, 4
      %v792 = vor.u32 %v791, %v787
      %v793 = vrot.slane %v792, 4
      %v795 = vshll.u32 %v447, 16
      %v797 = vrot.slane %v795, 5
      %v798 = vsel %vm462, %v793, %v797
      %v800 = vshrl.u32 %v448, 16
      %v802 = vrot.slane %v800, 4
      %v803 = vshll.u32 %v448, 16
      %v805 = vrot.slane %v803, 5
      %v806 = vor.u32 %v802, %v805
      %v807 = vrot.slane %v806, 4
      %v809 = vshll.u32 %v449, 16
      %v811 = vrot.slane %v809, 5
      %v812 = vsel %vm462, %v807, %v811
      %v813 = vshrl.u32 %v449, 16
      %v815 = vrot.slane %v813, 4
      %v816 = vor.u32 %v815, %v811
      %v817 = vrot.slane %v816, 4
      %v819 = vshll.u32 %v450, 16
      %v821 = vrot.slane %v819, 5
      %v822 = vsel %vm462, %v817, %v821
      %v824 = vshrl.u32 %v451, 16
      %v826 = vrot.slane %v824, 4
      %v827 = vshll.u32 %v451, 16
      %v829 = vrot.slane %v827, 5
      %v830 = vor.u32 %v826, %v829
      %v831 = vrot.slane %v830, 4
      %v833 = vshll.u32 %v452, 16
      %v835 = vrot.slane %v833, 5
      %v836 = vsel %vm462, %v831, %v835
      %v837 = vshrl.u32 %v452, 16
      %v839 = vrot.slane %v837, 4
      %v840 = vor.u32 %v839, %v835
      %v841 = vrot.slane %v840, 4
      %v843 = vshll.u32 %v453, 16
      %v845 = vrot.slane %v843, 5
      %v846 = vsel %vm462, %v841, %v845
      %vm895 = vcmask 1042432
      %vm896 = vcmask 1046532
      %vm897 = vmor %vm895, %vm896
      %v898 = vrot.slane %v406, 5
      %v899 = vrot.slane %v898, 4
      %v900 = vrot.slane %v407, 5
      %v901 = vsel %vm897, %v899, %v900
      %v902 = vrot.slane %v900, 4
      %v903 = vrot.slane %v408, 5
      %v904 = vsel %vm897, %v902, %v903
      %v905 = vrot.slane %v409, 5
      %v906 = vrot.slane %v905, 4
      %v907 = vrot.slane %v410, 5
      %v908 = vsel %vm897, %v906, %v907
      %v909 = vrot.slane %v907, 4
      %v910 = vrot.slane %v411, 5
      %v911 = vsel %vm897, %v909, %v910
      %v912 = vrot.slane %v412, 5
      %v913 = vrot.slane %v912, 4
      %v914 = vrot.slane %v413, 5
      %v915 = vsel %vm897, %v913, %v914
      %v916 = vrot.slane %v914, 4
      %v917 = vrot.slane %v414, 5
      %v918 = vsel %vm897, %v916, %v917
      %v919 = vrot.slane %v415, 5
      %v920 = vrot.slane %v919, 4
      %v921 = vrot.slane %v416, 5
      %v922 = vsel %vm897, %v920, %v921
      %v923 = vrot.slane %v921, 4
      %v924 = vrot.slane %v417, 5
      %v925 = vsel %vm897, %v923, %v924
      %v926 = vrot.slane %v418, 5
      %v927 = vrot.slane %v926, 4
      %v928 = vrot.slane %v419, 5
      %v929 = vsel %vm897, %v927, %v928
      %v930 = vrot.slane %v928, 4
      %v931 = vrot.slane %v420, 5
      %v932 = vsel %vm897, %v930, %v931
      %v933 = vrot.slane %v421, 5
      %v934 = vrot.slane %v933, 4
      %v935 = vrot.slane %v422, 5
      %v936 = vsel %vm897, %v934, %v935
      %v937 = vrot.slane %v935, 4
      %v938 = vrot.slane %v423, 5
      %v939 = vsel %vm897, %v937, %v938
      %v940 = vrot.slane %v424, 5
      %v941 = vrot.slane %v940, 4
      %v942 = vrot.slane %v425, 5
      %v943 = vsel %vm897, %v941, %v942
      %v944 = vrot.slane %v942, 4
      %v945 = vrot.slane %v426, 5
      %v946 = vsel %vm897, %v944, %v945
      %v947 = vrot.slane %v427, 5
      %v948 = vrot.slane %v947, 4
      %v949 = vrot.slane %v428, 5
      %v950 = vsel %vm897, %v948, %v949
      %v951 = vrot.slane %v949, 4
      %v952 = vrot.slane %v429, 5
      %v953 = vsel %vm897, %v951, %v952
      %v954 = vrot.slane %v430, 5
      %v955 = vrot.slane %v954, 4
      %v956 = vrot.slane %v431, 5
      %v957 = vsel %vm897, %v955, %v956
      %v958 = vrot.slane %v956, 4
      %v959 = vrot.slane %v432, 5
      %v960 = vsel %vm897, %v958, %v959
      %v961 = vrot.slane %v433, 5
      %v962 = vrot.slane %v961, 4
      %v963 = vrot.slane %v434, 5
      %v964 = vsel %vm897, %v962, %v963
      %v965 = vrot.slane %v963, 4
      %v966 = vrot.slane %v435, 5
      %v967 = vsel %vm897, %v965, %v966
      %v968 = vrot.slane %v436, 5
      %v969 = vrot.slane %v968, 4
      %v970 = vrot.slane %v437, 5
      %v971 = vsel %vm897, %v969, %v970
      %v972 = vrot.slane %v970, 4
      %v973 = vrot.slane %v438, 5
      %v974 = vsel %vm897, %v972, %v973
      %v975 = vrot.slane %v439, 5
      %v976 = vrot.slane %v975, 4
      %v977 = vrot.slane %v440, 5
      %v978 = vsel %vm897, %v976, %v977
      %v979 = vrot.slane %v977, 4
      %v980 = vrot.slane %v441, 5
      %v981 = vsel %vm897, %v979, %v980
      %v982 = vrot.slane %v442, 5
      %v983 = vrot.slane %v982, 4
      %v984 = vrot.slane %v443, 5
      %v985 = vsel %vm897, %v983, %v984
      %v986 = vrot.slane %v984, 4
      %v987 = vrot.slane %v444, 5
      %v988 = vsel %vm897, %v986, %v987
      %v989 = vrot.slane %v445, 5
      %v990 = vrot.slane %v989, 4
      %v991 = vrot.slane %v446, 5
      %v992 = vsel %vm897, %v990, %v991
      %v993 = vrot.slane %v991, 4
      %v994 = vrot.slane %v447, 5
      %v995 = vsel %vm897, %v993, %v994
      %v996 = vrot.slane %v448, 5
      %v997 = vrot.slane %v996, 4
      %v998 = vrot.slane %v449, 5
      %v999 = vsel %vm897, %v997, %v998
      %v1000 = vrot.slane %v998, 4
      %v1001 = vrot.slane %v450, 5
      %v1002 = vsel %vm897, %v1000, %v1001
      %v1003 = vrot.slane %v451, 5
      %v1004 = vrot.slane %v1003, 4
      %v1005 = vrot.slane %v452, 5
      %v1006 = vsel %vm897, %v1004, %v1005
      %v1007 = vrot.slane %v1005, 4
      %v1008 = vrot.slane %v453, 5
      %v1009 = vsel %vm897, %v1007, %v1008
      %v1011 = vshrl.u32 %v454, 16
      %v1013 = vrot.slane %v1011, 4
      %v1014 = vshll.u32 %v454, 16
      %v1016 = vrot.slane %v1014, 5
      %v1017 = vor.u32 %v1013, %v1016
      %v1018 = vrot.slane %v1017, 4
      %v1020 = vshll.u32 %v455, 16
      %v1022 = vrot.slane %v1020, 5
      %v1023 = vsel %vm462, %v1018, %v1022
      %v1024 = vshrl.u32 %v455, 16
      %v1026 = vrot.slane %v1024, 4
      %v1027 = vor.u32 %v1026, %v1022
      %v1028 = vrot.slane %v1027, 4
      %v1030 = vshll.u32 %v456, 16
      %v1032 = vrot.slane %v1030, 5
      %v1033 = vsel %vm462, %v1028, %v1032
      %v1037 = vrot.slane %v454, 5
      %v1038 = vrot.slane %v1037, 4
      %v1039 = vrot.slane %v455, 5
      %v1040 = vsel %vm897, %v1038, %v1039
      %v1041 = vrot.slane %v1039, 4
      %v1042 = vrot.slane %v456, 5
      %v1043 = vsel %vm897, %v1041, %v1042
      %v1045 = vshrl.u32 %v457, 16
      %v1047 = vrot.slane %v1045, 4
      %v1048 = vshll.u32 %v457, 16
      %v1050 = vrot.slane %v1048, 5
      %v1051 = vor.u32 %v1047, %v1050
      %v1052 = vrot.slane %v1051, 4
      %v1054 = vshll.u32 %v458, 16
      %v1056 = vrot.slane %v1054, 5
      %v1057 = vsel %vm462, %v1052, %v1056
      %v1058 = vshrl.u32 %v458, 16
      %v1060 = vrot.slane %v1058, 4
      %v1061 = vor.u32 %v1060, %v1056
      %v1062 = vrot.slane %v1061, 4
      %v1064 = vshll.u32 %v459, 16
      %v1066 = vrot.slane %v1064, 5
      %v1067 = vsel %vm462, %v1062, %v1066
      %v1071 = vrot.slane %v457, 5
      %v1072 = vrot.slane %v1071, 4
      %v1073 = vrot.slane %v458, 5
      %v1074 = vsel %vm897, %v1072, %v1073
      %v1075 = vrot.slane %v1073, 4
      %v1076 = vrot.slane %v459, 5
      %v1077 = vsel %vm897, %v1075, %v1076
      %v1078 = vunpack.c.l.b16 %v406
      %v1079 = vunpack.c.l.b16 %v407
      %v1080 = vunpack.c.l.b16 %v409
      %v1081 = vunpack.c.l.b16 %v410
      %v1082 = vunpack.c.l.b16 %v412
      %v1083 = vunpack.c.l.b16 %v413
      %v1084 = vunpack.c.l.b16 %v415
      %v1085 = vunpack.c.l.b16 %v416
      %v1086 = vunpack.c.l.b16 %v418
      %v1087 = vunpack.c.l.b16 %v419
      %v1088 = vunpack.c.l.b16 %v421
      %v1089 = vunpack.c.l.b16 %v422
      %v1090 = vunpack.c.l.b16 %v424
      %v1091 = vunpack.c.l.b16 %v425
      %v1092 = vunpack.c.l.b16 %v427
      %v1093 = vunpack.c.l.b16 %v428
      %v1094 = vunpack.c.l.b16 %v430
      %v1095 = vunpack.c.l.b16 %v431
      %v1096 = vunpack.c.l.b16 %v433
      %v1097 = vunpack.c.l.b16 %v434
      %v1098 = vunpack.c.l.b16 %v436
      %v1099 = vunpack.c.l.b16 %v437
      %v1100 = vunpack.c.l.b16 %v439
      %v1101 = vunpack.c.l.b16 %v440
      %v1102 = vunpack.c.l.b16 %v442
      %v1103 = vunpack.c.l.b16 %v443
      %v1104 = vunpack.c.l.b16 %v445
      %v1105 = vunpack.c.l.b16 %v446
      %v1106 = vunpack.c.l.b16 %v448
      %v1107 = vunpack.c.l.b16 %v449
      %v1108 = vunpack.c.l.b16 %v451
      %v1109 = vunpack.c.l.b16 %v452
      %v1110 = vpack.c.b16 %v1079, %v1078
      %v1111 = vpack.c.b16 %v1081, %v1080
      %v1112 = vpack.c.b16 %v1083, %v1082
      %v1113 = vpack.c.b16 %v1085, %v1084
      %v1114 = vpack.c.b16 %v1087, %v1086
      %v1115 = vpack.c.b16 %v1089, %v1088
      %v1116 = vpack.c.b16 %v1091, %v1090
      %v1117 = vpack.c.b16 %v1093, %v1092
      %v1118 = vpack.c.b16 %v1095, %v1094
      %v1119 = vpack.c.b16 %v1097, %v1096
      %v1120 = vpack.c.b16 %v1099, %v1098
      %v1121 = vpack.c.b16 %v1101, %v1100
      %v1122 = vpack.c.b16 %v1103, %v1102
      %v1123 = vpack.c.b16 %v1105, %v1104
      %v1124 = vpack.c.b16 %v1107, %v1106
      %v1125 = vpack.c.b16 %v1109, %v1108
      %v1126 = vunpack.c.l.b16 %v476
      %v1127 = vunpack.c.l.b16 %v486
      %v1128 = vunpack.c.l.b16 %v500
      %v1129 = vunpack.c.l.b16 %v510
      %v1130 = vunpack.c.l.b16 %v524
      %v1131 = vunpack.c.l.b16 %v534
      %v1132 = vunpack.c.l.b16 %v548
      %v1133 = vunpack.c.l.b16 %v558
      %v1134 = vunpack.c.l.b16 %v572
      %v1135 = vunpack.c.l.b16 %v582
      %v1136 = vunpack.c.l.b16 %v596
      %v1137 = vunpack.c.l.b16 %v606
      %v1138 = vunpack.c.l.b16 %v620
      %v1139 = vunpack.c.l.b16 %v630
      %v1140 = vunpack.c.l.b16 %v644
      %v1141 = vunpack.c.l.b16 %v654
      %v1142 = vunpack.c.l.b16 %v668
      %v1143 = vunpack.c.l.b16 %v678
      %v1144 = vunpack.c.l.b16 %v692
      %v1145 = vunpack.c.l.b16 %v702
      %v1146 = vunpack.c.l.b16 %v716
      %v1147 = vunpack.c.l.b16 %v726
      %v1148 = vunpack.c.l.b16 %v740
      %v1149 = vunpack.c.l.b16 %v750
      %v1150 = vunpack.c.l.b16 %v764
      %v1151 = vunpack.c.l.b16 %v774
      %v1152 = vunpack.c.l.b16 %v788
      %v1153 = vunpack.c.l.b16 %v798
      %v1154 = vunpack.c.l.b16 %v812
      %v1155 = vunpack.c.l.b16 %v822
      %v1156 = vunpack.c.l.b16 %v836
      %v1157 = vunpack.c.l.b16 %v846
      %v1158 = vpack.c.b16 %v1127, %v1126
      %v1159 = vpack.c.b16 %v1129, %v1128
      %v1160 = vpack.c.b16 %v1131, %v1130
      %v1161 = vpack.c.b16 %v1133, %v1132
      %v1162 = vpack.c.b16 %v1135, %v1134
      %v1163 = vpack.c.b16 %v1137, %v1136
      %v1164 = vpack.c.b16 %v1139, %v1138
      %v1165 = vpack.c.b16 %v1141, %v1140
      %v1166 = vpack.c.b16 %v1143, %v1142
      %v1167 = vpack.c.b16 %v1145, %v1144
      %v1168 = vpack.c.b16 %v1147, %v1146
      %v1169 = vpack.c.b16 %v1149, %v1148
      %v1170 = vpack.c.b16 %v1151, %v1150
      %v1171 = vpack.c.b16 %v1153, %v1152
      %v1172 = vpack.c.b16 %v1155, %v1154
      %v1173 = vpack.c.b16 %v1157, %v1156
      %1174 = vrot.lane.b32.xlu0 %v1158, 8
      %v1175 = vpop.permute.xlu0 %1174
      %1176 = vrot.lane.b32.xlu0 %v1159, 8
      %v1177 = vpop.permute.xlu0 %1176
      %1178 = vrot.lane.b32.xlu0 %v1160, 8
      %v1179 = vpop.permute.xlu0 %1178
      %1180 = vrot.lane.b32.xlu0 %v1161, 8
      %v1181 = vpop.permute.xlu0 %1180
      %1182 = vrot.lane.b32.xlu0 %v1162, 8
      %v1183 = vpop.permute.xlu0 %1182
      %1184 = vrot.lane.b32.xlu0 %v1163, 8
      %v1185 = vpop.permute.xlu0 %1184
      %1186 = vrot.lane.b32.xlu0 %v1164, 8
      %v1187 = vpop.permute.xlu0 %1186
      %1188 = vrot.lane.b32.xlu0 %v1165, 8
      %v1189 = vpop.permute.xlu0 %1188
      %1190 = vrot.lane.b32.xlu0 %v1166, 8
      %v1191 = vpop.permute.xlu0 %1190
      %1192 = vrot.lane.b32.xlu0 %v1167, 8
      %v1193 = vpop.permute.xlu0 %1192
      %1194 = vrot.lane.b32.xlu0 %v1168, 8
      %v1195 = vpop.permute.xlu0 %1194
      %1196 = vrot.lane.b32.xlu0 %v1169, 8
      %v1197 = vpop.permute.xlu0 %1196
      %1198 = vrot.lane.b32.xlu0 %v1170, 8
      %v1199 = vpop.permute.xlu0 %1198
      %1200 = vrot.lane.b32.xlu0 %v1171, 8
      %v1201 = vpop.permute.xlu0 %1200
      %1202 = vrot.lane.b32.xlu0 %v1172, 8
      %v1203 = vpop.permute.xlu0 %1202
      %1204 = vrot.lane.b32.xlu0 %v1173, 8
      %v1205 = vpop.permute.xlu0 %1204
      %v1206 = vunpack.c.l.b16 %v901
      %v1207 = vunpack.c.l.b16 %v904
      %v1208 = vunpack.c.l.b16 %v908
      %v1209 = vunpack.c.l.b16 %v911
      %v1210 = vunpack.c.l.b16 %v915
      %v1211 = vunpack.c.l.b16 %v918
      %v1212 = vunpack.c.l.b16 %v922
      %v1213 = vunpack.c.l.b16 %v925
      %v1214 = vunpack.c.l.b16 %v929
      %v1215 = vunpack.c.l.b16 %v932
      %v1216 = vunpack.c.l.b16 %v936
      %v1217 = vunpack.c.l.b16 %v939
      %v1218 = vunpack.c.l.b16 %v943
      %v1219 = vunpack.c.l.b16 %v946
      %v1220 = vunpack.c.l.b16 %v950
      %v1221 = vunpack.c.l.b16 %v953
      %v1222 = vunpack.c.l.b16 %v957
      %v1223 = vunpack.c.l.b16 %v960
      %v1224 = vunpack.c.l.b16 %v964
      %v1225 = vunpack.c.l.b16 %v967
      %v1226 = vunpack.c.l.b16 %v971
      %v1227 = vunpack.c.l.b16 %v974
      %v1228 = vunpack.c.l.b16 %v978
      %v1229 = vunpack.c.l.b16 %v981
      %v1230 = vunpack.c.l.b16 %v985
      %v1231 = vunpack.c.l.b16 %v988
      %v1232 = vunpack.c.l.b16 %v992
      %v1233 = vunpack.c.l.b16 %v995
      %v1234 = vunpack.c.l.b16 %v999
      %v1235 = vunpack.c.l.b16 %v1002
      %v1236 = vunpack.c.l.b16 %v1006
      %v1237 = vunpack.c.l.b16 %v1009
      %v1238 = vpack.c.b16 %v1207, %v1206
      %v1239 = vpack.c.b16 %v1209, %v1208
      %v1240 = vpack.c.b16 %v1211, %v1210
      %v1241 = vpack.c.b16 %v1213, %v1212
      %v1242 = vpack.c.b16 %v1215, %v1214
      %v1243 = vpack.c.b16 %v1217, %v1216
      %v1244 = vpack.c.b16 %v1219, %v1218
      %v1245 = vpack.c.b16 %v1221, %v1220
      %v1246 = vpack.c.b16 %v1223, %v1222
      %v1247 = vpack.c.b16 %v1225, %v1224
      %v1248 = vpack.c.b16 %v1227, %v1226
      %v1249 = vpack.c.b16 %v1229, %v1228
      %v1250 = vpack.c.b16 %v1231, %v1230
      %v1251 = vpack.c.b16 %v1233, %v1232
      %v1252 = vpack.c.b16 %v1235, %v1234
      %v1253 = vpack.c.b16 %v1237, %v1236
      %1254 = vrot.lane.b32.xlu0 %v1238, 16
      %v1255 = vpop.permute.xlu0 %1254
      %1256 = vrot.lane.b32.xlu0 %v1239, 16
      %v1257 = vpop.permute.xlu0 %1256
      %1258 = vrot.lane.b32.xlu0 %v1240, 16
      %v1259 = vpop.permute.xlu0 %1258
      %1260 = vrot.lane.b32.xlu0 %v1241, 16
      %v1261 = vpop.permute.xlu0 %1260
      %1262 = vrot.lane.b32.xlu0 %v1242, 16
      %v1263 = vpop.permute.xlu0 %1262
      %1264 = vrot.lane.b32.xlu0 %v1243, 16
      %v1265 = vpop.permute.xlu0 %1264
      %1266 = vrot.lane.b32.xlu0 %v1244, 16
      %v1267 = vpop.permute.xlu0 %1266
      %1268 = vrot.lane.b32.xlu0 %v1245, 16
      %v1269 = vpop.permute.xlu0 %1268
      %1270 = vrot.lane.b32.xlu0 %v1246, 16
      %v1271 = vpop.permute.xlu0 %1270
      %1272 = vrot.lane.b32.xlu0 %v1247, 16
      %v1273 = vpop.permute.xlu0 %1272
      %1274 = vrot.lane.b32.xlu0 %v1248, 16
      %v1275 = vpop.permute.xlu0 %1274
      %1276 = vrot.lane.b32.xlu0 %v1249, 16
      %v1277 = vpop.permute.xlu0 %1276
      %1278 = vrot.lane.b32.xlu0 %v1250, 16
      %v1279 = vpop.permute.xlu0 %1278
      %1280 = vrot.lane.b32.xlu0 %v1251, 16
      %v1281 = vpop.permute.xlu0 %1280
      %1282 = vrot.lane.b32.xlu0 %v1252, 16
      %v1283 = vpop.permute.xlu0 %1282
      %1284 = vrot.lane.b32.xlu0 %v1253, 16
      %v1285 = vpop.permute.xlu0 %1284
      %v1286 = vunpack.c.l.b16 %v454
      %v1287 = vunpack.c.l.b16 %v455
      %v1288 = vpack.c.b16 %v1287, %v1286
      %1289 = vrot.lane.b32.xlu0 %v1111, 24
      %v1290 = vpop.permute.xlu0 %1289
      %1291 = vrot.lane.b32.xlu0 %v1112, 24
      %v1292 = vpop.permute.xlu0 %1291
      %1293 = vrot.lane.b32.xlu0 %v1113, 24
      %v1294 = vpop.permute.xlu0 %1293
      %1295 = vrot.lane.b32.xlu0 %v1114, 24
      %v1296 = vpop.permute.xlu0 %1295
      %1297 = vrot.lane.b32.xlu0 %v1115, 24
      %v1298 = vpop.permute.xlu0 %1297
      %1299 = vrot.lane.b32.xlu0 %v1116, 24
      %v1300 = vpop.permute.xlu0 %1299
      %1301 = vrot.lane.b32.xlu0 %v1117, 24
      %v1302 = vpop.permute.xlu0 %1301
      %1303 = vrot.lane.b32.xlu0 %v1118, 24
      %v1304 = vpop.permute.xlu0 %1303
      %1305 = vrot.lane.b32.xlu0 %v1119, 24
      %v1306 = vpop.permute.xlu0 %1305
      %1307 = vrot.lane.b32.xlu0 %v1120, 24
      %v1308 = vpop.permute.xlu0 %1307
      %1309 = vrot.lane.b32.xlu0 %v1121, 24
      %v1310 = vpop.permute.xlu0 %1309
      %1311 = vrot.lane.b32.xlu0 %v1122, 24
      %v1312 = vpop.permute.xlu0 %1311
      %1313 = vrot.lane.b32.xlu0 %v1123, 24
      %v1314 = vpop.permute.xlu0 %1313
      %1315 = vrot.lane.b32.xlu0 %v1124, 24
      %v1316 = vpop.permute.xlu0 %1315
      %1317 = vrot.lane.b32.xlu0 %v1125, 24
      %v1318 = vpop.permute.xlu0 %1317
      %1319 = vrot.lane.b32.xlu0 %v1288, 24
      %v1320 = vpop.permute.xlu0 %1319
      %v1321 = vunpack.c.l.b16 %v1023
      %v1322 = vunpack.c.l.b16 %v1033
      %v1323 = vpack.c.b16 %v1322, %v1321
      %1324 = vrot.lane.b32.xlu0 %v1159, 32
      %v1325 = vpop.permute.xlu0 %1324
      %1326 = vrot.lane.b32.xlu0 %v1160, 32
      %v1327 = vpop.permute.xlu0 %1326
      %1328 = vrot.lane.b32.xlu0 %v1161, 32
      %v1329 = vpop.permute.xlu0 %1328
      %1330 = vrot.lane.b32.xlu0 %v1162, 32
      %v1331 = vpop.permute.xlu0 %1330
      %1332 = vrot.lane.b32.xlu0 %v1163, 32
      %v1333 = vpop.permute.xlu0 %1332
      %1334 = vrot.lane.b32.xlu0 %v1164, 32
      %v1335 = vpop.permute.xlu0 %1334
      %1336 = vrot.lane.b32.xlu0 %v1165, 32
      %v1337 = vpop.permute.xlu0 %1336
      %1338 = vrot.lane.b32.xlu0 %v1166, 32
      %v1339 = vpop.permute.xlu0 %1338
      %1340 = vrot.lane.b32.xlu0 %v1167, 32
      %v1341 = vpop.permute.xlu0 %1340
      %1342 = vrot.lane.b32.xlu0 %v1168, 32
      %v1343 = vpop.permute.xlu0 %1342
      %1344 = vrot.lane.b32.xlu0 %v1169, 32
      %v1345 = vpop.permute.xlu0 %1344
      %1346 = vrot.lane.b32.xlu0 %v1170, 32
      %v1347 = vpop.permute.xlu0 %1346
      %1348 = vrot.lane.b32.xlu0 %v1171, 32
      %v1349 = vpop.permute.xlu0 %1348
      %1350 = vrot.lane.b32.xlu0 %v1172, 32
      %v1351 = vpop.permute.xlu0 %1350
      %1352 = vrot.lane.b32.xlu0 %v1173, 32
      %v1353 = vpop.permute.xlu0 %1352
      %1354 = vrot.lane.b32.xlu0 %v1323, 32
      %v1355 = vpop.permute.xlu0 %1354
      %v1356 = vunpack.c.l.b16 %v1040
      %v1357 = vunpack.c.l.b16 %v1043
      %v1358 = vpack.c.b16 %v1357, %v1356
      %1359 = vrot.lane.b32.xlu0 %v1239, 40
      %v1360 = vpop.permute.xlu0 %1359
      %1361 = vrot.lane.b32.xlu0 %v1240, 40
      %v1362 = vpop.permute.xlu0 %1361
      %1363 = vrot.lane.b32.xlu0 %v1241, 40
      %v1364 = vpop.permute.xlu0 %1363
      %1365 = vrot.lane.b32.xlu0 %v1242, 40
      %v1366 = vpop.permute.xlu0 %1365
      %1367 = vrot.lane.b32.xlu0 %v1243, 40
      %v1368 = vpop.permute.xlu0 %1367
      %1369 = vrot.lane.b32.xlu0 %v1244, 40
      %v1370 = vpop.permute.xlu0 %1369
      %1371 = vrot.lane.b32.xlu0 %v1245, 40
      %v1372 = vpop.permute.xlu0 %1371
      %1373 = vrot.lane.b32.xlu0 %v1246, 40
      %v1374 = vpop.permute.xlu0 %1373
      %1375 = vrot.lane.b32.xlu0 %v1247, 40
      %v1376 = vpop.permute.xlu0 %1375
      %1377 = vrot.lane.b32.xlu0 %v1248, 40
      %v1378 = vpop.permute.xlu0 %1377
      %1379 = vrot.lane.b32.xlu0 %v1249, 40
      %v1380 = vpop.permute.xlu0 %1379
      %1381 = vrot.lane.b32.xlu0 %v1250, 40
      %v1382 = vpop.permute.xlu0 %1381
      %1383 = vrot.lane.b32.xlu0 %v1251, 40
      %v1384 = vpop.permute.xlu0 %1383
      %1385 = vrot.lane.b32.xlu0 %v1252, 40
      %v1386 = vpop.permute.xlu0 %1385
      %1387 = vrot.lane.b32.xlu0 %v1253, 40
      %v1388 = vpop.permute.xlu0 %1387
      %1389 = vrot.lane.b32.xlu0 %v1358, 40
      %v1390 = vpop.permute.xlu0 %1389
      %v1391 = vunpack.c.l.b16 %v457
      %v1392 = vunpack.c.l.b16 %v458
      %v1393 = vpack.c.b16 %v1392, %v1391
      %1394 = vrot.lane.b32.xlu0 %v1112, 48
      %v1395 = vpop.permute.xlu0 %1394
      %1396 = vrot.lane.b32.xlu0 %v1113, 48
      %v1397 = vpop.permute.xlu0 %1396
      %1398 = vrot.lane.b32.xlu0 %v1114, 48
      %v1399 = vpop.permute.xlu0 %1398
      %1400 = vrot.lane.b32.xlu0 %v1115, 48
      %v1401 = vpop.permute.xlu0 %1400
      %1402 = vrot.lane.b32.xlu0 %v1116, 48
      %v1403 = vpop.permute.xlu0 %1402
      %1404 = vrot.lane.b32.xlu0 %v1117, 48
      %v1405 = vpop.permute.xlu0 %1404
      %1406 = vrot.lane.b32.xlu0 %v1118, 48
      %v1407 = vpop.permute.xlu0 %1406
      %1408 = vrot.lane.b32.xlu0 %v1119, 48
      %v1409 = vpop.permute.xlu0 %1408
      %1410 = vrot.lane.b32.xlu0 %v1120, 48
      %v1411 = vpop.permute.xlu0 %1410
      %1412 = vrot.lane.b32.xlu0 %v1121, 48
      %v1413 = vpop.permute.xlu0 %1412
      %1414 = vrot.lane.b32.xlu0 %v1122, 48
      %v1415 = vpop.permute.xlu0 %1414
      %1416 = vrot.lane.b32.xlu0 %v1123, 48
      %v1417 = vpop.permute.xlu0 %1416
      %1418 = vrot.lane.b32.xlu0 %v1124, 48
      %v1419 = vpop.permute.xlu0 %1418
      %1420 = vrot.lane.b32.xlu0 %v1125, 48
      %v1421 = vpop.permute.xlu0 %1420
      %1422 = vrot.lane.b32.xlu0 %v1288, 48
      %v1423 = vpop.permute.xlu0 %1422
      %1424 = vrot.lane.b32.xlu0 %v1393, 48
      %v1425 = vpop.permute.xlu0 %1424
      %v1426 = vunpack.c.l.b16 %v1057
      %v1427 = vunpack.c.l.b16 %v1067
      %v1428 = vpack.c.b16 %v1427, %v1426
      %1429 = vrot.lane.b32.xlu0 %v1160, 56
      %v1430 = vpop.permute.xlu0 %1429
      %1431 = vrot.lane.b32.xlu0 %v1161, 56
      %v1432 = vpop.permute.xlu0 %1431
      %1433 = vrot.lane.b32.xlu0 %v1162, 56
      %v1434 = vpop.permute.xlu0 %1433
      %1435 = vrot.lane.b32.xlu0 %v1163, 56
      %v1436 = vpop.permute.xlu0 %1435
      %1437 = vrot.lane.b32.xlu0 %v1164, 56
      %v1438 = vpop.permute.xlu0 %1437
      %1439 = vrot.lane.b32.xlu0 %v1165, 56
      %v1440 = vpop.permute.xlu0 %1439
      %1441 = vrot.lane.b32.xlu0 %v1166, 56
      %v1442 = vpop.permute.xlu0 %1441
      %1443 = vrot.lane.b32.xlu0 %v1167, 56
      %v1444 = vpop.permute.xlu0 %1443
      %1445 = vrot.lane.b32.xlu0 %v1168, 56
      %v1446 = vpop.permute.xlu0 %1445
      %1447 = vrot.lane.b32.xlu0 %v1169, 56
      %v1448 = vpop.permute.xlu0 %1447
      %1449 = vrot.lane.b32.xlu0 %v1170, 56
      %v1450 = vpop.permute.xlu0 %1449
      %1451 = vrot.lane.b32.xlu0 %v1171, 56
      %v1452 = vpop.permute.xlu0 %1451
      %1453 = vrot.lane.b32.xlu0 %v1172, 56
      %v1454 = vpop.permute.xlu0 %1453
      %1455 = vrot.lane.b32.xlu0 %v1173, 56
      %v1456 = vpop.permute.xlu0 %1455
      %1457 = vrot.lane.b32.xlu0 %v1323, 56
      %v1458 = vpop.permute.xlu0 %1457
      %1459 = vrot.lane.b32.xlu0 %v1428, 56
      %v1460 = vpop.permute.xlu0 %1459
      %v1461 = vunpack.c.l.b16 %v1074
      %v1462 = vunpack.c.l.b16 %v1077
      %v1463 = vpack.c.b16 %v1462, %v1461
      %1464 = vrot.lane.b32.xlu0 %v1240, 64
      %v1465 = vpop.permute.xlu0 %1464
      %1466 = vrot.lane.b32.xlu0 %v1241, 64
      %v1467 = vpop.permute.xlu0 %1466
      %1468 = vrot.lane.b32.xlu0 %v1242, 64
      %v1469 = vpop.permute.xlu0 %1468
      %1470 = vrot.lane.b32.xlu0 %v1243, 64
      %v1471 = vpop.permute.xlu0 %1470
      %1472 = vrot.lane.b32.xlu0 %v1244, 64
      %v1473 = vpop.permute.xlu0 %1472
      %1474 = vrot.lane.b32.xlu0 %v1245, 64
      %v1475 = vpop.permute.xlu0 %1474
      %1476 = vrot.lane.b32.xlu0 %v1246, 64
      %v1477 = vpop.permute.xlu0 %1476
      %1478 = vrot.lane.b32.xlu0 %v1247, 64
      %v1479 = vpop.permute.xlu0 %1478
      %1480 = vrot.lane.b32.xlu0 %v1248, 64
      %v1481 = vpop.permute.xlu0 %1480
      %1482 = vrot.lane.b32.xlu0 %v1249, 64
      %v1483 = vpop.permute.xlu0 %1482
      %1484 = vrot.lane.b32.xlu0 %v1250, 64
      %v1485 = vpop.permute.xlu0 %1484
      %1486 = vrot.lane.b32.xlu0 %v1251, 64
      %v1487 = vpop.permute.xlu0 %1486
      %1488 = vrot.lane.b32.xlu0 %v1252, 64
      %v1489 = vpop.permute.xlu0 %1488
      %1490 = vrot.lane.b32.xlu0 %v1253, 64
      %v1491 = vpop.permute.xlu0 %1490
      %1492 = vrot.lane.b32.xlu0 %v1358, 64
      %v1493 = vpop.permute.xlu0 %1492
      %1494 = vrot.lane.b32.xlu0 %v1463, 64
      %v1495 = vpop.permute.xlu0 %1494
      %vm1496 = vcmask 64512
      %v1499 = vsel %vm1496, %v1110, %v1175
      %v1502 = vsel %vm1496, %v1111, %v1177
      %v1505 = vsel %vm1496, %v1112, %v1179
      %v1508 = vsel %vm1496, %v1113, %v1181
      %v1511 = vsel %vm1496, %v1114, %v1183
      %v1514 = vsel %vm1496, %v1115, %v1185
      %v1517 = vsel %vm1496, %v1116, %v1187
      %v1520 = vsel %vm1496, %v1117, %v1189
      %v1523 = vsel %vm1496, %v1118, %v1191
      %v1526 = vsel %vm1496, %v1119, %v1193
      %v1529 = vsel %vm1496, %v1120, %v1195
      %v1532 = vsel %vm1496, %v1121, %v1197
      %v1535 = vsel %vm1496, %v1122, %v1199
      %v1538 = vsel %vm1496, %v1123, %v1201
      %v1541 = vsel %vm1496, %v1124, %v1203
      %v1544 = vsel %vm1496, %v1125, %v1205
      %vm1545 = vcmask 130048
      %v1547 = vsel %vm1545, %v1499, %v1255
      %v1549 = vsel %vm1545, %v1502, %v1257
      %v1551 = vsel %vm1545, %v1505, %v1259
      %v1553 = vsel %vm1545, %v1508, %v1261
      %v1555 = vsel %vm1545, %v1511, %v1263
      %v1557 = vsel %vm1545, %v1514, %v1265
      %v1559 = vsel %vm1545, %v1517, %v1267
      %v1561 = vsel %vm1545, %v1520, %v1269
      %v1563 = vsel %vm1545, %v1523, %v1271
      %v1565 = vsel %vm1545, %v1526, %v1273
      %v1567 = vsel %vm1545, %v1529, %v1275
      %v1569 = vsel %vm1545, %v1532, %v1277
      %v1571 = vsel %vm1545, %v1535, %v1279
      %v1573 = vsel %vm1545, %v1538, %v1281
      %v1575 = vsel %vm1545, %v1541, %v1283
      %v1577 = vsel %vm1545, %v1544, %v1285
      %vm1578 = vcmask 195584
      %v1580 = vsel %vm1578, %v1547, %v1290
      %v1582 = vsel %vm1578, %v1549, %v1292
      %v1584 = vsel %vm1578, %v1551, %v1294
      %v1586 = vsel %vm1578, %v1553, %v1296
      %v1588 = vsel %vm1578, %v1555, %v1298
      %v1590 = vsel %vm1578, %v1557, %v1300
      %v1592 = vsel %vm1578, %v1559, %v1302
      %v1594 = vsel %vm1578, %v1561, %v1304
      %v1596 = vsel %vm1578, %v1563, %v1306
      %v1598 = vsel %vm1578, %v1565, %v1308
      %v1600 = vsel %vm1578, %v1567, %v1310
      %v1602 = vsel %vm1578, %v1569, %v1312
      %v1604 = vsel %vm1578, %v1571, %v1314
      %v1606 = vsel %vm1578, %v1573, %v1316
      %v1608 = vsel %vm1578, %v1575, %v1318
      %v1610 = vsel %vm1578, %v1577, %v1320
      %vm1611 = vcmask 261120
      %v1613 = vsel %vm1611, %v1580, %v1325
      %v1615 = vsel %vm1611, %v1582, %v1327
      %v1617 = vsel %vm1611, %v1584, %v1329
      %v1619 = vsel %vm1611, %v1586, %v1331
      %v1621 = vsel %vm1611, %v1588, %v1333
      %v1623 = vsel %vm1611, %v1590, %v1335
      %v1625 = vsel %vm1611, %v1592, %v1337
      %v1627 = vsel %vm1611, %v1594, %v1339
      %v1629 = vsel %vm1611, %v1596, %v1341
      %v1631 = vsel %vm1611, %v1598, %v1343
      %v1633 = vsel %vm1611, %v1600, %v1345
      %v1635 = vsel %vm1611, %v1602, %v1347
      %v1637 = vsel %vm1611, %v1604, %v1349
      %v1639 = vsel %vm1611, %v1606, %v1351
      %v1641 = vsel %vm1611, %v1608, %v1353
      %v1643 = vsel %vm1611, %v1610, %v1355
      %vm1644 = vcmask 326656
      %v1646 = vsel %vm1644, %v1613, %v1360
      %v1648 = vsel %vm1644, %v1615, %v1362
      %v1650 = vsel %vm1644, %v1617, %v1364
      %v1652 = vsel %vm1644, %v1619, %v1366
      %v1654 = vsel %vm1644, %v1621, %v1368
      %v1656 = vsel %vm1644, %v1623, %v1370
      %v1658 = vsel %vm1644, %v1625, %v1372
      %v1660 = vsel %vm1644, %v1627, %v1374
      %v1662 = vsel %vm1644, %v1629, %v1376
      %v1664 = vsel %vm1644, %v1631, %v1378
      %v1666 = vsel %vm1644, %v1633, %v1380
      %v1668 = vsel %vm1644, %v1635, %v1382
      %v1670 = vsel %vm1644, %v1637, %v1384
      %v1672 = vsel %vm1644, %v1639, %v1386
      %v1674 = vsel %vm1644, %v1641, %v1388
      %v1676 = vsel %vm1644, %v1643, %v1390
      %vm1677 = vcmask 392192
      %v1679 = vsel %vm1677, %v1646, %v1395
      %v1681 = vsel %vm1677, %v1648, %v1397
      %v1683 = vsel %vm1677, %v1650, %v1399
      %v1685 = vsel %vm1677, %v1652, %v1401
      %v1687 = vsel %vm1677, %v1654, %v1403
      %v1689 = vsel %vm1677, %v1656, %v1405
      %v1691 = vsel %vm1677, %v1658, %v1407
      %v1693 = vsel %vm1677, %v1660, %v1409
      %v1695 = vsel %vm1677, %v1662, %v1411
      %v1697 = vsel %vm1677, %v1664, %v1413
      %v1699 = vsel %vm1677, %v1666, %v1415
      %v1701 = vsel %vm1677, %v1668, %v1417
      %v1703 = vsel %vm1677, %v1670, %v1419
      %v1705 = vsel %vm1677, %v1672, %v1421
      %v1707 = vsel %vm1677, %v1674, %v1423
      %v1709 = vsel %vm1677, %v1676, %v1425
      %vm1710 = vcmask 457728
      %v1712 = vsel %vm1710, %v1679, %v1430
      %v1714 = vsel %vm1710, %v1681, %v1432
      %v1716 = vsel %vm1710, %v1683, %v1434
      %v1718 = vsel %vm1710, %v1685, %v1436
      %v1720 = vsel %vm1710, %v1687, %v1438
      %v1722 = vsel %vm1710, %v1689, %v1440
      %v1724 = vsel %vm1710, %v1691, %v1442
      %v1726 = vsel %vm1710, %v1693, %v1444
      %v1728 = vsel %vm1710, %v1695, %v1446
      %v1730 = vsel %vm1710, %v1697, %v1448
      %v1732 = vsel %vm1710, %v1699, %v1450
      %v1734 = vsel %vm1710, %v1701, %v1452
      %v1736 = vsel %vm1710, %v1703, %v1454
      %v1738 = vsel %vm1710, %v1705, %v1456
      %v1740 = vsel %vm1710, %v1707, %v1458
      %v1742 = vsel %vm1710, %v1709, %v1460
      %vm1743 = vcmask 523264
      %v1745 = vsel %vm1743, %v1712, %v1465
      %v1747 = vsel %vm1743, %v1714, %v1467
      %v1749 = vsel %vm1743, %v1716, %v1469
      %v1751 = vsel %vm1743, %v1718, %v1471
      %v1753 = vsel %vm1743, %v1720, %v1473
      %v1755 = vsel %vm1743, %v1722, %v1475
      %v1757 = vsel %vm1743, %v1724, %v1477
      %v1759 = vsel %vm1743, %v1726, %v1479
      %v1761 = vsel %vm1743, %v1728, %v1481
      %v1763 = vsel %vm1743, %v1730, %v1483
      %v1765 = vsel %vm1743, %v1732, %v1485
      %v1767 = vsel %vm1743, %v1734, %v1487
      %v1769 = vsel %vm1743, %v1736, %v1489
      %v1771 = vsel %vm1743, %v1738, %v1491
      %v1773 = vsel %vm1743, %v1740, %v1493
      %v1775 = vsel %vm1743, %v1742, %v1495
      %v1776 = vld [vmem:[%s2] sm:$0xf]
      %v1777 = vld [vmem:[%s2 + $0x4] sm:$0xf]
      %v1778 = vld [vmem:[%s2 + $0x8] sm:$0xf]
      %v1779 = vld [vmem:[%s2 + $0xc] sm:$0xf]
      %v1780 = vld [vmem:[%s2 + $0x10] sm:$0xf]
      %v1781 = vld [vmem:[%s2 + $0x14] sm:$0xf]
      %v1782 = vld [vmem:[%s2 + $0x18] sm:$0xf]
      %v1783 = vld [vmem:[%s2 + $0x1c] sm:$0xf]
      %v1784 = vld [vmem:[%s2 + $0x20] sm:$0xf]
      %v1785 = vld [vmem:[%s385] sm:$0xf]
      %v1786 = vld [vmem:[%s385 + $0x4] sm:$0xf]
      %v1787 = vld [vmem:[%s385 + $0x8] sm:$0xf]
      %v1788 = vld [vmem:[%s385 + $0xc] sm:$0xf]
      %v1789 = vld [vmem:[%s385 + $0x10] sm:$0xf]
      %v1790 = vld [vmem:[%s385 + $0x14] sm:$0xf]
      %v1791 = vld [vmem:[%s385 + $0x18] sm:$0xf]
      %v1792 = vld [vmem:[%s385 + $0x1c] sm:$0xf]
      %v1793 = vld [vmem:[%s385 + $0x20] sm:$0xf]
      %v1794 = vld [vmem:[%s385 + $0x24] sm:$0xf]
      %v1795 = vld [vmem:[%s385 + $0x28] sm:$0xf]
      %v1796 = vld [vmem:[%s385 + $0x2c] sm:$0xf]
      %v1797 = vld [vmem:[%s385 + $0x30] sm:$0xf]
      %v1798 = vld [vmem:[%s385 + $0x34] sm:$0xf]
      %v1799 = vld [vmem:[%s385 + $0x38] sm:$0xf]
      %v1800 = vld [vmem:[%s385 + $0x3c] sm:$0xf]
      %v1801 = vld [vmem:[%s385 + $0x40] sm:$0xf]
      %v1802 = vld [vmem:[%s385 + $0x44] sm:$0xf]
      %v1803 = vld [vmem:[%s385 + $0x48] sm:$0xf]
      %v1804 = vld [vmem:[%s385 + $0x4c] sm:$0xf]
      %v1805 = vld [vmem:[%s385 + $0x50] sm:$0xf]
      %v1806 = vld [vmem:[%s385 + $0x54] sm:$0xf]
      %v1807 = vld [vmem:[%s385 + $0x58] sm:$0xf]
      %v1808 = vld [vmem:[%s385 + $0x5c] sm:$0xf]
      %v1809 = vld [vmem:[%s385 + $0x60] sm:$0xf]
      %v1810 = vld [vmem:[%s385 + $0x64] sm:$0xf]
      %v1811 = vld [vmem:[%s385 + $0x68] sm:$0xf]
      %v1812 = vld [vmem:[%s385 + $0x6c] sm:$0xf]
      %v1813 = vld [vmem:[%s385 + $0x70] sm:$0xf]
      %v1814 = vld [vmem:[%s385 + $0x74] sm:$0xf]
      %v1815 = vld [vmem:[%s385 + $0x78] sm:$0xf]
      %v1816 = vld [vmem:[%s385 + $0x7c] sm:$0xf]
      %v1817 = vunpack.c.l.bf16 %v1785
      %v1818 = vunpack.c.l.bf16 %v1786
      %v1819 = vunpack.c.l.bf16 %v1787
      %v1820 = vunpack.c.l.bf16 %v1788
      %v1821 = vunpack.c.l.bf16 %v1789
      %v1822 = vunpack.c.l.bf16 %v1790
      %v1823 = vunpack.c.l.bf16 %v1791
      %v1824 = vunpack.c.l.bf16 %v1792
      %v1825 = vunpack.c.l.bf16 %v1793
      %v1826 = vunpack.c.l.bf16 %v1794
      %v1827 = vunpack.c.l.bf16 %v1795
      %v1828 = vunpack.c.l.bf16 %v1796
      %v1829 = vunpack.c.l.bf16 %v1797
      %v1830 = vunpack.c.l.bf16 %v1798
      %v1831 = vunpack.c.l.bf16 %v1799
      %v1832 = vunpack.c.l.bf16 %v1800
      %v1833 = vunpack.c.l.bf16 %v1801
      %v1834 = vunpack.c.l.bf16 %v1802
      %v1835 = vunpack.c.l.bf16 %v1803
      %v1836 = vunpack.c.l.bf16 %v1804
      %v1837 = vunpack.c.l.bf16 %v1805
      %v1838 = vunpack.c.l.bf16 %v1806
      %v1839 = vunpack.c.l.bf16 %v1807
      %v1840 = vunpack.c.l.bf16 %v1808
      %v1841 = vunpack.c.l.bf16 %v1809
      %v1842 = vunpack.c.l.bf16 %v1810
      %v1843 = vunpack.c.l.bf16 %v1811
      %v1844 = vunpack.c.l.bf16 %v1812
      %v1845 = vunpack.c.l.bf16 %v1813
      %v1846 = vunpack.c.l.bf16 %v1814
      %v1847 = vunpack.c.l.bf16 %v1815
      %v1848 = vunpack.c.l.bf16 %v1816
      %v1858 = vunpack.c.l.b16 %v1776
      %v1859 = vunpack.c.l.b16 %v1777
      %v1860 = vunpack.c.l.b16 %v1778
      %v1861 = vunpack.c.l.b16 %v1779
      %v1862 = vunpack.c.l.b16 %v1780
      %v1863 = vunpack.c.l.b16 %v1781
      %v1864 = vunpack.c.l.b16 %v1782
      %v1865 = vunpack.c.l.b16 %v1783
      %v1866 = vunpack.c.l.b16 %v1784
      %v1867 = vpack.c.b16 %v1859, %v1858
      %v1868 = vpack.c.b16 %v1861, %v1860
      %v1869 = vpack.c.b16 %v1863, %v1862
      %v1870 = vpack.c.b16 %v1865, %v1864
      %v1871 = vpack.c.b16 %v1866, %v1866
      %vm1876 = vcmask 588800
      %v1877 = vsel %vm1876, %v1745, 0
      %v1879 = vsel %vm1876, %v1747, 0
      %v1881 = vsel %vm1876, %v1749, 0
      %v1883 = vsel %vm1876, %v1751, 0
      %v1885 = vsel %vm1876, %v1753, 0
      %v1887 = vsel %vm1876, %v1755, 0
      %v1889 = vsel %vm1876, %v1757, 0
      %v1891 = vsel %vm1876, %v1759, 0
      %v1893 = vsel %vm1876, %v1761, 0
      %v1895 = vsel %vm1876, %v1763, 0
      %v1897 = vsel %vm1876, %v1765, 0
      %v1899 = vsel %vm1876, %v1767, 0
      %v1901 = vsel %vm1876, %v1769, 0
      %v1903 = vsel %vm1876, %v1771, 0
      %v1905 = vsel %vm1876, %v1773, 0
      %v1907 = vsel %vm1876, %v1775, 0
      %vm1909 = vcmask 1043456
      %v1911 = vsel %vm1909, %v1871, 0
      %1913 = vmatprep.subr.bf16.mxu0 0
      %1914 = vmatpush1.bf16.msra.mxu0 %v1867
      %1915 = vmatprep.subr.bf16.mxu0 0
      %1916 = vmatpush1.bf16.msra.mxu0 %v1868
      %1917 = vmatprep.subr.bf16.mxu0 0
      %1918 = vmatpush1.bf16.msra.mxu0 %v1869
      %1919 = vmatprep.subr.bf16.mxu0 0
      %1920 = vmatpush1.bf16.msra.mxu0 %v1870
      %1921 = vmatprep.subr.bf16.mxu0 0
      %1922 = vmatpush1.bf16.msra.mxu0 %v1911
      %1923 = vmatprep.subr.bf16.mxu0 0
      %1924 = vmatpush1.bf16.msra.mxu0 0
      %1925 = vmatprep.subr.bf16.mxu0 0
      %1926 = vmatpush1.bf16.msra.mxu0 0
      %1927 = vmatprep.subr.bf16.mxu0 0
      %1928 = vmatpush1.bf16.msra.mxu0 0
      %1929 = vmatprep.subr.bf16.mxu0 0
      %1930 = vmatpush1.bf16.msra.mxu0 0
      %1931 = vmatprep.subr.bf16.mxu0 0
      %1932 = vmatpush1.bf16.msra.mxu0 0
      %1933 = vmatprep.subr.bf16.mxu0 0
      %1934 = vmatpush1.bf16.msra.mxu0 0
      %1935 = vmatprep.subr.bf16.mxu0 0
      %1936 = vmatpush1.bf16.msra.mxu0 0
      %1937 = vmatprep.subr.bf16.mxu0 0
      %1938 = vmatpush1.bf16.msra.mxu0 0
      %1939 = vmatprep.subr.bf16.mxu0 0
      %1940 = vmatpush1.bf16.msra.mxu0 0
      %1941 = vmatprep.subr.bf16.mxu0 0
      %1942 = vmatpush1.bf16.msra.mxu0 0
      %1943 = vmatprep.subr.bf16.mxu0 0
      %1944 = vmatpush1.bf16.msra.mxu0 0
      %1945 = vmatprep.mubr.bf16.mxu0 0
      %1946 = vmatmul.mubr.bf16.gmra.mrb[0].mxu0 %v1877
      %v1947 = vpop.f32.mrb[0].mxu0
      %v1948 = vadd.f32 %v1817, %v1947
      %v1949 = vpop.f32.mrb[0].mxu0
      %v1950 = vpop.f32.mrb[0].mxu0
      %v1951 = vadd.f32 %v1818, %v1950
      %v1952 = vpop.f32.mrb[0].mxu0
      %1953 = vmatprep.mubr.bf16.mxu0 0
      %1954 = vmatmul.mubr.bf16.gmra.mrb[0].mxu0 %v1879
      %v1955 = vpop.f32.mrb[0].mxu0
      %v1956 = vadd.f32 %v1819, %v1955
      %v1957 = vpop.f32.mrb[0].mxu0
      %v1958 = vpop.f32.mrb[0].mxu0
      %v1959 = vadd.f32 %v1820, %v1958
      %v1960 = vpop.f32.mrb[0].mxu0
      %1961 = vmatprep.mubr.bf16.mxu0 0
      %1962 = vmatmul.mubr.bf16.gmra.mrb[0].mxu0 %v1881
      %v1963 = vpop.f32.mrb[0].mxu0
      %v1964 = vadd.f32 %v1821, %v1963
      %v1965 = vpop.f32.mrb[0].mxu0
      %v1966 = vpop.f32.mrb[0].mxu0
      %v1967 = vadd.f32 %v1822, %v1966
      %v1968 = vpop.f32.mrb[0].mxu0
      %1969 = vmatprep.mubr.bf16.mxu0 0
      %1970 = vmatmul.mubr.bf16.gmra.mrb[0].mxu0 %v1883
      %v1971 = vpop.f32.mrb[0].mxu0
      %v1972 = vadd.f32 %v1823, %v1971
      %v1973 = vpop.f32.mrb[0].mxu0
      %v1974 = vpop.f32.mrb[0].mxu0
      %v1975 = vadd.f32 %v1824, %v1974
      %v1976 = vpop.f32.mrb[0].mxu0
      %1977 = vmatprep.mubr.bf16.mxu0 0
      %1978 = vmatmul.mubr.bf16.gmra.mrb[0].mxu0 %v1885
      %v1979 = vpop.f32.mrb[0].mxu0
      %v1980 = vadd.f32 %v1825, %v1979
      %v1981 = vpop.f32.mrb[0].mxu0
      %v1982 = vpop.f32.mrb[0].mxu0
      %v1983 = vadd.f32 %v1826, %v1982
      %v1984 = vpop.f32.mrb[0].mxu0
      %1985 = vmatprep.mubr.bf16.mxu0 0
      %1986 = vmatmul.mubr.bf16.gmra.mrb[0].mxu0 %v1887
      %v1987 = vpop.f32.mrb[0].mxu0
      %v1988 = vadd.f32 %v1827, %v1987
      %v1989 = vpop.f32.mrb[0].mxu0
      %v1990 = vpop.f32.mrb[0].mxu0
      %v1991 = vadd.f32 %v1828, %v1990
      %v1992 = vpop.f32.mrb[0].mxu0
      %1993 = vmatprep.mubr.bf16.mxu0 0
      %1994 = vmatmul.mubr.bf16.gmra.mrb[0].mxu0 %v1889
      %v1995 = vpop.f32.mrb[0].mxu0
      %v1996 = vadd.f32 %v1829, %v1995
      %v1997 = vpop.f32.mrb[0].mxu0
      %v1998 = vpop.f32.mrb[0].mxu0
      %v1999 = vadd.f32 %v1830, %v1998
      %v2000 = vpop.f32.mrb[0].mxu0
      %2001 = vmatprep.mubr.bf16.mxu0 0
      %2002 = vmatmul.mubr.bf16.gmra.mrb[0].mxu0 %v1891
      %v2003 = vpop.f32.mrb[0].mxu0
      %v2004 = vadd.f32 %v1831, %v2003
      %v2005 = vpop.f32.mrb[0].mxu0
      %v2006 = vpop.f32.mrb[0].mxu0
      %v2007 = vadd.f32 %v1832, %v2006
      %v2008 = vpop.f32.mrb[0].mxu0
      %2009 = vmatprep.mubr.bf16.mxu0 0
      %2010 = vmatmul.mubr.bf16.gmra.mrb[0].mxu0 %v1893
      %v2011 = vpop.f32.mrb[0].mxu0
      %v2012 = vadd.f32 %v1833, %v2011
      %v2013 = vpop.f32.mrb[0].mxu0
      %v2014 = vpop.f32.mrb[0].mxu0
      %v2015 = vadd.f32 %v1834, %v2014
      %v2016 = vpop.f32.mrb[0].mxu0
      %2017 = vmatprep.mubr.bf16.mxu0 0
      %2018 = vmatmul.mubr.bf16.gmra.mrb[0].mxu0 %v1895
      %v2019 = vpop.f32.mrb[0].mxu0
      %v2020 = vadd.f32 %v1835, %v2019
      %v2021 = vpop.f32.mrb[0].mxu0
      %v2022 = vpop.f32.mrb[0].mxu0
      %v2023 = vadd.f32 %v1836, %v2022
      %v2024 = vpop.f32.mrb[0].mxu0
      %2025 = vmatprep.mubr.bf16.mxu0 0
      %2026 = vmatmul.mubr.bf16.gmra.mrb[0].mxu0 %v1897
      %v2027 = vpop.f32.mrb[0].mxu0
      %v2028 = vadd.f32 %v1837, %v2027
      %v2029 = vpop.f32.mrb[0].mxu0
      %v2030 = vpop.f32.mrb[0].mxu0
      %v2031 = vadd.f32 %v1838, %v2030
      %v2032 = vpop.f32.mrb[0].mxu0
      %2033 = vmatprep.mubr.bf16.mxu0 0
      %2034 = vmatmul.mubr.bf16.gmra.mrb[0].mxu0 %v1899
      %v2035 = vpop.f32.mrb[0].mxu0
      %v2036 = vadd.f32 %v1839, %v2035
      %v2037 = vpop.f32.mrb[0].mxu0
      %v2038 = vpop.f32.mrb[0].mxu0
      %v2039 = vadd.f32 %v1840, %v2038
      %v2040 = vpop.f32.mrb[0].mxu0
      %2041 = vmatprep.mubr.bf16.mxu0 0
      %2042 = vmatmul.mubr.bf16.gmra.mrb[0].mxu0 %v1901
      %v2043 = vpop.f32.mrb[0].mxu0
      %v2044 = vadd.f32 %v1841, %v2043
      %v2045 = vpop.f32.mrb[0].mxu0
      %v2046 = vpop.f32.mrb[0].mxu0
      %v2047 = vadd.f32 %v1842, %v2046
      %v2048 = vpop.f32.mrb[0].mxu0
      %2049 = vmatprep.mubr.bf16.mxu0 0
      %2050 = vmatmul.mubr.bf16.gmra.mrb[0].mxu0 %v1903
      %v2051 = vpop.f32.mrb[0].mxu0
      %v2052 = vadd.f32 %v1843, %v2051
      %v2053 = vpop.f32.mrb[0].mxu0
      %v2054 = vpop.f32.mrb[0].mxu0
      %v2055 = vadd.f32 %v1844, %v2054
      %v2056 = vpop.f32.mrb[0].mxu0
      %2057 = vmatprep.mubr.bf16.mxu0 0
      %2058 = vmatmul.mubr.bf16.gmra.mrb[0].mxu0 %v1905
      %v2059 = vpop.f32.mrb[0].mxu0
      %v2060 = vadd.f32 %v1845, %v2059
      %v2061 = vpop.f32.mrb[0].mxu0
      %v2062 = vpop.f32.mrb[0].mxu0
      %v2063 = vadd.f32 %v1846, %v2062
      %v2064 = vpop.f32.mrb[0].mxu0
      %2065 = vmatprep.mubr.bf16.mxu0 0
      %2066 = vmatmul.mubr.bf16.gmra.mrb[0].mxu0 %v1907
      %v2067 = vpop.f32.mrb[0].mxu0
      %v2068 = vadd.f32 %v1847, %v2067
      %v2069 = vpop.f32.mrb[0].mxu0
      %v2070 = vpop.f32.mrb[0].mxu0
      %v2071 = vadd.f32 %v1848, %v2070
      %v2072 = vpop.f32.mrb[0].mxu0
      %2073 = vdwg.mxu0
      %v2074 = vsel %vm1496, %v1948, 0.0
      %v2075 = vsel %vm1496, %v1951, 0.0
      %v2076 = vadd.f32 %v2074, %v2075
      %v2077 = vsel %vm1496, %v1956, 0.0
      %v2078 = vadd.f32 %v2076, %v2077
      %v2079 = vsel %vm1496, %v1959, 0.0
      %v2080 = vadd.f32 %v2078, %v2079
      %v2081 = vsel %vm1496, %v1964, 0.0
      %v2082 = vadd.f32 %v2080, %v2081
      %v2083 = vsel %vm1496, %v1967, 0.0
      %v2084 = vadd.f32 %v2082, %v2083
      %v2085 = vsel %vm1496, %v1972, 0.0
      %v2086 = vadd.f32 %v2084, %v2085
      %v2087 = vsel %vm1496, %v1975, 0.0
      %v2088 = vadd.f32 %v2086, %v2087
      %v2089 = vsel %vm1496, %v1980, 0.0
      %v2090 = vadd.f32 %v2088, %v2089
      %v2091 = vsel %vm1496, %v1983, 0.0
      %v2092 = vadd.f32 %v2090, %v2091
      %v2093 = vsel %vm1496, %v1988, 0.0
      %v2094 = vadd.f32 %v2092, %v2093
      %v2095 = vsel %vm1496, %v1991, 0.0
      %v2096 = vadd.f32 %v2094, %v2095
      %v2097 = vsel %vm1496, %v1996, 0.0
      %v2098 = vadd.f32 %v2096, %v2097
      %v2099 = vsel %vm1496, %v1999, 0.0
      %v2100 = vadd.f32 %v2098, %v2099
      %v2101 = vsel %vm1496, %v2004, 0.0
      %v2102 = vadd.f32 %v2100, %v2101
      %v2103 = vsel %vm1496, %v2007, 0.0
      %v2104 = vadd.f32 %v2102, %v2103
      %v2105 = vsel %vm1496, %v2012, 0.0
      %v2106 = vadd.f32 %v2104, %v2105
      %v2107 = vsel %vm1496, %v2015, 0.0
      %v2108 = vadd.f32 %v2106, %v2107
      %v2109 = vsel %vm1496, %v2020, 0.0
      %v2110 = vadd.f32 %v2108, %v2109
      %v2111 = vsel %vm1496, %v2023, 0.0
      %v2112 = vadd.f32 %v2110, %v2111
      %v2113 = vsel %vm1496, %v2028, 0.0
      %v2114 = vadd.f32 %v2112, %v2113
      %v2115 = vsel %vm1496, %v2031, 0.0
      %v2116 = vadd.f32 %v2114, %v2115
      %v2117 = vsel %vm1496, %v2036, 0.0
      %v2118 = vadd.f32 %v2116, %v2117
      %v2119 = vsel %vm1496, %v2039, 0.0
      %v2120 = vadd.f32 %v2118, %v2119
      %v2121 = vsel %vm1496, %v2044, 0.0
      %v2122 = vadd.f32 %v2120, %v2121
      %v2123 = vsel %vm1496, %v2047, 0.0
      %v2124 = vadd.f32 %v2122, %v2123
      %v2125 = vsel %vm1496, %v2052, 0.0
      %v2126 = vadd.f32 %v2124, %v2125
      %v2127 = vsel %vm1496, %v2055, 0.0
      %v2128 = vadd.f32 %v2126, %v2127
      %v2129 = vsel %vm1496, %v2060, 0.0
      %v2130 = vadd.f32 %v2128, %v2129
      %v2131 = vsel %vm1496, %v2063, 0.0
      %v2132 = vadd.f32 %v2130, %v2131
      %v2133 = vsel %vm1496, %v2068, 0.0
      %v2134 = vadd.f32 %v2132, %v2133
      %v2135 = vsel %vm1496, %v2071, 0.0
      %v2136 = vadd.f32 %v2134, %v2135
      %v2137 = vrot.slane %v2136, 4
      %v2138 = vadd.f32 %v2136, %v2137
      %v2139 = vrot.slane %v2138, 2
      %v2140 = vadd.f32 %v2138, %v2139
      %v2141 = vrot.slane %v2140, 1
      %v2142 = vadd.f32 %v2140, %v2141
      %v2143 = vmul.f32 %v1948, %v1948
      %v2144 = vmul.f32 %v1951, %v1951
      %v2145 = vmul.f32 %v1956, %v1956
      %v2146 = vmul.f32 %v1959, %v1959
      %v2147 = vmul.f32 %v1964, %v1964
      %v2148 = vmul.f32 %v1967, %v1967
      %v2149 = vmul.f32 %v1972, %v1972
      %v2150 = vmul.f32 %v1975, %v1975
      %v2151 = vmul.f32 %v1980, %v1980
      %v2152 = vmul.f32 %v1983, %v1983
      %v2153 = vmul.f32 %v1988, %v1988
      %v2154 = vmul.f32 %v1991, %v1991
      %v2155 = vmul.f32 %v1996, %v1996
      %v2156 = vmul.f32 %v1999, %v1999
      %v2157 = vmul.f32 %v2004, %v2004
      %v2158 = vmul.f32 %v2007, %v2007
      %v2159 = vmul.f32 %v2012, %v2012
      %v2160 = vmul.f32 %v2015, %v2015
      %v2161 = vmul.f32 %v2020, %v2020
      %v2162 = vmul.f32 %v2023, %v2023
      %v2163 = vmul.f32 %v2028, %v2028
      %v2164 = vmul.f32 %v2031, %v2031
      %v2165 = vmul.f32 %v2036, %v2036
      %v2166 = vmul.f32 %v2039, %v2039
      %v2167 = vmul.f32 %v2044, %v2044
      %v2168 = vmul.f32 %v2047, %v2047
      %v2169 = vmul.f32 %v2052, %v2052
      %v2170 = vmul.f32 %v2055, %v2055
      %v2171 = vmul.f32 %v2060, %v2060
      %v2172 = vmul.f32 %v2063, %v2063
      %v2173 = vmul.f32 %v2068, %v2068
      %v2174 = vmul.f32 %v2071, %v2071
      %v2175 = vsel %vm1496, %v2143, 0.0
      %v2176 = vsel %vm1496, %v2144, 0.0
      %v2177 = vadd.f32 %v2175, %v2176
      %v2178 = vsel %vm1496, %v2145, 0.0
      %v2179 = vadd.f32 %v2177, %v2178
      %v2180 = vsel %vm1496, %v2146, 0.0
      %v2181 = vadd.f32 %v2179, %v2180
      %v2182 = vsel %vm1496, %v2147, 0.0
      %v2183 = vadd.f32 %v2181, %v2182
      %v2184 = vsel %vm1496, %v2148, 0.0
      %v2185 = vadd.f32 %v2183, %v2184
      %v2186 = vsel %vm1496, %v2149, 0.0
      %v2187 = vadd.f32 %v2185, %v2186
      %v2188 = vsel %vm1496, %v2150, 0.0
      %v2189 = vadd.f32 %v2187, %v2188
      %v2190 = vsel %vm1496, %v2151, 0.0
      %v2191 = vadd.f32 %v2189, %v2190
      %v2192 = vsel %vm1496, %v2152, 0.0
      %v2193 = vadd.f32 %v2191, %v2192
      %v2194 = vsel %vm1496, %v2153, 0.0
      %v2195 = vadd.f32 %v2193, %v2194
      %v2196 = vsel %vm1496, %v2154, 0.0
      %v2197 = vadd.f32 %v2195, %v2196
      %v2198 = vsel %vm1496, %v2155, 0.0
      %v2199 = vadd.f32 %v2197, %v2198
      %v2200 = vsel %vm1496, %v2156, 0.0
      %v2201 = vadd.f32 %v2199, %v2200
      %v2202 = vsel %vm1496, %v2157, 0.0
      %v2203 = vadd.f32 %v2201, %v2202
      %v2204 = vsel %vm1496, %v2158, 0.0
      %v2205 = vadd.f32 %v2203, %v2204
      %v2206 = vsel %vm1496, %v2159, 0.0
      %v2207 = vadd.f32 %v2205, %v2206
      %v2208 = vsel %vm1496, %v2160, 0.0
      %v2209 = vadd.f32 %v2207, %v2208
      %v2210 = vsel %vm1496, %v2161, 0.0
      %v2211 = vadd.f32 %v2209, %v2210
      %v2212 = vsel %vm1496, %v2162, 0.0
      %v2213 = vadd.f32 %v2211, %v2212
      %v2214 = vsel %vm1496, %v2163, 0.0
      %v2215 = vadd.f32 %v2213, %v2214
      %v2216 = vsel %vm1496, %v2164, 0.0
      %v2217 = vadd.f32 %v2215, %v2216
      %v2218 = vsel %vm1496, %v2165, 0.0
      %v2219 = vadd.f32 %v2217, %v2218
      %v2220 = vsel %vm1496, %v2166, 0.0
      %v2221 = vadd.f32 %v2219, %v2220
      %v2222 = vsel %vm1496, %v2167, 0.0
      %v2223 = vadd.f32 %v2221, %v2222
      %v2224 = vsel %vm1496, %v2168, 0.0
      %v2225 = vadd.f32 %v2223, %v2224
      %v2226 = vsel %vm1496, %v2169, 0.0
      %v2227 = vadd.f32 %v2225, %v2226
      %v2228 = vsel %vm1496, %v2170, 0.0
      %v2229 = vadd.f32 %v2227, %v2228
      %v2230 = vsel %vm1496, %v2171, 0.0
      %v2231 = vadd.f32 %v2229, %v2230
      %v2232 = vsel %vm1496, %v2172, 0.0
      %v2233 = vadd.f32 %v2231, %v2232
      %v2234 = vsel %vm1496, %v2173, 0.0
      %v2235 = vadd.f32 %v2233, %v2234
      %v2236 = vsel %vm1496, %v2174, 0.0
      %v2237 = vadd.f32 %v2235, %v2236
      %v2238 = vrot.slane %v2237, 4
      %v2239 = vadd.f32 %v2237, %v2238
      %v2240 = vrot.slane %v2239, 2
      %v2241 = vadd.f32 %v2239, %v2240
      %v2242 = vrot.slane %v2241, 1
      %v2243 = vadd.f32 %v2241, %v2242
      %vm2244 = vcmask 1040384
      %v2245 = vsel %vm2244, %v2142, %v2243
      %vm2246 = vcmask 58368
      %2247 = vst.msk [vmem:[%s404] sm:$0x3] %vm2246, %v2245
      %v2248 = vpack.c.bf16 %v1951, %v1948
      %v2249 = vpack.c.bf16 %v1959, %v1956
      %v2250 = vpack.c.bf16 %v1967, %v1964
      %v2251 = vpack.c.bf16 %v1975, %v1972
      %v2252 = vpack.c.bf16 %v1983, %v1980
      %v2253 = vpack.c.bf16 %v1991, %v1988
      %v2254 = vpack.c.bf16 %v1999, %v1996
      %v2255 = vpack.c.bf16 %v2007, %v2004
      %v2256 = vpack.c.bf16 %v2015, %v2012
      %v2257 = vpack.c.bf16 %v2023, %v2020
      %v2258 = vpack.c.bf16 %v2031, %v2028
      %v2259 = vpack.c.bf16 %v2039, %v2036
      %v2260 = vpack.c.bf16 %v2047, %v2044
      %v2261 = vpack.c.bf16 %v2055, %v2052
      %v2262 = vpack.c.bf16 %v2063, %v2060
      %v2263 = vpack.c.bf16 %v2071, %v2068
      %v2280 = vunpack.c.l.b16 %v2248
      %v2281 = vunpack.c.h.b16 %v2248
      %v2282 = vunpack.c.l.b16 %v2249
      %v2283 = vunpack.c.h.b16 %v2249
      %v2284 = vunpack.c.l.b16 %v2250
      %v2285 = vunpack.c.h.b16 %v2250
      %v2286 = vunpack.c.l.b16 %v2251
      %v2287 = vunpack.c.h.b16 %v2251
      %v2288 = vunpack.c.l.b16 %v2252
      %v2289 = vunpack.c.h.b16 %v2252
      %v2290 = vunpack.c.l.b16 %v2253
      %v2291 = vunpack.c.h.b16 %v2253
      %v2292 = vunpack.c.l.b16 %v2254
      %v2293 = vunpack.c.h.b16 %v2254
      %v2294 = vunpack.c.l.b16 %v2255
      %v2295 = vunpack.c.h.b16 %v2255
      %v2296 = vunpack.c.l.b16 %v2256
      %v2297 = vunpack.c.h.b16 %v2256
      %v2298 = vunpack.c.l.b16 %v2257
      %v2299 = vunpack.c.h.b16 %v2257
      %v2300 = vunpack.c.l.b16 %v2258
      %v2301 = vunpack.c.h.b16 %v2258
      %v2302 = vunpack.c.l.b16 %v2259
      %v2303 = vunpack.c.h.b16 %v2259
      %v2304 = vunpack.c.l.b16 %v2260
      %v2305 = vunpack.c.h.b16 %v2260
      %v2306 = vunpack.c.l.b16 %v2261
      %v2307 = vunpack.c.h.b16 %v2261
      %v2308 = vunpack.c.l.b16 %v2262
      %v2309 = vunpack.c.h.b16 %v2262
      %v2310 = vunpack.c.l.b16 %v2263
      %v2311 = vunpack.c.h.b16 %v2263
      %v2312 = vpack.c.b16 %v2280, %v2280
      %v2313 = vpack.c.b16 %v2281, %v2281
      %v2314 = vpack.c.b16 %v2282, %v2282
      %v2315 = vpack.c.b16 %v2283, %v2283
      %v2316 = vpack.c.b16 %v2284, %v2284
      %v2317 = vpack.c.b16 %v2285, %v2285
      %v2318 = vpack.c.b16 %v2286, %v2286
      %v2319 = vpack.c.b16 %v2287, %v2287
      %v2320 = vpack.c.b16 %v2288, %v2288
      %v2321 = vpack.c.b16 %v2289, %v2289
      %v2322 = vpack.c.b16 %v2290, %v2290
      %v2323 = vpack.c.b16 %v2291, %v2291
      %v2324 = vpack.c.b16 %v2292, %v2292
      %v2325 = vpack.c.b16 %v2293, %v2293
      %v2326 = vpack.c.b16 %v2294, %v2294
      %v2327 = vpack.c.b16 %v2295, %v2295
      %v2328 = vpack.c.b16 %v2296, %v2296
      %v2329 = vpack.c.b16 %v2297, %v2297
      %v2330 = vpack.c.b16 %v2298, %v2298
      %v2331 = vpack.c.b16 %v2299, %v2299
      %v2332 = vpack.c.b16 %v2300, %v2300
      %v2333 = vpack.c.b16 %v2301, %v2301
      %v2334 = vpack.c.b16 %v2302, %v2302
      %v2335 = vpack.c.b16 %v2303, %v2303
      %v2336 = vpack.c.b16 %v2304, %v2304
      %v2337 = vpack.c.b16 %v2305, %v2305
      %v2338 = vpack.c.b16 %v2306, %v2306
      %v2339 = vpack.c.b16 %v2307, %v2307
      %v2340 = vpack.c.b16 %v2308, %v2308
      %v2341 = vpack.c.b16 %v2309, %v2309
      %v2342 = vpack.c.b16 %v2310, %v2310
      %v2343 = vpack.c.b16 %v2311, %v2311
      %vm2376 = vcmask 60416
      %2377 = vst.msk [vmem:[%s396] sm:$0xf] %vm2376, %v2312
      %2378 = vst.msk [vmem:[%s396 + $0x4] sm:$0xf] %vm2376, %v2313
      %2379 = vst.msk [vmem:[%s396 + $0x8] sm:$0xf] %vm2376, %v2314
      %2380 = vst.msk [vmem:[%s396 + $0xc] sm:$0xf] %vm2376, %v2315
      %2381 = vst.msk [vmem:[%s396 + $0x10] sm:$0xf] %vm2376, %v2316
      %2382 = vst.msk [vmem:[%s396 + $0x14] sm:$0xf] %vm2376, %v2317
      %2383 = vst.msk [vmem:[%s396 + $0x18] sm:$0xf] %vm2376, %v2318
      %2384 = vst.msk [vmem:[%s396 + $0x1c] sm:$0xf] %vm2376, %v2319
      %2385 = vst.msk [vmem:[%s396 + $0x20] sm:$0xf] %vm2376, %v2320
      %2386 = vst.msk [vmem:[%s396 + $0x24] sm:$0xf] %vm2376, %v2321
      %2387 = vst.msk [vmem:[%s396 + $0x28] sm:$0xf] %vm2376, %v2322
      %2388 = vst.msk [vmem:[%s396 + $0x2c] sm:$0xf] %vm2376, %v2323
      %2389 = vst.msk [vmem:[%s396 + $0x30] sm:$0xf] %vm2376, %v2324
      %2390 = vst.msk [vmem:[%s396 + $0x34] sm:$0xf] %vm2376, %v2325
      %2391 = vst.msk [vmem:[%s396 + $0x38] sm:$0xf] %vm2376, %v2326
      %2392 = vst.msk [vmem:[%s396 + $0x3c] sm:$0xf] %vm2376, %v2327
      %2393 = vst.msk [vmem:[%s396 + $0x40] sm:$0xf] %vm2376, %v2328
      %2394 = vst.msk [vmem:[%s396 + $0x44] sm:$0xf] %vm2376, %v2329
      %2395 = vst.msk [vmem:[%s396 + $0x48] sm:$0xf] %vm2376, %v2330
      %2396 = vst.msk [vmem:[%s396 + $0x4c] sm:$0xf] %vm2376, %v2331
      %2397 = vst.msk [vmem:[%s396 + $0x50] sm:$0xf] %vm2376, %v2332
      %2398 = vst.msk [vmem:[%s396 + $0x54] sm:$0xf] %vm2376, %v2333
      %2399 = vst.msk [vmem:[%s396 + $0x58] sm:$0xf] %vm2376, %v2334
      %2400 = vst.msk [vmem:[%s396 + $0x5c] sm:$0xf] %vm2376, %v2335
      %2401 = vst.msk [vmem:[%s396 + $0x60] sm:$0xf] %vm2376, %v2336
      %2402 = vst.msk [vmem:[%s396 + $0x64] sm:$0xf] %vm2376, %v2337
      %2403 = vst.msk [vmem:[%s396 + $0x68] sm:$0xf] %vm2376, %v2338
      %2404 = vst.msk [vmem:[%s396 + $0x6c] sm:$0xf] %vm2376, %v2339
      %2405 = vst.msk [vmem:[%s396 + $0x70] sm:$0xf] %vm2376, %v2340
      %2406 = vst.msk [vmem:[%s396 + $0x74] sm:$0xf] %vm2376, %v2341
      %2407 = vst.msk [vmem:[%s396 + $0x78] sm:$0xf] %vm2376, %v2342
      %2408 = vst.msk [vmem:[%s396 + $0x7c] sm:$0xf] %vm2376, %v2343
      %s2409 = smul.u32 16, %s22
      %p2410 = scmp.lt.s32.totalorder %s21, 1
      %s2411 = scalar_select %p2410, %s21, 1
      %p2412 = scmp.lt.s32.totalorder %s2409, 15
      %s2413 = scalar_select %p2412, %s2409, 15
      %s2414 = smul.addr %s2413, 2
      %s2415 = smul.addr %s2411, 32
      %s2416 = sadd.s32 %s2414, %s2415
      %s2417 = smul.addr %s2416, 4
      %s2418 = scalar_lea.vmem %s4, %s2417
      %p2419 = scmp.lt.s32.totalorder %s21, 1
      %s2420 = scalar_select %p2419, %s21, 1
      %p2421 = scmp.lt.s32.totalorder %s22, 0
      %s2422 = scalar_select %p2421, %s22, 0
      %s2423 = sadd.s32 %s2422, %s2420
      %s2424 = smul.addr %s2423, 2
      %s2425 = scalar_lea.vmem %s5, %s2424
      // Predicated region
      $region37: #{double_conv_forward.17} parent=35 // pred_check
        %p2426 = pneg %p158
      $region38: #{double_conv_forward.17} parent=35 // pred_check_branch
        %2428 = sbr.rel (%p2426) target = $region40
      $region39: #{double_conv_forward.17} parent=35 // pred_region
        %s2429 = smul.u32 16, %s22
      $region40: #{double_conv_forward.17} parent=35 // pred_fallthru
        _
      // Predicated region
      $region41: #{double_conv_forward.17} parent=35 // pred_check
        %p2430 = pneg %p186
      $region42: #{double_conv_forward.17} parent=35 // pred_check_branch
        %2432 = sbr.rel (%p2430) target = $region44
      $region43: #{double_conv_forward.17} parent=35 // pred_region
        _
      $region44: #{double_conv_forward.17} parent=35 // pred_fallthru
        _
    $region36: #{double_conv_forward.17} parent=5 // pred_fallthru
      _
    %p2433 = scmp.le.s32.totalorder 2, %s12
    // Predicated region
    $region45: #{double_conv_forward.17} parent=5 // pred_check
      %p2434 = pneg %p2433
    $region46: #{double_conv_forward.17} parent=5 // pred_check_branch
      %2436 = sbr.rel (%p2434) target = $region48
    $region47: #{double_conv_forward.17} parent=5 // pred_region
      %s2437 = ssub.s32 %s12, 2
      // Predicated region
      $region49: #{double_conv_forward.17} parent=47 // pred_check
        %p2438 = pneg %p164
      $region50: #{double_conv_forward.17} parent=47 // pred_check_branch
        %2440 = sbr.rel (%p2438) target = $region52
      $region51: #{double_conv_forward.17} parent=47 // pred_region
        %s2441 = smul.u32 16, %s24
        %p2442 = scmp.lt.s32.totalorder %s23, 1
        %s2443 = scalar_select %p2442, %s23, 1
        %p2444 = scmp.lt.s32.totalorder %s2441, 15
        %s2445 = scalar_select %p2444, %s2441, 15
        %s2446 = smul.addr %s2445, 2
        %s2447 = smul.addr %s2443, 32
        %s2448 = sadd.s32 %s2446, %s2447
        %s2449 = smul.addr %s2448, 4
        %s2450 = scalar_lea.vmem %s4, %s2449
      $region52: #{double_conv_forward.17} parent=47 // pred_fallthru
        _
      // Predicated region
      $region53: #{double_conv_forward.17} parent=47 // pred_check
        %p2451 = pneg %p192
      $region54: #{double_conv_forward.17} parent=47 // pred_check_branch
        %2453 = sbr.rel (%p2451) target = $region56
      $region55: #{double_conv_forward.17} parent=47 // pred_region
        %p2454 = scmp.lt.s32.totalorder %s23, 1
        %s2455 = scalar_select %p2454, %s23, 1
        %p2456 = scmp.lt.s32.totalorder %s24, 0
        %s2457 = scalar_select %p2456, %s24, 0
        %s2458 = sadd.s32 %s2457, %s2455
        %s2459 = smul.addr %s2458, 2
        %s2460 = scalar_lea.vmem %s5, %s2459
      $region56: #{double_conv_forward.17} parent=47 // pred_fallthru
        _
    $region48: #{double_conv_forward.17} parent=5 // pred_fallthru
      _
  $region6: #{double_conv_forward.17} parent=0 // loop_footer
    %s16 = sadd.s32 1, %s12
  $region7: #{double_conv_forward.17} parent=0 // loop_footer_branch
    %11 = sbr.rel target = $region3
  $region8: #{double_conv_forward.17} parent=0 // loop_exit
    _

</llo_original>
